<compile_context>
chip_gen: v5e
topology: v5e:2x2
jax: 0.10.0
libtpu: 0.0.40
codegen_flags: <defaults>
</compile_context>

<pallas_src>
import math

import jax
import jax.numpy as jnp
from jax import lax
from jax.experimental import pallas as pl
from jax.experimental.pallas import tpu as pltpu


# ----------------------------- kernel helpers ------------------------------

def _gelu_tanh(x):
    # tanh-approximate GELU (|err| < ~4e-4): one EUP tanh instead of an erf polynomial on the
    # widest (S, 4C) activation.  Intentional approximation (within test tolerance).
    # TODO(synk): on v6e/v7x this elementwise chain could run in bf16 (bf16 VALU/EUP).
    c = math.sqrt(2.0 / math.pi)
    return 0.5 * x * (1.0 + jnp.tanh(c * (x + 0.044715 * x * x * x)))


def _layernorm(x, g, b, eps=1e-5):
    mu = jnp.mean(x, axis=-1, keepdims=True)
    xc = x - mu
    var = jnp.mean(xc * xc, axis=-1, keepdims=True)
    return xc * lax.rsqrt(var + eps) * g + b


# --------------------------------- kernel ----------------------------------

def _make_kernel(n_head, d_head, C):
    bf16 = jnp.bfloat16
    f32 = jnp.float32

    # row indices into the packed (13, C) small-parameter array
    (IDX_GN_G, IDX_GN_B, IDX_CIN_B, IDX_LN1_G, IDX_LN1_B, IDX_A1_BO,
     IDX_LN2_G, IDX_LN2_B, IDX_A2_BO, IDX_LN3_G, IDX_LN3_B, IDX_L2_B,
     IDX_COUT_B) = range(13)

    def _attn_core(q, k, v, wo, bo):
        # q: (Sq, C) f32, k/v: (Sk, C) f32, wo: (C, C) bf16, bo: (1, C) f32.
        # 1/sqrt(d_head) is already folded into the Q weights host-side.
        head_outs = []
        for hd in range(n_head):
            sl = slice(hd * d_head, (hd + 1) * d_head)
            qh = q[:, sl].astype(bf16)                       # (Sq, dh)
            kh = k[:, sl].astype(bf16)                       # (Sk, dh)
            vh = v[:, sl].astype(bf16)                       # (Sk, dh)
            # scores = q @ k^T, f32 accumulation
            s = lax.dot_general(qh, kh, (((1,), (1,)), ((), ())),
                                preferred_element_type=f32)  # (Sq, Sk)
            s = s - jnp.max(s, axis=-1, keepdims=True)
            p = jnp.exp(s)
            p = p * pl.reciprocal(jnp.sum(p, axis=-1, keepdims=True), approx=True)
            head_outs.append(jnp.dot(p.astype(bf16), vh,
                                     preferred_element_type=f32))  # (Sq, dh)
        o = jnp.concatenate(head_outs, axis=-1).astype(bf16)        # merged heads (Sq, C)
        return jnp.dot(o, wo, preferred_element_type=f32) + bo      # single lane-dense out-proj

    def kernel(x_ref, ctx_ref,
               vecs_ref, gproj_ref, cin_w_ref,
               a1_wqkv_ref, a1_wo_ref,
               a2_wq_ref, a2_wkv_ref, a2_wo_ref,
               l1_w_ref, l1_b_ref, l2_w_ref, cout_w_ref,
               out_ref):
        x0 = x_ref[0]                                   # (S, C) f32 -- outer residual
        ctx = ctx_ref[0]                                # (Sc, Dc) f32 (unpadded)
        vecs = vecs_ref[...]                            # (13, C) f32 packed small params
        row = lambda i: vecs[i:i + 1, :]                # (1, C) static row slice

        # ---- GroupNorm(32, C): reduce over S, then tiny group-average projector (bf16, f32 acc)
        gp = gproj_ref[...]                                               # (C, C) bf16
        mean_c = jnp.dot(jnp.mean(x0, axis=0, keepdims=True).astype(bf16), gp,
                         preferred_element_type=f32)                      # (1, C) group means
        xc = x0 - mean_c
        var_c = jnp.dot(jnp.mean(xc * xc, axis=0, keepdims=True).astype(bf16), gp,
                        preferred_element_type=f32)                       # (1, C) group vars
        x = xc * lax.rsqrt(var_c + 1e-5) * row(IDX_GN_G) + row(IDX_GN_B)

        # ---- conv_in (1x1 conv == per-pixel channel matmul) ----
        x = jnp.dot(x.astype(bf16), cin_w_ref[...],
                    preferred_element_type=f32) + row(IDX_CIN_B)

        # ---- LN1 + self attention + residual ----
        res = x
        h = _layernorm(x, row(IDX_LN1_G), row(IDX_LN1_B)).astype(bf16)
        qkv = jnp.dot(h, a1_wqkv_ref[...], preferred_element_type=f32)    # (S, 3C) fused, lane-dense
        x = _attn_core(qkv[:, :C], qkv[:, C:2 * C], qkv[:, 2 * C:],
                       a1_wo_ref[...], row(IDX_A1_BO)) + res

        # ---- LN2 + cross attention (context) + residual ----
        res = x
        h = _layernorm(x, row(IDX_LN2_G), row(IDX_LN2_B)).astype(bf16)
        q = jnp.dot(h, a2_wq_ref[...], preferred_element_type=f32)        # (S, C), scale folded
        kv = jnp.dot(ctx.astype(bf16), a2_wkv_ref[...],
                     preferred_element_type=f32)                          # (Sc, 2C) fused
        x = _attn_core(q, kv[:, :C], kv[:, C:],
                       a2_wo_ref[...], row(IDX_A2_BO)) + res

        # ---- LN3 + GEGLU feed-forward + residual ----
        res = x
        h = _layernorm(x, row(IDX_LN3_G), row(IDX_LN3_B)).astype(bf16)
        z = jnp.dot(h, l1_w_ref[...], preferred_element_type=f32) + l1_b_ref[...]  # (S, 8C)
        a, gate = z[:, :4 * C], z[:, 4 * C:]             # split at 4C -> 128-lane aligned
        f = (a * _gelu_tanh(gate)).astype(bf16)
        x = jnp.dot(f, l2_w_ref[...], preferred_element_type=f32) + row(IDX_L2_B) + res

        # ---- conv_out (1x1) + outer residual (single store of the block) ----
        out_ref[0] = (jnp.dot(x.astype(bf16), cout_w_ref[...],
                              preferred_element_type=f32)
                      + row(IDX_COUT_B) + x0)

    return kernel


# -------------------------------- wrapper -----------------------------------

def multimodal_attention_block(x_nchw, context, p, n_head):
    N, C, H, W = x_nchw.shape
    S = H * W
    _, Sc, Dc = context.shape
    d_head = C // n_head
    G = 32
    gsz = C // G
    bf16 = jnp.bfloat16
    scale = 1.0 / math.sqrt(d_head)

    # channels-last sequence layout for the kernel
    x_seq = jnp.transpose(x_nchw.reshape(N, C, S), (0, 2, 1)).astype(jnp.float32)
    ctx = context.astype(jnp.float32)

    # group-averaging projector (one-hot group assignment A, then A @ A.T / gsz), bf16
    # (entries are 0 or 1/gsz -> exactly representable; M=1 matmuls, f32 accumulation).
    A = (jnp.arange(C)[:, None] // gsz == jnp.arange(G)[None, :]).astype(jnp.float32)
    gproj = ((A @ A.T) / float(gsz)).astype(bf16)                     # (C, C)

    # pack the 13 per-channel parameter vectors into ONE (13, C) array -> one DMA / one tile
    vecs = jnp.stack([
        p["gn_g"], p["gn_b"], p["cin_b"],
        p["ln1_g"], p["ln1_b"], p["a1_bout"],
        p["ln2_g"], p["ln2_b"], p["a2_bout"],
        p["ln3_g"], p["ln3_b"], p["l2_b"], p["cout_b"],
    ], axis=0).astype(jnp.float32)

    # fused self-attn QKV weight (C, 3C): softmax scale folded into the Q columns host-side
    a1_wqkv = jnp.concatenate([p["a1_win"][:C].T * scale,
                               p["a1_win"][C:2 * C].T,
                               p["a1_win"][2 * C:].T], axis=1).astype(bf16)
    a1_wo = p["a1_wout"].T.astype(bf16)                               # (C, C)
    a2_wq = (p["a2_wq"].T * scale).astype(bf16)                       # (C, C), scale folded
    a2_wkv = p["a2_wkv"].T.astype(bf16)                               # (Dc, 2C): [K | V]
    a2_wo = p["a2_wout"].T.astype(bf16)                               # (C, C)

    args = [
        x_seq, ctx,
        vecs, gproj,
        p["cin_w"].T.astype(bf16),
        a1_wqkv, a1_wo,
        a2_wq, a2_wkv, a2_wo,
        p["l1_w"].T.astype(bf16), p["l1_b"].reshape(1, -1).astype(jnp.float32),
        p["l2_w"].T.astype(bf16),
        p["cout_w"].T.astype(bf16),
    ]

    def build(single_buffer_weights):
        def invariant_spec(a):
            kwargs = {}
            if single_buffer_weights:
                # grid-invariant weights: no need for double-buffering, halve their VMEM cost
                kwargs["pipeline_mode"] = pl.Buffered(1)
            return pl.BlockSpec(a.shape, lambda b, _n=a.ndim: (0,) * _n, **kwargs)

        in_specs = [pl.BlockSpec((1, S, C), lambda b: (b, 0, 0)),
                    pl.BlockSpec((1, Sc, Dc), lambda b: (b, 0, 0))]
        in_specs += [invariant_spec(a) for a in args[2:]]

        return pl.pallas_call(
            _make_kernel(n_head, d_head, C),
            out_shape=jax.ShapeDtypeStruct((N, S, C), jnp.float32),
            grid=(N,),
            in_specs=in_specs,
            out_specs=pl.BlockSpec((1, S, C), lambda b: (b, 0, 0)),
            compiler_params=pltpu.CompilerParams(dimension_semantics=("parallel",)),
        )

    try:
        out = build(True)(*args)
    except Exception:
        # Fallback for JAX builds where single-buffering via pipeline_mode is unsupported;
        # semantics identical, only weight VMEM footprint differs.
        out = build(False)(*args)

    return jnp.transpose(out, (0, 2, 1)).reshape(N, C, H, W)


# --------------------------- pure-JAX reference -----------------------------

def ref_forward(x, context, p, n_head):
    N, C, H, W = x.shape
    d_head = C // n_head
    G = 32
    residual = x

    xg = x.reshape(N, G, -1)
    mu = xg.mean(axis=-1, keepdims=True)
    var = ((xg - mu) ** 2).mean(axis=-1, keepdims=True)
    xn = ((xg - mu) / jnp.sqrt(var + 1e-5)).reshape(N, C, H, W)
    x = xn * p["gn_g"][None, :, None, None] + p["gn_b"][None, :, None, None]

    x = jnp.einsum("nchw,oc->nohw", x, p["cin_w"]) + p["cin_b"][None, :, None, None]
    n, c, h, w = x.shape
    x = x.reshape(n, c, h * w).transpose(0, 2, 1)  # (N, S, C)

    def ln(t, g, b):
        m = t.mean(-1, keepdims=True)
        v = ((t - m) ** 2).mean(-1, keepdims=True)
        return (t - m) / jnp.sqrt(v + 1e-5) * g + b

    def split_heads(t):
        B, S, _ = t.shape
        return t.reshape(B, S, n_head, d_head).transpose(0, 2, 1, 3)

    def merge_heads(t):
        B, Hh, S, Dh = t.shape
        return t.transpose(0, 2, 1, 3).reshape(B, S, Hh * Dh)

    def attend(q, k, v):
        s = jnp.einsum("bhsd,bhtd->bhst", q, k) / math.sqrt(d_head)
        a = jax.nn.softmax(s, axis=-1)
        return jnp.einsum("bhst,bhtd->bhsd", a, v)

    rt = x
    hln = ln(x, p["ln1_g"], p["ln1_b"])
    qkv = hln @ p["a1_win"].T
    q, k, v = jnp.split(qkv, 3, axis=-1)
    o = merge_heads(attend(split_heads(q), split_heads(k), split_heads(v)))
    x = o @ p["a1_wout"].T + p["a1_bout"] + rt

    rt = x
    hln = ln(x, p["ln2_g"], p["ln2_b"])
    q = hln @ p["a2_wq"].T
    kv = context.astype(jnp.float32) @ p["a2_wkv"].T
    k, v = jnp.split(kv, 2, axis=-1)
    o = merge_heads(attend(split_heads(q), split_heads(k), split_heads(v)))
    x = o @ p["a2_wout"].T + p["a2_bout"] + rt

    rt = x
    hln = ln(x, p["ln3_g"], p["ln3_b"])
    z = hln @ p["l1_w"].T + p["l1_b"]
    a, gate = jnp.split(z, 2, axis=-1)
    x = a * jax.nn.gelu(gate, approximate=False)
    x = x @ p["l2_w"].T + p["l2_b"] + rt

    x = x.transpose(0, 2, 1).reshape(n, c, h, w)
    x = jnp.einsum("nchw,oc->nohw", x, p["cout_w"]) + p["cout_b"][None, :, None, None]
    return x + residual


# ------------------------------ param init ----------------------------------

def init_params(key, C, d_context):
    ks = iter(jax.random.split(key, 32))

    def nrm(shape, scale=0.1):
        return scale * jax.random.normal(next(ks), shape, dtype=jnp.float32)

    p = {}
    p["gn_g"] = 1.0 + nrm((C,));        p["gn_b"] = nrm((C,))
    p["cin_w"] = nrm((C, C));           p["cin_b"] = nrm((C,))
    p["ln1_g"] = 1.0 + nrm((C,));       p["ln1_b"] = nrm((C,))
    p["a1_win"] = nrm((3 * C, C))                       # SelfAttention in_proj (no bias)
    p["a1_wout"] = nrm((C, C));         p["a1_bout"] = nrm((C,))
    p["ln2_g"] = 1.0 + nrm((C,));       p["ln2_b"] = nrm((C,))
    p["a2_wq"] = nrm((C, C))                            # CrossAttention q_in_proj (no bias)
    p["a2_wkv"] = nrm((2 * C, d_context))               # CrossAttention kv_in_proj (no bias)
    p["a2_wout"] = nrm((C, C));         p["a2_bout"] = nrm((C,))
    p["ln3_g"] = 1.0 + nrm((C,));       p["ln3_b"] = nrm((C,))
    p["l1_w"] = nrm((8 * C, C));        p["l1_b"] = nrm((8 * C,))
    p["l2_w"] = nrm((C, 4 * C));        p["l2_b"] = nrm((C,))
    p["cout_w"] = nrm((C, C));          p["cout_b"] = nrm((C,))
    return p


# ---------------------------------- main -------------------------------------

if __name__ == "__main__":
    key = jax.random.PRNGKey(0)
    N, C, H, W = 2, 64, 8, 8          # n_embed=64 (divisible by 32 GroupNorm groups)
    n_head = 4                        # d_head = 16
    d_context, S_ctx = 64, 8

    k_x, k_c, k_p = jax.random.split(key, 3)
    x = jax.random.normal(k_x, (N, C, H, W), dtype=jnp.float32)
    ctx = jax.random.normal(k_c, (N, S_ctx, d_context), dtype=jnp.float32)
    params = init_params(k_p, C, d_context)

    out = multimodal_attention_block(x, ctx, params, n_head)
    out = jax.block_until_ready(out)

    # accurate f32 reference (scoped 'highest' precision only here; the kernel uses bf16 MXU)
    with jax.default_matmul_precision("highest"):
        ref = jax.block_until_ready(ref_forward(x, ctx, params, n_head))

    assert out.shape == (N, C, H, W)
    assert bool(jnp.all(jnp.isfinite(out)))
    # bf16 MXU operands everywhere + approx reciprocal + tanh-GELU: compare at bf16-level tolerance
    max_err = float(jnp.max(jnp.abs(out - ref)))
    rel_l2 = float(jnp.linalg.norm(out - ref) / jnp.linalg.norm(ref))
    assert jnp.allclose(out, ref, atol=4e-2, rtol=4e-2), \
        f"mismatch: max abs err {max_err}, rel L2 {rel_l2}"
    assert rel_l2 < 2e-2, f"relative L2 error too large: {rel_l2}"

    print("KERNEL_OK")
</pallas_src>

<mosaic_0001>
module attributes {stable_mosaic.version = 11 : i64} {
  func.func @kernel(%arg0: i32, %arg1: memref<1x64x64xf32, #tpu.memory_space<vmem>>, %arg2: memref<1x8x64xf32, #tpu.memory_space<vmem>>, %arg3: memref<13x64xf32, #tpu.memory_space<vmem>>, %arg4: memref<64x64xbf16, #tpu.memory_space<vmem>>, %arg5: memref<64x64xbf16, #tpu.memory_space<vmem>>, %arg6: memref<64x192xbf16, #tpu.memory_space<vmem>>, %arg7: memref<64x64xbf16, #tpu.memory_space<vmem>>, %arg8: memref<64x64xbf16, #tpu.memory_space<vmem>>, %arg9: memref<64x128xbf16, #tpu.memory_space<vmem>>, %arg10: memref<64x64xbf16, #tpu.memory_space<vmem>>, %arg11: memref<64x512xbf16, #tpu.memory_space<vmem>>, %arg12: memref<1x512xf32, #tpu.memory_space<vmem>>, %arg13: memref<256x64xbf16, #tpu.memory_space<vmem>>, %arg14: memref<64x64xbf16, #tpu.memory_space<vmem>>, %arg15: memref<1x64x64xf32, #tpu.memory_space<vmem>>) attributes {dimension_semantics = [#tpu.dimension_semantics<parallel>], iteration_bounds = array<i64: 2>, scalar_prefetch = 0 : i64, scratch_operands = 0 : i64, tpu.core_type = #tpu.core_type<tc>, window_params = [{transform_indices = @transform_0, window_bounds = array<i64: 1, 64, 64>}, {transform_indices = @transform_1, window_bounds = array<i64: 1, 8, 64>}, {pipeline_mode = #tpu.pipeline_mode<synchronous>, transform_indices = @transform_2, window_bounds = array<i64: 13, 64>}, {pipeline_mode = #tpu.pipeline_mode<synchronous>, transform_indices = @transform_3, window_bounds = array<i64: 64, 64>}, {pipeline_mode = #tpu.pipeline_mode<synchronous>, transform_indices = @transform_4, window_bounds = array<i64: 64, 64>}, {pipeline_mode = #tpu.pipeline_mode<synchronous>, transform_indices = @transform_5, window_bounds = array<i64: 64, 192>}, {pipeline_mode = #tpu.pipeline_mode<synchronous>, transform_indices = @transform_6, window_bounds = array<i64: 64, 64>}, {pipeline_mode = #tpu.pipeline_mode<synchronous>, transform_indices = @transform_7, window_bounds = array<i64: 64, 64>}, {pipeline_mode = #tpu.pipeline_mode<synchronous>, transform_indices = @transform_8, window_bounds = array<i64: 64, 128>}, {pipeline_mode = #tpu.pipeline_mode<synchronous>, transform_indices = @transform_9, window_bounds = array<i64: 64, 64>}, {pipeline_mode = #tpu.pipeline_mode<synchronous>, transform_indices = @transform_10, window_bounds = array<i64: 64, 512>}, {pipeline_mode = #tpu.pipeline_mode<synchronous>, transform_indices = @transform_11, window_bounds = array<i64: 1, 512>}, {pipeline_mode = #tpu.pipeline_mode<synchronous>, transform_indices = @transform_12, window_bounds = array<i64: 256, 64>}, {pipeline_mode = #tpu.pipeline_mode<synchronous>, transform_indices = @transform_13, window_bounds = array<i64: 64, 64>}, {transform_indices = @transform_14, window_bounds = array<i64: 1, 64, 64>}]} {
    %c0 = arith.constant 0 : index
    %c0_0 = arith.constant 0 : index
    %c0_1 = arith.constant 0 : index
    %0 = vector.load %arg1[%c0, %c0_0, %c0_1] : memref<1x64x64xf32, #tpu.memory_space<vmem>>, vector<1x64x64xf32>
    %1 = vector.shape_cast %0 : vector<1x64x64xf32> to vector<64x64xf32>
    %c0_2 = arith.constant 0 : index
    %c0_3 = arith.constant 0 : index
    %c0_4 = arith.constant 0 : index
    %2 = vector.load %arg2[%c0_2, %c0_3, %c0_4] : memref<1x8x64xf32, #tpu.memory_space<vmem>>, vector<1x8x64xf32>
    %3 = vector.shape_cast %2 : vector<1x8x64xf32> to vector<8x64xf32>
    %c0_5 = arith.constant 0 : index
    %c0_6 = arith.constant 0 : index
    %4 = vector.load %arg3[%c0_5, %c0_6] : memref<13x64xf32, #tpu.memory_space<vmem>>, vector<13x64xf32>
    %c0_7 = arith.constant 0 : index
    %c0_8 = arith.constant 0 : index
    %5 = vector.load %arg4[%c0_7, %c0_8] : memref<64x64xbf16, #tpu.memory_space<vmem>>, vector<64x64xbf16>
    %cst = arith.constant dense<0.000000e+00> : vector<64xf32>
    %6 = vector.multi_reduction <add>, %1, %cst [0] : vector<64x64xf32> to vector<64xf32>
    %7 = vector.shape_cast %6 : vector<64xf32> to vector<1x64xf32>
    %cst_9 = arith.constant 6.400000e+01 : f32
    %8 = vector.broadcast %cst_9 : f32 to vector<1x64xf32>
    %9 = arith.divf %7, %8 : vector<1x64xf32>
    %10 = arith.truncf %9 : vector<1x64xf32> to vector<1x64xbf16>
    %cst_10 = arith.constant dense<0.000000e+00> : vector<1x64xf32>
    %11 = tpu.matmul %10, %5, %cst_10 {dimension_numbers = #tpu.dot_dimension_numbers<[1], [0], [0], [1], [0, 0, 1, 1], [], []>} : vector<1x64xbf16>, vector<64x64xbf16>, vector<1x64xf32> -> vector<1x64xf32>
    %12 = vector.broadcast %11 : vector<1x64xf32> to vector<64x64xf32>
    %13 = arith.subf %1, %12 : vector<64x64xf32>
    %14 = arith.mulf %13, %13 : vector<64x64xf32>
    %cst_11 = arith.constant dense<0.000000e+00> : vector<64xf32>
    %15 = vector.multi_reduction <add>, %14, %cst_11 [0] : vector<64x64xf32> to vector<64xf32>
    %16 = vector.shape_cast %15 : vector<64xf32> to vector<1x64xf32>
    %cst_12 = arith.constant 6.400000e+01 : f32
    %17 = vector.broadcast %cst_12 : f32 to vector<1x64xf32>
    %18 = arith.divf %16, %17 : vector<1x64xf32>
    %19 = arith.truncf %18 : vector<1x64xf32> to vector<1x64xbf16>
    %cst_13 = arith.constant dense<0.000000e+00> : vector<1x64xf32>
    %20 = tpu.matmul %19, %5, %cst_13 {dimension_numbers = #tpu.dot_dimension_numbers<[1], [0], [0], [1], [0, 0, 1, 1], [], []>} : vector<1x64xbf16>, vector<64x64xbf16>, vector<1x64xf32> -> vector<1x64xf32>
    %cst_14 = arith.constant 9.99999974E-6 : f32
    %21 = vector.broadcast %cst_14 : f32 to vector<1x64xf32>
    %22 = arith.addf %20, %21 : vector<1x64xf32>
    %23 = math.rsqrt %22 : vector<1x64xf32>
    %24 = vector.broadcast %23 : vector<1x64xf32> to vector<64x64xf32>
    %25 = arith.mulf %13, %24 : vector<64x64xf32>
    %26 = vector.extract_strided_slice %4 {offsets = [0, 0], sizes = [1, 64], strides = [1, 1]} : vector<13x64xf32> to vector<1x64xf32>
    %27 = vector.broadcast %26 : vector<1x64xf32> to vector<64x64xf32>
    %28 = arith.mulf %25, %27 : vector<64x64xf32>
    %29 = vector.extract_strided_slice %4 {offsets = [1, 0], sizes = [1, 64], strides = [1, 1]} : vector<13x64xf32> to vector<1x64xf32>
    %30 = vector.broadcast %29 : vector<1x64xf32> to vector<64x64xf32>
    %31 = arith.addf %28, %30 : vector<64x64xf32>
    %32 = arith.truncf %31 : vector<64x64xf32> to vector<64x64xbf16>
    %c0_15 = arith.constant 0 : index
    %c0_16 = arith.constant 0 : index
    %33 = vector.load %arg5[%c0_15, %c0_16] : memref<64x64xbf16, #tpu.memory_space<vmem>>, vector<64x64xbf16>
    %cst_17 = arith.constant dense<0.000000e+00> : vector<64x64xf32>
    %34 = tpu.matmul %32, %33, %cst_17 {dimension_numbers = #tpu.dot_dimension_numbers<[1], [0], [0], [1], [0, 0, 1, 1], [], []>} : vector<64x64xbf16>, vector<64x64xbf16>, vector<64x64xf32> -> vector<64x64xf32>
    %35 = vector.extract_strided_slice %4 {offsets = [2, 0], sizes = [1, 64], strides = [1, 1]} : vector<13x64xf32> to vector<1x64xf32>
    %36 = vector.broadcast %35 : vector<1x64xf32> to vector<64x64xf32>
    %37 = arith.addf %34, %36 : vector<64x64xf32>
    %38 = vector.extract_strided_slice %4 {offsets = [3, 0], sizes = [1, 64], strides = [1, 1]} : vector<13x64xf32> to vector<1x64xf32>
    %39 = vector.extract_strided_slice %4 {offsets = [4, 0], sizes = [1, 64], strides = [1, 1]} : vector<13x64xf32> to vector<1x64xf32>
    %cst_18 = arith.constant dense<0.000000e+00> : vector<64xf32>
    %40 = vector.multi_reduction <add>, %37, %cst_18 [1] : vector<64x64xf32> to vector<64xf32>
    %41 = vector.shape_cast %40 : vector<64xf32> to vector<64x1xf32>
    %cst_19 = arith.constant 6.400000e+01 : f32
    %42 = vector.broadcast %cst_19 : f32 to vector<64x1xf32>
    %43 = arith.divf %41, %42 : vector<64x1xf32>
    %44 = vector.broadcast %43 : vector<64x1xf32> to vector<64x64xf32>
    %45 = arith.subf %37, %44 : vector<64x64xf32>
    %46 = arith.mulf %45, %45 : vector<64x64xf32>
    %cst_20 = arith.constant dense<0.000000e+00> : vector<64xf32>
    %47 = vector.multi_reduction <add>, %46, %cst_20 [1] : vector<64x64xf32> to vector<64xf32>
    %48 = vector.shape_cast %47 : vector<64xf32> to vector<64x1xf32>
    %cst_21 = arith.constant 6.400000e+01 : f32
    %49 = vector.broadcast %cst_21 : f32 to vector<64x1xf32>
    %50 = arith.divf %48, %49 : vector<64x1xf32>
    %cst_22 = arith.constant 9.99999974E-6 : f32
    %51 = vector.broadcast %cst_22 : f32 to vector<64x1xf32>
    %52 = arith.addf %50, %51 : vector<64x1xf32>
    %53 = math.rsqrt %52 : vector<64x1xf32>
    %54 = vector.broadcast %53 : vector<64x1xf32> to vector<64x64xf32>
    %55 = arith.mulf %45, %54 : vector<64x64xf32>
    %56 = vector.broadcast %38 : vector<1x64xf32> to vector<64x64xf32>
    %57 = arith.mulf %55, %56 : vector<64x64xf32>
    %58 = vector.broadcast %39 : vector<1x64xf32> to vector<64x64xf32>
    %59 = arith.addf %57, %58 : vector<64x64xf32>
    %60 = arith.truncf %59 : vector<64x64xf32> to vector<64x64xbf16>
    %c0_23 = arith.constant 0 : index
    %c0_24 = arith.constant 0 : index
    %61 = vector.load %arg6[%c0_23, %c0_24] : memref<64x192xbf16, #tpu.memory_space<vmem>>, vector<64x192xbf16>
    %cst_25 = arith.constant dense<0.000000e+00> : vector<64x192xf32>
    %62 = tpu.matmul %60, %61, %cst_25 {dimension_numbers = #tpu.dot_dimension_numbers<[1], [0], [0], [1], [0, 0, 1, 1], [], []>} : vector<64x64xbf16>, vector<64x192xbf16>, vector<64x192xf32> -> vector<64x192xf32>
    %63 = vector.extract_strided_slice %62 {offsets = [0, 0], sizes = [64, 64], strides = [1, 1]} : vector<64x192xf32> to vector<64x64xf32>
    %64 = vector.extract_strided_slice %62 {offsets = [0, 64], sizes = [64, 64], strides = [1, 1]} : vector<64x192xf32> to vector<64x64xf32>
    %65 = vector.extract_strided_slice %62 {offsets = [0, 128], sizes = [64, 64], strides = [1, 1]} : vector<64x192xf32> to vector<64x64xf32>
    %c0_26 = arith.constant 0 : index
    %c0_27 = arith.constant 0 : index
    %66 = vector.load %arg7[%c0_26, %c0_27] : memref<64x64xbf16, #tpu.memory_space<vmem>>, vector<64x64xbf16>
    %67 = vector.extract_strided_slice %4 {offsets = [5, 0], sizes = [1, 64], strides = [1, 1]} : vector<13x64xf32> to vector<1x64xf32>
    %68 = vector.extract_strided_slice %63 {offsets = [0, 0], sizes = [64, 16], strides = [1, 1]} : vector<64x64xf32> to vector<64x16xf32>
    %69 = arith.truncf %68 : vector<64x16xf32> to vector<64x16xbf16>
    %70 = vector.extract_strided_slice %64 {offsets = [0, 0], sizes = [64, 16], strides = [1, 1]} : vector<64x64xf32> to vector<64x16xf32>
    %71 = arith.truncf %70 : vector<64x16xf32> to vector<64x16xbf16>
    %72 = vector.extract_strided_slice %65 {offsets = [0, 0], sizes = [64, 16], strides = [1, 1]} : vector<64x64xf32> to vector<64x16xf32>
    %73 = arith.truncf %72 : vector<64x16xf32> to vector<64x16xbf16>
    %cst_28 = arith.constant dense<0.000000e+00> : vector<64x64xf32>
    %74 = tpu.matmul %69, %71, %cst_28 {dimension_numbers = #tpu.dot_dimension_numbers<[1], [1], [0], [0], [0, 0, 1, 0], [], []>} : vector<64x16xbf16>, vector<64x16xbf16>, vector<64x64xf32> -> vector<64x64xf32>
    %cst_29 = arith.constant dense<0xFF800000> : vector<64xf32>
    %75 = vector.multi_reduction <maximumf>, %74, %cst_29 [1] : vector<64x64xf32> to vector<64xf32>
    %76 = vector.shape_cast %75 : vector<64xf32> to vector<64x1xf32>
    %77 = vector.broadcast %76 : vector<64x1xf32> to vector<64x64xf32>
    %78 = arith.subf %74, %77 : vector<64x64xf32>
    %79 = math.exp %78 : vector<64x64xf32>
    %cst_30 = arith.constant dense<0.000000e+00> : vector<64xf32>
    %80 = vector.multi_reduction <add>, %79, %cst_30 [1] : vector<64x64xf32> to vector<64xf32>
    %81 = vector.shape_cast %80 : vector<64xf32> to vector<64x1xf32>
    %82 = tpu.reciprocal %81 {approx = true} : vector<64x1xf32> -> vector<64x1xf32>
    %83 = vector.broadcast %82 : vector<64x1xf32> to vector<64x64xf32>
    %84 = arith.mulf %79, %83 : vector<64x64xf32>
    %85 = arith.truncf %84 : vector<64x64xf32> to vector<64x64xbf16>
    %cst_31 = arith.constant dense<0.000000e+00> : vector<64x16xf32>
    %86 = tpu.matmul %85, %73, %cst_31 {dimension_numbers = #tpu.dot_dimension_numbers<[1], [0], [0], [1], [0, 0, 1, 1], [], []>} : vector<64x64xbf16>, vector<64x16xbf16>, vector<64x16xf32> -> vector<64x16xf32>
    %87 = vector.extract_strided_slice %63 {offsets = [0, 16], sizes = [64, 16], strides = [1, 1]} : vector<64x64xf32> to vector<64x16xf32>
    %88 = arith.truncf %87 : vector<64x16xf32> to vector<64x16xbf16>
    %89 = vector.extract_strided_slice %64 {offsets = [0, 16], sizes = [64, 16], strides = [1, 1]} : vector<64x64xf32> to vector<64x16xf32>
    %90 = arith.truncf %89 : vector<64x16xf32> to vector<64x16xbf16>
    %91 = vector.extract_strided_slice %65 {offsets = [0, 16], sizes = [64, 16], strides = [1, 1]} : vector<64x64xf32> to vector<64x16xf32>
    %92 = arith.truncf %91 : vector<64x16xf32> to vector<64x16xbf16>
    %cst_32 = arith.constant dense<0.000000e+00> : vector<64x64xf32>
    %93 = tpu.matmul %88, %90, %cst_32 {dimension_numbers = #tpu.dot_dimension_numbers<[1], [1], [0], [0], [0, 0, 1, 0], [], []>} : vector<64x16xbf16>, vector<64x16xbf16>, vector<64x64xf32> -> vector<64x64xf32>
    %cst_33 = arith.constant dense<0xFF800000> : vector<64xf32>
    %94 = vector.multi_reduction <maximumf>, %93, %cst_33 [1] : vector<64x64xf32> to vector<64xf32>
    %95 = vector.shape_cast %94 : vector<64xf32> to vector<64x1xf32>
    %96 = vector.broadcast %95 : vector<64x1xf32> to vector<64x64xf32>
    %97 = arith.subf %93, %96 : vector<64x64xf32>
    %98 = math.exp %97 : vector<64x64xf32>
    %cst_34 = arith.constant dense<0.000000e+00> : vector<64xf32>
    %99 = vector.multi_reduction <add>, %98, %cst_34 [1] : vector<64x64xf32> to vector<64xf32>
    %100 = vector.shape_cast %99 : vector<64xf32> to vector<64x1xf32>
    %101 = tpu.reciprocal %100 {approx = true} : vector<64x1xf32> -> vector<64x1xf32>
    %102 = vector.broadcast %101 : vector<64x1xf32> to vector<64x64xf32>
    %103 = arith.mulf %98, %102 : vector<64x64xf32>
    %104 = arith.truncf %103 : vector<64x64xf32> to vector<64x64xbf16>
    %cst_35 = arith.constant dense<0.000000e+00> : vector<64x16xf32>
    %105 = tpu.matmul %104, %92, %cst_35 {dimension_numbers = #tpu.dot_dimension_numbers<[1], [0], [0], [1], [0, 0, 1, 1], [], []>} : vector<64x64xbf16>, vector<64x16xbf16>, vector<64x16xf32> -> vector<64x16xf32>
    %106 = vector.extract_strided_slice %63 {offsets = [0, 32], sizes = [64, 16], strides = [1, 1]} : vector<64x64xf32> to vector<64x16xf32>
    %107 = arith.truncf %106 : vector<64x16xf32> to vector<64x16xbf16>
    %108 = vector.extract_strided_slice %64 {offsets = [0, 32], sizes = [64, 16], strides = [1, 1]} : vector<64x64xf32> to vector<64x16xf32>
    %109 = arith.truncf %108 : vector<64x16xf32> to vector<64x16xbf16>
    %110 = vector.extract_strided_slice %65 {offsets = [0, 32], sizes = [64, 16], strides = [1, 1]} : vector<64x64xf32> to vector<64x16xf32>
    %111 = arith.truncf %110 : vector<64x16xf32> to vector<64x16xbf16>
    %cst_36 = arith.constant dense<0.000000e+00> : vector<64x64xf32>
    %112 = tpu.matmul %107, %109, %cst_36 {dimension_numbers = #tpu.dot_dimension_numbers<[1], [1], [0], [0], [0, 0, 1, 0], [], []>} : vector<64x16xbf16>, vector<64x16xbf16>, vector<64x64xf32> -> vector<64x64xf32>
    %cst_37 = arith.constant dense<0xFF800000> : vector<64xf32>
    %113 = vector.multi_reduction <maximumf>, %112, %cst_37 [1] : vector<64x64xf32> to vector<64xf32>
    %114 = vector.shape_cast %113 : vector<64xf32> to vector<64x1xf32>
    %115 = vector.broadcast %114 : vector<64x1xf32> to vector<64x64xf32>
    %116 = arith.subf %112, %115 : vector<64x64xf32>
    %117 = math.exp %116 : vector<64x64xf32>
    %cst_38 = arith.constant dense<0.000000e+00> : vector<64xf32>
    %118 = vector.multi_reduction <add>, %117, %cst_38 [1] : vector<64x64xf32> to vector<64xf32>
    %119 = vector.shape_cast %118 : vector<64xf32> to vector<64x1xf32>
    %120 = tpu.reciprocal %119 {approx = true} : vector<64x1xf32> -> vector<64x1xf32>
    %121 = vector.broadcast %120 : vector<64x1xf32> to vector<64x64xf32>
    %122 = arith.mulf %117, %121 : vector<64x64xf32>
    %123 = arith.truncf %122 : vector<64x64xf32> to vector<64x64xbf16>
    %cst_39 = arith.constant dense<0.000000e+00> : vector<64x16xf32>
    %124 = tpu.matmul %123, %111, %cst_39 {dimension_numbers = #tpu.dot_dimension_numbers<[1], [0], [0], [1], [0, 0, 1, 1], [], []>} : vector<64x64xbf16>, vector<64x16xbf16>, vector<64x16xf32> -> vector<64x16xf32>
    %125 = vector.extract_strided_slice %63 {offsets = [0, 48], sizes = [64, 16], strides = [1, 1]} : vector<64x64xf32> to vector<64x16xf32>
    %126 = arith.truncf %125 : vector<64x16xf32> to vector<64x16xbf16>
    %127 = vector.extract_strided_slice %64 {offsets = [0, 48], sizes = [64, 16], strides = [1, 1]} : vector<64x64xf32> to vector<64x16xf32>
    %128 = arith.truncf %127 : vector<64x16xf32> to vector<64x16xbf16>
    %129 = vector.extract_strided_slice %65 {offsets = [0, 48], sizes = [64, 16], strides = [1, 1]} : vector<64x64xf32> to vector<64x16xf32>
    %130 = arith.truncf %129 : vector<64x16xf32> to vector<64x16xbf16>
    %cst_40 = arith.constant dense<0.000000e+00> : vector<64x64xf32>
    %131 = tpu.matmul %126, %128, %cst_40 {dimension_numbers = #tpu.dot_dimension_numbers<[1], [1], [0], [0], [0, 0, 1, 0], [], []>} : vector<64x16xbf16>, vector<64x16xbf16>, vector<64x64xf32> -> vector<64x64xf32>
    %cst_41 = arith.constant dense<0xFF800000> : vector<64xf32>
    %132 = vector.multi_reduction <maximumf>, %131, %cst_41 [1] : vector<64x64xf32> to vector<64xf32>
    %133 = vector.shape_cast %132 : vector<64xf32> to vector<64x1xf32>
    %134 = vector.broadcast %133 : vector<64x1xf32> to vector<64x64xf32>
    %135 = arith.subf %131, %134 : vector<64x64xf32>
    %136 = math.exp %135 : vector<64x64xf32>
    %cst_42 = arith.constant dense<0.000000e+00> : vector<64xf32>
    %137 = vector.multi_reduction <add>, %136, %cst_42 [1] : vector<64x64xf32> to vector<64xf32>
    %138 = vector.shape_cast %137 : vector<64xf32> to vector<64x1xf32>
    %139 = tpu.reciprocal %138 {approx = true} : vector<64x1xf32> -> vector<64x1xf32>
    %140 = vector.broadcast %139 : vector<64x1xf32> to vector<64x64xf32>
    %141 = arith.mulf %136, %140 : vector<64x64xf32>
    %142 = arith.truncf %141 : vector<64x64xf32> to vector<64x64xbf16>
    %cst_43 = arith.constant dense<0.000000e+00> : vector<64x16xf32>
    %143 = tpu.matmul %142, %130, %cst_43 {dimension_numbers = #tpu.dot_dimension_numbers<[1], [0], [0], [1], [0, 0, 1, 1], [], []>} : vector<64x64xbf16>, vector<64x16xbf16>, vector<64x16xf32> -> vector<64x16xf32>
    %144 = tpu.concatenate %86, %105, %124, %143 in 1 : vector<64x16xf32>, vector<64x16xf32>, vector<64x16xf32>, vector<64x16xf32> -> vector<64x64xf32>
    %145 = arith.truncf %144 : vector<64x64xf32> to vector<64x64xbf16>
    %cst_44 = arith.constant dense<0.000000e+00> : vector<64x64xf32>
    %146 = tpu.matmul %145, %66, %cst_44 {dimension_numbers = #tpu.dot_dimension_numbers<[1], [0], [0], [1], [0, 0, 1, 1], [], []>} : vector<64x64xbf16>, vector<64x64xbf16>, vector<64x64xf32> -> vector<64x64xf32>
    %147 = vector.broadcast %67 : vector<1x64xf32> to vector<64x64xf32>
    %148 = arith.addf %146, %147 : vector<64x64xf32>
    %149 = arith.addf %148, %37 : vector<64x64xf32>
    %150 = vector.extract_strided_slice %4 {offsets = [6, 0], sizes = [1, 64], strides = [1, 1]} : vector<13x64xf32> to vector<1x64xf32>
    %151 = vector.extract_strided_slice %4 {offsets = [7, 0], sizes = [1, 64], strides = [1, 1]} : vector<13x64xf32> to vector<1x64xf32>
    %cst_45 = arith.constant dense<0.000000e+00> : vector<64xf32>
    %152 = vector.multi_reduction <add>, %149, %cst_45 [1] : vector<64x64xf32> to vector<64xf32>
    %153 = vector.shape_cast %152 : vector<64xf32> to vector<64x1xf32>
    %cst_46 = arith.constant 6.400000e+01 : f32
    %154 = vector.broadcast %cst_46 : f32 to vector<64x1xf32>
    %155 = arith.divf %153, %154 : vector<64x1xf32>
    %156 = vector.broadcast %155 : vector<64x1xf32> to vector<64x64xf32>
    %157 = arith.subf %149, %156 : vector<64x64xf32>
    %158 = arith.mulf %157, %157 : vector<64x64xf32>
    %cst_47 = arith.constant dense<0.000000e+00> : vector<64xf32>
    %159 = vector.multi_reduction <add>, %158, %cst_47 [1] : vector<64x64xf32> to vector<64xf32>
    %160 = vector.shape_cast %159 : vector<64xf32> to vector<64x1xf32>
    %cst_48 = arith.constant 6.400000e+01 : f32
    %161 = vector.broadcast %cst_48 : f32 to vector<64x1xf32>
    %162 = arith.divf %160, %161 : vector<64x1xf32>
    %cst_49 = arith.constant 9.99999974E-6 : f32
    %163 = vector.broadcast %cst_49 : f32 to vector<64x1xf32>
    %164 = arith.addf %162, %163 : vector<64x1xf32>
    %165 = math.rsqrt %164 : vector<64x1xf32>
    %166 = vector.broadcast %165 : vector<64x1xf32> to vector<64x64xf32>
    %167 = arith.mulf %157, %166 : vector<64x64xf32>
    %168 = vector.broadcast %150 : vector<1x64xf32> to vector<64x64xf32>
    %169 = arith.mulf %167, %168 : vector<64x64xf32>
    %170 = vector.broadcast %151 : vector<1x64xf32> to vector<64x64xf32>
    %171 = arith.addf %169, %170 : vector<64x64xf32>
    %172 = arith.truncf %171 : vector<64x64xf32> to vector<64x64xbf16>
    %c0_50 = arith.constant 0 : index
    %c0_51 = arith.constant 0 : index
    %173 = vector.load %arg8[%c0_50, %c0_51] : memref<64x64xbf16, #tpu.memory_space<vmem>>, vector<64x64xbf16>
    %cst_52 = arith.constant dense<0.000000e+00> : vector<64x64xf32>
    %174 = tpu.matmul %172, %173, %cst_52 {dimension_numbers = #tpu.dot_dimension_numbers<[1], [0], [0], [1], [0, 0, 1, 1], [], []>} : vector<64x64xbf16>, vector<64x64xbf16>, vector<64x64xf32> -> vector<64x64xf32>
    %175 = arith.truncf %3 : vector<8x64xf32> to vector<8x64xbf16>
    %c0_53 = arith.constant 0 : index
    %c0_54 = arith.constant 0 : index
    %176 = vector.load %arg9[%c0_53, %c0_54] : memref<64x128xbf16, #tpu.memory_space<vmem>>, vector<64x128xbf16>
    %cst_55 = arith.constant dense<0.000000e+00> : vector<8x128xf32>
    %177 = tpu.matmul %175, %176, %cst_55 {dimension_numbers = #tpu.dot_dimension_numbers<[1], [0], [0], [1], [0, 0, 1, 1], [], []>} : vector<8x64xbf16>, vector<64x128xbf16>, vector<8x128xf32> -> vector<8x128xf32>
    %178 = vector.extract_strided_slice %177 {offsets = [0, 0], sizes = [8, 64], strides = [1, 1]} : vector<8x128xf32> to vector<8x64xf32>
    %179 = vector.extract_strided_slice %177 {offsets = [0, 64], sizes = [8, 64], strides = [1, 1]} : vector<8x128xf32> to vector<8x64xf32>
    %c0_56 = arith.constant 0 : index
    %c0_57 = arith.constant 0 : index
    %180 = vector.load %arg10[%c0_56, %c0_57] : memref<64x64xbf16, #tpu.memory_space<vmem>>, vector<64x64xbf16>
    %181 = vector.extract_strided_slice %4 {offsets = [8, 0], sizes = [1, 64], strides = [1, 1]} : vector<13x64xf32> to vector<1x64xf32>
    %182 = vector.extract_strided_slice %174 {offsets = [0, 0], sizes = [64, 16], strides = [1, 1]} : vector<64x64xf32> to vector<64x16xf32>
    %183 = arith.truncf %182 : vector<64x16xf32> to vector<64x16xbf16>
    %184 = vector.extract_strided_slice %178 {offsets = [0, 0], sizes = [8, 16], strides = [1, 1]} : vector<8x64xf32> to vector<8x16xf32>
    %185 = arith.truncf %184 : vector<8x16xf32> to vector<8x16xbf16>
    %186 = vector.extract_strided_slice %179 {offsets = [0, 0], sizes = [8, 16], strides = [1, 1]} : vector<8x64xf32> to vector<8x16xf32>
    %187 = arith.truncf %186 : vector<8x16xf32> to vector<8x16xbf16>
    %cst_58 = arith.constant dense<0.000000e+00> : vector<64x8xf32>
    %188 = tpu.matmul %183, %185, %cst_58 {dimension_numbers = #tpu.dot_dimension_numbers<[1], [1], [0], [0], [0, 0, 1, 0], [], []>} : vector<64x16xbf16>, vector<8x16xbf16>, vector<64x8xf32> -> vector<64x8xf32>
    %cst_59 = arith.constant dense<0xFF800000> : vector<64xf32>
    %189 = vector.multi_reduction <maximumf>, %188, %cst_59 [1] : vector<64x8xf32> to vector<64xf32>
    %190 = vector.shape_cast %189 : vector<64xf32> to vector<64x1xf32>
    %191 = vector.broadcast %190 : vector<64x1xf32> to vector<64x8xf32>
    %192 = arith.subf %188, %191 : vector<64x8xf32>
    %193 = math.exp %192 : vector<64x8xf32>
    %cst_60 = arith.constant dense<0.000000e+00> : vector<64xf32>
    %194 = vector.multi_reduction <add>, %193, %cst_60 [1] : vector<64x8xf32> to vector<64xf32>
    %195 = vector.shape_cast %194 : vector<64xf32> to vector<64x1xf32>
    %196 = tpu.reciprocal %195 {approx = true} : vector<64x1xf32> -> vector<64x1xf32>
    %197 = vector.broadcast %196 : vector<64x1xf32> to vector<64x8xf32>
    %198 = arith.mulf %193, %197 : vector<64x8xf32>
    %199 = arith.truncf %198 : vector<64x8xf32> to vector<64x8xbf16>
    %cst_61 = arith.constant dense<0.000000e+00> : vector<64x16xf32>
    %200 = tpu.matmul %199, %187, %cst_61 {dimension_numbers = #tpu.dot_dimension_numbers<[1], [0], [0], [1], [0, 0, 1, 1], [], []>} : vector<64x8xbf16>, vector<8x16xbf16>, vector<64x16xf32> -> vector<64x16xf32>
    %201 = vector.extract_strided_slice %174 {offsets = [0, 16], sizes = [64, 16], strides = [1, 1]} : vector<64x64xf32> to vector<64x16xf32>
    %202 = arith.truncf %201 : vector<64x16xf32> to vector<64x16xbf16>
    %203 = vector.extract_strided_slice %178 {offsets = [0, 16], sizes = [8, 16], strides = [1, 1]} : vector<8x64xf32> to vector<8x16xf32>
    %204 = arith.truncf %203 : vector<8x16xf32> to vector<8x16xbf16>
    %205 = vector.extract_strided_slice %179 {offsets = [0, 16], sizes = [8, 16], strides = [1, 1]} : vector<8x64xf32> to vector<8x16xf32>
    %206 = arith.truncf %205 : vector<8x16xf32> to vector<8x16xbf16>
    %cst_62 = arith.constant dense<0.000000e+00> : vector<64x8xf32>
    %207 = tpu.matmul %202, %204, %cst_62 {dimension_numbers = #tpu.dot_dimension_numbers<[1], [1], [0], [0], [0, 0, 1, 0], [], []>} : vector<64x16xbf16>, vector<8x16xbf16>, vector<64x8xf32> -> vector<64x8xf32>
    %cst_63 = arith.constant dense<0xFF800000> : vector<64xf32>
    %208 = vector.multi_reduction <maximumf>, %207, %cst_63 [1] : vector<64x8xf32> to vector<64xf32>
    %209 = vector.shape_cast %208 : vector<64xf32> to vector<64x1xf32>
    %210 = vector.broadcast %209 : vector<64x1xf32> to vector<64x8xf32>
    %211 = arith.subf %207, %210 : vector<64x8xf32>
    %212 = math.exp %211 : vector<64x8xf32>
    %cst_64 = arith.constant dense<0.000000e+00> : vector<64xf32>
    %213 = vector.multi_reduction <add>, %212, %cst_64 [1] : vector<64x8xf32> to vector<64xf32>
    %214 = vector.shape_cast %213 : vector<64xf32> to vector<64x1xf32>
    %215 = tpu.reciprocal %214 {approx = true} : vector<64x1xf32> -> vector<64x1xf32>
    %216 = vector.broadcast %215 : vector<64x1xf32> to vector<64x8xf32>
    %217 = arith.mulf %212, %216 : vector<64x8xf32>
    %218 = arith.truncf %217 : vector<64x8xf32> to vector<64x8xbf16>
    %cst_65 = arith.constant dense<0.000000e+00> : vector<64x16xf32>
    %219 = tpu.matmul %218, %206, %cst_65 {dimension_numbers = #tpu.dot_dimension_numbers<[1], [0], [0], [1], [0, 0, 1, 1], [], []>} : vector<64x8xbf16>, vector<8x16xbf16>, vector<64x16xf32> -> vector<64x16xf32>
    %220 = vector.extract_strided_slice %174 {offsets = [0, 32], sizes = [64, 16], strides = [1, 1]} : vector<64x64xf32> to vector<64x16xf32>
    %221 = arith.truncf %220 : vector<64x16xf32> to vector<64x16xbf16>
    %222 = vector.extract_strided_slice %178 {offsets = [0, 32], sizes = [8, 16], strides = [1, 1]} : vector<8x64xf32> to vector<8x16xf32>
    %223 = arith.truncf %222 : vector<8x16xf32> to vector<8x16xbf16>
    %224 = vector.extract_strided_slice %179 {offsets = [0, 32], sizes = [8, 16], strides = [1, 1]} : vector<8x64xf32> to vector<8x16xf32>
    %225 = arith.truncf %224 : vector<8x16xf32> to vector<8x16xbf16>
    %cst_66 = arith.constant dense<0.000000e+00> : vector<64x8xf32>
    %226 = tpu.matmul %221, %223, %cst_66 {dimension_numbers = #tpu.dot_dimension_numbers<[1], [1], [0], [0], [0, 0, 1, 0], [], []>} : vector<64x16xbf16>, vector<8x16xbf16>, vector<64x8xf32> -> vector<64x8xf32>
    %cst_67 = arith.constant dense<0xFF800000> : vector<64xf32>
    %227 = vector.multi_reduction <maximumf>, %226, %cst_67 [1] : vector<64x8xf32> to vector<64xf32>
    %228 = vector.shape_cast %227 : vector<64xf32> to vector<64x1xf32>
    %229 = vector.broadcast %228 : vector<64x1xf32> to vector<64x8xf32>
    %230 = arith.subf %226, %229 : vector<64x8xf32>
    %231 = math.exp %230 : vector<64x8xf32>
    %cst_68 = arith.constant dense<0.000000e+00> : vector<64xf32>
    %232 = vector.multi_reduction <add>, %231, %cst_68 [1] : vector<64x8xf32> to vector<64xf32>
    %233 = vector.shape_cast %232 : vector<64xf32> to vector<64x1xf32>
    %234 = tpu.reciprocal %233 {approx = true} : vector<64x1xf32> -> vector<64x1xf32>
    %235 = vector.broadcast %234 : vector<64x1xf32> to vector<64x8xf32>
    %236 = arith.mulf %231, %235 : vector<64x8xf32>
    %237 = arith.truncf %236 : vector<64x8xf32> to vector<64x8xbf16>
    %cst_69 = arith.constant dense<0.000000e+00> : vector<64x16xf32>
    %238 = tpu.matmul %237, %225, %cst_69 {dimension_numbers = #tpu.dot_dimension_numbers<[1], [0], [0], [1], [0, 0, 1, 1], [], []>} : vector<64x8xbf16>, vector<8x16xbf16>, vector<64x16xf32> -> vector<64x16xf32>
    %239 = vector.extract_strided_slice %174 {offsets = [0, 48], sizes = [64, 16], strides = [1, 1]} : vector<64x64xf32> to vector<64x16xf32>
    %240 = arith.truncf %239 : vector<64x16xf32> to vector<64x16xbf16>
    %241 = vector.extract_strided_slice %178 {offsets = [0, 48], sizes = [8, 16], strides = [1, 1]} : vector<8x64xf32> to vector<8x16xf32>
    %242 = arith.truncf %241 : vector<8x16xf32> to vector<8x16xbf16>
    %243 = vector.extract_strided_slice %179 {offsets = [0, 48], sizes = [8, 16], strides = [1, 1]} : vector<8x64xf32> to vector<8x16xf32>
    %244 = arith.truncf %243 : vector<8x16xf32> to vector<8x16xbf16>
    %cst_70 = arith.constant dense<0.000000e+00> : vector<64x8xf32>
    %245 = tpu.matmul %240, %242, %cst_70 {dimension_numbers = #tpu.dot_dimension_numbers<[1], [1], [0], [0], [0, 0, 1, 0], [], []>} : vector<64x16xbf16>, vector<8x16xbf16>, vector<64x8xf32> -> vector<64x8xf32>
    %cst_71 = arith.constant dense<0xFF800000> : vector<64xf32>
    %246 = vector.multi_reduction <maximumf>, %245, %cst_71 [1] : vector<64x8xf32> to vector<64xf32>
    %247 = vector.shape_cast %246 : vector<64xf32> to vector<64x1xf32>
    %248 = vector.broadcast %247 : vector<64x1xf32> to vector<64x8xf32>
    %249 = arith.subf %245, %248 : vector<64x8xf32>
    %250 = math.exp %249 : vector<64x8xf32>
    %cst_72 = arith.constant dense<0.000000e+00> : vector<64xf32>
    %251 = vector.multi_reduction <add>, %250, %cst_72 [1] : vector<64x8xf32> to vector<64xf32>
    %252 = vector.shape_cast %251 : vector<64xf32> to vector<64x1xf32>
    %253 = tpu.reciprocal %252 {approx = true} : vector<64x1xf32> -> vector<64x1xf32>
    %254 = vector.broadcast %253 : vector<64x1xf32> to vector<64x8xf32>
    %255 = arith.mulf %250, %254 : vector<64x8xf32>
    %256 = arith.truncf %255 : vector<64x8xf32> to vector<64x8xbf16>
    %cst_73 = arith.constant dense<0.000000e+00> : vector<64x16xf32>
    %257 = tpu.matmul %256, %244, %cst_73 {dimension_numbers = #tpu.dot_dimension_numbers<[1], [0], [0], [1], [0, 0, 1, 1], [], []>} : vector<64x8xbf16>, vector<8x16xbf16>, vector<64x16xf32> -> vector<64x16xf32>
    %258 = tpu.concatenate %200, %219, %238, %257 in 1 : vector<64x16xf32>, vector<64x16xf32>, vector<64x16xf32>, vector<64x16xf32> -> vector<64x64xf32>
    %259 = arith.truncf %258 : vector<64x64xf32> to vector<64x64xbf16>
    %cst_74 = arith.constant dense<0.000000e+00> : vector<64x64xf32>
    %260 = tpu.matmul %259, %180, %cst_74 {dimension_numbers = #tpu.dot_dimension_numbers<[1], [0], [0], [1], [0, 0, 1, 1], [], []>} : vector<64x64xbf16>, vector<64x64xbf16>, vector<64x64xf32> -> vector<64x64xf32>
    %261 = vector.broadcast %181 : vector<1x64xf32> to vector<64x64xf32>
    %262 = arith.addf %260, %261 : vector<64x64xf32>
    %263 = arith.addf %262, %149 : vector<64x64xf32>
    %264 = vector.extract_strided_slice %4 {offsets = [9, 0], sizes = [1, 64], strides = [1, 1]} : vector<13x64xf32> to vector<1x64xf32>
    %265 = vector.extract_strided_slice %4 {offsets = [10, 0], sizes = [1, 64], strides = [1, 1]} : vector<13x64xf32> to vector<1x64xf32>
    %cst_75 = arith.constant dense<0.000000e+00> : vector<64xf32>
    %266 = vector.multi_reduction <add>, %263, %cst_75 [1] : vector<64x64xf32> to vector<64xf32>
    %267 = vector.shape_cast %266 : vector<64xf32> to vector<64x1xf32>
    %cst_76 = arith.constant 6.400000e+01 : f32
    %268 = vector.broadcast %cst_76 : f32 to vector<64x1xf32>
    %269 = arith.divf %267, %268 : vector<64x1xf32>
    %270 = vector.broadcast %269 : vector<64x1xf32> to vector<64x64xf32>
    %271 = arith.subf %263, %270 : vector<64x64xf32>
    %272 = arith.mulf %271, %271 : vector<64x64xf32>
    %cst_77 = arith.constant dense<0.000000e+00> : vector<64xf32>
    %273 = vector.multi_reduction <add>, %272, %cst_77 [1] : vector<64x64xf32> to vector<64xf32>
    %274 = vector.shape_cast %273 : vector<64xf32> to vector<64x1xf32>
    %cst_78 = arith.constant 6.400000e+01 : f32
    %275 = vector.broadcast %cst_78 : f32 to vector<64x1xf32>
    %276 = arith.divf %274, %275 : vector<64x1xf32>
    %cst_79 = arith.constant 9.99999974E-6 : f32
    %277 = vector.broadcast %cst_79 : f32 to vector<64x1xf32>
    %278 = arith.addf %276, %277 : vector<64x1xf32>
    %279 = math.rsqrt %278 : vector<64x1xf32>
    %280 = vector.broadcast %279 : vector<64x1xf32> to vector<64x64xf32>
    %281 = arith.mulf %271, %280 : vector<64x64xf32>
    %282 = vector.broadcast %264 : vector<1x64xf32> to vector<64x64xf32>
    %283 = arith.mulf %281, %282 : vector<64x64xf32>
    %284 = vector.broadcast %265 : vector<1x64xf32> to vector<64x64xf32>
    %285 = arith.addf %283, %284 : vector<64x64xf32>
    %286 = arith.truncf %285 : vector<64x64xf32> to vector<64x64xbf16>
    %c0_80 = arith.constant 0 : index
    %c0_81 = arith.constant 0 : index
    %287 = vector.load %arg11[%c0_80, %c0_81] : memref<64x512xbf16, #tpu.memory_space<vmem>>, vector<64x512xbf16>
    %cst_82 = arith.constant dense<0.000000e+00> : vector<64x512xf32>
    %288 = tpu.matmul %286, %287, %cst_82 {dimension_numbers = #tpu.dot_dimension_numbers<[1], [0], [0], [1], [0, 0, 1, 1], [], []>} : vector<64x64xbf16>, vector<64x512xbf16>, vector<64x512xf32> -> vector<64x512xf32>
    %c0_83 = arith.constant 0 : index
    %c0_84 = arith.constant 0 : index
    %289 = vector.load %arg12[%c0_83, %c0_84] : memref<1x512xf32, #tpu.memory_space<vmem>>, vector<1x512xf32>
    %290 = vector.broadcast %289 : vector<1x512xf32> to vector<64x512xf32>
    %291 = arith.addf %288, %290 : vector<64x512xf32>
    %292 = vector.extract_strided_slice %291 {offsets = [0, 0], sizes = [64, 256], strides = [1, 1]} : vector<64x512xf32> to vector<64x256xf32>
    %293 = vector.extract_strided_slice %291 {offsets = [0, 256], sizes = [64, 256], strides = [1, 1]} : vector<64x512xf32> to vector<64x256xf32>
    %cst_85 = arith.constant 5.000000e-01 : f32
    %294 = vector.broadcast %cst_85 : f32 to vector<64x256xf32>
    %295 = arith.mulf %294, %293 : vector<64x256xf32>
    %cst_86 = arith.constant 4.471500e-02 : f32
    %296 = vector.broadcast %cst_86 : f32 to vector<64x256xf32>
    %297 = arith.mulf %296, %293 : vector<64x256xf32>
    %298 = arith.mulf %297, %293 : vector<64x256xf32>
    %299 = arith.mulf %298, %293 : vector<64x256xf32>
    %300 = arith.addf %293, %299 : vector<64x256xf32>
    %cst_87 = arith.constant 0.797884583 : f32
    %301 = vector.broadcast %cst_87 : f32 to vector<64x256xf32>
    %302 = arith.mulf %301, %300 : vector<64x256xf32>
    %303 = math.tanh %302 : vector<64x256xf32>
    %cst_88 = arith.constant 1.000000e+00 : f32
    %304 = vector.broadcast %cst_88 : f32 to vector<64x256xf32>
    %305 = arith.addf %304, %303 : vector<64x256xf32>
    %306 = arith.mulf %295, %305 : vector<64x256xf32>
    %307 = arith.mulf %292, %306 : vector<64x256xf32>
    %308 = arith.truncf %307 : vector<64x256xf32> to vector<64x256xbf16>
    %c0_89 = arith.constant 0 : index
    %c0_90 = arith.constant 0 : index
    %309 = vector.load %arg13[%c0_89, %c0_90] : memref<256x64xbf16, #tpu.memory_space<vmem>>, vector<256x64xbf16>
    %cst_91 = arith.constant dense<0.000000e+00> : vector<64x64xf32>
    %310 = tpu.matmul %308, %309, %cst_91 {dimension_numbers = #tpu.dot_dimension_numbers<[1], [0], [0], [1], [0, 0, 1, 1], [], []>} : vector<64x256xbf16>, vector<256x64xbf16>, vector<64x64xf32> -> vector<64x64xf32>
    %311 = vector.extract_strided_slice %4 {offsets = [11, 0], sizes = [1, 64], strides = [1, 1]} : vector<13x64xf32> to vector<1x64xf32>
    %312 = vector.broadcast %311 : vector<1x64xf32> to vector<64x64xf32>
    %313 = arith.addf %310, %312 : vector<64x64xf32>
    %314 = arith.addf %313, %263 : vector<64x64xf32>
    %315 = arith.truncf %314 : vector<64x64xf32> to vector<64x64xbf16>
    %c0_92 = arith.constant 0 : index
    %c0_93 = arith.constant 0 : index
    %316 = vector.load %arg14[%c0_92, %c0_93] : memref<64x64xbf16, #tpu.memory_space<vmem>>, vector<64x64xbf16>
    %cst_94 = arith.constant dense<0.000000e+00> : vector<64x64xf32>
    %317 = tpu.matmul %315, %316, %cst_94 {dimension_numbers = #tpu.dot_dimension_numbers<[1], [0], [0], [1], [0, 0, 1, 1], [], []>} : vector<64x64xbf16>, vector<64x64xbf16>, vector<64x64xf32> -> vector<64x64xf32>
    %318 = vector.extract_strided_slice %4 {offsets = [12, 0], sizes = [1, 64], strides = [1, 1]} : vector<13x64xf32> to vector<1x64xf32>
    %319 = vector.broadcast %318 : vector<1x64xf32> to vector<64x64xf32>
    %320 = arith.addf %317, %319 : vector<64x64xf32>
    %321 = arith.addf %320, %1 : vector<64x64xf32>
    %c0_95 = arith.constant 0 : index
    %c0_96 = arith.constant 0 : index
    %c0_97 = arith.constant 0 : index
    %322 = vector.load %arg15[%c0_95, %c0_96, %c0_97] : memref<1x64x64xf32, #tpu.memory_space<vmem>>, vector<1x64x64xf32>
    %323 = vector.shape_cast %322 : vector<1x64x64xf32> to vector<64x64xf32>
    %324 = vector.shape_cast %321 : vector<64x64xf32> to vector<1x64x64xf32>
    tpu.vector_store %arg15[%c0_95, %c0_96, %c0_97], %324 {strides = array<i32>} : memref<1x64x64xf32, #tpu.memory_space<vmem>>, vector<1x64x64xf32>,
    return
  }
  func.func @transform_0(%arg0: i32) -> (i32, i32, i32) {
    %c0_i32 = arith.constant 0 : i32
    %c0_i32_0 = arith.constant 0 : i32
    %c0_i32_1 = arith.constant 0 : i32
    return %arg0, %c0_i32, %c0_i32_0 : i32, i32, i32
  }
  func.func @transform_1(%arg0: i32) -> (i32, i32, i32) {
    %c0_i32 = arith.constant 0 : i32
    %c0_i32_0 = arith.constant 0 : i32
    %c0_i32_1 = arith.constant 0 : i32
    return %arg0, %c0_i32, %c0_i32_0 : i32, i32, i32
  }
  func.func @transform_2(%arg0: i32) -> (i32, i32) {
    %c0_i32 = arith.constant 0 : i32
    %c0_i32_0 = arith.constant 0 : i32
    %c0_i32_1 = arith.constant 0 : i32
    return %c0_i32, %c0_i32_0 : i32, i32
  }
  func.func @transform_3(%arg0: i32) -> (i32, i32) {
    %c0_i32 = arith.constant 0 : i32
    %c0_i32_0 = arith.constant 0 : i32
    %c0_i32_1 = arith.constant 0 : i32
    return %c0_i32, %c0_i32_0 : i32, i32
  }
  func.func @transform_4(%arg0: i32) -> (i32, i32) {
    %c0_i32 = arith.constant 0 : i32
    %c0_i32_0 = arith.constant 0 : i32
    %c0_i32_1 = arith.constant 0 : i32
    return %c0_i32, %c0_i32_0 : i32, i32
  }
  func.func @transform_5(%arg0: i32) -> (i32, i32) {
    %c0_i32 = arith.constant 0 : i32
    %c0_i32_0 = arith.constant 0 : i32
    %c0_i32_1 = arith.constant 0 : i32
    return %c0_i32, %c0_i32_0 : i32, i32
  }
  func.func @transform_6(%arg0: i32) -> (i32, i32) {
    %c0_i32 = arith.constant 0 : i32
    %c0_i32_0 = arith.constant 0 : i32
    %c0_i32_1 = arith.constant 0 : i32
    return %c0_i32, %c0_i32_0 : i32, i32
  }
  func.func @transform_7(%arg0: i32) -> (i32, i32) {
    %c0_i32 = arith.constant 0 : i32
    %c0_i32_0 = arith.constant 0 : i32
    %c0_i32_1 = arith.constant 0 : i32
    return %c0_i32, %c0_i32_0 : i32, i32
  }
  func.func @transform_8(%arg0: i32) -> (i32, i32) {
    %c0_i32 = arith.constant 0 : i32
    %c0_i32_0 = arith.constant 0 : i32
    %c0_i32_1 = arith.constant 0 : i32
    return %c0_i32, %c0_i32_0 : i32, i32
  }
  func.func @transform_9(%arg0: i32) -> (i32, i32) {
    %c0_i32 = arith.constant 0 : i32
    %c0_i32_0 = arith.constant 0 : i32
    %c0_i32_1 = arith.constant 0 : i32
    return %c0_i32, %c0_i32_0 : i32, i32
  }
  func.func @transform_10(%arg0: i32) -> (i32, i32) {
    %c0_i32 = arith.constant 0 : i32
    %c0_i32_0 = arith.constant 0 : i32
    %c0_i32_1 = arith.constant 0 : i32
    return %c0_i32, %c0_i32_0 : i32, i32
  }
  func.func @transform_11(%arg0: i32) -> (i32, i32) {
    %c0_i32 = arith.constant 0 : i32
    %c0_i32_0 = arith.constant 0 : i32
    %c0_i32_1 = arith.constant 0 : i32
    return %c0_i32, %c0_i32_0 : i32, i32
  }
  func.func @transform_12(%arg0: i32) -> (i32, i32) {
    %c0_i32 = arith.constant 0 : i32
    %c0_i32_0 = arith.constant 0 : i32
    %c0_i32_1 = arith.constant 0 : i32
    return %c0_i32, %c0_i32_0 : i32, i32
  }
  func.func @transform_13(%arg0: i32) -> (i32, i32) {
    %c0_i32 = arith.constant 0 : i32
    %c0_i32_0 = arith.constant 0 : i32
    %c0_i32_1 = arith.constant 0 : i32
    return %c0_i32, %c0_i32_0 : i32, i32
  }
  func.func @transform_14(%arg0: i32) -> (i32, i32, i32) {
    %c0_i32 = arith.constant 0 : i32
    %c0_i32_0 = arith.constant 0 : i32
    %c0_i32_1 = arith.constant 0 : i32
    return %arg0, %c0_i32, %c0_i32_0 : i32, i32, i32
  }
}

module attributes {stable_mosaic.version = 11 : i64} {
  func.func @kernel(%arg0: i32, %arg1: memref<1x64x64xf32, #tpu.memory_space<vmem>>, %arg2: memref<1x8x64xf32, #tpu.memory_space<vmem>>, %arg3: memref<13x64xf32, #tpu.memory_space<vmem>>, %arg4: memref<64x64xbf16, #tpu.memory_space<vmem>>, %arg5: memref<64x64xbf16, #tpu.memory_space<vmem>>, %arg6: memref<64x192xbf16, #tpu.memory_space<vmem>>, %arg7: memref<64x64xbf16, #tpu.memory_space<vmem>>, %arg8: memref<64x64xbf16, #tpu.memory_space<vmem>>, %arg9: memref<64x128xbf16, #tpu.memory_space<vmem>>, %arg10: memref<64x64xbf16, #tpu.memory_space<vmem>>, %arg11: memref<64x512xbf16, #tpu.memory_space<vmem>>, %arg12: memref<1x512xf32, #tpu.memory_space<vmem>>, %arg13: memref<256x64xbf16, #tpu.memory_space<vmem>>, %arg14: memref<64x64xbf16, #tpu.memory_space<vmem>>, %arg15: memref<1x64x64xf32, #tpu.memory_space<vmem>>) attributes {dimension_semantics = [#tpu.dimension_semantics<parallel>], iteration_bounds = array<i64: 2>, scalar_prefetch = 0 : i64, scratch_operands = 0 : i64, tpu.core_type = #tpu.core_type<tc>, window_params = [{transform_indices = @transform_0, window_bounds = array<i64: 1, 64, 64>}, {transform_indices = @transform_1, window_bounds = array<i64: 1, 8, 64>}, {pipeline_mode = #tpu.pipeline_mode<synchronous>, transform_indices = @transform_2, window_bounds = array<i64: 13, 64>}, {pipeline_mode = #tpu.pipeline_mode<synchronous>, transform_indices = @transform_3, window_bounds = array<i64: 64, 64>}, {pipeline_mode = #tpu.pipeline_mode<synchronous>, transform_indices = @transform_4, window_bounds = array<i64: 64, 64>}, {pipeline_mode = #tpu.pipeline_mode<synchronous>, transform_indices = @transform_5, window_bounds = array<i64: 64, 192>}, {pipeline_mode = #tpu.pipeline_mode<synchronous>, transform_indices = @transform_6, window_bounds = array<i64: 64, 64>}, {pipeline_mode = #tpu.pipeline_mode<synchronous>, transform_indices = @transform_7, window_bounds = array<i64: 64, 64>}, {pipeline_mode = #tpu.pipeline_mode<synchronous>, transform_indices = @transform_8, window_bounds = array<i64: 64, 128>}, {pipeline_mode = #tpu.pipeline_mode<synchronous>, transform_indices = @transform_9, window_bounds = array<i64: 64, 64>}, {pipeline_mode = #tpu.pipeline_mode<synchronous>, transform_indices = @transform_10, window_bounds = array<i64: 64, 512>}, {pipeline_mode = #tpu.pipeline_mode<synchronous>, transform_indices = @transform_11, window_bounds = array<i64: 1, 512>}, {pipeline_mode = #tpu.pipeline_mode<synchronous>, transform_indices = @transform_12, window_bounds = array<i64: 256, 64>}, {pipeline_mode = #tpu.pipeline_mode<synchronous>, transform_indices = @transform_13, window_bounds = array<i64: 64, 64>}, {transform_indices = @transform_14, window_bounds = array<i64: 1, 64, 64>}]} {
    %c0 = arith.constant 0 : index
    %c0_0 = arith.constant 0 : index
    %c0_1 = arith.constant 0 : index
    %0 = vector.load %arg1[%c0, %c0_0, %c0_1] : memref<1x64x64xf32, #tpu.memory_space<vmem>>, vector<1x64x64xf32>
    %1 = vector.shape_cast %0 : vector<1x64x64xf32> to vector<64x64xf32>
    %c0_2 = arith.constant 0 : index
    %c0_3 = arith.constant 0 : index
    %c0_4 = arith.constant 0 : index
    %2 = vector.load %arg2[%c0_2, %c0_3, %c0_4] : memref<1x8x64xf32, #tpu.memory_space<vmem>>, vector<1x8x64xf32>
    %3 = vector.shape_cast %2 : vector<1x8x64xf32> to vector<8x64xf32>
    %c0_5 = arith.constant 0 : index
    %c0_6 = arith.constant 0 : index
    %4 = vector.load %arg3[%c0_5, %c0_6] : memref<13x64xf32, #tpu.memory_space<vmem>>, vector<13x64xf32>
    %c0_7 = arith.constant 0 : index
    %c0_8 = arith.constant 0 : index
    %5 = vector.load %arg4[%c0_7, %c0_8] : memref<64x64xbf16, #tpu.memory_space<vmem>>, vector<64x64xbf16>
    %cst = arith.constant dense<0.000000e+00> : vector<64xf32>
    %6 = vector.multi_reduction <add>, %1, %cst [0] : vector<64x64xf32> to vector<64xf32>
    %7 = vector.shape_cast %6 : vector<64xf32> to vector<1x64xf32>
    %cst_9 = arith.constant 6.400000e+01 : f32
    %8 = vector.broadcast %cst_9 : f32 to vector<1x64xf32>
    %9 = arith.divf %7, %8 : vector<1x64xf32>
    %10 = arith.truncf %9 : vector<1x64xf32> to vector<1x64xbf16>
    %cst_10 = arith.constant dense<0.000000e+00> : vector<1x64xf32>
    %11 = tpu.matmul %10, %5, %cst_10 {dimension_numbers = #tpu.dot_dimension_numbers<[1], [0], [0], [1], [0, 0, 1, 1], [], []>} : vector<1x64xbf16>, vector<64x64xbf16>, vector<1x64xf32> -> vector<1x64xf32>
    %12 = vector.broadcast %11 : vector<1x64xf32> to vector<64x64xf32>
    %13 = arith.subf %1, %12 : vector<64x64xf32>
    %14 = arith.mulf %13, %13 : vector<64x64xf32>
    %cst_11 = arith.constant dense<0.000000e+00> : vector<64xf32>
    %15 = vector.multi_reduction <add>, %14, %cst_11 [0] : vector<64x64xf32> to vector<64xf32>
    %16 = vector.shape_cast %15 : vector<64xf32> to vector<1x64xf32>
    %cst_12 = arith.constant 6.400000e+01 : f32
    %17 = vector.broadcast %cst_12 : f32 to vector<1x64xf32>
    %18 = arith.divf %16, %17 : vector<1x64xf32>
    %19 = arith.truncf %18 : vector<1x64xf32> to vector<1x64xbf16>
    %cst_13 = arith.constant dense<0.000000e+00> : vector<1x64xf32>
    %20 = tpu.matmul %19, %5, %cst_13 {dimension_numbers = #tpu.dot_dimension_numbers<[1], [0], [0], [1], [0, 0, 1, 1], [], []>} : vector<1x64xbf16>, vector<64x64xbf16>, vector<1x64xf32> -> vector<1x64xf32>
    %cst_14 = arith.constant 9.99999974E-6 : f32
    %21 = vector.broadcast %cst_14 : f32 to vector<1x64xf32>
    %22 = arith.addf %20, %21 : vector<1x64xf32>
    %23 = math.rsqrt %22 : vector<1x64xf32>
    %24 = vector.broadcast %23 : vector<1x64xf32> to vector<64x64xf32>
    %25 = arith.mulf %13, %24 : vector<64x64xf32>
    %26 = vector.extract_strided_slice %4 {offsets = [0, 0], sizes = [1, 64], strides = [1, 1]} : vector<13x64xf32> to vector<1x64xf32>
    %27 = vector.broadcast %26 : vector<1x64xf32> to vector<64x64xf32>
    %28 = arith.mulf %25, %27 : vector<64x64xf32>
    %29 = vector.extract_strided_slice %4 {offsets = [1, 0], sizes = [1, 64], strides = [1, 1]} : vector<13x64xf32> to vector<1x64xf32>
    %30 = vector.broadcast %29 : vector<1x64xf32> to vector<64x64xf32>
    %31 = arith.addf %28, %30 : vector<64x64xf32>
    %32 = arith.truncf %31 : vector<64x64xf32> to vector<64x64xbf16>
    %c0_15 = arith.constant 0 : index
    %c0_16 = arith.constant 0 : index
    %33 = vector.load %arg5[%c0_15, %c0_16] : memref<64x64xbf16, #tpu.memory_space<vmem>>, vector<64x64xbf16>
    %cst_17 = arith.constant dense<0.000000e+00> : vector<64x64xf32>
    %34 = tpu.matmul %32, %33, %cst_17 {dimension_numbers = #tpu.dot_dimension_numbers<[1], [0], [0], [1], [0, 0, 1, 1], [], []>} : vector<64x64xbf16>, vector<64x64xbf16>, vector<64x64xf32> -> vector<64x64xf32>
    %35 = vector.extract_strided_slice %4 {offsets = [2, 0], sizes = [1, 64], strides = [1, 1]} : vector<13x64xf32> to vector<1x64xf32>
    %36 = vector.broadcast %35 : vector<1x64xf32> to vector<64x64xf32>
    %37 = arith.addf %34, %36 : vector<64x64xf32>
    %38 = vector.extract_strided_slice %4 {offsets = [3, 0], sizes = [1, 64], strides = [1, 1]} : vector<13x64xf32> to vector<1x64xf32>
    %39 = vector.extract_strided_slice %4 {offsets = [4, 0], sizes = [1, 64], strides = [1, 1]} : vector<13x64xf32> to vector<1x64xf32>
    %cst_18 = arith.constant dense<0.000000e+00> : vector<64xf32>
    %40 = vector.multi_reduction <add>, %37, %cst_18 [1] : vector<64x64xf32> to vector<64xf32>
    %41 = vector.shape_cast %40 : vector<64xf32> to vector<64x1xf32>
    %cst_19 = arith.constant 6.400000e+01 : f32
    %42 = vector.broadcast %cst_19 : f32 to vector<64x1xf32>
    %43 = arith.divf %41, %42 : vector<64x1xf32>
    %44 = vector.broadcast %43 : vector<64x1xf32> to vector<64x64xf32>
    %45 = arith.subf %37, %44 : vector<64x64xf32>
    %46 = arith.mulf %45, %45 : vector<64x64xf32>
    %cst_20 = arith.constant dense<0.000000e+00> : vector<64xf32>
    %47 = vector.multi_reduction <add>, %46, %cst_20 [1] : vector<64x64xf32> to vector<64xf32>
    %48 = vector.shape_cast %47 : vector<64xf32> to vector<64x1xf32>
    %cst_21 = arith.constant 6.400000e+01 : f32
    %49 = vector.broadcast %cst_21 : f32 to vector<64x1xf32>
    %50 = arith.divf %48, %49 : vector<64x1xf32>
    %cst_22 = arith.constant 9.99999974E-6 : f32
    %51 = vector.broadcast %cst_22 : f32 to vector<64x1xf32>
    %52 = arith.addf %50, %51 : vector<64x1xf32>
    %53 = math.rsqrt %52 : vector<64x1xf32>
    %54 = vector.broadcast %53 : vector<64x1xf32> to vector<64x64xf32>
    %55 = arith.mulf %45, %54 : vector<64x64xf32>
    %56 = vector.broadcast %38 : vector<1x64xf32> to vector<64x64xf32>
    %57 = arith.mulf %55, %56 : vector<64x64xf32>
    %58 = vector.broadcast %39 : vector<1x64xf32> to vector<64x64xf32>
    %59 = arith.addf %57, %58 : vector<64x64xf32>
    %60 = arith.truncf %59 : vector<64x64xf32> to vector<64x64xbf16>
    %c0_23 = arith.constant 0 : index
    %c0_24 = arith.constant 0 : index
    %61 = vector.load %arg6[%c0_23, %c0_24] : memref<64x192xbf16, #tpu.memory_space<vmem>>, vector<64x192xbf16>
    %cst_25 = arith.constant dense<0.000000e+00> : vector<64x192xf32>
    %62 = tpu.matmul %60, %61, %cst_25 {dimension_numbers = #tpu.dot_dimension_numbers<[1], [0], [0], [1], [0, 0, 1, 1], [], []>} : vector<64x64xbf16>, vector<64x192xbf16>, vector<64x192xf32> -> vector<64x192xf32>
    %63 = vector.extract_strided_slice %62 {offsets = [0, 0], sizes = [64, 64], strides = [1, 1]} : vector<64x192xf32> to vector<64x64xf32>
    %64 = vector.extract_strided_slice %62 {offsets = [0, 64], sizes = [64, 64], strides = [1, 1]} : vector<64x192xf32> to vector<64x64xf32>
    %65 = vector.extract_strided_slice %62 {offsets = [0, 128], sizes = [64, 64], strides = [1, 1]} : vector<64x192xf32> to vector<64x64xf32>
    %c0_26 = arith.constant 0 : index
    %c0_27 = arith.constant 0 : index
    %66 = vector.load %arg7[%c0_26, %c0_27] : memref<64x64xbf16, #tpu.memory_space<vmem>>, vector<64x64xbf16>
    %67 = vector.extract_strided_slice %4 {offsets = [5, 0], sizes = [1, 64], strides = [1, 1]} : vector<13x64xf32> to vector<1x64xf32>
    %68 = vector.extract_strided_slice %63 {offsets = [0, 0], sizes = [64, 16], strides = [1, 1]} : vector<64x64xf32> to vector<64x16xf32>
    %69 = arith.truncf %68 : vector<64x16xf32> to vector<64x16xbf16>
    %70 = vector.extract_strided_slice %64 {offsets = [0, 0], sizes = [64, 16], strides = [1, 1]} : vector<64x64xf32> to vector<64x16xf32>
    %71 = arith.truncf %70 : vector<64x16xf32> to vector<64x16xbf16>
    %72 = vector.extract_strided_slice %65 {offsets = [0, 0], sizes = [64, 16], strides = [1, 1]} : vector<64x64xf32> to vector<64x16xf32>
    %73 = arith.truncf %72 : vector<64x16xf32> to vector<64x16xbf16>
    %cst_28 = arith.constant dense<0.000000e+00> : vector<64x64xf32>
    %74 = tpu.matmul %69, %71, %cst_28 {dimension_numbers = #tpu.dot_dimension_numbers<[1], [1], [0], [0], [0, 0, 1, 0], [], []>} : vector<64x16xbf16>, vector<64x16xbf16>, vector<64x64xf32> -> vector<64x64xf32>
    %cst_29 = arith.constant dense<0xFF800000> : vector<64xf32>
    %75 = vector.multi_reduction <maximumf>, %74, %cst_29 [1] : vector<64x64xf32> to vector<64xf32>
    %76 = vector.shape_cast %75 : vector<64xf32> to vector<64x1xf32>
    %77 = vector.broadcast %76 : vector<64x1xf32> to vector<64x64xf32>
    %78 = arith.subf %74, %77 : vector<64x64xf32>
    %79 = math.exp %78 : vector<64x64xf32>
    %cst_30 = arith.constant dense<0.000000e+00> : vector<64xf32>
    %80 = vector.multi_reduction <add>, %79, %cst_30 [1] : vector<64x64xf32> to vector<64xf32>
    %81 = vector.shape_cast %80 : vector<64xf32> to vector<64x1xf32>
    %82 = tpu.reciprocal %81 {approx = true} : vector<64x1xf32> -> vector<64x1xf32>
    %83 = vector.broadcast %82 : vector<64x1xf32> to vector<64x64xf32>
    %84 = arith.mulf %79, %83 : vector<64x64xf32>
    %85 = arith.truncf %84 : vector<64x64xf32> to vector<64x64xbf16>
    %cst_31 = arith.constant dense<0.000000e+00> : vector<64x16xf32>
    %86 = tpu.matmul %85, %73, %cst_31 {dimension_numbers = #tpu.dot_dimension_numbers<[1], [0], [0], [1], [0, 0, 1, 1], [], []>} : vector<64x64xbf16>, vector<64x16xbf16>, vector<64x16xf32> -> vector<64x16xf32>
    %87 = vector.extract_strided_slice %63 {offsets = [0, 16], sizes = [64, 16], strides = [1, 1]} : vector<64x64xf32> to vector<64x16xf32>
    %88 = arith.truncf %87 : vector<64x16xf32> to vector<64x16xbf16>
    %89 = vector.extract_strided_slice %64 {offsets = [0, 16], sizes = [64, 16], strides = [1, 1]} : vector<64x64xf32> to vector<64x16xf32>
    %90 = arith.truncf %89 : vector<64x16xf32> to vector<64x16xbf16>
    %91 = vector.extract_strided_slice %65 {offsets = [0, 16], sizes = [64, 16], strides = [1, 1]} : vector<64x64xf32> to vector<64x16xf32>
    %92 = arith.truncf %91 : vector<64x16xf32> to vector<64x16xbf16>
    %cst_32 = arith.constant dense<0.000000e+00> : vector<64x64xf32>
    %93 = tpu.matmul %88, %90, %cst_32 {dimension_numbers = #tpu.dot_dimension_numbers<[1], [1], [0], [0], [0, 0, 1, 0], [], []>} : vector<64x16xbf16>, vector<64x16xbf16>, vector<64x64xf32> -> vector<64x64xf32>
    %cst_33 = arith.constant dense<0xFF800000> : vector<64xf32>
    %94 = vector.multi_reduction <maximumf>, %93, %cst_33 [1] : vector<64x64xf32> to vector<64xf32>
    %95 = vector.shape_cast %94 : vector<64xf32> to vector<64x1xf32>
    %96 = vector.broadcast %95 : vector<64x1xf32> to vector<64x64xf32>
    %97 = arith.subf %93, %96 : vector<64x64xf32>
    %98 = math.exp %97 : vector<64x64xf32>
    %cst_34 = arith.constant dense<0.000000e+00> : vector<64xf32>
    %99 = vector.multi_reduction <add>, %98, %cst_34 [1] : vector<64x64xf32> to vector<64xf32>
    %100 = vector.shape_cast %99 : vector<64xf32> to vector<64x1xf32>
    %101 = tpu.reciprocal %100 {approx = true} : vector<64x1xf32> -> vector<64x1xf32>
    %102 = vector.broadcast %101 : vector<64x1xf32> to vector<64x64xf32>
    %103 = arith.mulf %98, %102 : vector<64x64xf32>
    %104 = arith.truncf %103 : vector<64x64xf32> to vector<64x64xbf16>
    %cst_35 = arith.constant dense<0.000000e+00> : vector<64x16xf32>
    %105 = tpu.matmul %104, %92, %cst_35 {dimension_numbers = #tpu.dot_dimension_numbers<[1], [0], [0], [1], [0, 0, 1, 1], [], []>} : vector<64x64xbf16>, vector<64x16xbf16>, vector<64x16xf32> -> vector<64x16xf32>
    %106 = vector.extract_strided_slice %63 {offsets = [0, 32], sizes = [64, 16], strides = [1, 1]} : vector<64x64xf32> to vector<64x16xf32>
    %107 = arith.truncf %106 : vector<64x16xf32> to vector<64x16xbf16>
    %108 = vector.extract_strided_slice %64 {offsets = [0, 32], sizes = [64, 16], strides = [1, 1]} : vector<64x64xf32> to vector<64x16xf32>
    %109 = arith.truncf %108 : vector<64x16xf32> to vector<64x16xbf16>
    %110 = vector.extract_strided_slice %65 {offsets = [0, 32], sizes = [64, 16], strides = [1, 1]} : vector<64x64xf32> to vector<64x16xf32>
    %111 = arith.truncf %110 : vector<64x16xf32> to vector<64x16xbf16>
    %cst_36 = arith.constant dense<0.000000e+00> : vector<64x64xf32>
    %112 = tpu.matmul %107, %109, %cst_36 {dimension_numbers = #tpu.dot_dimension_numbers<[1], [1], [0], [0], [0, 0, 1, 0], [], []>} : vector<64x16xbf16>, vector<64x16xbf16>, vector<64x64xf32> -> vector<64x64xf32>
    %cst_37 = arith.constant dense<0xFF800000> : vector<64xf32>
    %113 = vector.multi_reduction <maximumf>, %112, %cst_37 [1] : vector<64x64xf32> to vector<64xf32>
    %114 = vector.shape_cast %113 : vector<64xf32> to vector<64x1xf32>
    %115 = vector.broadcast %114 : vector<64x1xf32> to vector<64x64xf32>
    %116 = arith.subf %112, %115 : vector<64x64xf32>
    %117 = math.exp %116 : vector<64x64xf32>
    %cst_38 = arith.constant dense<0.000000e+00> : vector<64xf32>
    %118 = vector.multi_reduction <add>, %117, %cst_38 [1] : vector<64x64xf32> to vector<64xf32>
    %119 = vector.shape_cast %118 : vector<64xf32> to vector<64x1xf32>
    %120 = tpu.reciprocal %119 {approx = true} : vector<64x1xf32> -> vector<64x1xf32>
    %121 = vector.broadcast %120 : vector<64x1xf32> to vector<64x64xf32>
    %122 = arith.mulf %117, %121 : vector<64x64xf32>
    %123 = arith.truncf %122 : vector<64x64xf32> to vector<64x64xbf16>
    %cst_39 = arith.constant dense<0.000000e+00> : vector<64x16xf32>
    %124 = tpu.matmul %123, %111, %cst_39 {dimension_numbers = #tpu.dot_dimension_numbers<[1], [0], [0], [1], [0, 0, 1, 1], [], []>} : vector<64x64xbf16>, vector<64x16xbf16>, vector<64x16xf32> -> vector<64x16xf32>
    %125 = vector.extract_strided_slice %63 {offsets = [0, 48], sizes = [64, 16], strides = [1, 1]} : vector<64x64xf32> to vector<64x16xf32>
    %126 = arith.truncf %125 : vector<64x16xf32> to vector<64x16xbf16>
    %127 = vector.extract_strided_slice %64 {offsets = [0, 48], sizes = [64, 16], strides = [1, 1]} : vector<64x64xf32> to vector<64x16xf32>
    %128 = arith.truncf %127 : vector<64x16xf32> to vector<64x16xbf16>
    %129 = vector.extract_strided_slice %65 {offsets = [0, 48], sizes = [64, 16], strides = [1, 1]} : vector<64x64xf32> to vector<64x16xf32>
    %130 = arith.truncf %129 : vector<64x16xf32> to vector<64x16xbf16>
    %cst_40 = arith.constant dense<0.000000e+00> : vector<64x64xf32>
    %131 = tpu.matmul %126, %128, %cst_40 {dimension_numbers = #tpu.dot_dimension_numbers<[1], [1], [0], [0], [0, 0, 1, 0], [], []>} : vector<64x16xbf16>, vector<64x16xbf16>, vector<64x64xf32> -> vector<64x64xf32>
    %cst_41 = arith.constant dense<0xFF800000> : vector<64xf32>
    %132 = vector.multi_reduction <maximumf>, %131, %cst_41 [1] : vector<64x64xf32> to vector<64xf32>
    %133 = vector.shape_cast %132 : vector<64xf32> to vector<64x1xf32>
    %134 = vector.broadcast %133 : vector<64x1xf32> to vector<64x64xf32>
    %135 = arith.subf %131, %134 : vector<64x64xf32>
    %136 = math.exp %135 : vector<64x64xf32>
    %cst_42 = arith.constant dense<0.000000e+00> : vector<64xf32>
    %137 = vector.multi_reduction <add>, %136, %cst_42 [1] : vector<64x64xf32> to vector<64xf32>
    %138 = vector.shape_cast %137 : vector<64xf32> to vector<64x1xf32>
    %139 = tpu.reciprocal %138 {approx = true} : vector<64x1xf32> -> vector<64x1xf32>
    %140 = vector.broadcast %139 : vector<64x1xf32> to vector<64x64xf32>
    %141 = arith.mulf %136, %140 : vector<64x64xf32>
    %142 = arith.truncf %141 : vector<64x64xf32> to vector<64x64xbf16>
    %cst_43 = arith.constant dense<0.000000e+00> : vector<64x16xf32>
    %143 = tpu.matmul %142, %130, %cst_43 {dimension_numbers = #tpu.dot_dimension_numbers<[1], [0], [0], [1], [0, 0, 1, 1], [], []>} : vector<64x64xbf16>, vector<64x16xbf16>, vector<64x16xf32> -> vector<64x16xf32>
    %144 = tpu.concatenate %86, %105, %124, %143 in 1 : vector<64x16xf32>, vector<64x16xf32>, vector<64x16xf32>, vector<64x16xf32> -> vector<64x64xf32>
    %145 = arith.truncf %144 : vector<64x64xf32> to vector<64x64xbf16>
    %cst_44 = arith.constant dense<0.000000e+00> : vector<64x64xf32>
    %146 = tpu.matmul %145, %66, %cst_44 {dimension_numbers = #tpu.dot_dimension_numbers<[1], [0], [0], [1], [0, 0, 1, 1], [], []>} : vector<64x64xbf16>, vector<64x64xbf16>, vector<64x64xf32> -> vector<64x64xf32>
    %147 = vector.broadcast %67 : vector<1x64xf32> to vector<64x64xf32>
    %148 = arith.addf %146, %147 : vector<64x64xf32>
    %149 = arith.addf %148, %37 : vector<64x64xf32>
    %150 = vector.extract_strided_slice %4 {offsets = [6, 0], sizes = [1, 64], strides = [1, 1]} : vector<13x64xf32> to vector<1x64xf32>
    %151 = vector.extract_strided_slice %4 {offsets = [7, 0], sizes = [1, 64], strides = [1, 1]} : vector<13x64xf32> to vector<1x64xf32>
    %cst_45 = arith.constant dense<0.000000e+00> : vector<64xf32>
    %152 = vector.multi_reduction <add>, %149, %cst_45 [1] : vector<64x64xf32> to vector<64xf32>
    %153 = vector.shape_cast %152 : vector<64xf32> to vector<64x1xf32>
    %cst_46 = arith.constant 6.400000e+01 : f32
    %154 = vector.broadcast %cst_46 : f32 to vector<64x1xf32>
    %155 = arith.divf %153, %154 : vector<64x1xf32>
    %156 = vector.broadcast %155 : vector<64x1xf32> to vector<64x64xf32>
    %157 = arith.subf %149, %156 : vector<64x64xf32>
    %158 = arith.mulf %157, %157 : vector<64x64xf32>
    %cst_47 = arith.constant dense<0.000000e+00> : vector<64xf32>
    %159 = vector.multi_reduction <add>, %158, %cst_47 [1] : vector<64x64xf32> to vector<64xf32>
    %160 = vector.shape_cast %159 : vector<64xf32> to vector<64x1xf32>
    %cst_48 = arith.constant 6.400000e+01 : f32
    %161 = vector.broadcast %cst_48 : f32 to vector<64x1xf32>
    %162 = arith.divf %160, %161 : vector<64x1xf32>
    %cst_49 = arith.constant 9.99999974E-6 : f32
    %163 = vector.broadcast %cst_49 : f32 to vector<64x1xf32>
    %164 = arith.addf %162, %163 : vector<64x1xf32>
    %165 = math.rsqrt %164 : vector<64x1xf32>
    %166 = vector.broadcast %165 : vector<64x1xf32> to vector<64x64xf32>
    %167 = arith.mulf %157, %166 : vector<64x64xf32>
    %168 = vector.broadcast %150 : vector<1x64xf32> to vector<64x64xf32>
    %169 = arith.mulf %167, %168 : vector<64x64xf32>
    %170 = vector.broadcast %151 : vector<1x64xf32> to vector<64x64xf32>
    %171 = arith.addf %169, %170 : vector<64x64xf32>
    %172 = arith.truncf %171 : vector<64x64xf32> to vector<64x64xbf16>
    %c0_50 = arith.constant 0 : index
    %c0_51 = arith.constant 0 : index
    %173 = vector.load %arg8[%c0_50, %c0_51] : memref<64x64xbf16, #tpu.memory_space<vmem>>, vector<64x64xbf16>
    %cst_52 = arith.constant dense<0.000000e+00> : vector<64x64xf32>
    %174 = tpu.matmul %172, %173, %cst_52 {dimension_numbers = #tpu.dot_dimension_numbers<[1], [0], [0], [1], [0, 0, 1, 1], [], []>} : vector<64x64xbf16>, vector<64x64xbf16>, vector<64x64xf32> -> vector<64x64xf32>
    %175 = arith.truncf %3 : vector<8x64xf32> to vector<8x64xbf16>
    %c0_53 = arith.constant 0 : index
    %c0_54 = arith.constant 0 : index
    %176 = vector.load %arg9[%c0_53, %c0_54] : memref<64x128xbf16, #tpu.memory_space<vmem>>, vector<64x128xbf16>
    %cst_55 = arith.constant dense<0.000000e+00> : vector<8x128xf32>
    %177 = tpu.matmul %175, %176, %cst_55 {dimension_numbers = #tpu.dot_dimension_numbers<[1], [0], [0], [1], [0, 0, 1, 1], [], []>} : vector<8x64xbf16>, vector<64x128xbf16>, vector<8x128xf32> -> vector<8x128xf32>
    %178 = vector.extract_strided_slice %177 {offsets = [0, 0], sizes = [8, 64], strides = [1, 1]} : vector<8x128xf32> to vector<8x64xf32>
    %179 = vector.extract_strided_slice %177 {offsets = [0, 64], sizes = [8, 64], strides = [1, 1]} : vector<8x128xf32> to vector<8x64xf32>
    %c0_56 = arith.constant 0 : index
    %c0_57 = arith.constant 0 : index
    %180 = vector.load %arg10[%c0_56, %c0_57] : memref<64x64xbf16, #tpu.memory_space<vmem>>, vector<64x64xbf16>
    %181 = vector.extract_strided_slice %4 {offsets = [8, 0], sizes = [1, 64], strides = [1, 1]} : vector<13x64xf32> to vector<1x64xf32>
    %182 = vector.extract_strided_slice %174 {offsets = [0, 0], sizes = [64, 16], strides = [1, 1]} : vector<64x64xf32> to vector<64x16xf32>
    %183 = arith.truncf %182 : vector<64x16xf32> to vector<64x16xbf16>
    %184 = vector.extract_strided_slice %178 {offsets = [0, 0], sizes = [8, 16], strides = [1, 1]} : vector<8x64xf32> to vector<8x16xf32>
    %185 = arith.truncf %184 : vector<8x16xf32> to vector<8x16xbf16>
    %186 = vector.extract_strided_slice %179 {offsets = [0, 0], sizes = [8, 16], strides = [1, 1]} : vector<8x64xf32> to vector<8x16xf32>
    %187 = arith.truncf %186 : vector<8x16xf32> to vector<8x16xbf16>
    %cst_58 = arith.constant dense<0.000000e+00> : vector<64x8xf32>
    %188 = tpu.matmul %183, %185, %cst_58 {dimension_numbers = #tpu.dot_dimension_numbers<[1], [1], [0], [0], [0, 0, 1, 0], [], []>} : vector<64x16xbf16>, vector<8x16xbf16>, vector<64x8xf32> -> vector<64x8xf32>
    %cst_59 = arith.constant dense<0xFF800000> : vector<64xf32>
    %189 = vector.multi_reduction <maximumf>, %188, %cst_59 [1] : vector<64x8xf32> to vector<64xf32>
    %190 = vector.shape_cast %189 : vector<64xf32> to vector<64x1xf32>
    %191 = vector.broadcast %190 : vector<64x1xf32> to vector<64x8xf32>
    %192 = arith.subf %188, %191 : vector<64x8xf32>
    %193 = math.exp %192 : vector<64x8xf32>
    %cst_60 = arith.constant dense<0.000000e+00> : vector<64xf32>
    %194 = vector.multi_reduction <add>, %193, %cst_60 [1] : vector<64x8xf32> to vector<64xf32>
    %195 = vector.shape_cast %194 : vector<64xf32> to vector<64x1xf32>
    %196 = tpu.reciprocal %195 {approx = true} : vector<64x1xf32> -> vector<64x1xf32>
    %197 = vector.broadcast %196 : vector<64x1xf32> to vector<64x8xf32>
    %198 = arith.mulf %193, %197 : vector<64x8xf32>
    %199 = arith.truncf %198 : vector<64x8xf32> to vector<64x8xbf16>
    %cst_61 = arith.constant dense<0.000000e+00> : vector<64x16xf32>
    %200 = tpu.matmul %199, %187, %cst_61 {dimension_numbers = #tpu.dot_dimension_numbers<[1], [0], [0], [1], [0, 0, 1, 1], [], []>} : vector<64x8xbf16>, vector<8x16xbf16>, vector<64x16xf32> -> vector<64x16xf32>
    %201 = vector.extract_strided_slice %174 {offsets = [0, 16], sizes = [64, 16], strides = [1, 1]} : vector<64x64xf32> to vector<64x16xf32>
    %202 = arith.truncf %201 : vector<64x16xf32> to vector<64x16xbf16>
    %203 = vector.extract_strided_slice %178 {offsets = [0, 16], sizes = [8, 16], strides = [1, 1]} : vector<8x64xf32> to vector<8x16xf32>
    %204 = arith.truncf %203 : vector<8x16xf32> to vector<8x16xbf16>
    %205 = vector.extract_strided_slice %179 {offsets = [0, 16], sizes = [8, 16], strides = [1, 1]} : vector<8x64xf32> to vector<8x16xf32>
    %206 = arith.truncf %205 : vector<8x16xf32> to vector<8x16xbf16>
    %cst_62 = arith.constant dense<0.000000e+00> : vector<64x8xf32>
    %207 = tpu.matmul %202, %204, %cst_62 {dimension_numbers = #tpu.dot_dimension_numbers<[1], [1], [0], [0], [0, 0, 1, 0], [], []>} : vector<64x16xbf16>, vector<8x16xbf16>, vector<64x8xf32> -> vector<64x8xf32>
    %cst_63 = arith.constant dense<0xFF800000> : vector<64xf32>
    %208 = vector.multi_reduction <maximumf>, %207, %cst_63 [1] : vector<64x8xf32> to vector<64xf32>
    %209 = vector.shape_cast %208 : vector<64xf32> to vector<64x1xf32>
    %210 = vector.broadcast %209 : vector<64x1xf32> to vector<64x8xf32>
    %211 = arith.subf %207, %210 : vector<64x8xf32>
    %212 = math.exp %211 : vector<64x8xf32>
    %cst_64 = arith.constant dense<0.000000e+00> : vector<64xf32>
    %213 = vector.multi_reduction <add>, %212, %cst_64 [1] : vector<64x8xf32> to vector<64xf32>
    %214 = vector.shape_cast %213 : vector<64xf32> to vector<64x1xf32>
    %215 = tpu.reciprocal %214 {approx = true} : vector<64x1xf32> -> vector<64x1xf32>
    %216 = vector.broadcast %215 : vector<64x1xf32> to vector<64x8xf32>
    %217 = arith.mulf %212, %216 : vector<64x8xf32>
    %218 = arith.truncf %217 : vector<64x8xf32> to vector<64x8xbf16>
    %cst_65 = arith.constant dense<0.000000e+00> : vector<64x16xf32>
    %219 = tpu.matmul %218, %206, %cst_65 {dimension_numbers = #tpu.dot_dimension_numbers<[1], [0], [0], [1], [0, 0, 1, 1], [], []>} : vector<64x8xbf16>, vector<8x16xbf16>, vector<64x16xf32> -> vector<64x16xf32>
    %220 = vector.extract_strided_slice %174 {offsets = [0, 32], sizes = [64, 16], strides = [1, 1]} : vector<64x64xf32> to vector<64x16xf32>
    %221 = arith.truncf %220 : vector<64x16xf32> to vector<64x16xbf16>
    %222 = vector.extract_strided_slice %178 {offsets = [0, 32], sizes = [8, 16], strides = [1, 1]} : vector<8x64xf32> to vector<8x16xf32>
    %223 = arith.truncf %222 : vector<8x16xf32> to vector<8x16xbf16>
    %224 = vector.extract_strided_slice %179 {offsets = [0, 32], sizes = [8, 16], strides = [1, 1]} : vector<8x64xf32> to vector<8x16xf32>
    %225 = arith.truncf %224 : vector<8x16xf32> to vector<8x16xbf16>
    %cst_66 = arith.constant dense<0.000000e+00> : vector<64x8xf32>
    %226 = tpu.matmul %221, %223, %cst_66 {dimension_numbers = #tpu.dot_dimension_numbers<[1], [1], [0], [0], [0, 0, 1, 0], [], []>} : vector<64x16xbf16>, vector<8x16xbf16>, vector<64x8xf32> -> vector<64x8xf32>
    %cst_67 = arith.constant dense<0xFF800000> : vector<64xf32>
    %227 = vector.multi_reduction <maximumf>, %226, %cst_67 [1] : vector<64x8xf32> to vector<64xf32>
    %228 = vector.shape_cast %227 : vector<64xf32> to vector<64x1xf32>
    %229 = vector.broadcast %228 : vector<64x1xf32> to vector<64x8xf32>
    %230 = arith.subf %226, %229 : vector<64x8xf32>
    %231 = math.exp %230 : vector<64x8xf32>
    %cst_68 = arith.constant dense<0.000000e+00> : vector<64xf32>
    %232 = vector.multi_reduction <add>, %231, %cst_68 [1] : vector<64x8xf32> to vector<64xf32>
    %233 = vector.shape_cast %232 : vector<64xf32> to vector<64x1xf32>
    %234 = tpu.reciprocal %233 {approx = true} : vector<64x1xf32> -> vector<64x1xf32>
    %235 = vector.broadcast %234 : vector<64x1xf32> to vector<64x8xf32>
    %236 = arith.mulf %231, %235 : vector<64x8xf32>
    %237 = arith.truncf %236 : vector<64x8xf32> to vector<64x8xbf16>
    %cst_69 = arith.constant dense<0.000000e+00> : vector<64x16xf32>
    %238 = tpu.matmul %237, %225, %cst_69 {dimension_numbers = #tpu.dot_dimension_numbers<[1], [0], [0], [1], [0, 0, 1, 1], [], []>} : vector<64x8xbf16>, vector<8x16xbf16>, vector<64x16xf32> -> vector<64x16xf32>
    %239 = vector.extract_strided_slice %174 {offsets = [0, 48], sizes = [64, 16], strides = [1, 1]} : vector<64x64xf32> to vector<64x16xf32>
    %240 = arith.truncf %239 : vector<64x16xf32> to vector<64x16xbf16>
    %241 = vector.extract_strided_slice %178 {offsets = [0, 48], sizes = [8, 16], strides = [1, 1]} : vector<8x64xf32> to vector<8x16xf32>
    %242 = arith.truncf %241 : vector<8x16xf32> to vector<8x16xbf16>
    %243 = vector.extract_strided_slice %179 {offsets = [0, 48], sizes = [8, 16], strides = [1, 1]} : vector<8x64xf32> to vector<8x16xf32>
    %244 = arith.truncf %243 : vector<8x16xf32> to vector<8x16xbf16>
    %cst_70 = arith.constant dense<0.000000e+00> : vector<64x8xf32>
    %245 = tpu.matmul %240, %242, %cst_70 {dimension_numbers = #tpu.dot_dimension_numbers<[1], [1], [0], [0], [0, 0, 1, 0], [], []>} : vector<64x16xbf16>, vector<8x16xbf16>, vector<64x8xf32> -> vector<64x8xf32>
    %cst_71 = arith.constant dense<0xFF800000> : vector<64xf32>
    %246 = vector.multi_reduction <maximumf>, %245, %cst_71 [1] : vector<64x8xf32> to vector<64xf32>
    %247 = vector.shape_cast %246 : vector<64xf32> to vector<64x1xf32>
    %248 = vector.broadcast %247 : vector<64x1xf32> to vector<64x8xf32>
    %249 = arith.subf %245, %248 : vector<64x8xf32>
    %250 = math.exp %249 : vector<64x8xf32>
    %cst_72 = arith.constant dense<0.000000e+00> : vector<64xf32>
    %251 = vector.multi_reduction <add>, %250, %cst_72 [1] : vector<64x8xf32> to vector<64xf32>
    %252 = vector.shape_cast %251 : vector<64xf32> to vector<64x1xf32>
    %253 = tpu.reciprocal %252 {approx = true} : vector<64x1xf32> -> vector<64x1xf32>
    %254 = vector.broadcast %253 : vector<64x1xf32> to vector<64x8xf32>
    %255 = arith.mulf %250, %254 : vector<64x8xf32>
    %256 = arith.truncf %255 : vector<64x8xf32> to vector<64x8xbf16>
    %cst_73 = arith.constant dense<0.000000e+00> : vector<64x16xf32>
    %257 = tpu.matmul %256, %244, %cst_73 {dimension_numbers = #tpu.dot_dimension_numbers<[1], [0], [0], [1], [0, 0, 1, 1], [], []>} : vector<64x8xbf16>, vector<8x16xbf16>, vector<64x16xf32> -> vector<64x16xf32>
    %258 = tpu.concatenate %200, %219, %238, %257 in 1 : vector<64x16xf32>, vector<64x16xf32>, vector<64x16xf32>, vector<64x16xf32> -> vector<64x64xf32>
    %259 = arith.truncf %258 : vector<64x64xf32> to vector<64x64xbf16>
    %cst_74 = arith.constant dense<0.000000e+00> : vector<64x64xf32>
    %260 = tpu.matmul %259, %180, %cst_74 {dimension_numbers = #tpu.dot_dimension_numbers<[1], [0], [0], [1], [0, 0, 1, 1], [], []>} : vector<64x64xbf16>, vector<64x64xbf16>, vector<64x64xf32> -> vector<64x64xf32>
    %261 = vector.broadcast %181 : vector<1x64xf32> to vector<64x64xf32>
    %262 = arith.addf %260, %261 : vector<64x64xf32>
    %263 = arith.addf %262, %149 : vector<64x64xf32>
    %264 = vector.extract_strided_slice %4 {offsets = [9, 0], sizes = [1, 64], strides = [1, 1]} : vector<13x64xf32> to vector<1x64xf32>
    %265 = vector.extract_strided_slice %4 {offsets = [10, 0], sizes = [1, 64], strides = [1, 1]} : vector<13x64xf32> to vector<1x64xf32>
    %cst_75 = arith.constant dense<0.000000e+00> : vector<64xf32>
    %266 = vector.multi_reduction <add>, %263, %cst_75 [1] : vector<64x64xf32> to vector<64xf32>
    %267 = vector.shape_cast %266 : vector<64xf32> to vector<64x1xf32>
    %cst_76 = arith.constant 6.400000e+01 : f32
    %268 = vector.broadcast %cst_76 : f32 to vector<64x1xf32>
    %269 = arith.divf %267, %268 : vector<64x1xf32>
    %270 = vector.broadcast %269 : vector<64x1xf32> to vector<64x64xf32>
    %271 = arith.subf %263, %270 : vector<64x64xf32>
    %272 = arith.mulf %271, %271 : vector<64x64xf32>
    %cst_77 = arith.constant dense<0.000000e+00> : vector<64xf32>
    %273 = vector.multi_reduction <add>, %272, %cst_77 [1] : vector<64x64xf32> to vector<64xf32>
    %274 = vector.shape_cast %273 : vector<64xf32> to vector<64x1xf32>
    %cst_78 = arith.constant 6.400000e+01 : f32
    %275 = vector.broadcast %cst_78 : f32 to vector<64x1xf32>
    %276 = arith.divf %274, %275 : vector<64x1xf32>
    %cst_79 = arith.constant 9.99999974E-6 : f32
    %277 = vector.broadcast %cst_79 : f32 to vector<64x1xf32>
    %278 = arith.addf %276, %277 : vector<64x1xf32>
    %279 = math.rsqrt %278 : vector<64x1xf32>
    %280 = vector.broadcast %279 : vector<64x1xf32> to vector<64x64xf32>
    %281 = arith.mulf %271, %280 : vector<64x64xf32>
    %282 = vector.broadcast %264 : vector<1x64xf32> to vector<64x64xf32>
    %283 = arith.mulf %281, %282 : vector<64x64xf32>
    %284 = vector.broadcast %265 : vector<1x64xf32> to vector<64x64xf32>
    %285 = arith.addf %283, %284 : vector<64x64xf32>
    %286 = arith.truncf %285 : vector<64x64xf32> to vector<64x64xbf16>
    %c0_80 = arith.constant 0 : index
    %c0_81 = arith.constant 0 : index
    %287 = vector.load %arg11[%c0_80, %c0_81] : memref<64x512xbf16, #tpu.memory_space<vmem>>, vector<64x512xbf16>
    %cst_82 = arith.constant dense<0.000000e+00> : vector<64x512xf32>
    %288 = tpu.matmul %286, %287, %cst_82 {dimension_numbers = #tpu.dot_dimension_numbers<[1], [0], [0], [1], [0, 0, 1, 1], [], []>} : vector<64x64xbf16>, vector<64x512xbf16>, vector<64x512xf32> -> vector<64x512xf32>
    %c0_83 = arith.constant 0 : index
    %c0_84 = arith.constant 0 : index
    %289 = vector.load %arg12[%c0_83, %c0_84] : memref<1x512xf32, #tpu.memory_space<vmem>>, vector<1x512xf32>
    %290 = vector.broadcast %289 : vector<1x512xf32> to vector<64x512xf32>
    %291 = arith.addf %288, %290 : vector<64x512xf32>
    %292 = vector.extract_strided_slice %291 {offsets = [0, 0], sizes = [64, 256], strides = [1, 1]} : vector<64x512xf32> to vector<64x256xf32>
    %293 = vector.extract_strided_slice %291 {offsets = [0, 256], sizes = [64, 256], strides = [1, 1]} : vector<64x512xf32> to vector<64x256xf32>
    %cst_85 = arith.constant 5.000000e-01 : f32
    %294 = vector.broadcast %cst_85 : f32 to vector<64x256xf32>
    %295 = arith.mulf %294, %293 : vector<64x256xf32>
    %cst_86 = arith.constant 4.471500e-02 : f32
    %296 = vector.broadcast %cst_86 : f32 to vector<64x256xf32>
    %297 = arith.mulf %296, %293 : vector<64x256xf32>
    %298 = arith.mulf %297, %293 : vector<64x256xf32>
    %299 = arith.mulf %298, %293 : vector<64x256xf32>
    %300 = arith.addf %293, %299 : vector<64x256xf32>
    %cst_87 = arith.constant 0.797884583 : f32
    %301 = vector.broadcast %cst_87 : f32 to vector<64x256xf32>
    %302 = arith.mulf %301, %300 : vector<64x256xf32>
    %303 = math.tanh %302 : vector<64x256xf32>
    %cst_88 = arith.constant 1.000000e+00 : f32
    %304 = vector.broadcast %cst_88 : f32 to vector<64x256xf32>
    %305 = arith.addf %304, %303 : vector<64x256xf32>
    %306 = arith.mulf %295, %305 : vector<64x256xf32>
    %307 = arith.mulf %292, %306 : vector<64x256xf32>
    %308 = arith.truncf %307 : vector<64x256xf32> to vector<64x256xbf16>
    %c0_89 = arith.constant 0 : index
    %c0_90 = arith.constant 0 : index
    %309 = vector.load %arg13[%c0_89, %c0_90] : memref<256x64xbf16, #tpu.memory_space<vmem>>, vector<256x64xbf16>
    %cst_91 = arith.constant dense<0.000000e+00> : vector<64x64xf32>
    %310 = tpu.matmul %308, %309, %cst_91 {dimension_numbers = #tpu.dot_dimension_numbers<[1], [0], [0], [1], [0, 0, 1, 1], [], []>} : vector<64x256xbf16>, vector<256x64xbf16>, vector<64x64xf32> -> vector<64x64xf32>
    %311 = vector.extract_strided_slice %4 {offsets = [11, 0], sizes = [1, 64], strides = [1, 1]} : vector<13x64xf32> to vector<1x64xf32>
    %312 = vector.broadcast %311 : vector<1x64xf32> to vector<64x64xf32>
    %313 = arith.addf %310, %312 : vector<64x64xf32>
    %314 = arith.addf %313, %263 : vector<64x64xf32>
    %315 = arith.truncf %314 : vector<64x64xf32> to vector<64x64xbf16>
    %c0_92 = arith.constant 0 : index
    %c0_93 = arith.constant 0 : index
    %316 = vector.load %arg14[%c0_92, %c0_93] : memref<64x64xbf16, #tpu.memory_space<vmem>>, vector<64x64xbf16>
    %cst_94 = arith.constant dense<0.000000e+00> : vector<64x64xf32>
    %317 = tpu.matmul %315, %316, %cst_94 {dimension_numbers = #tpu.dot_dimension_numbers<[1], [0], [0], [1], [0, 0, 1, 1], [], []>} : vector<64x64xbf16>, vector<64x64xbf16>, vector<64x64xf32> -> vector<64x64xf32>
    %318 = vector.extract_strided_slice %4 {offsets = [12, 0], sizes = [1, 64], strides = [1, 1]} : vector<13x64xf32> to vector<1x64xf32>
    %319 = vector.broadcast %318 : vector<1x64xf32> to vector<64x64xf32>
    %320 = arith.addf %317, %319 : vector<64x64xf32>
    %321 = arith.addf %320, %1 : vector<64x64xf32>
    %c0_95 = arith.constant 0 : index
    %c0_96 = arith.constant 0 : index
    %c0_97 = arith.constant 0 : index
    %322 = vector.load %arg15[%c0_95, %c0_96, %c0_97] : memref<1x64x64xf32, #tpu.memory_space<vmem>>, vector<1x64x64xf32>
    %323 = vector.shape_cast %322 : vector<1x64x64xf32> to vector<64x64xf32>
    %324 = vector.shape_cast %321 : vector<64x64xf32> to vector<1x64x64xf32>
    tpu.vector_store %arg15[%c0_95, %c0_96, %c0_97], %324 {strides = array<i32>} : memref<1x64x64xf32, #tpu.memory_space<vmem>>, vector<1x64x64xf32>,
    return
  }
  func.func @transform_0(%arg0: i32) -> (i32, i32, i32) {
    %c0_i32 = arith.constant 0 : i32
    %c0_i32_0 = arith.constant 0 : i32
    %c0_i32_1 = arith.constant 0 : i32
    return %arg0, %c0_i32, %c0_i32_0 : i32, i32, i32
  }
  func.func @transform_1(%arg0: i32) -> (i32, i32, i32) {
    %c0_i32 = arith.constant 0 : i32
    %c0_i32_0 = arith.constant 0 : i32
    %c0_i32_1 = arith.constant 0 : i32
    return %arg0, %c0_i32, %c0_i32_0 : i32, i32, i32
  }
  func.func @transform_2(%arg0: i32) -> (i32, i32) {
    %c0_i32 = arith.constant 0 : i32
    %c0_i32_0 = arith.constant 0 : i32
    %c0_i32_1 = arith.constant 0 : i32
    return %c0_i32, %c0_i32_0 : i32, i32
  }
  func.func @transform_3(%arg0: i32) -> (i32, i32) {
    %c0_i32 = arith.constant 0 : i32
    %c0_i32_0 = arith.constant 0 : i32
    %c0_i32_1 = arith.constant 0 : i32
    return %c0_i32, %c0_i32_0 : i32, i32
  }
  func.func @transform_4(%arg0: i32) -> (i32, i32) {
    %c0_i32 = arith.constant 0 : i32
    %c0_i32_0 = arith.constant 0 : i32
    %c0_i32_1 = arith.constant 0 : i32
    return %c0_i32, %c0_i32_0 : i32, i32
  }
  func.func @transform_5(%arg0: i32) -> (i32, i32) {
    %c0_i32 = arith.constant 0 : i32
    %c0_i32_0 = arith.constant 0 : i32
    %c0_i32_1 = arith.constant 0 : i32
    return %c0_i32, %c0_i32_0 : i32, i32
  }
  func.func @transform_6(%arg0: i32) -> (i32, i32) {
    %c0_i32 = arith.constant 0 : i32
    %c0_i32_0 = arith.constant 0 : i32
    %c0_i32_1 = arith.constant 0 : i32
    return %c0_i32, %c0_i32_0 : i32, i32
  }
  func.func @transform_7(%arg0: i32) -> (i32, i32) {
    %c0_i32 = arith.constant 0 : i32
    %c0_i32_0 = arith.constant 0 : i32
    %c0_i32_1 = arith.constant 0 : i32
    return %c0_i32, %c0_i32_0 : i32, i32
  }
  func.func @transform_8(%arg0: i32) -> (i32, i32) {
    %c0_i32 = arith.constant 0 : i32
    %c0_i32_0 = arith.constant 0 : i32
    %c0_i32_1 = arith.constant 0 : i32
    return %c0_i32, %c0_i32_0 : i32, i32
  }
  func.func @transform_9(%arg0: i32) -> (i32, i32) {
    %c0_i32 = arith.constant 0 : i32
    %c0_i32_0 = arith.constant 0 : i32
    %c0_i32_1 = arith.constant 0 : i32
    return %c0_i32, %c0_i32_0 : i32, i32
  }
  func.func @transform_10(%arg0: i32) -> (i32, i32) {
    %c0_i32 = arith.constant 0 : i32
    %c0_i32_0 = arith.constant 0 : i32
    %c0_i32_1 = arith.constant 0 : i32
    return %c0_i32, %c0_i32_0 : i32, i32
  }
  func.func @transform_11(%arg0: i32) -> (i32, i32) {
    %c0_i32 = arith.constant 0 : i32
    %c0_i32_0 = arith.constant 0 : i32
    %c0_i32_1 = arith.constant 0 : i32
    return %c0_i32, %c0_i32_0 : i32, i32
  }
  func.func @transform_12(%arg0: i32) -> (i32, i32) {
    %c0_i32 = arith.constant 0 : i32
    %c0_i32_0 = arith.constant 0 : i32
    %c0_i32_1 = arith.constant 0 : i32
    return %c0_i32, %c0_i32_0 : i32, i32
  }
  func.func @transform_13(%arg0: i32) -> (i32, i32) {
    %c0_i32 = arith.constant 0 : i32
    %c0_i32_0 = arith.constant 0 : i32
    %c0_i32_1 = arith.constant 0 : i32
    return %c0_i32, %c0_i32_0 : i32, i32
  }
  func.func @transform_14(%arg0: i32) -> (i32, i32, i32) {
    %c0_i32 = arith.constant 0 : i32
    %c0_i32_0 = arith.constant 0 : i32
    %c0_i32_1 = arith.constant 0 : i32
    return %arg0, %c0_i32, %c0_i32_0 : i32, i32, i32
  }
}

</mosaic_0001>

<llo_original>
// kernel: tpu_custom_call.1
$region0: #{tpu_custom_call.1}
  #allocation0 [shape = 'u32[]', space=smem, size = 0x4, offset = 0x4, fixed_abs, tag = 'smem constant byte address 0x4 - core index']
  #allocation1 [shape = 'u32[72,128]{1,0:T(1,128)}', space=vmem, size = 0x9000, scoped, tag = 'internal scratch']
  %s0 = inlined_call_operand.vmem [shape: f32[2,64,64], index: 0, kind: input, shape index: {}]
  %s1 = inlined_call_operand.hbm [shape: f32[2,8,64], index: 1, kind: input, shape index: {}]
  %s2 = inlined_call_operand.hbm [shape: f32[13,64], index: 2, kind: input, shape index: {}]
  %s3 = inlined_call_operand.hbm [shape: bf16[64,64], index: 3, kind: input, shape index: {}]
  %s4 = inlined_call_operand.hbm [shape: bf16[64,64], index: 4, kind: input, shape index: {}]
  %s5 = inlined_call_operand.vmem [shape: bf16[64,192], index: 5, kind: input, shape index: {}]
  %s6 = inlined_call_operand.hbm [shape: bf16[64,64], index: 6, kind: input, shape index: {}]
  %s7 = inlined_call_operand.hbm [shape: bf16[64,64], index: 7, kind: input, shape index: {}]
  %s8 = inlined_call_operand.hbm [shape: bf16[64,128], index: 8, kind: input, shape index: {}]
  %s9 = inlined_call_operand.hbm [shape: bf16[64,64], index: 9, kind: input, shape index: {}]
  %s10 = inlined_call_operand.hbm [shape: bf16[64,512], index: 10, kind: input, shape index: {}]
  %s11 = inlined_call_operand.vmem [shape: f32[1,512], index: 11, kind: input, shape index: {}]
  %s12 = inlined_call_operand.vmem [shape: bf16[256,64], index: 12, kind: input, shape index: {}]
  %s13 = inlined_call_operand.hbm [shape: bf16[64,64], index: 13, kind: input, shape index: {}]
  %s14 = inlined_call_operand.hbm [shape: f32[2,64,64], index: 14, kind: output, shape index: {}]
  %s15 = sld [smem:[#allocation0]]
  $region129: #{tpu_custom_call.1} parent=0
    _
  %s17 = ssub.s32 1, %s15
  %s18 = scalar_select 0, %s17, %s15
  $region1: #{tpu_custom_call.1} parent=0
    #allocation2 [shape = 'u8[8192]{0}', space=vmem, size = 0x2000, scoped, tag = 'input window, operand 1']
    #allocation3 [shape = 's32[2]{0}', space=sflag, size = 0x8, scoped, tag = 'scoped memory for tpu_custom_call.1']
    #allocation4 [shape = 's32[2]{0}', space=sflag, size = 0x8, scoped, tag = 'scoped memory for tpu_custom_call.1']
    #allocation5 [shape = 'u8[8192]{0}', space=vmem, size = 0x2000, scoped, tag = 'input window, operand 2, single buffered']
    #allocation6 [shape = 's32[1]{0}', space=sflag, size = 0x4, scoped, tag = 'scoped memory for tpu_custom_call.1']
    #allocation7 [shape = 'u8[16384]{0}', space=vmem, size = 0x4000, scoped, tag = 'input window, operand 3, single buffered']
    #allocation8 [shape = 'u8[16384]{0}', space=vmem, size = 0x4000, scoped, tag = 'input window, operand 4, single buffered']
    #allocation9 [shape = 's32[1]{0}', space=sflag, size = 0x4, scoped, tag = 'scoped memory for tpu_custom_call.1']
    #allocation10 [shape = 'u8[16384]{0}', space=vmem, size = 0x4000, scoped, tag = 'input window, operand 6, single buffered']
    #allocation11 [shape = 'u8[16384]{0}', space=vmem, size = 0x4000, scoped, tag = 'input window, operand 7, single buffered']
    #allocation12 [shape = 's32[1]{0}', space=sflag, size = 0x4, scoped, tag = 'scoped memory for tpu_custom_call.1']
    #allocation13 [shape = 'u8[16384]{0}', space=vmem, size = 0x4000, scoped, tag = 'input window, operand 8, single buffered']
    #allocation14 [shape = 'u8[16384]{0}', space=vmem, size = 0x4000, scoped, tag = 'input window, operand 9, single buffered']
    #allocation15 [shape = 's32[1]{0}', space=sflag, size = 0x4, scoped, tag = 'scoped memory for tpu_custom_call.1']
    #allocation16 [shape = 'u8[65536]{0}', space=vmem, size = 0x10000, scoped, tag = 'input window, operand 10, single buffered']
    #allocation17 [shape = 'u8[16384]{0}', space=vmem, size = 0x4000, scoped, tag = 'input window, operand 13, single buffered']
    #allocation18 [shape = 's32[1]{0}', space=sflag, size = 0x4, scoped, tag = 'scoped memory for tpu_custom_call.1']
    #allocation19 [shape = 'u8[65536]{0}', space=vmem, size = 0x10000, scoped, tag = 'output window, operand 0']
    %19 = vsyncpa [#allocation3], 0
    %s20 = scalar_lea.sflag [#allocation3], 1
    %21 = vsyncpa %s20, 0
    %22 = vsyncpa [#allocation6], 0
    %23 = vsyncpa [#allocation9], 0
    %24 = vsyncpa [#allocation12], 0
    %25 = vsyncpa [#allocation15], 0
    %26 = vsyncpa [#allocation18], 0
    %27 = vsyncpa [#allocation4], 0
    %s28 = scalar_lea.sflag [#allocation4], 1
    %29 = vsyncpa %s28, 0
    loop: start=0, step=1, limit=4
    $region2: #{tpu_custom_call.1} parent=1 // loop_pre_header
      _
    $region3: #{tpu_custom_call.1} parent=1 // loop_header
      %s31 = sphi 0, %s35
      %p32 = scmp.ge.s32.totalorder %s31, 4
      %s41 = sphi 0, %s43
      %s44 = sphi 0, %s41
      %s45 = sphi 0, %s44
      %s61 = sphi 0, %s45
      %s67 = sphi 0, %s69
      %s70 = sphi 0, %s67
      %s71 = sphi 0, %s70
      %s87 = sphi 0, %s71
      %s91 = sphi 0, %s91
      %s93 = sphi 0, %s91
      %s94 = sphi 0, %s93
      %s108 = sphi 0, %s94
      %s112 = sphi 0, %s112
      %s114 = sphi 0, %s112
      %s115 = sphi 0, %s114
      %s129 = sphi 0, %s115
      %s133 = sphi 0, %s133
      %s135 = sphi 0, %s133
      %s136 = sphi 0, %s135
      %s150 = sphi 0, %s136
      %s154 = sphi 0, %s154
      %s156 = sphi 0, %s154
      %s157 = sphi 0, %s156
      %s171 = sphi 0, %s157
      %s175 = sphi 0, %s175
      %s177 = sphi 0, %s175
      %s178 = sphi 0, %s177
      %s192 = sphi 0, %s178
      %s196 = sphi 0, %s196
      %s198 = sphi 0, %s196
      %s199 = sphi 0, %s198
      %s213 = sphi 0, %s199
      %s217 = sphi 0, %s217
      %s219 = sphi 0, %s217
      %s220 = sphi 0, %s219
      %s234 = sphi 0, %s220
      %s238 = sphi 0, %s238
      %s240 = sphi 0, %s238
      %s241 = sphi 0, %s240
      %s255 = sphi 0, %s241
      %s259 = sphi 0, %s259
      %s261 = sphi 0, %s259
      %s262 = sphi 0, %s261
      %s276 = sphi 0, %s262
      %s280 = sphi 0, %s280
      %s282 = sphi 0, %s280
      %s283 = sphi 0, %s282
      %s297 = sphi 0, %s283
      %s301 = sphi 0, %s301
      %s303 = sphi 0, %s301
      %s304 = sphi 0, %s303
      %s318 = sphi 0, %s304
      %s322 = sphi 0, %s322
      %s324 = sphi 0, %s322
      %s325 = sphi 0, %s324
      %s339 = sphi 0, %s325
      %s345 = sphi 0, %s347
      %s348 = sphi 0, %s345
      %s349 = sphi 0, %s348
      %s365 = sphi 0, %s349
    $region4: #{tpu_custom_call.1} parent=1 // loop_header_branch
      %34 = sbr.rel (%p32) target = $region8
    $region5: #{tpu_custom_call.1} parent=1 // loop_body
      %s36 = ssub.s32 %s31, 1
      %s37 = ssub.s32 %s31, 2
      %s38 = sadd.s32 %s31, 1
      %s39 = ssub.s32 %s31, %s38
      %p40 = scmp.eq.s32.totalorder %s39, 0
      %s42 = sadd.s32 %s41, 1
      %s43 = scalar_select %p40, %s41, %s42
      %p46 = pneg %p40
      %p47 = scmp.eq.s32.totalorder %s31, 1
      %p48 = por %p46, %p47
      %p49 = scmp.ne.s32.totalorder %s41, %s44
      %p50 = scmp.eq.s32.totalorder %s31, 0
      %p51 = por %p49, %p50
      %p52 = scmp.ne.s32.totalorder %s41, %s44
      %p53 = scmp.eq.s32.totalorder %s36, 1
      %p54 = por %p52, %p53
      %p55 = scmp.ne.s32.totalorder %s44, %s45
      %p56 = scmp.eq.s32.totalorder %s36, 0
      %p57 = por %p55, %p56
      %p58 = scmp.ne.s32.totalorder %s44, %s45
      %p59 = scmp.eq.s32.totalorder %s37, 1
      %p60 = por %p58, %p59
      %p62 = scmp.ne.s32.totalorder %s45, %s61
      %p63 = scmp.eq.s32.totalorder %s37, 0
      %p64 = por %p62, %p63
      %s65 = ssub.s32 %s31, %s38
      %p66 = scmp.eq.s32.totalorder %s65, 0
      %s68 = sadd.s32 %s67, 1
      %s69 = scalar_select %p66, %s67, %s68
      %p72 = pneg %p66
      %p73 = scmp.eq.s32.totalorder %s31, 1
      %p74 = por %p72, %p73
      %p75 = scmp.ne.s32.totalorder %s67, %s70
      %p76 = scmp.eq.s32.totalorder %s31, 0
      %p77 = por %p75, %p76
      %p78 = scmp.ne.s32.totalorder %s67, %s70
      %p79 = scmp.eq.s32.totalorder %s36, 1
      %p80 = por %p78, %p79
      %p81 = scmp.ne.s32.totalorder %s70, %s71
      %p82 = scmp.eq.s32.totalorder %s36, 0
      %p83 = por %p81, %p82
      %p84 = scmp.ne.s32.totalorder %s70, %s71
      %p85 = scmp.eq.s32.totalorder %s37, 1
      %p86 = por %p84, %p85
      %p88 = scmp.ne.s32.totalorder %s71, %s87
      %p89 = scmp.eq.s32.totalorder %s37, 0
      %p90 = por %p88, %p89
      %s92 = sadd.s32 %s91, 1
      %p95 = scmp.eq.s32.totalorder %s31, 1
      %p96 = scmp.ne.s32.totalorder %s91, %s93
      %p97 = scmp.eq.s32.totalorder %s31, 0
      %p98 = por %p96, %p97
      %p99 = scmp.ne.s32.totalorder %s91, %s93
      %p100 = scmp.eq.s32.totalorder %s36, 1
      %p101 = por %p99, %p100
      %p102 = scmp.ne.s32.totalorder %s93, %s94
      %p103 = scmp.eq.s32.totalorder %s36, 0
      %p104 = por %p102, %p103
      %p105 = scmp.ne.s32.totalorder %s93, %s94
      %p106 = scmp.eq.s32.totalorder %s37, 1
      %p107 = por %p105, %p106
      %p109 = scmp.ne.s32.totalorder %s94, %s108
      %p110 = scmp.eq.s32.totalorder %s37, 0
      %p111 = por %p109, %p110
      %s113 = sadd.s32 %s112, 1
      %p116 = scmp.eq.s32.totalorder %s31, 1
      %p117 = scmp.ne.s32.totalorder %s112, %s114
      %p118 = scmp.eq.s32.totalorder %s31, 0
      %p119 = por %p117, %p118
      %p120 = scmp.ne.s32.totalorder %s112, %s114
      %p121 = scmp.eq.s32.totalorder %s36, 1
      %p122 = por %p120, %p121
      %p123 = scmp.ne.s32.totalorder %s114, %s115
      %p124 = scmp.eq.s32.totalorder %s36, 0
      %p125 = por %p123, %p124
      %p126 = scmp.ne.s32.totalorder %s114, %s115
      %p127 = scmp.eq.s32.totalorder %s37, 1
      %p128 = por %p126, %p127
      %p130 = scmp.ne.s32.totalorder %s115, %s129
      %p131 = scmp.eq.s32.totalorder %s37, 0
      %p132 = por %p130, %p131
      %s134 = sadd.s32 %s133, 1
      %p137 = scmp.eq.s32.totalorder %s31, 1
      %p138 = scmp.ne.s32.totalorder %s133, %s135
      %p139 = scmp.eq.s32.totalorder %s31, 0
      %p140 = por %p138, %p139
      %p141 = scmp.ne.s32.totalorder %s133, %s135
      %p142 = scmp.eq.s32.totalorder %s36, 1
      %p143 = por %p141, %p142
      %p144 = scmp.ne.s32.totalorder %s135, %s136
      %p145 = scmp.eq.s32.totalorder %s36, 0
      %p146 = por %p144, %p145
      %p147 = scmp.ne.s32.totalorder %s135, %s136
      %p148 = scmp.eq.s32.totalorder %s37, 1
      %p149 = por %p147, %p148
      %p151 = scmp.ne.s32.totalorder %s136, %s150
      %p152 = scmp.eq.s32.totalorder %s37, 0
      %p153 = por %p151, %p152
      %s155 = sadd.s32 %s154, 1
      %p158 = scmp.eq.s32.totalorder %s31, 1
      %p159 = scmp.ne.s32.totalorder %s154, %s156
      %p160 = scmp.eq.s32.totalorder %s31, 0
      %p161 = por %p159, %p160
      %p162 = scmp.ne.s32.totalorder %s154, %s156
      %p163 = scmp.eq.s32.totalorder %s36, 1
      %p164 = por %p162, %p163
      %p165 = scmp.ne.s32.totalorder %s156, %s157
      %p166 = scmp.eq.s32.totalorder %s36, 0
      %p167 = por %p165, %p166
      %p168 = scmp.ne.s32.totalorder %s156, %s157
      %p169 = scmp.eq.s32.totalorder %s37, 1
      %p170 = por %p168, %p169
      %p172 = scmp.ne.s32.totalorder %s157, %s171
      %p173 = scmp.eq.s32.totalorder %s37, 0
      %p174 = por %p172, %p173
      %s176 = sadd.s32 %s175, 1
      %p179 = scmp.eq.s32.totalorder %s31, 1
      %p180 = scmp.ne.s32.totalorder %s175, %s177
      %p181 = scmp.eq.s32.totalorder %s31, 0
      %p182 = por %p180, %p181
      %p183 = scmp.ne.s32.totalorder %s175, %s177
      %p184 = scmp.eq.s32.totalorder %s36, 1
      %p185 = por %p183, %p184
      %p186 = scmp.ne.s32.totalorder %s177, %s178
      %p187 = scmp.eq.s32.totalorder %s36, 0
      %p188 = por %p186, %p187
      %p189 = scmp.ne.s32.totalorder %s177, %s178
      %p190 = scmp.eq.s32.totalorder %s37, 1
      %p191 = por %p189, %p190
      %p193 = scmp.ne.s32.totalorder %s178, %s192
      %p194 = scmp.eq.s32.totalorder %s37, 0
      %p195 = por %p193, %p194
      %s197 = sadd.s32 %s196, 1
      %p200 = scmp.eq.s32.totalorder %s31, 1
      %p201 = scmp.ne.s32.totalorder %s196, %s198
      %p202 = scmp.eq.s32.totalorder %s31, 0
      %p203 = por %p201, %p202
      %p204 = scmp.ne.s32.totalorder %s196, %s198
      %p205 = scmp.eq.s32.totalorder %s36, 1
      %p206 = por %p204, %p205
      %p207 = scmp.ne.s32.totalorder %s198, %s199
      %p208 = scmp.eq.s32.totalorder %s36, 0
      %p209 = por %p207, %p208
      %p210 = scmp.ne.s32.totalorder %s198, %s199
      %p211 = scmp.eq.s32.totalorder %s37, 1
      %p212 = por %p210, %p211
      %p214 = scmp.ne.s32.totalorder %s199, %s213
      %p215 = scmp.eq.s32.totalorder %s37, 0
      %p216 = por %p214, %p215
      %s218 = sadd.s32 %s217, 1
      %p221 = scmp.eq.s32.totalorder %s31, 1
      %p222 = scmp.ne.s32.totalorder %s217, %s219
      %p223 = scmp.eq.s32.totalorder %s31, 0
      %p224 = por %p222, %p223
      %p225 = scmp.ne.s32.totalorder %s217, %s219
      %p226 = scmp.eq.s32.totalorder %s36, 1
      %p227 = por %p225, %p226
      %p228 = scmp.ne.s32.totalorder %s219, %s220
      %p229 = scmp.eq.s32.totalorder %s36, 0
      %p230 = por %p228, %p229
      %p231 = scmp.ne.s32.totalorder %s219, %s220
      %p232 = scmp.eq.s32.totalorder %s37, 1
      %p233 = por %p231, %p232
      %p235 = scmp.ne.s32.totalorder %s220, %s234
      %p236 = scmp.eq.s32.totalorder %s37, 0
      %p237 = por %p235, %p236
      %s239 = sadd.s32 %s238, 1
      %p242 = scmp.eq.s32.totalorder %s31, 1
      %p243 = scmp.ne.s32.totalorder %s238, %s240
      %p244 = scmp.eq.s32.totalorder %s31, 0
      %p245 = por %p243, %p244
      %p246 = scmp.ne.s32.totalorder %s238, %s240
      %p247 = scmp.eq.s32.totalorder %s36, 1
      %p248 = por %p246, %p247
      %p249 = scmp.ne.s32.totalorder %s240, %s241
      %p250 = scmp.eq.s32.totalorder %s36, 0
      %p251 = por %p249, %p250
      %p252 = scmp.ne.s32.totalorder %s240, %s241
      %p253 = scmp.eq.s32.totalorder %s37, 1
      %p254 = por %p252, %p253
      %p256 = scmp.ne.s32.totalorder %s241, %s255
      %p257 = scmp.eq.s32.totalorder %s37, 0
      %p258 = por %p256, %p257
      %s260 = sadd.s32 %s259, 1
      %p263 = scmp.eq.s32.totalorder %s31, 1
      %p264 = scmp.ne.s32.totalorder %s259, %s261
      %p265 = scmp.eq.s32.totalorder %s31, 0
      %p266 = por %p264, %p265
      %p267 = scmp.ne.s32.totalorder %s259, %s261
      %p268 = scmp.eq.s32.totalorder %s36, 1
      %p269 = por %p267, %p268
      %p270 = scmp.ne.s32.totalorder %s261, %s262
      %p271 = scmp.eq.s32.totalorder %s36, 0
      %p272 = por %p270, %p271
      %p273 = scmp.ne.s32.totalorder %s261, %s262
      %p274 = scmp.eq.s32.totalorder %s37, 1
      %p275 = por %p273, %p274
      %p277 = scmp.ne.s32.totalorder %s262, %s276
      %p278 = scmp.eq.s32.totalorder %s37, 0
      %p279 = por %p277, %p278
      %s281 = sadd.s32 %s280, 1
      %p284 = scmp.eq.s32.totalorder %s31, 1
      %p285 = scmp.ne.s32.totalorder %s280, %s282
      %p286 = scmp.eq.s32.totalorder %s31, 0
      %p287 = por %p285, %p286
      %p288 = scmp.ne.s32.totalorder %s280, %s282
      %p289 = scmp.eq.s32.totalorder %s36, 1
      %p290 = por %p288, %p289
      %p291 = scmp.ne.s32.totalorder %s282, %s283
      %p292 = scmp.eq.s32.totalorder %s36, 0
      %p293 = por %p291, %p292
      %p294 = scmp.ne.s32.totalorder %s282, %s283
      %p295 = scmp.eq.s32.totalorder %s37, 1
      %p296 = por %p294, %p295
      %p298 = scmp.ne.s32.totalorder %s283, %s297
      %p299 = scmp.eq.s32.totalorder %s37, 0
      %p300 = por %p298, %p299
      %s302 = sadd.s32 %s301, 1
      %p305 = scmp.eq.s32.totalorder %s31, 1
      %p306 = scmp.ne.s32.totalorder %s301, %s303
      %p307 = scmp.eq.s32.totalorder %s31, 0
      %p308 = por %p306, %p307
      %p309 = scmp.ne.s32.totalorder %s301, %s303
      %p310 = scmp.eq.s32.totalorder %s36, 1
      %p311 = por %p309, %p310
      %p312 = scmp.ne.s32.totalorder %s303, %s304
      %p313 = scmp.eq.s32.totalorder %s36, 0
      %p314 = por %p312, %p313
      %p315 = scmp.ne.s32.totalorder %s303, %s304
      %p316 = scmp.eq.s32.totalorder %s37, 1
      %p317 = por %p315, %p316
      %p319 = scmp.ne.s32.totalorder %s304, %s318
      %p320 = scmp.eq.s32.totalorder %s37, 0
      %p321 = por %p319, %p320
      %s323 = sadd.s32 %s322, 1
      %p326 = scmp.eq.s32.totalorder %s31, 1
      %p327 = scmp.ne.s32.totalorder %s322, %s324
      %p328 = scmp.eq.s32.totalorder %s31, 0
      %p329 = por %p327, %p328
      %p330 = scmp.ne.s32.totalorder %s322, %s324
      %p331 = scmp.eq.s32.totalorder %s36, 1
      %p332 = por %p330, %p331
      %p333 = scmp.ne.s32.totalorder %s324, %s325
      %p334 = scmp.eq.s32.totalorder %s36, 0
      %p335 = por %p333, %p334
      %p336 = scmp.ne.s32.totalorder %s324, %s325
      %p337 = scmp.eq.s32.totalorder %s37, 1
      %p338 = por %p336, %p337
      %p340 = scmp.ne.s32.totalorder %s325, %s339
      %p341 = scmp.eq.s32.totalorder %s37, 0
      %p342 = por %p340, %p341
      %s343 = ssub.s32 %s31, %s38
      %p344 = scmp.eq.s32.totalorder %s343, 0
      %s346 = sadd.s32 %s345, 1
      %s347 = scalar_select %p344, %s345, %s346
      %p350 = pneg %p344
      %p351 = scmp.eq.s32.totalorder %s31, 1
      %p352 = por %p350, %p351
      %p353 = scmp.ne.s32.totalorder %s345, %s348
      %p354 = scmp.eq.s32.totalorder %s31, 0
      %p355 = por %p353, %p354
      %p356 = scmp.ne.s32.totalorder %s345, %s348
      %p357 = scmp.eq.s32.totalorder %s36, 1
      %p358 = por %p356, %p357
      %p359 = scmp.ne.s32.totalorder %s348, %s349
      %p360 = scmp.eq.s32.totalorder %s36, 0
      %p361 = por %p359, %p360
      %p362 = scmp.ne.s32.totalorder %s348, %s349
      %p363 = scmp.eq.s32.totalorder %s37, 1
      %p364 = por %p362, %p363
      %p366 = scmp.ne.s32.totalorder %s349, %s365
      %p367 = scmp.eq.s32.totalorder %s37, 0
      %p368 = por %p366, %p367
      %p369 = scmp.le.s32.totalorder 1, %s31
      %p370 = scmp.lt.s32.totalorder %s31, 3
      %p371 = pnand %p369, %p370
      %p372 = pneg %p371
      // Predicated region
      $region9: #{tpu_custom_call.1} parent=5 // pred_check
        _
      $region10: #{tpu_custom_call.1} parent=5 // pred_check_branch
        %374 = sbr.rel (%p371) target = $region12
      $region11: #{tpu_custom_call.1} parent=5 // pred_region
        %s375 = ssub.s32 %s31, 1
        // Predicated region
        $region13: #{tpu_custom_call.1} parent=11 // pred_check
          %p376 = pneg %p104
        $region14: #{tpu_custom_call.1} parent=11 // pred_check_branch
          %378 = sbr.rel (%p376) target = $region16
        $region15: #{tpu_custom_call.1} parent=11 // pred_region
          %380 = vsyncadd [#allocation6], 0
          %s381 = sshll.u32 %s2, 4
          %s382 = int_to_ptr.hbm [resolvable:$true] %s381
          %s383 = sshll.u32 [#allocation5], 4
          %s384 = int_to_ptr.vmem [resolvable:$true] %s383
          %389 = dma.hbm_to_vmem [thread:$0]  %s382, 256, %s384, [#allocation6], 128, 128, 8
        $region16: #{tpu_custom_call.1} parent=11 // pred_fallthru
          _
        // Predicated region
        $region17: #{tpu_custom_call.1} parent=11 // pred_check
          %p390 = pneg %p125
        $region18: #{tpu_custom_call.1} parent=11 // pred_check_branch
          %392 = sbr.rel (%p390) target = $region20
        $region19: #{tpu_custom_call.1} parent=11 // pred_region
          %394 = vsyncadd [#allocation6], 0
          %s395 = sshll.u32 %s3, 4
          %s396 = int_to_ptr.hbm [resolvable:$true] %s395
          %s397 = sshll.u32 [#allocation7], 4
          %s398 = int_to_ptr.vmem [resolvable:$true] %s397
          %403 = dma.hbm_to_vmem [thread:$0]  %s396, 512, %s398, [#allocation6], 64, 64, 4
        $region20: #{tpu_custom_call.1} parent=11 // pred_fallthru
          _
        // Predicated region
        $region21: #{tpu_custom_call.1} parent=11 // pred_check
          %p404 = pneg %p146
        $region22: #{tpu_custom_call.1} parent=11 // pred_check_branch
          %406 = sbr.rel (%p404) target = $region24
        $region23: #{tpu_custom_call.1} parent=11 // pred_region
          %408 = vsyncadd [#allocation9], 0
          %s409 = sshll.u32 %s4, 4
          %s410 = int_to_ptr.hbm [resolvable:$true] %s409
          %s411 = sshll.u32 [#allocation8], 4
          %s412 = int_to_ptr.vmem [resolvable:$true] %s411
          %417 = dma.hbm_to_vmem [thread:$0]  %s410, 512, %s412, [#allocation9], 64, 64, 4
        $region24: #{tpu_custom_call.1} parent=11 // pred_fallthru
          _
        // Predicated region
        $region25: #{tpu_custom_call.1} parent=11 // pred_check
          %p418 = pneg %p167
        $region26: #{tpu_custom_call.1} parent=11 // pred_check_branch
          %420 = sbr.rel (%p418) target = $region28
        $region27: #{tpu_custom_call.1} parent=11 // pred_region
          _
        $region28: #{tpu_custom_call.1} parent=11 // pred_fallthru
          _
        // Predicated region
        $region29: #{tpu_custom_call.1} parent=11 // pred_check
          %p421 = pneg %p188
        $region30: #{tpu_custom_call.1} parent=11 // pred_check_branch
          %423 = sbr.rel (%p421) target = $region32
        $region31: #{tpu_custom_call.1} parent=11 // pred_region
          %425 = vsyncadd [#allocation9], 0
          %s426 = sshll.u32 %s6, 4
          %s427 = int_to_ptr.hbm [resolvable:$true] %s426
          %s428 = sshll.u32 [#allocation10], 4
          %s429 = int_to_ptr.vmem [resolvable:$true] %s428
          %434 = dma.hbm_to_vmem [thread:$0]  %s427, 512, %s429, [#allocation9], 64, 64, 4
        $region32: #{tpu_custom_call.1} parent=11 // pred_fallthru
          _
        // Predicated region
        $region33: #{tpu_custom_call.1} parent=11 // pred_check
          %p435 = pneg %p209
        $region34: #{tpu_custom_call.1} parent=11 // pred_check_branch
          %437 = sbr.rel (%p435) target = $region36
        $region35: #{tpu_custom_call.1} parent=11 // pred_region
          %439 = vsyncadd [#allocation12], 0
          %s440 = sshll.u32 %s7, 4
          %s441 = int_to_ptr.hbm [resolvable:$true] %s440
          %s442 = sshll.u32 [#allocation11], 4
          %s443 = int_to_ptr.vmem [resolvable:$true] %s442
          %448 = dma.hbm_to_vmem [thread:$0]  %s441, 512, %s443, [#allocation12], 64, 64, 4
        $region36: #{tpu_custom_call.1} parent=11 // pred_fallthru
          _
        // Predicated region
        $region37: #{tpu_custom_call.1} parent=11 // pred_check
          %p449 = pneg %p230
        $region38: #{tpu_custom_call.1} parent=11 // pred_check_branch
          %451 = sbr.rel (%p449) target = $region40
        $region39: #{tpu_custom_call.1} parent=11 // pred_region
          %453 = vsyncadd [#allocation12], 0
          %s454 = sshll.u32 %s8, 4
          %s455 = int_to_ptr.hbm [resolvable:$true] %s454
          %s456 = sshll.u32 [#allocation13], 4
          %s457 = int_to_ptr.vmem [resolvable:$true] %s456
          %462 = dma.hbm_to_vmem [thread:$0]  %s455, 512, %s457, [#allocation12], 64, 64, 4
        $region40: #{tpu_custom_call.1} parent=11 // pred_fallthru
          _
        // Predicated region
        $region41: #{tpu_custom_call.1} parent=11 // pred_check
          %p463 = pneg %p251
        $region42: #{tpu_custom_call.1} parent=11 // pred_check_branch
          %465 = sbr.rel (%p463) target = $region44
        $region43: #{tpu_custom_call.1} parent=11 // pred_region
          %467 = vsyncadd [#allocation15], 0
          %s468 = sshll.u32 %s9, 4
          %s469 = int_to_ptr.hbm [resolvable:$true] %s468
          %s470 = sshll.u32 [#allocation14], 4
          %s471 = int_to_ptr.vmem [resolvable:$true] %s470
          %476 = dma.hbm_to_vmem [thread:$0]  %s469, 512, %s471, [#allocation15], 64, 64, 4
        $region44: #{tpu_custom_call.1} parent=11 // pred_fallthru
          _
        // Predicated region
        $region45: #{tpu_custom_call.1} parent=11 // pred_check
          %p477 = pneg %p272
        $region46: #{tpu_custom_call.1} parent=11 // pred_check_branch
          %479 = sbr.rel (%p477) target = $region48
        $region47: #{tpu_custom_call.1} parent=11 // pred_region
          %481 = vsyncadd [#allocation15], 0
          %s482 = sshll.u32 %s10, 4
          %s483 = int_to_ptr.hbm [resolvable:$true] %s482
          %s484 = sshll.u32 [#allocation16], 4
          %s485 = int_to_ptr.vmem [resolvable:$true] %s484
          %490 = dma.hbm_to_vmem [thread:$0]  %s483, 2048, %s485, [#allocation15], 256, 256, 16
        $region48: #{tpu_custom_call.1} parent=11 // pred_fallthru
          _
        // Predicated region
        $region49: #{tpu_custom_call.1} parent=11 // pred_check
          %p491 = pneg %p293
        $region50: #{tpu_custom_call.1} parent=11 // pred_check_branch
          %493 = sbr.rel (%p491) target = $region52
        $region51: #{tpu_custom_call.1} parent=11 // pred_region
          _
        $region52: #{tpu_custom_call.1} parent=11 // pred_fallthru
          _
        // Predicated region
        $region53: #{tpu_custom_call.1} parent=11 // pred_check
          %p494 = pneg %p314
        $region54: #{tpu_custom_call.1} parent=11 // pred_check_branch
          %496 = sbr.rel (%p494) target = $region56
        $region55: #{tpu_custom_call.1} parent=11 // pred_region
          _
        $region56: #{tpu_custom_call.1} parent=11 // pred_fallthru
          _
        // Predicated region
        $region57: #{tpu_custom_call.1} parent=11 // pred_check
          %p497 = pneg %p335
        $region58: #{tpu_custom_call.1} parent=11 // pred_check_branch
          %499 = sbr.rel (%p497) target = $region60
        $region59: #{tpu_custom_call.1} parent=11 // pred_region
          %501 = vsyncadd [#allocation18], 0
          %s502 = sshll.u32 %s13, 4
          %s503 = int_to_ptr.hbm [resolvable:$true] %s502
          %s504 = sshll.u32 [#allocation17], 4
          %s505 = int_to_ptr.vmem [resolvable:$true] %s504
          %510 = dma.hbm_to_vmem [thread:$0]  %s503, 512, %s505, [#allocation18], 64, 64, 4
        $region60: #{tpu_custom_call.1} parent=11 // pred_fallthru
          _
      $region12: #{tpu_custom_call.1} parent=5 // pred_fallthru
        _
      %p511 = scmp.lt.s32.totalorder %s31, 2
      // Predicated region
      $region61: #{tpu_custom_call.1} parent=5 // pred_check
        %p512 = pneg %p511
      $region62: #{tpu_custom_call.1} parent=5 // pred_check_branch
        %514 = sbr.rel (%p512) target = $region64
      $region63: #{tpu_custom_call.1} parent=5 // pred_region
        // Predicated region
        $region65: #{tpu_custom_call.1} parent=63 // pred_check
          %p515 = pneg %p51
        $region66: #{tpu_custom_call.1} parent=63 // pred_check_branch
          %517 = sbr.rel (%p515) target = $region68
        $region67: #{tpu_custom_call.1} parent=63 // pred_region
          %p518 = scmp.lt.s32.totalorder %s31, 1
          %s519 = scalar_select %p518, %s31, 1
          %s520 = smul.addr %s519, 8
          %s521 = smul.addr %s520, 8
          %s522 = scalar_lea.vmem %s0, %s521
        $region68: #{tpu_custom_call.1} parent=63 // pred_fallthru
          _
        // Predicated region
        $region69: #{tpu_custom_call.1} parent=63 // pred_check
          %p523 = pneg %p77
        $region70: #{tpu_custom_call.1} parent=63 // pred_check_branch
          %525 = sbr.rel (%p523) target = $region72
        $region71: #{tpu_custom_call.1} parent=63 // pred_region
          %s526 = sand.u32 %s67, 1
          %s527 = scalar_lea.sflag [#allocation3], %s526
          %s528 = sand.u32 %s67, 1
          %s529 = smul.addr %s528, 8
          %s530 = scalar_lea.vmem [#allocation2], %s529
          %532 = vsyncadd %s527, 0
          %s533 = smul.addr %s31, 8
          %s534 = scalar_lea.hbm %s1, %s533
          %s536 = sshll.u32 %s534, 4
          %s537 = int_to_ptr.hbm [resolvable:$true] %s536
          %s538 = sshll.u32 %s530, 4
          %s539 = int_to_ptr.vmem [resolvable:$true] %s538
          %541 = dma.hbm_to_vmem [thread:$0]  %s537, 128, %s539, %s527
        $region72: #{tpu_custom_call.1} parent=63 // pred_fallthru
          _
      $region64: #{tpu_custom_call.1} parent=5 // pred_fallthru
        _
      %p542 = scmp.le.s32.totalorder 1, %s31
      %p543 = scmp.lt.s32.totalorder %s31, 3
      %p544 = pnand %p542, %p543
      %p545 = pneg %p544
      // Predicated region
      $region73: #{tpu_custom_call.1} parent=5 // pred_check
        _
      $region74: #{tpu_custom_call.1} parent=5 // pred_check_branch
        %547 = sbr.rel (%p544) target = $region76
      $region75: #{tpu_custom_call.1} parent=5 // pred_region
        %s548 = ssub.s32 %s31, 1
        %s549 = sand.u32 %s70, 1
        %s550 = scalar_lea.sflag [#allocation3], %s549
        %s551 = sand.u32 %s70, 1
        %s552 = smul.addr %s551, 8
        %s553 = scalar_lea.vmem [#allocation2], %s552
        // Predicated region
        $region77: #{tpu_custom_call.1} parent=75 // pred_check
          %p554 = pneg %p83
        $region78: #{tpu_custom_call.1} parent=75 // pred_check_branch
          %556 = sbr.rel (%p554) target = $region80
        $region79: #{tpu_custom_call.1} parent=75 // pred_region
          %558 = dma.done %s550, 128
        $region80: #{tpu_custom_call.1} parent=75 // pred_fallthru
          _
        // Predicated region
        $region81: #{tpu_custom_call.1} parent=75 // pred_check
          %p559 = pneg %p104
        $region82: #{tpu_custom_call.1} parent=75 // pred_check_branch
          %561 = sbr.rel (%p559) target = $region84
        $region83: #{tpu_custom_call.1} parent=75 // pred_region
          %563 = dma.done [#allocation6], 256
        $region84: #{tpu_custom_call.1} parent=75 // pred_fallthru
          _
        // Predicated region
        $region85: #{tpu_custom_call.1} parent=75 // pred_check
          %p564 = pneg %p125
        $region86: #{tpu_custom_call.1} parent=75 // pred_check_branch
          %566 = sbr.rel (%p564) target = $region88
        $region87: #{tpu_custom_call.1} parent=75 // pred_region
          %568 = dma.done [#allocation6], 512
        $region88: #{tpu_custom_call.1} parent=75 // pred_fallthru
          _
        // Predicated region
        $region89: #{tpu_custom_call.1} parent=75 // pred_check
          %p569 = pneg %p146
        $region90: #{tpu_custom_call.1} parent=75 // pred_check_branch
          %571 = sbr.rel (%p569) target = $region92
        $region91: #{tpu_custom_call.1} parent=75 // pred_region
          %573 = dma.done [#allocation9], 512
        $region92: #{tpu_custom_call.1} parent=75 // pred_fallthru
          _
        // Predicated region
        $region93: #{tpu_custom_call.1} parent=75 // pred_check
          %p574 = pneg %p188
        $region94: #{tpu_custom_call.1} parent=75 // pred_check_branch
          %576 = sbr.rel (%p574) target = $region96
        $region95: #{tpu_custom_call.1} parent=75 // pred_region
          %578 = dma.done [#allocation9], 512
        $region96: #{tpu_custom_call.1} parent=75 // pred_fallthru
          _
        // Predicated region
        $region97: #{tpu_custom_call.1} parent=75 // pred_check
          %p579 = pneg %p209
        $region98: #{tpu_custom_call.1} parent=75 // pred_check_branch
          %581 = sbr.rel (%p579) target = $region100
        $region99: #{tpu_custom_call.1} parent=75 // pred_region
          %583 = dma.done [#allocation12], 512
        $region100: #{tpu_custom_call.1} parent=75 // pred_fallthru
          _
        // Predicated region
        $region101: #{tpu_custom_call.1} parent=75 // pred_check
          %p584 = pneg %p230
        $region102: #{tpu_custom_call.1} parent=75 // pred_check_branch
          %586 = sbr.rel (%p584) target = $region104
        $region103: #{tpu_custom_call.1} parent=75 // pred_region
          %588 = dma.done [#allocation12], 512
        $region104: #{tpu_custom_call.1} parent=75 // pred_fallthru
          _
        // Predicated region
        $region105: #{tpu_custom_call.1} parent=75 // pred_check
          %p589 = pneg %p251
        $region106: #{tpu_custom_call.1} parent=75 // pred_check_branch
          %591 = sbr.rel (%p589) target = $region108
        $region107: #{tpu_custom_call.1} parent=75 // pred_region
          %593 = dma.done [#allocation15], 512
        $region108: #{tpu_custom_call.1} parent=75 // pred_fallthru
          _
        // Predicated region
        $region109: #{tpu_custom_call.1} parent=75 // pred_check
          %p594 = pneg %p272
        $region110: #{tpu_custom_call.1} parent=75 // pred_check_branch
          %596 = sbr.rel (%p594) target = $region112
        $region111: #{tpu_custom_call.1} parent=75 // pred_region
          %598 = dma.done [#allocation15], 2048
        $region112: #{tpu_custom_call.1} parent=75 // pred_fallthru
          _
        // Predicated region
        $region113: #{tpu_custom_call.1} parent=75 // pred_check
          %p599 = pneg %p335
        $region114: #{tpu_custom_call.1} parent=75 // pred_check_branch
          %601 = sbr.rel (%p599) target = $region116
        $region115: #{tpu_custom_call.1} parent=75 // pred_region
          %603 = dma.done [#allocation18], 512
        $region116: #{tpu_custom_call.1} parent=75 // pred_fallthru
          _
        %p604 = scmp.lt.s32.totalorder %s36, 1
        %s605 = scalar_select %p604, %s36, 1
        %s606 = smul.addr %s605, 8
        %s607 = smul.addr %s606, 8
        %s608 = scalar_lea.vmem %s0, %s607
        %p609 = pneg %p57
        %p610 = pneg %p54
        %s611 = sand.u32 %s70, 1
        %s612 = scalar_lea.sflag [#allocation3], %s611
        %s613 = sand.u32 %s70, 1
        %s614 = smul.addr %s613, 8
        %s615 = scalar_lea.vmem [#allocation2], %s614
        %p616 = pneg %p83
        %p617 = pneg %p80
        %p618 = pneg %p104
        %p619 = pneg %p101
        %p620 = pneg %p125
        %p621 = pneg %p122
        %p622 = pneg %p146
        %p623 = pneg %p143
        %p624 = pneg %p167
        %p625 = pneg %p164
        %p626 = pneg %p188
        %p627 = pneg %p185
        %p628 = pneg %p209
        %p629 = pneg %p206
        %p630 = pneg %p230
        %p631 = pneg %p227
        %p632 = pneg %p251
        %p633 = pneg %p248
        %p634 = pneg %p272
        %p635 = pneg %p269
        %p636 = pneg %p293
        %p637 = pneg %p290
        %p638 = pneg %p314
        %p639 = pneg %p311
        %p640 = pneg %p335
        %p641 = pneg %p332
        %p642 = pneg %p361
        %p643 = pneg %p358
        %s644 = sand.u32 %s348, 1
        %s645 = scalar_lea.sflag [#allocation4], %s644
        %s646 = sand.u32 %s348, 1
        %s647 = smul.addr %s646, 64
        %s648 = scalar_lea.vmem [#allocation19], %s647
        %p649 = scmp.lt.s32.totalorder %s36, 1
        %s650 = scalar_select %p649, %s36, 1
        %s651 = smul.addr %s650, 8
        %s652 = smul.addr %s651, 8
        %s653 = scalar_lea.vmem %s0, %s652
        %v655 = vld [vmem:[%s653] sm:$0xff]
        %v656 = vld [vmem:[%s653 + $0x8] sm:$0xff]
        %v657 = vld [vmem:[%s653 + $0x10] sm:$0xff]
        %v658 = vld [vmem:[%s653 + $0x18] sm:$0xff]
        %v659 = vld [vmem:[%s653 + $0x20] sm:$0xff]
        %v660 = vld [vmem:[%s653 + $0x28] sm:$0xff]
        %v661 = vld [vmem:[%s653 + $0x30] sm:$0xff]
        %v662 = vld [vmem:[%s653 + $0x38] sm:$0xff]
        %v663 = vld [vmem:[%s553] sm:$0xff]
        %v664 = vld [vmem:[#allocation5] sm:$0xff]
        %v665 = vld [vmem:[#allocation5 + $0x8] sm:$0x1f]
        %v666 = vld [vmem:[#allocation7] sm:$0xf]
        %v667 = vld [vmem:[#allocation7 + $0x4] sm:$0xf]
        %v668 = vld [vmem:[#allocation7 + $0x8] sm:$0xf]
        %v669 = vld [vmem:[#allocation7 + $0xc] sm:$0xf]
        %v670 = vld [vmem:[#allocation7 + $0x10] sm:$0xf]
        %v671 = vld [vmem:[#allocation7 + $0x14] sm:$0xf]
        %v672 = vld [vmem:[#allocation7 + $0x18] sm:$0xf]
        %v673 = vld [vmem:[#allocation7 + $0x1c] sm:$0xf]
        %vm674 = vcmask 523264
        %v675 = vsel %vm674, %v655, 0.0
        %v676 = vsel %vm674, %v656, 0.0
        %v677 = vadd.f32 %v675, %v676
        %v678 = vsel %vm674, %v657, 0.0
        %v679 = vadd.f32 %v677, %v678
        %v680 = vsel %vm674, %v658, 0.0
        %v681 = vadd.f32 %v679, %v680
        %v682 = vsel %vm674, %v659, 0.0
        %v683 = vadd.f32 %v681, %v682
        %v684 = vsel %vm674, %v660, 0.0
        %v685 = vadd.f32 %v683, %v684
        %v686 = vsel %vm674, %v661, 0.0
        %v687 = vadd.f32 %v685, %v686
        %v688 = vsel %vm674, %v662, 0.0
        %v689 = vadd.f32 %v687, %v688
        %v690 = vrot.slane %v689, 4
        %v691 = vadd.f32 %v689, %v690
        %v692 = vrot.slane %v691, 2
        %v693 = vadd.f32 %v691, %v692
        %v694 = vrot.slane %v693, 1
        %v695 = vadd.f32 %v693, %v694
        %v696 = vrcp.pop 64.0
        %v697 = vmul.f32 64.0, %v696
        %v698 = vsub.f32 1.0, %v697
        %v699 = vmul.f32 %v696, %v698
        %v700 = vadd.f32 %v696, %v699
        %vm701 = vweird.f32 %v696
        %v702 = vsel %vm701, %v696, %v700
        %v703 = vmul.f32 %v695, %v702
        %v704 = vpack.c.bf16 %v703, %v703
        %v713 = vunpack.c.l.b16 %v666
        %v714 = vunpack.c.l.b16 %v667
        %v715 = vunpack.c.l.b16 %v668
        %v716 = vunpack.c.l.b16 %v669
        %v717 = vunpack.c.l.b16 %v670
        %v718 = vunpack.c.l.b16 %v671
        %v719 = vunpack.c.l.b16 %v672
        %v720 = vunpack.c.l.b16 %v673
        %v721 = vpack.c.b16 %v714, %v713
        %v722 = vpack.c.b16 %v716, %v715
        %v723 = vpack.c.b16 %v718, %v717
        %v724 = vpack.c.b16 %v720, %v719
        %v730 = vsel %vm674, %v704, 0
        %732 = vmatpush.bf16.msra.mxu0 0
        %733 = vmatpush.bf16.msra.mxu0 0
        %734 = vmatpush.bf16.msra.mxu0 0
        %735 = vmatpush.bf16.msra.mxu0 0
        %736 = vmatpush.bf16.msra.mxu0 %v724
        %737 = vmatpush.bf16.msra.mxu0 %v723
        %738 = vmatpush.bf16.msra.mxu0 %v722
        %739 = vmatpush.bf16.msra.mxu0 %v721
        %740 = vmatmul.bf16.gmra.mxu0 %v730
        %v741 = vpop.f32.mrf.mxu0
        %v742 = vadd.f32 0.0, %v741
        %v743 = vpop.f32.mrf.mxu0
        %744 = vdwg.mxu0
        %v745 = vperm.slane %v742, 0
        %v746 = vsub.f32 %v655, %v745
        %v747 = vsub.f32 %v656, %v745
        %v748 = vsub.f32 %v657, %v745
        %v749 = vsub.f32 %v658, %v745
        %v750 = vsub.f32 %v659, %v745
        %v751 = vsub.f32 %v660, %v745
        %v752 = vsub.f32 %v661, %v745
        %v753 = vsub.f32 %v662, %v745
        %v754 = vmul.f32 %v746, %v746
        %v755 = vmul.f32 %v747, %v747
        %v756 = vmul.f32 %v748, %v748
        %v757 = vmul.f32 %v749, %v749
        %v758 = vmul.f32 %v750, %v750
        %v759 = vmul.f32 %v751, %v751
        %v760 = vmul.f32 %v752, %v752
        %v761 = vmul.f32 %v753, %v753
        %v762 = vsel %vm674, %v754, 0.0
        %v763 = vsel %vm674, %v755, 0.0
        %v764 = vadd.f32 %v762, %v763
        %v765 = vsel %vm674, %v756, 0.0
        %v766 = vadd.f32 %v764, %v765
        %v767 = vsel %vm674, %v757, 0.0
        %v768 = vadd.f32 %v766, %v767
        %v769 = vsel %vm674, %v758, 0.0
        %v770 = vadd.f32 %v768, %v769
        %v771 = vsel %vm674, %v759, 0.0
        %v772 = vadd.f32 %v770, %v771
        %v773 = vsel %vm674, %v760, 0.0
        %v774 = vadd.f32 %v772, %v773
        %v775 = vsel %vm674, %v761, 0.0
        %v776 = vadd.f32 %v774, %v775
        %v777 = vrot.slane %v776, 4
        %v778 = vadd.f32 %v776, %v777
        %v779 = vrot.slane %v778, 2
        %v780 = vadd.f32 %v778, %v779
        %v781 = vrot.slane %v780, 1
        %v782 = vadd.f32 %v780, %v781
        %v783 = vmul.f32 %v782, %v702
        %v784 = vpack.c.bf16 %v783, %v783
        %v786 = vsel %vm674, %v784, 0
        %788 = vmatpush.bf16.msra.mxu0 0
        %789 = vmatpush.bf16.msra.mxu0 0
        %790 = vmatpush.bf16.msra.mxu0 0
        %791 = vmatpush.bf16.msra.mxu0 0
        %792 = vmatpush.bf16.msra.mxu0 %v724
        %793 = vmatpush.bf16.msra.mxu0 %v723
        %794 = vmatpush.bf16.msra.mxu0 %v722
        %795 = vmatpush.bf16.msra.mxu0 %v721
        %796 = vmatmul.bf16.gmra.mxu0 %v786
        %v797 = vpop.f32.mrf.mxu0
        %v798 = vadd.f32 1e-05, %v797
        %v799 = vpop.f32.mrf.mxu0
        %800 = vdwg.mxu0
        %v801 = vrsqrt.pop %v798
        %v802 = vmul.f32 %v801, %v798
        %v803 = vmul.f32 %v802, %v801
        %v804 = vmul.f32 0.5, %v803
        %v805 = vsub.f32 1.5, %v804
        %v806 = vmul.f32 %v801, %v805
        %vm807 = vweird.f32 %v798
        %vm808 = vweird.f32 %v801
        %vm809 = vmor %vm807, %vm808
        %v810 = vsel %vm809, %v801, %v806
        %v811 = vperm.slane %v810, 0
        %v812 = vmul.f32 %v746, %v811
        %v813 = vmul.f32 %v747, %v811
        %v814 = vmul.f32 %v748, %v811
        %v815 = vmul.f32 %v749, %v811
        %v816 = vmul.f32 %v750, %v811
        %v817 = vmul.f32 %v751, %v811
        %v818 = vmul.f32 %v752, %v811
        %v819 = vmul.f32 %v753, %v811
        %v820 = vperm.slane %v664, 0
        %v821 = vmul.f32 %v812, %v820
        %v822 = vmul.f32 %v813, %v820
        %v823 = vmul.f32 %v814, %v820
        %v824 = vmul.f32 %v815, %v820
        %v825 = vmul.f32 %v816, %v820
        %v826 = vmul.f32 %v817, %v820
        %v827 = vmul.f32 %v818, %v820
        %v828 = vmul.f32 %v819, %v820
        %v829 = vperm.slane %v664, 1
        %v830 = vadd.f32 %v821, %v829
        %v831 = vadd.f32 %v822, %v829
        %v832 = vadd.f32 %v823, %v829
        %v833 = vadd.f32 %v824, %v829
        %v834 = vadd.f32 %v825, %v829
        %v835 = vadd.f32 %v826, %v829
        %v836 = vadd.f32 %v827, %v829
        %v837 = vadd.f32 %v828, %v829
        %v838 = vpack.c.bf16 %v831, %v830
        %v839 = vpack.c.bf16 %v833, %v832
        %v840 = vpack.c.bf16 %v835, %v834
        %v841 = vpack.c.bf16 %v837, %v836
        %v842 = vld [vmem:[#allocation8] sm:$0xf]
        %v843 = vld [vmem:[#allocation8 + $0x4] sm:$0xf]
        %v844 = vld [vmem:[#allocation8 + $0x8] sm:$0xf]
        %v845 = vld [vmem:[#allocation8 + $0xc] sm:$0xf]
        %v846 = vld [vmem:[#allocation8 + $0x10] sm:$0xf]
        %v847 = vld [vmem:[#allocation8 + $0x14] sm:$0xf]
        %v848 = vld [vmem:[#allocation8 + $0x18] sm:$0xf]
        %v849 = vld [vmem:[#allocation8 + $0x1c] sm:$0xf]
        %v850 = vperm.slane %v664, 2
        %v859 = vunpack.c.l.b16 %v842
        %v860 = vunpack.c.l.b16 %v843
        %v861 = vunpack.c.l.b16 %v844
        %v862 = vunpack.c.l.b16 %v845
        %v863 = vunpack.c.l.b16 %v846
        %v864 = vunpack.c.l.b16 %v847
        %v865 = vunpack.c.l.b16 %v848
        %v866 = vunpack.c.l.b16 %v849
        %v867 = vpack.c.b16 %v860, %v859
        %v868 = vpack.c.b16 %v862, %v861
        %v869 = vpack.c.b16 %v864, %v863
        %v870 = vpack.c.b16 %v866, %v865
        %v876 = vsel %vm674, %v838, 0
        %v879 = vsel %vm674, %v839, 0
        %v882 = vsel %vm674, %v840, 0
        %v885 = vsel %vm674, %v841, 0
        %887 = vmatpush.bf16.msra.mxu0 0
        %888 = vmatpush.bf16.msra.mxu0 0
        %889 = vmatpush.bf16.msra.mxu0 0
        %890 = vmatpush.bf16.msra.mxu0 0
        %891 = vmatpush.bf16.msra.mxu0 %v870
        %892 = vmatpush.bf16.msra.mxu0 %v869
        %893 = vmatpush.bf16.msra.mxu0 %v868
        %894 = vmatpush.bf16.msra.mxu0 %v867
        %895 = vmatmul.bf16.gmra.mxu0 %v876
        %v896 = vpop.f32.mrf.mxu0
        %v897 = vadd.f32 %v850, %v896
        %v898 = vpop.f32.mrf.mxu0
        %v899 = vadd.f32 %v850, %v898
        %900 = vmatmul.bf16.gmra.mxu0 %v879
        %v901 = vpop.f32.mrf.mxu0
        %v902 = vadd.f32 %v850, %v901
        %v903 = vpop.f32.mrf.mxu0
        %v904 = vadd.f32 %v850, %v903
        %905 = vmatmul.bf16.gmra.mxu0 %v882
        %v906 = vpop.f32.mrf.mxu0
        %v907 = vadd.f32 %v850, %v906
        %v908 = vpop.f32.mrf.mxu0
        %v909 = vadd.f32 %v850, %v908
        %910 = vmatmul.bf16.gmra.mxu0 %v885
        %v911 = vpop.f32.mrf.mxu0
        %v912 = vadd.f32 %v850, %v911
        %v913 = vpop.f32.mrf.mxu0
        %v914 = vadd.f32 %v850, %v913
        %915 = vdwg.mxu0
        %v916 = vsel %vm674, %v897, 0.0
        %917 = vadd.xlane.f32.xlu0 %v916
        %v918 = vpop.xlane.xlu0 %917
        %v919 = vsel %vm674, %v899, 0.0
        %920 = vadd.xlane.f32.xlu0 %v919
        %v921 = vpop.xlane.xlu0 %920
        %v922 = vsel %vm674, %v902, 0.0
        %923 = vadd.xlane.f32.xlu0 %v922
        %v924 = vpop.xlane.xlu0 %923
        %v925 = vsel %vm674, %v904, 0.0
        %926 = vadd.xlane.f32.xlu0 %v925
        %v927 = vpop.xlane.xlu0 %926
        %v928 = vsel %vm674, %v907, 0.0
        %929 = vadd.xlane.f32.xlu0 %v928
        %v930 = vpop.xlane.xlu0 %929
        %v931 = vsel %vm674, %v909, 0.0
        %932 = vadd.xlane.f32.xlu0 %v931
        %v933 = vpop.xlane.xlu0 %932
        %v934 = vsel %vm674, %v912, 0.0
        %935 = vadd.xlane.f32.xlu0 %v934
        %v936 = vpop.xlane.xlu0 %935
        %v937 = vsel %vm674, %v914, 0.0
        %938 = vadd.xlane.f32.xlu0 %v937
        %v939 = vpop.xlane.xlu0 %938
        %v940 = vmul.f32 %v918, %v702
        %v941 = vmul.f32 %v921, %v702
        %v942 = vmul.f32 %v924, %v702
        %v943 = vmul.f32 %v927, %v702
        %v944 = vmul.f32 %v930, %v702
        %v945 = vmul.f32 %v933, %v702
        %v946 = vmul.f32 %v936, %v702
        %v947 = vmul.f32 %v939, %v702
        %v948 = vsub.f32 %v897, %v940
        %v949 = vsub.f32 %v899, %v941
        %v950 = vsub.f32 %v902, %v942
        %v951 = vsub.f32 %v904, %v943
        %v952 = vsub.f32 %v907, %v944
        %v953 = vsub.f32 %v909, %v945
        %v954 = vsub.f32 %v912, %v946
        %v955 = vsub.f32 %v914, %v947
        %v956 = vmul.f32 %v948, %v948
        %v957 = vmul.f32 %v949, %v949
        %v958 = vmul.f32 %v950, %v950
        %v959 = vmul.f32 %v951, %v951
        %v960 = vmul.f32 %v952, %v952
        %v961 = vmul.f32 %v953, %v953
        %v962 = vmul.f32 %v954, %v954
        %v963 = vmul.f32 %v955, %v955
        %v964 = vsel %vm674, %v956, 0.0
        %965 = vadd.xlane.f32.xlu0 %v964
        %v966 = vpop.xlane.xlu0 %965
        %v967 = vsel %vm674, %v957, 0.0
        %968 = vadd.xlane.f32.xlu0 %v967
        %v969 = vpop.xlane.xlu0 %968
        %v970 = vsel %vm674, %v958, 0.0
        %971 = vadd.xlane.f32.xlu0 %v970
        %v972 = vpop.xlane.xlu0 %971
        %v973 = vsel %vm674, %v959, 0.0
        %974 = vadd.xlane.f32.xlu0 %v973
        %v975 = vpop.xlane.xlu0 %974
        %v976 = vsel %vm674, %v960, 0.0
        %977 = vadd.xlane.f32.xlu0 %v976
        %v978 = vpop.xlane.xlu0 %977
        %v979 = vsel %vm674, %v961, 0.0
        %980 = vadd.xlane.f32.xlu0 %v979
        %v981 = vpop.xlane.xlu0 %980
        %v982 = vsel %vm674, %v962, 0.0
        %983 = vadd.xlane.f32.xlu0 %v982
        %v984 = vpop.xlane.xlu0 %983
        %v985 = vsel %vm674, %v963, 0.0
        %986 = vadd.xlane.f32.xlu0 %v985
        %v987 = vpop.xlane.xlu0 %986
        %v988 = vmul.f32 %v966, %v702
        %v989 = vmul.f32 %v969, %v702
        %v990 = vmul.f32 %v972, %v702
        %v991 = vmul.f32 %v975, %v702
        %v992 = vmul.f32 %v978, %v702
        %v993 = vmul.f32 %v981, %v702
        %v994 = vmul.f32 %v984, %v702
        %v995 = vmul.f32 %v987, %v702
        %v996 = vadd.f32 %v988, 1e-05
        %v997 = vadd.f32 %v989, 1e-05
        %v998 = vadd.f32 %v990, 1e-05
        %v999 = vadd.f32 %v991, 1e-05
        %v1000 = vadd.f32 %v992, 1e-05
        %v1001 = vadd.f32 %v993, 1e-05
        %v1002 = vadd.f32 %v994, 1e-05
        %v1003 = vadd.f32 %v995, 1e-05
        %v1004 = vrsqrt.pop %v996
        %v1005 = vmul.f32 %v1004, %v996
        %v1006 = vmul.f32 %v1005, %v1004
        %v1007 = vmul.f32 0.5, %v1006
        %v1008 = vsub.f32 1.5, %v1007
        %v1009 = vmul.f32 %v1004, %v1008
        %vm1010 = vweird.f32 %v996
        %vm1011 = vweird.f32 %v1004
        %vm1012 = vmor %vm1010, %vm1011
        %v1013 = vsel %vm1012, %v1004, %v1009
        %v1014 = vrsqrt.pop %v997
        %v1015 = vmul.f32 %v1014, %v997
        %v1016 = vmul.f32 %v1015, %v1014
        %v1017 = vmul.f32 0.5, %v1016
        %v1018 = vsub.f32 1.5, %v1017
        %v1019 = vmul.f32 %v1014, %v1018
        %vm1020 = vweird.f32 %v997
        %vm1021 = vweird.f32 %v1014
        %vm1022 = vmor %vm1020, %vm1021
        %v1023 = vsel %vm1022, %v1014, %v1019
        %v1024 = vrsqrt.pop %v998
        %v1025 = vmul.f32 %v1024, %v998
        %v1026 = vmul.f32 %v1025, %v1024
        %v1027 = vmul.f32 0.5, %v1026
        %v1028 = vsub.f32 1.5, %v1027
        %v1029 = vmul.f32 %v1024, %v1028
        %vm1030 = vweird.f32 %v998
        %vm1031 = vweird.f32 %v1024
        %vm1032 = vmor %vm1030, %vm1031
        %v1033 = vsel %vm1032, %v1024, %v1029
        %v1034 = vrsqrt.pop %v999
        %v1035 = vmul.f32 %v1034, %v999
        %v1036 = vmul.f32 %v1035, %v1034
        %v1037 = vmul.f32 0.5, %v1036
        %v1038 = vsub.f32 1.5, %v1037
        %v1039 = vmul.f32 %v1034, %v1038
        %vm1040 = vweird.f32 %v999
        %vm1041 = vweird.f32 %v1034
        %vm1042 = vmor %vm1040, %vm1041
        %v1043 = vsel %vm1042, %v1034, %v1039
        %v1044 = vrsqrt.pop %v1000
        %v1045 = vmul.f32 %v1044, %v1000
        %v1046 = vmul.f32 %v1045, %v1044
        %v1047 = vmul.f32 0.5, %v1046
        %v1048 = vsub.f32 1.5, %v1047
        %v1049 = vmul.f32 %v1044, %v1048
        %vm1050 = vweird.f32 %v1000
        %vm1051 = vweird.f32 %v1044
        %vm1052 = vmor %vm1050, %vm1051
        %v1053 = vsel %vm1052, %v1044, %v1049
        %v1054 = vrsqrt.pop %v1001
        %v1055 = vmul.f32 %v1054, %v1001
        %v1056 = vmul.f32 %v1055, %v1054
        %v1057 = vmul.f32 0.5, %v1056
        %v1058 = vsub.f32 1.5, %v1057
        %v1059 = vmul.f32 %v1054, %v1058
        %vm1060 = vweird.f32 %v1001
        %vm1061 = vweird.f32 %v1054
        %vm1062 = vmor %vm1060, %vm1061
        %v1063 = vsel %vm1062, %v1054, %v1059
        %v1064 = vrsqrt.pop %v1002
        %v1065 = vmul.f32 %v1064, %v1002
        %v1066 = vmul.f32 %v1065, %v1064
        %v1067 = vmul.f32 0.5, %v1066
        %v1068 = vsub.f32 1.5, %v1067
        %v1069 = vmul.f32 %v1064, %v1068
        %vm1070 = vweird.f32 %v1002
        %vm1071 = vweird.f32 %v1064
        %vm1072 = vmor %vm1070, %vm1071
        %v1073 = vsel %vm1072, %v1064, %v1069
        %v1074 = vrsqrt.pop %v1003
        %v1075 = vmul.f32 %v1074, %v1003
        %v1076 = vmul.f32 %v1075, %v1074
        %v1077 = vmul.f32 0.5, %v1076
        %v1078 = vsub.f32 1.5, %v1077
        %v1079 = vmul.f32 %v1074, %v1078
        %vm1080 = vweird.f32 %v1003
        %vm1081 = vweird.f32 %v1074
        %vm1082 = vmor %vm1080, %vm1081
        %v1083 = vsel %vm1082, %v1074, %v1079
        %v1084 = vmul.f32 %v948, %v1013
        %v1085 = vmul.f32 %v949, %v1023
        %v1086 = vmul.f32 %v950, %v1033
        %v1087 = vmul.f32 %v951, %v1043
        %v1088 = vmul.f32 %v952, %v1053
        %v1089 = vmul.f32 %v953, %v1063
        %v1090 = vmul.f32 %v954, %v1073
        %v1091 = vmul.f32 %v955, %v1083
        %v1092 = vperm.slane %v664, 3
        %v1093 = vmul.f32 %v1084, %v1092
        %v1094 = vmul.f32 %v1085, %v1092
        %v1095 = vmul.f32 %v1086, %v1092
        %v1096 = vmul.f32 %v1087, %v1092
        %v1097 = vmul.f32 %v1088, %v1092
        %v1098 = vmul.f32 %v1089, %v1092
        %v1099 = vmul.f32 %v1090, %v1092
        %v1100 = vmul.f32 %v1091, %v1092
        %v1101 = vperm.slane %v664, 4
        %v1102 = vadd.f32 %v1093, %v1101
        %v1103 = vadd.f32 %v1094, %v1101
        %v1104 = vadd.f32 %v1095, %v1101
        %v1105 = vadd.f32 %v1096, %v1101
        %v1106 = vadd.f32 %v1097, %v1101
        %v1107 = vadd.f32 %v1098, %v1101
        %v1108 = vadd.f32 %v1099, %v1101
        %v1109 = vadd.f32 %v1100, %v1101
        %v1110 = vpack.c.bf16 %v1103, %v1102
        %v1111 = vpack.c.bf16 %v1105, %v1104
        %v1112 = vpack.c.bf16 %v1107, %v1106
        %v1113 = vpack.c.bf16 %v1109, %v1108
        %v1114 = vld [vmem:[%s5] sm:$0xff]
        %v1115 = vld [vmem:[%s5 + $0x8] sm:$0xff]
        %v1116 = vld [vmem:[%s5 + $0x10] sm:$0xff]
        %v1117 = vld [vmem:[%s5 + $0x18] sm:$0xff]
        %v1118 = vld [vmem:[%s5 + $0x20] sm:$0xff]
        %v1119 = vld [vmem:[%s5 + $0x28] sm:$0xff]
        %v1120 = vld [vmem:[%s5 + $0x30] sm:$0xff]
        %v1121 = vld [vmem:[%s5 + $0x38] sm:$0xff]
        %v1130 = vunpack.c.l.b16 %v1114
        %v1131 = vunpack.c.h.b16 %v1114
        %v1132 = vunpack.c.l.b16 %v1115
        %v1133 = vunpack.c.h.b16 %v1115
        %v1134 = vunpack.c.l.b16 %v1116
        %v1135 = vunpack.c.h.b16 %v1116
        %v1136 = vunpack.c.l.b16 %v1117
        %v1137 = vunpack.c.h.b16 %v1117
        %v1138 = vunpack.c.l.b16 %v1118
        %v1139 = vunpack.c.h.b16 %v1118
        %v1140 = vunpack.c.l.b16 %v1119
        %v1141 = vunpack.c.h.b16 %v1119
        %v1142 = vunpack.c.l.b16 %v1120
        %v1143 = vunpack.c.h.b16 %v1120
        %v1144 = vunpack.c.l.b16 %v1121
        %v1145 = vunpack.c.h.b16 %v1121
        %v1146 = vpack.c.b16 %v1132, %v1130
        %v1147 = vpack.c.b16 %v1133, %v1131
        %v1148 = vpack.c.b16 %v1136, %v1134
        %v1149 = vpack.c.b16 %v1137, %v1135
        %v1150 = vpack.c.b16 %v1140, %v1138
        %v1151 = vpack.c.b16 %v1141, %v1139
        %v1152 = vpack.c.b16 %v1144, %v1142
        %v1153 = vpack.c.b16 %v1145, %v1143
        %v1163 = vsel %vm674, %v1110, 0
        %v1166 = vsel %vm674, %v1111, 0
        %v1169 = vsel %vm674, %v1112, 0
        %v1172 = vsel %vm674, %v1113, 0
        %1174 = vmatpush.bf16.msra.mxu0 0
        %1175 = vmatpush.bf16.msra.mxu0 0
        %1176 = vmatpush.bf16.msra.mxu0 0
        %1177 = vmatpush.bf16.msra.mxu0 0
        %1178 = vmatpush.bf16.msra.mxu0 %v1152
        %1179 = vmatpush.bf16.msra.mxu0 %v1150
        %1180 = vmatpush.bf16.msra.mxu0 %v1148
        %1181 = vmatpush.bf16.msra.mxu0 %v1146
        %1182 = vmatmul.bf16.gmra.mxu0 %v1163
        %v1183 = vpop.f32.mrf.mxu0
        %v1184 = vadd.f32 0.0, %v1183
        %v1185 = vpop.f32.mrf.mxu0
        %v1186 = vadd.f32 0.0, %v1185
        %1187 = vmatmul.bf16.gmra.mxu0 %v1166
        %v1188 = vpop.f32.mrf.mxu0
        %v1189 = vadd.f32 0.0, %v1188
        %v1190 = vpop.f32.mrf.mxu0
        %v1191 = vadd.f32 0.0, %v1190
        %1192 = vmatmul.bf16.gmra.mxu0 %v1169
        %v1193 = vpop.f32.mrf.mxu0
        %v1194 = vadd.f32 0.0, %v1193
        %v1195 = vpop.f32.mrf.mxu0
        %v1196 = vadd.f32 0.0, %v1195
        %1197 = vmatmul.bf16.gmra.mxu0 %v1172
        %v1198 = vpop.f32.mrf.mxu0
        %v1199 = vadd.f32 0.0, %v1198
        %v1200 = vpop.f32.mrf.mxu0
        %v1201 = vadd.f32 0.0, %v1200
        %1202 = vdwg.mxu0
        %1203 = vmatpush.bf16.msra.mxu0 0
        %1204 = vmatpush.bf16.msra.mxu0 0
        %1205 = vmatpush.bf16.msra.mxu0 0
        %1206 = vmatpush.bf16.msra.mxu0 0
        %1207 = vmatpush.bf16.msra.mxu0 %v1153
        %1208 = vmatpush.bf16.msra.mxu0 %v1151
        %1209 = vmatpush.bf16.msra.mxu0 %v1149
        %1210 = vmatpush.bf16.msra.mxu0 %v1147
        %1211 = vmatmul.bf16.gmra.mxu0 %v1163
        %v1212 = vpop.f32.mrf.mxu0
        %v1213 = vadd.f32 0.0, %v1212
        %v1214 = vpop.f32.mrf.mxu0
        %v1215 = vadd.f32 0.0, %v1214
        %1216 = vmatmul.bf16.gmra.mxu0 %v1166
        %v1217 = vpop.f32.mrf.mxu0
        %v1218 = vadd.f32 0.0, %v1217
        %v1219 = vpop.f32.mrf.mxu0
        %v1220 = vadd.f32 0.0, %v1219
        %1221 = vmatmul.bf16.gmra.mxu0 %v1169
        %v1222 = vpop.f32.mrf.mxu0
        %v1223 = vadd.f32 0.0, %v1222
        %v1224 = vpop.f32.mrf.mxu0
        %v1225 = vadd.f32 0.0, %v1224
        %1226 = vmatmul.bf16.gmra.mxu0 %v1172
        %v1227 = vpop.f32.mrf.mxu0
        %v1228 = vadd.f32 0.0, %v1227
        %v1229 = vpop.f32.mrf.mxu0
        %v1230 = vadd.f32 0.0, %v1229
        %1231 = vdwg.mxu0
        %v1232 = vld [vmem:[#allocation10] sm:$0xf]
        %v1233 = vld [vmem:[#allocation10 + $0x4] sm:$0xf]
        %v1234 = vld [vmem:[#allocation10 + $0x8] sm:$0xf]
        %v1235 = vld [vmem:[#allocation10 + $0xc] sm:$0xf]
        %v1236 = vld [vmem:[#allocation10 + $0x10] sm:$0xf]
        %v1237 = vld [vmem:[#allocation10 + $0x14] sm:$0xf]
        %v1238 = vld [vmem:[#allocation10 + $0x18] sm:$0xf]
        %v1239 = vld [vmem:[#allocation10 + $0x1c] sm:$0xf]
        %v1240 = vpack.c.bf16 %v1186, %v1184
        %v1241 = vpack.c.bf16 %v1191, %v1189
        %v1242 = vpack.c.bf16 %v1196, %v1194
        %v1243 = vpack.c.bf16 %v1201, %v1199
        %v1244 = vpack.c.bf16 %v1215, %v1213
        %v1245 = vpack.c.bf16 %v1220, %v1218
        %v1246 = vpack.c.bf16 %v1225, %v1223
        %v1247 = vpack.c.bf16 %v1230, %v1228
        %1252 = vrot.lane.b32.xlu0 %v1240, 64
        %v1253 = vpop.permute.xlu0 %1252
        %1254 = vrot.lane.b32.xlu0 %v1241, 64
        %v1255 = vpop.permute.xlu0 %1254
        %1256 = vrot.lane.b32.xlu0 %v1242, 64
        %v1257 = vpop.permute.xlu0 %1256
        %1258 = vrot.lane.b32.xlu0 %v1243, 64
        %v1259 = vpop.permute.xlu0 %1258
        %vm1260 = vcmask 130048
        %v1262 = vsel %vm1260, %v1240, 0
        %v1265 = vsel %vm1260, %v1241, 0
        %v1268 = vsel %vm1260, %v1242, 0
        %v1271 = vsel %vm1260, %v1243, 0
        %v1274 = vsel %vm1260, %v1253, 0
        %v1277 = vsel %vm1260, %v1255, 0
        %v1280 = vsel %vm1260, %v1257, 0
        %v1283 = vsel %vm1260, %v1259, 0
        %1285 = vmatpush.bf16.xpose.msra.mxu0 0
        %1286 = vmatpush.bf16.xpose.msra.mxu0 0
        %1287 = vmatpush.bf16.xpose.msra.mxu0 0
        %1288 = vmatpush.bf16.xpose.msra.mxu0 0
        %1289 = vmatpush.bf16.xpose.msra.mxu0 %v1283
        %1290 = vmatpush.bf16.xpose.msra.mxu0 %v1280
        %1291 = vmatpush.bf16.xpose.msra.mxu0 %v1277
        %1292 = vmatpush.bf16.xpose.msra.mxu0 %v1274
        %1293 = vmatmul.bf16.gmra.mxu0 %v1262
        %v1294 = vpop.f32.mrf.mxu0
        %v1295 = vadd.f32 0.0, %v1294
        %v1296 = vpop.f32.mrf.mxu0
        %v1297 = vadd.f32 0.0, %v1296
        %1298 = vmatmul.bf16.gmra.mxu0 %v1265
        %v1299 = vpop.f32.mrf.mxu0
        %v1300 = vadd.f32 0.0, %v1299
        %v1301 = vpop.f32.mrf.mxu0
        %v1302 = vadd.f32 0.0, %v1301
        %1303 = vmatmul.bf16.gmra.mxu0 %v1268
        %v1304 = vpop.f32.mrf.mxu0
        %v1305 = vadd.f32 0.0, %v1304
        %v1306 = vpop.f32.mrf.mxu0
        %v1307 = vadd.f32 0.0, %v1306
        %1308 = vmatmul.bf16.gmra.mxu0 %v1271
        %v1309 = vpop.f32.mrf.mxu0
        %v1310 = vadd.f32 0.0, %v1309
        %v1311 = vpop.f32.mrf.mxu0
        %v1312 = vadd.f32 0.0, %v1311
        %1313 = vdwg.mxu0
        %v1314 = vsel %vm674, %v1295, -inf
        %1315 = vmax.xlane.f32.xlu0 %v1314
        %v1316 = vpop.xlane.xlu0 %1315
        %v1317 = vsel %vm674, %v1297, -inf
        %1318 = vmax.xlane.f32.xlu0 %v1317
        %v1319 = vpop.xlane.xlu0 %1318
        %v1320 = vsel %vm674, %v1300, -inf
        %1321 = vmax.xlane.f32.xlu0 %v1320
        %v1322 = vpop.xlane.xlu0 %1321
        %v1323 = vsel %vm674, %v1302, -inf
        %1324 = vmax.xlane.f32.xlu0 %v1323
        %v1325 = vpop.xlane.xlu0 %1324
        %v1326 = vsel %vm674, %v1305, -inf
        %1327 = vmax.xlane.f32.xlu0 %v1326
        %v1328 = vpop.xlane.xlu0 %1327
        %v1329 = vsel %vm674, %v1307, -inf
        %1330 = vmax.xlane.f32.xlu0 %v1329
        %v1331 = vpop.xlane.xlu0 %1330
        %v1332 = vsel %vm674, %v1310, -inf
        %1333 = vmax.xlane.f32.xlu0 %v1332
        %v1334 = vpop.xlane.xlu0 %1333
        %v1335 = vsel %vm674, %v1312, -inf
        %1336 = vmax.xlane.f32.xlu0 %v1335
        %v1337 = vpop.xlane.xlu0 %1336
        %v1338 = vsub.f32 %v1295, %v1316
        %v1339 = vsub.f32 %v1297, %v1319
        %v1340 = vsub.f32 %v1300, %v1322
        %v1341 = vsub.f32 %v1302, %v1325
        %v1342 = vsub.f32 %v1305, %v1328
        %v1343 = vsub.f32 %v1307, %v1331
        %v1344 = vsub.f32 %v1310, %v1334
        %v1345 = vsub.f32 %v1312, %v1337
        %v1346 = vmul.f32 %v1338, 1.442695
        %v1347 = vpow.pop %v1346
        %v1348 = vmul.f32 %v1339, 1.442695
        %v1349 = vpow.pop %v1348
        %v1350 = vmul.f32 %v1340, 1.442695
        %v1351 = vpow.pop %v1350
        %v1352 = vmul.f32 %v1341, 1.442695
        %v1353 = vpow.pop %v1352
        %v1354 = vmul.f32 %v1342, 1.442695
        %v1355 = vpow.pop %v1354
        %v1356 = vmul.f32 %v1343, 1.442695
        %v1357 = vpow.pop %v1356
        %v1358 = vmul.f32 %v1344, 1.442695
        %v1359 = vpow.pop %v1358
        %v1360 = vmul.f32 %v1345, 1.442695
        %v1361 = vpow.pop %v1360
        %v1362 = vsel %vm674, %v1347, 0.0
        %1363 = vadd.xlane.f32.xlu0 %v1362
        %v1364 = vpop.xlane.xlu0 %1363
        %v1365 = vsel %vm674, %v1349, 0.0
        %1366 = vadd.xlane.f32.xlu0 %v1365
        %v1367 = vpop.xlane.xlu0 %1366
        %v1368 = vsel %vm674, %v1351, 0.0
        %1369 = vadd.xlane.f32.xlu0 %v1368
        %v1370 = vpop.xlane.xlu0 %1369
        %v1371 = vsel %vm674, %v1353, 0.0
        %1372 = vadd.xlane.f32.xlu0 %v1371
        %v1373 = vpop.xlane.xlu0 %1372
        %v1374 = vsel %vm674, %v1355, 0.0
        %1375 = vadd.xlane.f32.xlu0 %v1374
        %v1376 = vpop.xlane.xlu0 %1375
        %v1377 = vsel %vm674, %v1357, 0.0
        %1378 = vadd.xlane.f32.xlu0 %v1377
        %v1379 = vpop.xlane.xlu0 %1378
        %v1380 = vsel %vm674, %v1359, 0.0
        %1381 = vadd.xlane.f32.xlu0 %v1380
        %v1382 = vpop.xlane.xlu0 %1381
        %v1383 = vsel %vm674, %v1361, 0.0
        %1384 = vadd.xlane.f32.xlu0 %v1383
        %v1385 = vpop.xlane.xlu0 %1384
        %v1386 = vrcp.pop %v1364
        %v1387 = vrcp.pop %v1367
        %v1388 = vrcp.pop %v1370
        %v1389 = vrcp.pop %v1373
        %v1390 = vrcp.pop %v1376
        %v1391 = vrcp.pop %v1379
        %v1392 = vrcp.pop %v1382
        %v1393 = vrcp.pop %v1385
        %v1394 = vmul.f32 %v1347, %v1386
        %v1395 = vmul.f32 %v1349, %v1387
        %v1396 = vmul.f32 %v1351, %v1388
        %v1397 = vmul.f32 %v1353, %v1389
        %v1398 = vmul.f32 %v1355, %v1390
        %v1399 = vmul.f32 %v1357, %v1391
        %v1400 = vmul.f32 %v1359, %v1392
        %v1401 = vmul.f32 %v1361, %v1393
        %v1402 = vpack.c.bf16 %v1395, %v1394
        %v1403 = vpack.c.bf16 %v1397, %v1396
        %v1404 = vpack.c.bf16 %v1399, %v1398
        %v1405 = vpack.c.bf16 %v1401, %v1400
        %v1407 = vsel %vm674, %v1402, 0
        %v1410 = vsel %vm674, %v1403, 0
        %v1413 = vsel %vm674, %v1404, 0
        %v1416 = vsel %vm674, %v1405, 0
        %1418 = vmatpush.bf16.msra.mxu0 0
        %1419 = vmatpush.bf16.msra.mxu0 0
        %1420 = vmatpush.bf16.msra.mxu0 0
        %1421 = vmatpush.bf16.msra.mxu0 0
        %1422 = vmatpush.bf16.msra.mxu0 %v1247
        %1423 = vmatpush.bf16.msra.mxu0 %v1246
        %1424 = vmatpush.bf16.msra.mxu0 %v1245
        %1425 = vmatpush.bf16.msra.mxu0 %v1244
        %1426 = vmatmul.bf16.gmra.mxu0 %v1407
        %v1427 = vpop.f32.mrf.mxu0
        %v1428 = vadd.f32 0.0, %v1427
        %v1429 = vpop.f32.mrf.mxu0
        %v1430 = vadd.f32 0.0, %v1429
        %1431 = vmatmul.bf16.gmra.mxu0 %v1410
        %v1432 = vpop.f32.mrf.mxu0
        %v1433 = vadd.f32 0.0, %v1432
        %v1434 = vpop.f32.mrf.mxu0
        %v1435 = vadd.f32 0.0, %v1434
        %1436 = vmatmul.bf16.gmra.mxu0 %v1413
        %v1437 = vpop.f32.mrf.mxu0
        %v1438 = vadd.f32 0.0, %v1437
        %v1439 = vpop.f32.mrf.mxu0
        %v1440 = vadd.f32 0.0, %v1439
        %1441 = vmatmul.bf16.gmra.mxu0 %v1416
        %v1442 = vpop.f32.mrf.mxu0
        %v1443 = vadd.f32 0.0, %v1442
        %v1444 = vpop.f32.mrf.mxu0
        %v1445 = vadd.f32 0.0, %v1444
        %1446 = vdwg.mxu0
        %1447 = vrot.lane.b32.xlu0 %v1240, 112
        %v1448 = vpop.permute.xlu0 %1447
        %1449 = vrot.lane.b32.xlu0 %v1241, 112
        %v1450 = vpop.permute.xlu0 %1449
        %1451 = vrot.lane.b32.xlu0 %v1242, 112
        %v1452 = vpop.permute.xlu0 %1451
        %1453 = vrot.lane.b32.xlu0 %v1243, 112
        %v1454 = vpop.permute.xlu0 %1453
        %1455 = vrot.lane.b32.xlu0 %v1240, 48
        %v1456 = vpop.permute.xlu0 %1455
        %1457 = vrot.lane.b32.xlu0 %v1241, 48
        %v1458 = vpop.permute.xlu0 %1457
        %1459 = vrot.lane.b32.xlu0 %v1242, 48
        %v1460 = vpop.permute.xlu0 %1459
        %1461 = vrot.lane.b32.xlu0 %v1243, 48
        %v1462 = vpop.permute.xlu0 %1461
        %v1464 = vsel %vm1260, %v1448, 0
        %v1467 = vsel %vm1260, %v1450, 0
        %v1470 = vsel %vm1260, %v1452, 0
        %v1473 = vsel %vm1260, %v1454, 0
        %v1476 = vsel %vm1260, %v1456, 0
        %v1479 = vsel %vm1260, %v1458, 0
        %v1482 = vsel %vm1260, %v1460, 0
        %v1485 = vsel %vm1260, %v1462, 0
        %1487 = vmatpush.bf16.xpose.msra.mxu0 0
        %1488 = vmatpush.bf16.xpose.msra.mxu0 0
        %1489 = vmatpush.bf16.xpose.msra.mxu0 0
        %1490 = vmatpush.bf16.xpose.msra.mxu0 0
        %1491 = vmatpush.bf16.xpose.msra.mxu0 %v1485
        %1492 = vmatpush.bf16.xpose.msra.mxu0 %v1482
        %1493 = vmatpush.bf16.xpose.msra.mxu0 %v1479
        %1494 = vmatpush.bf16.xpose.msra.mxu0 %v1476
        %1495 = vmatmul.bf16.gmra.mxu0 %v1464
        %v1496 = vpop.f32.mrf.mxu0
        %v1497 = vadd.f32 0.0, %v1496
        %v1498 = vpop.f32.mrf.mxu0
        %v1499 = vadd.f32 0.0, %v1498
        %1500 = vmatmul.bf16.gmra.mxu0 %v1467
        %v1501 = vpop.f32.mrf.mxu0
        %v1502 = vadd.f32 0.0, %v1501
        %v1503 = vpop.f32.mrf.mxu0
        %v1504 = vadd.f32 0.0, %v1503
        %1505 = vmatmul.bf16.gmra.mxu0 %v1470
        %v1506 = vpop.f32.mrf.mxu0
        %v1507 = vadd.f32 0.0, %v1506
        %v1508 = vpop.f32.mrf.mxu0
        %v1509 = vadd.f32 0.0, %v1508
        %1510 = vmatmul.bf16.gmra.mxu0 %v1473
        %v1511 = vpop.f32.mrf.mxu0
        %v1512 = vadd.f32 0.0, %v1511
        %v1513 = vpop.f32.mrf.mxu0
        %v1514 = vadd.f32 0.0, %v1513
        %1515 = vdwg.mxu0
        %v1516 = vsel %vm674, %v1497, -inf
        %1517 = vmax.xlane.f32.xlu0 %v1516
        %v1518 = vpop.xlane.xlu0 %1517
        %v1519 = vsel %vm674, %v1499, -inf
        %1520 = vmax.xlane.f32.xlu0 %v1519
        %v1521 = vpop.xlane.xlu0 %1520
        %v1522 = vsel %vm674, %v1502, -inf
        %1523 = vmax.xlane.f32.xlu0 %v1522
        %v1524 = vpop.xlane.xlu0 %1523
        %v1525 = vsel %vm674, %v1504, -inf
        %1526 = vmax.xlane.f32.xlu0 %v1525
        %v1527 = vpop.xlane.xlu0 %1526
        %v1528 = vsel %vm674, %v1507, -inf
        %1529 = vmax.xlane.f32.xlu0 %v1528
        %v1530 = vpop.xlane.xlu0 %1529
        %v1531 = vsel %vm674, %v1509, -inf
        %1532 = vmax.xlane.f32.xlu0 %v1531
        %v1533 = vpop.xlane.xlu0 %1532
        %v1534 = vsel %vm674, %v1512, -inf
        %1535 = vmax.xlane.f32.xlu0 %v1534
        %v1536 = vpop.xlane.xlu0 %1535
        %v1537 = vsel %vm674, %v1514, -inf
        %1538 = vmax.xlane.f32.xlu0 %v1537
        %v1539 = vpop.xlane.xlu0 %1538
        %v1540 = vsub.f32 %v1497, %v1518
        %v1541 = vsub.f32 %v1499, %v1521
        %v1542 = vsub.f32 %v1502, %v1524
        %v1543 = vsub.f32 %v1504, %v1527
        %v1544 = vsub.f32 %v1507, %v1530
        %v1545 = vsub.f32 %v1509, %v1533
        %v1546 = vsub.f32 %v1512, %v1536
        %v1547 = vsub.f32 %v1514, %v1539
        %v1548 = vmul.f32 %v1540, 1.442695
        %v1549 = vpow.pop %v1548
        %v1550 = vmul.f32 %v1541, 1.442695
        %v1551 = vpow.pop %v1550
        %v1552 = vmul.f32 %v1542, 1.442695
        %v1553 = vpow.pop %v1552
        %v1554 = vmul.f32 %v1543, 1.442695
        %v1555 = vpow.pop %v1554
        %v1556 = vmul.f32 %v1544, 1.442695
        %v1557 = vpow.pop %v1556
        %v1558 = vmul.f32 %v1545, 1.442695
        %v1559 = vpow.pop %v1558
        %v1560 = vmul.f32 %v1546, 1.442695
        %v1561 = vpow.pop %v1560
        %v1562 = vmul.f32 %v1547, 1.442695
        %v1563 = vpow.pop %v1562
        %v1564 = vsel %vm674, %v1549, 0.0
        %1565 = vadd.xlane.f32.xlu0 %v1564
        %v1566 = vpop.xlane.xlu0 %1565
        %v1567 = vsel %vm674, %v1551, 0.0
        %1568 = vadd.xlane.f32.xlu0 %v1567
        %v1569 = vpop.xlane.xlu0 %1568
        %v1570 = vsel %vm674, %v1553, 0.0
        %1571 = vadd.xlane.f32.xlu0 %v1570
        %v1572 = vpop.xlane.xlu0 %1571
        %v1573 = vsel %vm674, %v1555, 0.0
        %1574 = vadd.xlane.f32.xlu0 %v1573
        %v1575 = vpop.xlane.xlu0 %1574
        %v1576 = vsel %vm674, %v1557, 0.0
        %1577 = vadd.xlane.f32.xlu0 %v1576
        %v1578 = vpop.xlane.xlu0 %1577
        %v1579 = vsel %vm674, %v1559, 0.0
        %1580 = vadd.xlane.f32.xlu0 %v1579
        %v1581 = vpop.xlane.xlu0 %1580
        %v1582 = vsel %vm674, %v1561, 0.0
        %1583 = vadd.xlane.f32.xlu0 %v1582
        %v1584 = vpop.xlane.xlu0 %1583
        %v1585 = vsel %vm674, %v1563, 0.0
        %1586 = vadd.xlane.f32.xlu0 %v1585
        %v1587 = vpop.xlane.xlu0 %1586
        %v1588 = vrcp.pop %v1566
        %v1589 = vrcp.pop %v1569
        %v1590 = vrcp.pop %v1572
        %v1591 = vrcp.pop %v1575
        %v1592 = vrcp.pop %v1578
        %v1593 = vrcp.pop %v1581
        %v1594 = vrcp.pop %v1584
        %v1595 = vrcp.pop %v1587
        %v1596 = vmul.f32 %v1549, %v1588
        %v1597 = vmul.f32 %v1551, %v1589
        %v1598 = vmul.f32 %v1553, %v1590
        %v1599 = vmul.f32 %v1555, %v1591
        %v1600 = vmul.f32 %v1557, %v1592
        %v1601 = vmul.f32 %v1559, %v1593
        %v1602 = vmul.f32 %v1561, %v1594
        %v1603 = vmul.f32 %v1563, %v1595
        %v1604 = vpack.c.bf16 %v1597, %v1596
        %v1605 = vpack.c.bf16 %v1599, %v1598
        %v1606 = vpack.c.bf16 %v1601, %v1600
        %v1607 = vpack.c.bf16 %v1603, %v1602
        %1612 = vrot.lane.b32.xlu0 %v1244, 112
        %v1613 = vpop.permute.xlu0 %1612
        %1614 = vrot.lane.b32.xlu0 %v1245, 112
        %v1615 = vpop.permute.xlu0 %1614
        %1616 = vrot.lane.b32.xlu0 %v1246, 112
        %v1617 = vpop.permute.xlu0 %1616
        %1618 = vrot.lane.b32.xlu0 %v1247, 112
        %v1619 = vpop.permute.xlu0 %1618
        %v1625 = vsel %vm674, %v1604, 0
        %v1628 = vsel %vm674, %v1605, 0
        %v1631 = vsel %vm674, %v1606, 0
        %v1634 = vsel %vm674, %v1607, 0
        %1636 = vmatpush.bf16.msra.mxu0 0
        %1637 = vmatpush.bf16.msra.mxu0 0
        %1638 = vmatpush.bf16.msra.mxu0 0
        %1639 = vmatpush.bf16.msra.mxu0 0
        %1640 = vmatpush.bf16.msra.mxu0 %v1619
        %1641 = vmatpush.bf16.msra.mxu0 %v1617
        %1642 = vmatpush.bf16.msra.mxu0 %v1615
        %1643 = vmatpush.bf16.msra.mxu0 %v1613
        %1644 = vmatmul.bf16.gmra.mxu0 %v1625
        %v1645 = vpop.f32.mrf.mxu0
        %v1646 = vadd.f32 0.0, %v1645
        %v1647 = vpop.f32.mrf.mxu0
        %v1648 = vadd.f32 0.0, %v1647
        %1649 = vmatmul.bf16.gmra.mxu0 %v1628
        %v1650 = vpop.f32.mrf.mxu0
        %v1651 = vadd.f32 0.0, %v1650
        %v1652 = vpop.f32.mrf.mxu0
        %v1653 = vadd.f32 0.0, %v1652
        %1654 = vmatmul.bf16.gmra.mxu0 %v1631
        %v1655 = vpop.f32.mrf.mxu0
        %v1656 = vadd.f32 0.0, %v1655
        %v1657 = vpop.f32.mrf.mxu0
        %v1658 = vadd.f32 0.0, %v1657
        %1659 = vmatmul.bf16.gmra.mxu0 %v1634
        %v1660 = vpop.f32.mrf.mxu0
        %v1661 = vadd.f32 0.0, %v1660
        %v1662 = vpop.f32.mrf.mxu0
        %v1663 = vadd.f32 0.0, %v1662
        %1664 = vdwg.mxu0
        %1665 = vrot.lane.b32.xlu0 %v1240, 96
        %v1666 = vpop.permute.xlu0 %1665
        %1667 = vrot.lane.b32.xlu0 %v1241, 96
        %v1668 = vpop.permute.xlu0 %1667
        %1669 = vrot.lane.b32.xlu0 %v1242, 96
        %v1670 = vpop.permute.xlu0 %1669
        %1671 = vrot.lane.b32.xlu0 %v1243, 96
        %v1672 = vpop.permute.xlu0 %1671
        %1673 = vrot.lane.b32.xlu0 %v1240, 32
        %v1674 = vpop.permute.xlu0 %1673
        %1675 = vrot.lane.b32.xlu0 %v1241, 32
        %v1676 = vpop.permute.xlu0 %1675
        %1677 = vrot.lane.b32.xlu0 %v1242, 32
        %v1678 = vpop.permute.xlu0 %1677
        %1679 = vrot.lane.b32.xlu0 %v1243, 32
        %v1680 = vpop.permute.xlu0 %1679
        %v1682 = vsel %vm1260, %v1666, 0
        %v1685 = vsel %vm1260, %v1668, 0
        %v1688 = vsel %vm1260, %v1670, 0
        %v1691 = vsel %vm1260, %v1672, 0
        %v1694 = vsel %vm1260, %v1674, 0
        %v1697 = vsel %vm1260, %v1676, 0
        %v1700 = vsel %vm1260, %v1678, 0
        %v1703 = vsel %vm1260, %v1680, 0
        %1705 = vmatpush.bf16.xpose.msra.mxu0 0
        %1706 = vmatpush.bf16.xpose.msra.mxu0 0
        %1707 = vmatpush.bf16.xpose.msra.mxu0 0
        %1708 = vmatpush.bf16.xpose.msra.mxu0 0
        %1709 = vmatpush.bf16.xpose.msra.mxu0 %v1703
        %1710 = vmatpush.bf16.xpose.msra.mxu0 %v1700
        %1711 = vmatpush.bf16.xpose.msra.mxu0 %v1697
        %1712 = vmatpush.bf16.xpose.msra.mxu0 %v1694
        %1713 = vmatmul.bf16.gmra.mxu0 %v1682
        %v1714 = vpop.f32.mrf.mxu0
        %v1715 = vadd.f32 0.0, %v1714
        %v1716 = vpop.f32.mrf.mxu0
        %v1717 = vadd.f32 0.0, %v1716
        %1718 = vmatmul.bf16.gmra.mxu0 %v1685
        %v1719 = vpop.f32.mrf.mxu0
        %v1720 = vadd.f32 0.0, %v1719
        %v1721 = vpop.f32.mrf.mxu0
        %v1722 = vadd.f32 0.0, %v1721
        %1723 = vmatmul.bf16.gmra.mxu0 %v1688
        %v1724 = vpop.f32.mrf.mxu0
        %v1725 = vadd.f32 0.0, %v1724
        %v1726 = vpop.f32.mrf.mxu0
        %v1727 = vadd.f32 0.0, %v1726
        %1728 = vmatmul.bf16.gmra.mxu0 %v1691
        %v1729 = vpop.f32.mrf.mxu0
        %v1730 = vadd.f32 0.0, %v1729
        %v1731 = vpop.f32.mrf.mxu0
        %v1732 = vadd.f32 0.0, %v1731
        %1733 = vdwg.mxu0
        %v1734 = vsel %vm674, %v1715, -inf
        %1735 = vmax.xlane.f32.xlu0 %v1734
        %v1736 = vpop.xlane.xlu0 %1735
        %v1737 = vsel %vm674, %v1717, -inf
        %1738 = vmax.xlane.f32.xlu0 %v1737
        %v1739 = vpop.xlane.xlu0 %1738
        %v1740 = vsel %vm674, %v1720, -inf
        %1741 = vmax.xlane.f32.xlu0 %v1740
        %v1742 = vpop.xlane.xlu0 %1741
        %v1743 = vsel %vm674, %v1722, -inf
        %1744 = vmax.xlane.f32.xlu0 %v1743
        %v1745 = vpop.xlane.xlu0 %1744
        %v1746 = vsel %vm674, %v1725, -inf
        %1747 = vmax.xlane.f32.xlu0 %v1746
        %v1748 = vpop.xlane.xlu0 %1747
        %v1749 = vsel %vm674, %v1727, -inf
        %1750 = vmax.xlane.f32.xlu0 %v1749
        %v1751 = vpop.xlane.xlu0 %1750
        %v1752 = vsel %vm674, %v1730, -inf
        %1753 = vmax.xlane.f32.xlu0 %v1752
        %v1754 = vpop.xlane.xlu0 %1753
        %v1755 = vsel %vm674, %v1732, -inf
        %1756 = vmax.xlane.f32.xlu0 %v1755
        %v1757 = vpop.xlane.xlu0 %1756
        %v1758 = vsub.f32 %v1715, %v1736
        %v1759 = vsub.f32 %v1717, %v1739
        %v1760 = vsub.f32 %v1720, %v1742
        %v1761 = vsub.f32 %v1722, %v1745
        %v1762 = vsub.f32 %v1725, %v1748
        %v1763 = vsub.f32 %v1727, %v1751
        %v1764 = vsub.f32 %v1730, %v1754
        %v1765 = vsub.f32 %v1732, %v1757
        %v1766 = vmul.f32 %v1758, 1.442695
        %v1767 = vpow.pop %v1766
        %v1768 = vmul.f32 %v1759, 1.442695
        %v1769 = vpow.pop %v1768
        %v1770 = vmul.f32 %v1760, 1.442695
        %v1771 = vpow.pop %v1770
        %v1772 = vmul.f32 %v1761, 1.442695
        %v1773 = vpow.pop %v1772
        %v1774 = vmul.f32 %v1762, 1.442695
        %v1775 = vpow.pop %v1774
        %v1776 = vmul.f32 %v1763, 1.442695
        %v1777 = vpow.pop %v1776
        %v1778 = vmul.f32 %v1764, 1.442695
        %v1779 = vpow.pop %v1778
        %v1780 = vmul.f32 %v1765, 1.442695
        %v1781 = vpow.pop %v1780
        %v1782 = vsel %vm674, %v1767, 0.0
        %1783 = vadd.xlane.f32.xlu0 %v1782
        %v1784 = vpop.xlane.xlu0 %1783
        %v1785 = vsel %vm674, %v1769, 0.0
        %1786 = vadd.xlane.f32.xlu0 %v1785
        %v1787 = vpop.xlane.xlu0 %1786
        %v1788 = vsel %vm674, %v1771, 0.0
        %1789 = vadd.xlane.f32.xlu0 %v1788
        %v1790 = vpop.xlane.xlu0 %1789
        %v1791 = vsel %vm674, %v1773, 0.0
        %1792 = vadd.xlane.f32.xlu0 %v1791
        %v1793 = vpop.xlane.xlu0 %1792
        %v1794 = vsel %vm674, %v1775, 0.0
        %1795 = vadd.xlane.f32.xlu0 %v1794
        %v1796 = vpop.xlane.xlu0 %1795
        %v1797 = vsel %vm674, %v1777, 0.0
        %1798 = vadd.xlane.f32.xlu0 %v1797
        %v1799 = vpop.xlane.xlu0 %1798
        %v1800 = vsel %vm674, %v1779, 0.0
        %1801 = vadd.xlane.f32.xlu0 %v1800
        %v1802 = vpop.xlane.xlu0 %1801
        %v1803 = vsel %vm674, %v1781, 0.0
        %1804 = vadd.xlane.f32.xlu0 %v1803
        %v1805 = vpop.xlane.xlu0 %1804
        %v1806 = vrcp.pop %v1784
        %v1807 = vrcp.pop %v1787
        %v1808 = vrcp.pop %v1790
        %v1809 = vrcp.pop %v1793
        %v1810 = vrcp.pop %v1796
        %v1811 = vrcp.pop %v1799
        %v1812 = vrcp.pop %v1802
        %v1813 = vrcp.pop %v1805
        %v1814 = vmul.f32 %v1767, %v1806
        %v1815 = vmul.f32 %v1769, %v1807
        %v1816 = vmul.f32 %v1771, %v1808
        %v1817 = vmul.f32 %v1773, %v1809
        %v1818 = vmul.f32 %v1775, %v1810
        %v1819 = vmul.f32 %v1777, %v1811
        %v1820 = vmul.f32 %v1779, %v1812
        %v1821 = vmul.f32 %v1781, %v1813
        %v1822 = vpack.c.bf16 %v1815, %v1814
        %v1823 = vpack.c.bf16 %v1817, %v1816
        %v1824 = vpack.c.bf16 %v1819, %v1818
        %v1825 = vpack.c.bf16 %v1821, %v1820
        %1826 = vrot.lane.b32.xlu0 %v1244, 96
        %v1827 = vpop.permute.xlu0 %1826
        %1828 = vrot.lane.b32.xlu0 %v1245, 96
        %v1829 = vpop.permute.xlu0 %1828
        %1830 = vrot.lane.b32.xlu0 %v1246, 96
        %v1831 = vpop.permute.xlu0 %1830
        %1832 = vrot.lane.b32.xlu0 %v1247, 96
        %v1833 = vpop.permute.xlu0 %1832
        %v1839 = vsel %vm674, %v1822, 0
        %v1842 = vsel %vm674, %v1823, 0
        %v1845 = vsel %vm674, %v1824, 0
        %v1848 = vsel %vm674, %v1825, 0
        %1850 = vmatpush.bf16.msra.mxu0 0
        %1851 = vmatpush.bf16.msra.mxu0 0
        %1852 = vmatpush.bf16.msra.mxu0 0
        %1853 = vmatpush.bf16.msra.mxu0 0
        %1854 = vmatpush.bf16.msra.mxu0 %v1833
        %1855 = vmatpush.bf16.msra.mxu0 %v1831
        %1856 = vmatpush.bf16.msra.mxu0 %v1829
        %1857 = vmatpush.bf16.msra.mxu0 %v1827
        %1858 = vmatmul.bf16.gmra.mxu0 %v1839
        %v1859 = vpop.f32.mrf.mxu0
        %v1860 = vadd.f32 0.0, %v1859
        %v1861 = vpop.f32.mrf.mxu0
        %v1862 = vadd.f32 0.0, %v1861
        %1863 = vmatmul.bf16.gmra.mxu0 %v1842
        %v1864 = vpop.f32.mrf.mxu0
        %v1865 = vadd.f32 0.0, %v1864
        %v1866 = vpop.f32.mrf.mxu0
        %v1867 = vadd.f32 0.0, %v1866
        %1868 = vmatmul.bf16.gmra.mxu0 %v1845
        %v1869 = vpop.f32.mrf.mxu0
        %v1870 = vadd.f32 0.0, %v1869
        %v1871 = vpop.f32.mrf.mxu0
        %v1872 = vadd.f32 0.0, %v1871
        %1873 = vmatmul.bf16.gmra.mxu0 %v1848
        %v1874 = vpop.f32.mrf.mxu0
        %v1875 = vadd.f32 0.0, %v1874
        %v1876 = vpop.f32.mrf.mxu0
        %v1877 = vadd.f32 0.0, %v1876
        %1878 = vdwg.mxu0
        %1879 = vrot.lane.b32.xlu0 %v1240, 80
        %v1880 = vpop.permute.xlu0 %1879
        %1881 = vrot.lane.b32.xlu0 %v1241, 80
        %v1882 = vpop.permute.xlu0 %1881
        %1883 = vrot.lane.b32.xlu0 %v1242, 80
        %v1884 = vpop.permute.xlu0 %1883
        %1885 = vrot.lane.b32.xlu0 %v1243, 80
        %v1886 = vpop.permute.xlu0 %1885
        %1887 = vrot.lane.b32.xlu0 %v1240, 16
        %v1888 = vpop.permute.xlu0 %1887
        %1889 = vrot.lane.b32.xlu0 %v1241, 16
        %v1890 = vpop.permute.xlu0 %1889
        %1891 = vrot.lane.b32.xlu0 %v1242, 16
        %v1892 = vpop.permute.xlu0 %1891
        %1893 = vrot.lane.b32.xlu0 %v1243, 16
        %v1894 = vpop.permute.xlu0 %1893
        %v1896 = vsel %vm1260, %v1880, 0
        %v1899 = vsel %vm1260, %v1882, 0
        %v1902 = vsel %vm1260, %v1884, 0
        %v1905 = vsel %vm1260, %v1886, 0
        %v1908 = vsel %vm1260, %v1888, 0
        %v1911 = vsel %vm1260, %v1890, 0
        %v1914 = vsel %vm1260, %v1892, 0
        %v1917 = vsel %vm1260, %v1894, 0
        %1919 = vmatpush.bf16.xpose.msra.mxu0 0
        %1920 = vmatpush.bf16.xpose.msra.mxu0 0
        %1921 = vmatpush.bf16.xpose.msra.mxu0 0
        %1922 = vmatpush.bf16.xpose.msra.mxu0 0
        %1923 = vmatpush.bf16.xpose.msra.mxu0 %v1917
        %1924 = vmatpush.bf16.xpose.msra.mxu0 %v1914
        %1925 = vmatpush.bf16.xpose.msra.mxu0 %v1911
        %1926 = vmatpush.bf16.xpose.msra.mxu0 %v1908
        %1927 = vmatmul.bf16.gmra.mxu0 %v1896
        %v1928 = vpop.f32.mrf.mxu0
        %v1929 = vadd.f32 0.0, %v1928
        %v1930 = vpop.f32.mrf.mxu0
        %v1931 = vadd.f32 0.0, %v1930
        %1932 = vmatmul.bf16.gmra.mxu0 %v1899
        %v1933 = vpop.f32.mrf.mxu0
        %v1934 = vadd.f32 0.0, %v1933
        %v1935 = vpop.f32.mrf.mxu0
        %v1936 = vadd.f32 0.0, %v1935
        %1937 = vmatmul.bf16.gmra.mxu0 %v1902
        %v1938 = vpop.f32.mrf.mxu0
        %v1939 = vadd.f32 0.0, %v1938
        %v1940 = vpop.f32.mrf.mxu0
        %v1941 = vadd.f32 0.0, %v1940
        %1942 = vmatmul.bf16.gmra.mxu0 %v1905
        %v1943 = vpop.f32.mrf.mxu0
        %v1944 = vadd.f32 0.0, %v1943
        %v1945 = vpop.f32.mrf.mxu0
        %v1946 = vadd.f32 0.0, %v1945
        %1947 = vdwg.mxu0
        %v1948 = vsel %vm674, %v1929, -inf
        %1949 = vmax.xlane.f32.xlu0 %v1948
        %v1950 = vpop.xlane.xlu0 %1949
        %v1951 = vsel %vm674, %v1931, -inf
        %1952 = vmax.xlane.f32.xlu0 %v1951
        %v1953 = vpop.xlane.xlu0 %1952
        %v1954 = vsel %vm674, %v1934, -inf
        %1955 = vmax.xlane.f32.xlu0 %v1954
        %v1956 = vpop.xlane.xlu0 %1955
        %v1957 = vsel %vm674, %v1936, -inf
        %1958 = vmax.xlane.f32.xlu0 %v1957
        %v1959 = vpop.xlane.xlu0 %1958
        %v1960 = vsel %vm674, %v1939, -inf
        %1961 = vmax.xlane.f32.xlu0 %v1960
        %v1962 = vpop.xlane.xlu0 %1961
        %v1963 = vsel %vm674, %v1941, -inf
        %1964 = vmax.xlane.f32.xlu0 %v1963
        %v1965 = vpop.xlane.xlu0 %1964
        %v1966 = vsel %vm674, %v1944, -inf
        %1967 = vmax.xlane.f32.xlu0 %v1966
        %v1968 = vpop.xlane.xlu0 %1967
        %v1969 = vsel %vm674, %v1946, -inf
        %1970 = vmax.xlane.f32.xlu0 %v1969
        %v1971 = vpop.xlane.xlu0 %1970
        %v1972 = vsub.f32 %v1929, %v1950
        %v1973 = vsub.f32 %v1931, %v1953
        %v1974 = vsub.f32 %v1934, %v1956
        %v1975 = vsub.f32 %v1936, %v1959
        %v1976 = vsub.f32 %v1939, %v1962
        %v1977 = vsub.f32 %v1941, %v1965
        %v1978 = vsub.f32 %v1944, %v1968
        %v1979 = vsub.f32 %v1946, %v1971
        %v1980 = vmul.f32 %v1972, 1.442695
        %v1981 = vpow.pop %v1980
        %v1982 = vmul.f32 %v1973, 1.442695
        %v1983 = vpow.pop %v1982
        %v1984 = vmul.f32 %v1974, 1.442695
        %v1985 = vpow.pop %v1984
        %v1986 = vmul.f32 %v1975, 1.442695
        %v1987 = vpow.pop %v1986
        %v1988 = vmul.f32 %v1976, 1.442695
        %v1989 = vpow.pop %v1988
        %v1990 = vmul.f32 %v1977, 1.442695
        %v1991 = vpow.pop %v1990
        %v1992 = vmul.f32 %v1978, 1.442695
        %v1993 = vpow.pop %v1992
        %v1994 = vmul.f32 %v1979, 1.442695
        %v1995 = vpow.pop %v1994
        %v1996 = vsel %vm674, %v1981, 0.0
        %1997 = vadd.xlane.f32.xlu0 %v1996
        %v1998 = vpop.xlane.xlu0 %1997
        %v1999 = vsel %vm674, %v1983, 0.0
        %2000 = vadd.xlane.f32.xlu0 %v1999
        %v2001 = vpop.xlane.xlu0 %2000
        %v2002 = vsel %vm674, %v1985, 0.0
        %2003 = vadd.xlane.f32.xlu0 %v2002
        %v2004 = vpop.xlane.xlu0 %2003
        %v2005 = vsel %vm674, %v1987, 0.0
        %2006 = vadd.xlane.f32.xlu0 %v2005
        %v2007 = vpop.xlane.xlu0 %2006
        %v2008 = vsel %vm674, %v1989, 0.0
        %2009 = vadd.xlane.f32.xlu0 %v2008
        %v2010 = vpop.xlane.xlu0 %2009
        %v2011 = vsel %vm674, %v1991, 0.0
        %2012 = vadd.xlane.f32.xlu0 %v2011
        %v2013 = vpop.xlane.xlu0 %2012
        %v2014 = vsel %vm674, %v1993, 0.0
        %2015 = vadd.xlane.f32.xlu0 %v2014
        %v2016 = vpop.xlane.xlu0 %2015
        %v2017 = vsel %vm674, %v1995, 0.0
        %2018 = vadd.xlane.f32.xlu0 %v2017
        %v2019 = vpop.xlane.xlu0 %2018
        %v2020 = vrcp.pop %v1998
        %v2021 = vrcp.pop %v2001
        %v2022 = vrcp.pop %v2004
        %v2023 = vrcp.pop %v2007
        %v2024 = vrcp.pop %v2010
        %v2025 = vrcp.pop %v2013
        %v2026 = vrcp.pop %v2016
        %v2027 = vrcp.pop %v2019
        %v2028 = vmul.f32 %v1981, %v2020
        %v2029 = vmul.f32 %v1983, %v2021
        %v2030 = vmul.f32 %v1985, %v2022
        %v2031 = vmul.f32 %v1987, %v2023
        %v2032 = vmul.f32 %v1989, %v2024
        %v2033 = vmul.f32 %v1991, %v2025
        %v2034 = vmul.f32 %v1993, %v2026
        %v2035 = vmul.f32 %v1995, %v2027
        %v2036 = vpack.c.bf16 %v2029, %v2028
        %v2037 = vpack.c.bf16 %v2031, %v2030
        %v2038 = vpack.c.bf16 %v2033, %v2032
        %v2039 = vpack.c.bf16 %v2035, %v2034
        %2040 = vrot.lane.b32.xlu0 %v1244, 80
        %v2041 = vpop.permute.xlu0 %2040
        %2042 = vrot.lane.b32.xlu0 %v1245, 80
        %v2043 = vpop.permute.xlu0 %2042
        %2044 = vrot.lane.b32.xlu0 %v1246, 80
        %v2045 = vpop.permute.xlu0 %2044
        %2046 = vrot.lane.b32.xlu0 %v1247, 80
        %v2047 = vpop.permute.xlu0 %2046
        %v2053 = vsel %vm674, %v2036, 0
        %v2056 = vsel %vm674, %v2037, 0
        %v2059 = vsel %vm674, %v2038, 0
        %v2062 = vsel %vm674, %v2039, 0
        %2064 = vmatpush.bf16.msra.mxu0 0
        %2065 = vmatpush.bf16.msra.mxu0 0
        %2066 = vmatpush.bf16.msra.mxu0 0
        %2067 = vmatpush.bf16.msra.mxu0 0
        %2068 = vmatpush.bf16.msra.mxu0 %v2047
        %2069 = vmatpush.bf16.msra.mxu0 %v2045
        %2070 = vmatpush.bf16.msra.mxu0 %v2043
        %2071 = vmatpush.bf16.msra.mxu0 %v2041
        %2072 = vmatmul.bf16.gmra.mxu0 %v2053
        %v2073 = vpop.f32.mrf.mxu0
        %v2074 = vadd.f32 0.0, %v2073
        %v2075 = vpop.f32.mrf.mxu0
        %v2076 = vadd.f32 0.0, %v2075
        %2077 = vmatmul.bf16.gmra.mxu0 %v2056
        %v2078 = vpop.f32.mrf.mxu0
        %v2079 = vadd.f32 0.0, %v2078
        %v2080 = vpop.f32.mrf.mxu0
        %v2081 = vadd.f32 0.0, %v2080
        %2082 = vmatmul.bf16.gmra.mxu0 %v2059
        %v2083 = vpop.f32.mrf.mxu0
        %v2084 = vadd.f32 0.0, %v2083
        %v2085 = vpop.f32.mrf.mxu0
        %v2086 = vadd.f32 0.0, %v2085
        %2087 = vmatmul.bf16.gmra.mxu0 %v2062
        %v2088 = vpop.f32.mrf.mxu0
        %v2089 = vadd.f32 0.0, %v2088
        %v2090 = vpop.f32.mrf.mxu0
        %v2091 = vadd.f32 0.0, %v2090
        %2092 = vdwg.mxu0
        %2101 = vrot.lane.b32.xlu0 %v1646, 16
        %v2102 = vpop.permute.xlu0 %2101
        %2103 = vrot.lane.b32.xlu0 %v1648, 16
        %v2104 = vpop.permute.xlu0 %2103
        %2105 = vrot.lane.b32.xlu0 %v1651, 16
        %v2106 = vpop.permute.xlu0 %2105
        %2107 = vrot.lane.b32.xlu0 %v1653, 16
        %v2108 = vpop.permute.xlu0 %2107
        %2109 = vrot.lane.b32.xlu0 %v1656, 16
        %v2110 = vpop.permute.xlu0 %2109
        %2111 = vrot.lane.b32.xlu0 %v1658, 16
        %v2112 = vpop.permute.xlu0 %2111
        %2113 = vrot.lane.b32.xlu0 %v1661, 16
        %v2114 = vpop.permute.xlu0 %2113
        %2115 = vrot.lane.b32.xlu0 %v1663, 16
        %v2116 = vpop.permute.xlu0 %2115
        %2133 = vrot.lane.b32.xlu0 %v1860, 32
        %v2134 = vpop.permute.xlu0 %2133
        %2135 = vrot.lane.b32.xlu0 %v1862, 32
        %v2136 = vpop.permute.xlu0 %2135
        %2137 = vrot.lane.b32.xlu0 %v1865, 32
        %v2138 = vpop.permute.xlu0 %2137
        %2139 = vrot.lane.b32.xlu0 %v1867, 32
        %v2140 = vpop.permute.xlu0 %2139
        %2141 = vrot.lane.b32.xlu0 %v1870, 32
        %v2142 = vpop.permute.xlu0 %2141
        %2143 = vrot.lane.b32.xlu0 %v1872, 32
        %v2144 = vpop.permute.xlu0 %2143
        %2145 = vrot.lane.b32.xlu0 %v1875, 32
        %v2146 = vpop.permute.xlu0 %2145
        %2147 = vrot.lane.b32.xlu0 %v1877, 32
        %v2148 = vpop.permute.xlu0 %2147
        %2165 = vrot.lane.b32.xlu0 %v2074, 48
        %v2166 = vpop.permute.xlu0 %2165
        %2167 = vrot.lane.b32.xlu0 %v2076, 48
        %v2168 = vpop.permute.xlu0 %2167
        %2169 = vrot.lane.b32.xlu0 %v2079, 48
        %v2170 = vpop.permute.xlu0 %2169
        %2171 = vrot.lane.b32.xlu0 %v2081, 48
        %v2172 = vpop.permute.xlu0 %2171
        %2173 = vrot.lane.b32.xlu0 %v2084, 48
        %v2174 = vpop.permute.xlu0 %2173
        %2175 = vrot.lane.b32.xlu0 %v2086, 48
        %v2176 = vpop.permute.xlu0 %2175
        %2177 = vrot.lane.b32.xlu0 %v2089, 48
        %v2178 = vpop.permute.xlu0 %2177
        %2179 = vrot.lane.b32.xlu0 %v2091, 48
        %v2180 = vpop.permute.xlu0 %2179
        %v2189 = vsel %vm1260, %v1428, %v2102
        %v2190 = vsel %vm1260, %v1430, %v2104
        %v2191 = vsel %vm1260, %v1433, %v2106
        %v2192 = vsel %vm1260, %v1435, %v2108
        %v2193 = vsel %vm1260, %v1438, %v2110
        %v2194 = vsel %vm1260, %v1440, %v2112
        %v2195 = vsel %vm1260, %v1443, %v2114
        %v2196 = vsel %vm1260, %v1445, %v2116
        %vm2197 = vcmask 261120
        %v2198 = vsel %vm2197, %v2189, %v2134
        %v2199 = vsel %vm2197, %v2190, %v2136
        %v2200 = vsel %vm2197, %v2191, %v2138
        %v2201 = vsel %vm2197, %v2192, %v2140
        %v2202 = vsel %vm2197, %v2193, %v2142
        %v2203 = vsel %vm2197, %v2194, %v2144
        %v2204 = vsel %vm2197, %v2195, %v2146
        %v2205 = vsel %vm2197, %v2196, %v2148
        %vm2206 = vcmask 392192
        %v2207 = vsel %vm2206, %v2198, %v2166
        %v2208 = vsel %vm2206, %v2199, %v2168
        %v2209 = vsel %vm2206, %v2200, %v2170
        %v2210 = vsel %vm2206, %v2201, %v2172
        %v2211 = vsel %vm2206, %v2202, %v2174
        %v2212 = vsel %vm2206, %v2203, %v2176
        %v2213 = vsel %vm2206, %v2204, %v2178
        %v2214 = vsel %vm2206, %v2205, %v2180
        %v2215 = vpack.c.bf16 %v2208, %v2207
        %v2216 = vpack.c.bf16 %v2210, %v2209
        %v2217 = vpack.c.bf16 %v2212, %v2211
        %v2218 = vpack.c.bf16 %v2214, %v2213
        %v2219 = vperm.slane %v664, 5
        %v2228 = vunpack.c.l.b16 %v1232
        %v2229 = vunpack.c.l.b16 %v1233
        %v2230 = vunpack.c.l.b16 %v1234
        %v2231 = vunpack.c.l.b16 %v1235
        %v2232 = vunpack.c.l.b16 %v1236
        %v2233 = vunpack.c.l.b16 %v1237
        %v2234 = vunpack.c.l.b16 %v1238
        %v2235 = vunpack.c.l.b16 %v1239
        %v2236 = vpack.c.b16 %v2229, %v2228
        %v2237 = vpack.c.b16 %v2231, %v2230
        %v2238 = vpack.c.b16 %v2233, %v2232
        %v2239 = vpack.c.b16 %v2235, %v2234
        %v2245 = vsel %vm674, %v2215, 0
        %v2248 = vsel %vm674, %v2216, 0
        %v2251 = vsel %vm674, %v2217, 0
        %v2254 = vsel %vm674, %v2218, 0
        %2256 = vmatpush.bf16.msra.mxu0 0
        %2257 = vmatpush.bf16.msra.mxu0 0
        %2258 = vmatpush.bf16.msra.mxu0 0
        %2259 = vmatpush.bf16.msra.mxu0 0
        %2260 = vmatpush.bf16.msra.mxu0 %v2239
        %2261 = vmatpush.bf16.msra.mxu0 %v2238
        %2262 = vmatpush.bf16.msra.mxu0 %v2237
        %2263 = vmatpush.bf16.msra.mxu0 %v2236
        %2264 = vmatmul.bf16.gmra.mxu0 %v2245
        %v2265 = vpop.f32.mrf.mxu0
        %v2266 = vadd.f32 %v2219, %v2265
        %v2267 = vpop.f32.mrf.mxu0
        %v2268 = vadd.f32 %v2219, %v2267
        %2269 = vmatmul.bf16.gmra.mxu0 %v2248
        %v2270 = vpop.f32.mrf.mxu0
        %v2271 = vadd.f32 %v2219, %v2270
        %v2272 = vpop.f32.mrf.mxu0
        %v2273 = vadd.f32 %v2219, %v2272
        %2274 = vmatmul.bf16.gmra.mxu0 %v2251
        %v2275 = vpop.f32.mrf.mxu0
        %v2276 = vadd.f32 %v2219, %v2275
        %v2277 = vpop.f32.mrf.mxu0
        %v2278 = vadd.f32 %v2219, %v2277
        %2279 = vmatmul.bf16.gmra.mxu0 %v2254
        %v2280 = vpop.f32.mrf.mxu0
        %v2281 = vadd.f32 %v2219, %v2280
        %v2282 = vpop.f32.mrf.mxu0
        %v2283 = vadd.f32 %v2219, %v2282
        %2284 = vdwg.mxu0
        %v2285 = vadd.f32 %v2266, %v897
        %v2286 = vadd.f32 %v2268, %v899
        %v2287 = vadd.f32 %v2271, %v902
        %v2288 = vadd.f32 %v2273, %v904
        %v2289 = vadd.f32 %v2276, %v907
        %v2290 = vadd.f32 %v2278, %v909
        %v2291 = vadd.f32 %v2281, %v912
        %v2292 = vadd.f32 %v2283, %v914
        %v2293 = vsel %vm674, %v2285, 0.0
        %2294 = vadd.xlane.f32.xlu0 %v2293
        %v2295 = vpop.xlane.xlu0 %2294
        %v2296 = vsel %vm674, %v2286, 0.0
        %2297 = vadd.xlane.f32.xlu0 %v2296
        %v2298 = vpop.xlane.xlu0 %2297
        %v2299 = vsel %vm674, %v2287, 0.0
        %2300 = vadd.xlane.f32.xlu0 %v2299
        %v2301 = vpop.xlane.xlu0 %2300
        %v2302 = vsel %vm674, %v2288, 0.0
        %2303 = vadd.xlane.f32.xlu0 %v2302
        %v2304 = vpop.xlane.xlu0 %2303
        %v2305 = vsel %vm674, %v2289, 0.0
        %2306 = vadd.xlane.f32.xlu0 %v2305
        %v2307 = vpop.xlane.xlu0 %2306
        %v2308 = vsel %vm674, %v2290, 0.0
        %2309 = vadd.xlane.f32.xlu0 %v2308
        %v2310 = vpop.xlane.xlu0 %2309
        %v2311 = vsel %vm674, %v2291, 0.0
        %2312 = vadd.xlane.f32.xlu0 %v2311
        %v2313 = vpop.xlane.xlu0 %2312
        %v2314 = vsel %vm674, %v2292, 0.0
        %2315 = vadd.xlane.f32.xlu0 %v2314
        %v2316 = vpop.xlane.xlu0 %2315
        %v2317 = vmul.f32 %v2295, %v702
        %v2318 = vmul.f32 %v2298, %v702
        %v2319 = vmul.f32 %v2301, %v702
        %v2320 = vmul.f32 %v2304, %v702
        %v2321 = vmul.f32 %v2307, %v702
        %v2322 = vmul.f32 %v2310, %v702
        %v2323 = vmul.f32 %v2313, %v702
        %v2324 = vmul.f32 %v2316, %v702
        %v2325 = vsub.f32 %v2285, %v2317
        %v2326 = vsub.f32 %v2286, %v2318
        %v2327 = vsub.f32 %v2287, %v2319
        %v2328 = vsub.f32 %v2288, %v2320
        %v2329 = vsub.f32 %v2289, %v2321
        %v2330 = vsub.f32 %v2290, %v2322
        %v2331 = vsub.f32 %v2291, %v2323
        %v2332 = vsub.f32 %v2292, %v2324
        %v2333 = vmul.f32 %v2325, %v2325
        %v2334 = vmul.f32 %v2326, %v2326
        %v2335 = vmul.f32 %v2327, %v2327
        %v2336 = vmul.f32 %v2328, %v2328
        %v2337 = vmul.f32 %v2329, %v2329
        %v2338 = vmul.f32 %v2330, %v2330
        %v2339 = vmul.f32 %v2331, %v2331
        %v2340 = vmul.f32 %v2332, %v2332
        %v2341 = vsel %vm674, %v2333, 0.0
        %2342 = vadd.xlane.f32.xlu0 %v2341
        %v2343 = vpop.xlane.xlu0 %2342
        %v2344 = vsel %vm674, %v2334, 0.0
        %2345 = vadd.xlane.f32.xlu0 %v2344
        %v2346 = vpop.xlane.xlu0 %2345
        %v2347 = vsel %vm674, %v2335, 0.0
        %2348 = vadd.xlane.f32.xlu0 %v2347
        %v2349 = vpop.xlane.xlu0 %2348
        %v2350 = vsel %vm674, %v2336, 0.0
        %2351 = vadd.xlane.f32.xlu0 %v2350
        %v2352 = vpop.xlane.xlu0 %2351
        %v2353 = vsel %vm674, %v2337, 0.0
        %2354 = vadd.xlane.f32.xlu0 %v2353
        %v2355 = vpop.xlane.xlu0 %2354
        %v2356 = vsel %vm674, %v2338, 0.0
        %2357 = vadd.xlane.f32.xlu0 %v2356
        %v2358 = vpop.xlane.xlu0 %2357
        %v2359 = vsel %vm674, %v2339, 0.0
        %2360 = vadd.xlane.f32.xlu0 %v2359
        %v2361 = vpop.xlane.xlu0 %2360
        %v2362 = vsel %vm674, %v2340, 0.0
        %2363 = vadd.xlane.f32.xlu0 %v2362
        %v2364 = vpop.xlane.xlu0 %2363
        %v2365 = vmul.f32 %v2343, %v702
        %v2366 = vmul.f32 %v2346, %v702
        %v2367 = vmul.f32 %v2349, %v702
        %v2368 = vmul.f32 %v2352, %v702
        %v2369 = vmul.f32 %v2355, %v702
        %v2370 = vmul.f32 %v2358, %v702
        %v2371 = vmul.f32 %v2361, %v702
        %v2372 = vmul.f32 %v2364, %v702
        %v2373 = vadd.f32 %v2365, 1e-05
        %v2374 = vadd.f32 %v2366, 1e-05
        %v2375 = vadd.f32 %v2367, 1e-05
        %v2376 = vadd.f32 %v2368, 1e-05
        %v2377 = vadd.f32 %v2369, 1e-05
        %v2378 = vadd.f32 %v2370, 1e-05
        %v2379 = vadd.f32 %v2371, 1e-05
        %v2380 = vadd.f32 %v2372, 1e-05
        %v2381 = vrsqrt.pop %v2373
        %v2382 = vmul.f32 %v2381, %v2373
        %v2383 = vmul.f32 %v2382, %v2381
        %v2384 = vmul.f32 0.5, %v2383
        %v2385 = vsub.f32 1.5, %v2384
        %v2386 = vmul.f32 %v2381, %v2385
        %vm2387 = vweird.f32 %v2373
        %vm2388 = vweird.f32 %v2381
        %vm2389 = vmor %vm2387, %vm2388
        %v2390 = vsel %vm2389, %v2381, %v2386
        %v2391 = vrsqrt.pop %v2374
        %v2392 = vmul.f32 %v2391, %v2374
        %v2393 = vmul.f32 %v2392, %v2391
        %v2394 = vmul.f32 0.5, %v2393
        %v2395 = vsub.f32 1.5, %v2394
        %v2396 = vmul.f32 %v2391, %v2395
        %vm2397 = vweird.f32 %v2374
        %vm2398 = vweird.f32 %v2391
        %vm2399 = vmor %vm2397, %vm2398
        %v2400 = vsel %vm2399, %v2391, %v2396
        %v2401 = vrsqrt.pop %v2375
        %v2402 = vmul.f32 %v2401, %v2375
        %v2403 = vmul.f32 %v2402, %v2401
        %v2404 = vmul.f32 0.5, %v2403
        %v2405 = vsub.f32 1.5, %v2404
        %v2406 = vmul.f32 %v2401, %v2405
        %vm2407 = vweird.f32 %v2375
        %vm2408 = vweird.f32 %v2401
        %vm2409 = vmor %vm2407, %vm2408
        %v2410 = vsel %vm2409, %v2401, %v2406
        %v2411 = vrsqrt.pop %v2376
        %v2412 = vmul.f32 %v2411, %v2376
        %v2413 = vmul.f32 %v2412, %v2411
        %v2414 = vmul.f32 0.5, %v2413
        %v2415 = vsub.f32 1.5, %v2414
        %v2416 = vmul.f32 %v2411, %v2415
        %vm2417 = vweird.f32 %v2376
        %vm2418 = vweird.f32 %v2411
        %vm2419 = vmor %vm2417, %vm2418
        %v2420 = vsel %vm2419, %v2411, %v2416
        %v2421 = vrsqrt.pop %v2377
        %v2422 = vmul.f32 %v2421, %v2377
        %v2423 = vmul.f32 %v2422, %v2421
        %v2424 = vmul.f32 0.5, %v2423
        %v2425 = vsub.f32 1.5, %v2424
        %v2426 = vmul.f32 %v2421, %v2425
        %vm2427 = vweird.f32 %v2377
        %vm2428 = vweird.f32 %v2421
        %vm2429 = vmor %vm2427, %vm2428
        %v2430 = vsel %vm2429, %v2421, %v2426
        %v2431 = vrsqrt.pop %v2378
        %v2432 = vmul.f32 %v2431, %v2378
        %v2433 = vmul.f32 %v2432, %v2431
        %v2434 = vmul.f32 0.5, %v2433
        %v2435 = vsub.f32 1.5, %v2434
        %v2436 = vmul.f32 %v2431, %v2435
        %vm2437 = vweird.f32 %v2378
        %vm2438 = vweird.f32 %v2431
        %vm2439 = vmor %vm2437, %vm2438
        %v2440 = vsel %vm2439, %v2431, %v2436
        %v2441 = vrsqrt.pop %v2379
        %v2442 = vmul.f32 %v2441, %v2379
        %v2443 = vmul.f32 %v2442, %v2441
        %v2444 = vmul.f32 0.5, %v2443
        %v2445 = vsub.f32 1.5, %v2444
        %v2446 = vmul.f32 %v2441, %v2445
        %vm2447 = vweird.f32 %v2379
        %vm2448 = vweird.f32 %v2441
        %vm2449 = vmor %vm2447, %vm2448
        %v2450 = vsel %vm2449, %v2441, %v2446
        %v2451 = vrsqrt.pop %v2380
        %v2452 = vmul.f32 %v2451, %v2380
        %v2453 = vmul.f32 %v2452, %v2451
        %v2454 = vmul.f32 0.5, %v2453
        %v2455 = vsub.f32 1.5, %v2454
        %v2456 = vmul.f32 %v2451, %v2455
        %vm2457 = vweird.f32 %v2380
        %vm2458 = vweird.f32 %v2451
        %vm2459 = vmor %vm2457, %vm2458
        %v2460 = vsel %vm2459, %v2451, %v2456
        %v2461 = vmul.f32 %v2325, %v2390
        %v2462 = vmul.f32 %v2326, %v2400
        %v2463 = vmul.f32 %v2327, %v2410
        %v2464 = vmul.f32 %v2328, %v2420
        %v2465 = vmul.f32 %v2329, %v2430
        %v2466 = vmul.f32 %v2330, %v2440
        %v2467 = vmul.f32 %v2331, %v2450
        %v2468 = vmul.f32 %v2332, %v2460
        %v2469 = vperm.slane %v664, 6
        %v2470 = vmul.f32 %v2461, %v2469
        %v2471 = vmul.f32 %v2462, %v2469
        %v2472 = vmul.f32 %v2463, %v2469
        %v2473 = vmul.f32 %v2464, %v2469
        %v2474 = vmul.f32 %v2465, %v2469
        %v2475 = vmul.f32 %v2466, %v2469
        %v2476 = vmul.f32 %v2467, %v2469
        %v2477 = vmul.f32 %v2468, %v2469
        %v2478 = vperm.slane %v664, 7
        %v2479 = vadd.f32 %v2470, %v2478
        %v2480 = vadd.f32 %v2471, %v2478
        %v2481 = vadd.f32 %v2472, %v2478
        %v2482 = vadd.f32 %v2473, %v2478
        %v2483 = vadd.f32 %v2474, %v2478
        %v2484 = vadd.f32 %v2475, %v2478
        %v2485 = vadd.f32 %v2476, %v2478
        %v2486 = vadd.f32 %v2477, %v2478
        %v2487 = vpack.c.bf16 %v2480, %v2479
        %v2488 = vpack.c.bf16 %v2482, %v2481
        %v2489 = vpack.c.bf16 %v2484, %v2483
        %v2490 = vpack.c.bf16 %v2486, %v2485
        %v2491 = vld [vmem:[#allocation11] sm:$0xf]
        %v2492 = vld [vmem:[#allocation11 + $0x4] sm:$0xf]
        %v2493 = vld [vmem:[#allocation11 + $0x8] sm:$0xf]
        %v2494 = vld [vmem:[#allocation11 + $0xc] sm:$0xf]
        %v2495 = vld [vmem:[#allocation11 + $0x10] sm:$0xf]
        %v2496 = vld [vmem:[#allocation11 + $0x14] sm:$0xf]
        %v2497 = vld [vmem:[#allocation11 + $0x18] sm:$0xf]
        %v2498 = vld [vmem:[#allocation11 + $0x1c] sm:$0xf]
        %v2507 = vunpack.c.l.b16 %v2491
        %v2508 = vunpack.c.l.b16 %v2492
        %v2509 = vunpack.c.l.b16 %v2493
        %v2510 = vunpack.c.l.b16 %v2494
        %v2511 = vunpack.c.l.b16 %v2495
        %v2512 = vunpack.c.l.b16 %v2496
        %v2513 = vunpack.c.l.b16 %v2497
        %v2514 = vunpack.c.l.b16 %v2498
        %v2515 = vpack.c.b16 %v2508, %v2507
        %v2516 = vpack.c.b16 %v2510, %v2509
        %v2517 = vpack.c.b16 %v2512, %v2511
        %v2518 = vpack.c.b16 %v2514, %v2513
        %v2524 = vsel %vm674, %v2487, 0
        %v2527 = vsel %vm674, %v2488, 0
        %v2530 = vsel %vm674, %v2489, 0
        %v2533 = vsel %vm674, %v2490, 0
        %2535 = vmatpush.bf16.msra.mxu0 0
        %2536 = vmatpush.bf16.msra.mxu0 0
        %2537 = vmatpush.bf16.msra.mxu0 0
        %2538 = vmatpush.bf16.msra.mxu0 0
        %2539 = vmatpush.bf16.msra.mxu0 %v2518
        %2540 = vmatpush.bf16.msra.mxu0 %v2517
        %2541 = vmatpush.bf16.msra.mxu0 %v2516
        %2542 = vmatpush.bf16.msra.mxu0 %v2515
        %2543 = vmatmul.bf16.gmra.mxu0 %v2524
        %v2544 = vpop.f32.mrf.mxu0
        %v2545 = vadd.f32 0.0, %v2544
        %v2546 = vpop.f32.mrf.mxu0
        %v2547 = vadd.f32 0.0, %v2546
        %2548 = vmatmul.bf16.gmra.mxu0 %v2527
        %v2549 = vpop.f32.mrf.mxu0
        %v2550 = vadd.f32 0.0, %v2549
        %v2551 = vpop.f32.mrf.mxu0
        %v2552 = vadd.f32 0.0, %v2551
        %2553 = vmatmul.bf16.gmra.mxu0 %v2530
        %v2554 = vpop.f32.mrf.mxu0
        %v2555 = vadd.f32 0.0, %v2554
        %v2556 = vpop.f32.mrf.mxu0
        %v2557 = vadd.f32 0.0, %v2556
        %2558 = vmatmul.bf16.gmra.mxu0 %v2533
        %v2559 = vpop.f32.mrf.mxu0
        %v2560 = vadd.f32 0.0, %v2559
        %v2561 = vpop.f32.mrf.mxu0
        %v2562 = vadd.f32 0.0, %v2561
        %2563 = vdwg.mxu0
        %v2564 = vpack.c.bf16 %v663, %v663
        %v2565 = vld [vmem:[#allocation13] sm:$0xf]
        %v2566 = vld [vmem:[#allocation13 + $0x4] sm:$0xf]
        %v2567 = vld [vmem:[#allocation13 + $0x8] sm:$0xf]
        %v2568 = vld [vmem:[#allocation13 + $0xc] sm:$0xf]
        %v2569 = vld [vmem:[#allocation13 + $0x10] sm:$0xf]
        %v2570 = vld [vmem:[#allocation13 + $0x14] sm:$0xf]
        %v2571 = vld [vmem:[#allocation13 + $0x18] sm:$0xf]
        %v2572 = vld [vmem:[#allocation13 + $0x1c] sm:$0xf]
        %v2581 = vunpack.c.l.b16 %v2565
        %v2582 = vunpack.c.l.b16 %v2566
        %v2583 = vunpack.c.l.b16 %v2567
        %v2584 = vunpack.c.l.b16 %v2568
        %v2585 = vunpack.c.l.b16 %v2569
        %v2586 = vunpack.c.l.b16 %v2570
        %v2587 = vunpack.c.l.b16 %v2571
        %v2588 = vunpack.c.l.b16 %v2572
        %v2589 = vpack.c.b16 %v2582, %v2581
        %v2590 = vpack.c.b16 %v2584, %v2583
        %v2591 = vpack.c.b16 %v2586, %v2585
        %v2592 = vpack.c.b16 %v2588, %v2587
        %v2598 = vsel %vm674, %v2564, 0
        %2600 = vmatpush.bf16.msra.mxu0 0
        %2601 = vmatpush.bf16.msra.mxu0 0
        %2602 = vmatpush.bf16.msra.mxu0 0
        %2603 = vmatpush.bf16.msra.mxu0 0
        %2604 = vmatpush.bf16.msra.mxu0 %v2592
        %2605 = vmatpush.bf16.msra.mxu0 %v2591
        %2606 = vmatpush.bf16.msra.mxu0 %v2590
        %2607 = vmatpush.bf16.msra.mxu0 %v2589
        %2608 = vmatmul.bf16.gmra.mxu0 %v2598
        %v2609 = vpop.f32.mrf.mxu0
        %v2610 = vadd.f32 0.0, %v2609
        %v2611 = vpop.f32.mrf.mxu0
        %2612 = vdwg.mxu0
        %v2613 = vld [vmem:[#allocation14] sm:$0xf]
        %v2614 = vld [vmem:[#allocation14 + $0x4] sm:$0xf]
        %v2615 = vld [vmem:[#allocation14 + $0x8] sm:$0xf]
        %v2616 = vld [vmem:[#allocation14 + $0xc] sm:$0xf]
        %v2617 = vld [vmem:[#allocation14 + $0x10] sm:$0xf]
        %v2618 = vld [vmem:[#allocation14 + $0x14] sm:$0xf]
        %v2619 = vld [vmem:[#allocation14 + $0x18] sm:$0xf]
        %v2620 = vld [vmem:[#allocation14 + $0x1c] sm:$0xf]
        %v2621 = vpack.c.bf16 %v2547, %v2545
        %v2622 = vpack.c.bf16 %v2552, %v2550
        %v2623 = vpack.c.bf16 %v2557, %v2555
        %v2624 = vpack.c.bf16 %v2562, %v2560
        %v2625 = vpack.c.bf16 %v2610, %v2610
        %v2627 = vsel %vm1260, %v2621, 0
        %v2630 = vsel %vm1260, %v2622, 0
        %v2633 = vsel %vm1260, %v2623, 0
        %v2636 = vsel %vm1260, %v2624, 0
        %v2639 = vsel %vm1260, %v2625, 0
        %2641 = vmatpush.bf16.xpose.msra.mxu0 0
        %2642 = vmatpush.bf16.xpose.msra.mxu0 0
        %2643 = vmatpush.bf16.xpose.msra.mxu0 0
        %2644 = vmatpush.bf16.xpose.msra.mxu0 0
        %2645 = vmatpush.bf16.xpose.msra.mxu0 0
        %2646 = vmatpush.bf16.xpose.msra.mxu0 0
        %2647 = vmatpush.bf16.xpose.msra.mxu0 0
        %2648 = vmatpush.bf16.xpose.msra.mxu0 %v2639
        %2649 = vmatmul.bf16.gmra.mxu0 %v2627
        %v2650 = vpop.f32.mrf.mxu0
        %v2651 = vadd.f32 0.0, %v2650
        %v2652 = vpop.f32.mrf.mxu0
        %v2653 = vadd.f32 0.0, %v2652
        %2654 = vmatmul.bf16.gmra.mxu0 %v2630
        %v2655 = vpop.f32.mrf.mxu0
        %v2656 = vadd.f32 0.0, %v2655
        %v2657 = vpop.f32.mrf.mxu0
        %v2658 = vadd.f32 0.0, %v2657
        %2659 = vmatmul.bf16.gmra.mxu0 %v2633
        %v2660 = vpop.f32.mrf.mxu0
        %v2661 = vadd.f32 0.0, %v2660
        %v2662 = vpop.f32.mrf.mxu0
        %v2663 = vadd.f32 0.0, %v2662
        %2664 = vmatmul.bf16.gmra.mxu0 %v2636
        %v2665 = vpop.f32.mrf.mxu0
        %v2666 = vadd.f32 0.0, %v2665
        %v2667 = vpop.f32.mrf.mxu0
        %v2668 = vadd.f32 0.0, %v2667
        %2669 = vdwg.mxu0
        %vm2670 = vcmask 64512
        %v2671 = vsel %vm2670, %v2651, -inf
        %2672 = vmax.xlane.f32.xlu0 %v2671
        %v2673 = vpop.xlane.xlu0 %2672
        %v2674 = vsel %vm2670, %v2653, -inf
        %2675 = vmax.xlane.f32.xlu0 %v2674
        %v2676 = vpop.xlane.xlu0 %2675
        %v2677 = vsel %vm2670, %v2656, -inf
        %2678 = vmax.xlane.f32.xlu0 %v2677
        %v2679 = vpop.xlane.xlu0 %2678
        %v2680 = vsel %vm2670, %v2658, -inf
        %2681 = vmax.xlane.f32.xlu0 %v2680
        %v2682 = vpop.xlane.xlu0 %2681
        %v2683 = vsel %vm2670, %v2661, -inf
        %2684 = vmax.xlane.f32.xlu0 %v2683
        %v2685 = vpop.xlane.xlu0 %2684
        %v2686 = vsel %vm2670, %v2663, -inf
        %2687 = vmax.xlane.f32.xlu0 %v2686
        %v2688 = vpop.xlane.xlu0 %2687
        %v2689 = vsel %vm2670, %v2666, -inf
        %2690 = vmax.xlane.f32.xlu0 %v2689
        %v2691 = vpop.xlane.xlu0 %2690
        %v2692 = vsel %vm2670, %v2668, -inf
        %2693 = vmax.xlane.f32.xlu0 %v2692
        %v2694 = vpop.xlane.xlu0 %2693
        %v2695 = vsub.f32 %v2651, %v2673
        %v2696 = vsub.f32 %v2653, %v2676
        %v2697 = vsub.f32 %v2656, %v2679
        %v2698 = vsub.f32 %v2658, %v2682
        %v2699 = vsub.f32 %v2661, %v2685
        %v2700 = vsub.f32 %v2663, %v2688
        %v2701 = vsub.f32 %v2666, %v2691
        %v2702 = vsub.f32 %v2668, %v2694
        %v2703 = vmul.f32 %v2695, 1.442695
        %v2704 = vpow.pop %v2703
        %v2705 = vmul.f32 %v2696, 1.442695
        %v2706 = vpow.pop %v2705
        %v2707 = vmul.f32 %v2697, 1.442695
        %v2708 = vpow.pop %v2707
        %v2709 = vmul.f32 %v2698, 1.442695
        %v2710 = vpow.pop %v2709
        %v2711 = vmul.f32 %v2699, 1.442695
        %v2712 = vpow.pop %v2711
        %v2713 = vmul.f32 %v2700, 1.442695
        %v2714 = vpow.pop %v2713
        %v2715 = vmul.f32 %v2701, 1.442695
        %v2716 = vpow.pop %v2715
        %v2717 = vmul.f32 %v2702, 1.442695
        %v2718 = vpow.pop %v2717
        %v2719 = vsel %vm2670, %v2704, 0.0
        %2720 = vadd.xlane.f32.xlu0 %v2719
        %v2721 = vpop.xlane.xlu0 %2720
        %v2722 = vsel %vm2670, %v2706, 0.0
        %2723 = vadd.xlane.f32.xlu0 %v2722
        %v2724 = vpop.xlane.xlu0 %2723
        %v2725 = vsel %vm2670, %v2708, 0.0
        %2726 = vadd.xlane.f32.xlu0 %v2725
        %v2727 = vpop.xlane.xlu0 %2726
        %v2728 = vsel %vm2670, %v2710, 0.0
        %2729 = vadd.xlane.f32.xlu0 %v2728
        %v2730 = vpop.xlane.xlu0 %2729
        %v2731 = vsel %vm2670, %v2712, 0.0
        %2732 = vadd.xlane.f32.xlu0 %v2731
        %v2733 = vpop.xlane.xlu0 %2732
        %v2734 = vsel %vm2670, %v2714, 0.0
        %2735 = vadd.xlane.f32.xlu0 %v2734
        %v2736 = vpop.xlane.xlu0 %2735
        %v2737 = vsel %vm2670, %v2716, 0.0
        %2738 = vadd.xlane.f32.xlu0 %v2737
        %v2739 = vpop.xlane.xlu0 %2738
        %v2740 = vsel %vm2670, %v2718, 0.0
        %2741 = vadd.xlane.f32.xlu0 %v2740
        %v2742 = vpop.xlane.xlu0 %2741
        %v2743 = vrcp.pop %v2721
        %v2744 = vrcp.pop %v2724
        %v2745 = vrcp.pop %v2727
        %v2746 = vrcp.pop %v2730
        %v2747 = vrcp.pop %v2733
        %v2748 = vrcp.pop %v2736
        %v2749 = vrcp.pop %v2739
        %v2750 = vrcp.pop %v2742
        %v2751 = vmul.f32 %v2704, %v2743
        %v2752 = vmul.f32 %v2706, %v2744
        %v2753 = vmul.f32 %v2708, %v2745
        %v2754 = vmul.f32 %v2710, %v2746
        %v2755 = vmul.f32 %v2712, %v2747
        %v2756 = vmul.f32 %v2714, %v2748
        %v2757 = vmul.f32 %v2716, %v2749
        %v2758 = vmul.f32 %v2718, %v2750
        %v2759 = vpack.c.bf16 %v2752, %v2751
        %v2760 = vpack.c.bf16 %v2754, %v2753
        %v2761 = vpack.c.bf16 %v2756, %v2755
        %v2762 = vpack.c.bf16 %v2758, %v2757
        %2764 = vrot.lane.b32.xlu0 %v2625, 64
        %v2765 = vpop.permute.xlu0 %2764
        %v2767 = vsel %vm2670, %v2759, 0
        %v2770 = vsel %vm2670, %v2760, 0
        %v2773 = vsel %vm2670, %v2761, 0
        %v2776 = vsel %vm2670, %v2762, 0
        %vm2778 = vcmask 1043456
        %v2780 = vsel %vm2778, %v2765, 0
        %2782 = vmatpush.bf16.msra.mxu0 0
        %2783 = vmatpush.bf16.msra.mxu0 0
        %2784 = vmatpush.bf16.msra.mxu0 0
        %2785 = vmatpush.bf16.msra.mxu0 0
        %2786 = vmatpush.bf16.msra.mxu0 0
        %2787 = vmatpush.bf16.msra.mxu0 0
        %2788 = vmatpush.bf16.msra.mxu0 0
        %2789 = vmatpush.bf16.msra.mxu0 %v2780
        %2790 = vmatmul.bf16.gmra.mxu0 %v2767
        %v2791 = vpop.f32.mrf.mxu0
        %v2792 = vadd.f32 0.0, %v2791
        %v2793 = vpop.f32.mrf.mxu0
        %v2794 = vadd.f32 0.0, %v2793
        %2795 = vmatmul.bf16.gmra.mxu0 %v2770
        %v2796 = vpop.f32.mrf.mxu0
        %v2797 = vadd.f32 0.0, %v2796
        %v2798 = vpop.f32.mrf.mxu0
        %v2799 = vadd.f32 0.0, %v2798
        %2800 = vmatmul.bf16.gmra.mxu0 %v2773
        %v2801 = vpop.f32.mrf.mxu0
        %v2802 = vadd.f32 0.0, %v2801
        %v2803 = vpop.f32.mrf.mxu0
        %v2804 = vadd.f32 0.0, %v2803
        %2805 = vmatmul.bf16.gmra.mxu0 %v2776
        %v2806 = vpop.f32.mrf.mxu0
        %v2807 = vadd.f32 0.0, %v2806
        %v2808 = vpop.f32.mrf.mxu0
        %v2809 = vadd.f32 0.0, %v2808
        %2810 = vdwg.mxu0
        %2815 = vrot.lane.b32.xlu0 %v2621, 112
        %v2816 = vpop.permute.xlu0 %2815
        %2817 = vrot.lane.b32.xlu0 %v2622, 112
        %v2818 = vpop.permute.xlu0 %2817
        %2819 = vrot.lane.b32.xlu0 %v2623, 112
        %v2820 = vpop.permute.xlu0 %2819
        %2821 = vrot.lane.b32.xlu0 %v2624, 112
        %v2822 = vpop.permute.xlu0 %2821
        %2823 = vrot.lane.b32.xlu0 %v2625, 112
        %v2824 = vpop.permute.xlu0 %2823
        %v2826 = vsel %vm1260, %v2816, 0
        %v2829 = vsel %vm1260, %v2818, 0
        %v2832 = vsel %vm1260, %v2820, 0
        %v2835 = vsel %vm1260, %v2822, 0
        %v2838 = vsel %vm1260, %v2824, 0
        %2840 = vmatpush.bf16.xpose.msra.mxu0 0
        %2841 = vmatpush.bf16.xpose.msra.mxu0 0
        %2842 = vmatpush.bf16.xpose.msra.mxu0 0
        %2843 = vmatpush.bf16.xpose.msra.mxu0 0
        %2844 = vmatpush.bf16.xpose.msra.mxu0 0
        %2845 = vmatpush.bf16.xpose.msra.mxu0 0
        %2846 = vmatpush.bf16.xpose.msra.mxu0 0
        %2847 = vmatpush.bf16.xpose.msra.mxu0 %v2838
        %2848 = vmatmul.bf16.gmra.mxu0 %v2826
        %v2849 = vpop.f32.mrf.mxu0
        %v2850 = vadd.f32 0.0, %v2849
        %v2851 = vpop.f32.mrf.mxu0
        %v2852 = vadd.f32 0.0, %v2851
        %2853 = vmatmul.bf16.gmra.mxu0 %v2829
        %v2854 = vpop.f32.mrf.mxu0
        %v2855 = vadd.f32 0.0, %v2854
        %v2856 = vpop.f32.mrf.mxu0
        %v2857 = vadd.f32 0.0, %v2856
        %2858 = vmatmul.bf16.gmra.mxu0 %v2832
        %v2859 = vpop.f32.mrf.mxu0
        %v2860 = vadd.f32 0.0, %v2859
        %v2861 = vpop.f32.mrf.mxu0
        %v2862 = vadd.f32 0.0, %v2861
        %2863 = vmatmul.bf16.gmra.mxu0 %v2835
        %v2864 = vpop.f32.mrf.mxu0
        %v2865 = vadd.f32 0.0, %v2864
        %v2866 = vpop.f32.mrf.mxu0
        %v2867 = vadd.f32 0.0, %v2866
        %2868 = vdwg.mxu0
        %v2869 = vsel %vm2670, %v2850, -inf
        %2870 = vmax.xlane.f32.xlu0 %v2869
        %v2871 = vpop.xlane.xlu0 %2870
        %v2872 = vsel %vm2670, %v2852, -inf
        %2873 = vmax.xlane.f32.xlu0 %v2872
        %v2874 = vpop.xlane.xlu0 %2873
        %v2875 = vsel %vm2670, %v2855, -inf
        %2876 = vmax.xlane.f32.xlu0 %v2875
        %v2877 = vpop.xlane.xlu0 %2876
        %v2878 = vsel %vm2670, %v2857, -inf
        %2879 = vmax.xlane.f32.xlu0 %v2878
        %v2880 = vpop.xlane.xlu0 %2879
        %v2881 = vsel %vm2670, %v2860, -inf
        %2882 = vmax.xlane.f32.xlu0 %v2881
        %v2883 = vpop.xlane.xlu0 %2882
        %v2884 = vsel %vm2670, %v2862, -inf
        %2885 = vmax.xlane.f32.xlu0 %v2884
        %v2886 = vpop.xlane.xlu0 %2885
        %v2887 = vsel %vm2670, %v2865, -inf
        %2888 = vmax.xlane.f32.xlu0 %v2887
        %v2889 = vpop.xlane.xlu0 %2888
        %v2890 = vsel %vm2670, %v2867, -inf
        %2891 = vmax.xlane.f32.xlu0 %v2890
        %v2892 = vpop.xlane.xlu0 %2891
        %v2893 = vsub.f32 %v2850, %v2871
        %v2894 = vsub.f32 %v2852, %v2874
        %v2895 = vsub.f32 %v2855, %v2877
        %v2896 = vsub.f32 %v2857, %v2880
        %v2897 = vsub.f32 %v2860, %v2883
        %v2898 = vsub.f32 %v2862, %v2886
        %v2899 = vsub.f32 %v2865, %v2889
        %v2900 = vsub.f32 %v2867, %v2892
        %v2901 = vmul.f32 %v2893, 1.442695
        %v2902 = vpow.pop %v2901
        %v2903 = vmul.f32 %v2894, 1.442695
        %v2904 = vpow.pop %v2903
        %v2905 = vmul.f32 %v2895, 1.442695
        %v2906 = vpow.pop %v2905
        %v2907 = vmul.f32 %v2896, 1.442695
        %v2908 = vpow.pop %v2907
        %v2909 = vmul.f32 %v2897, 1.442695
        %v2910 = vpow.pop %v2909
        %v2911 = vmul.f32 %v2898, 1.442695
        %v2912 = vpow.pop %v2911
        %v2913 = vmul.f32 %v2899, 1.442695
        %v2914 = vpow.pop %v2913
        %v2915 = vmul.f32 %v2900, 1.442695
        %v2916 = vpow.pop %v2915
        %v2917 = vsel %vm2670, %v2902, 0.0
        %2918 = vadd.xlane.f32.xlu0 %v2917
        %v2919 = vpop.xlane.xlu0 %2918
        %v2920 = vsel %vm2670, %v2904, 0.0
        %2921 = vadd.xlane.f32.xlu0 %v2920
        %v2922 = vpop.xlane.xlu0 %2921
        %v2923 = vsel %vm2670, %v2906, 0.0
        %2924 = vadd.xlane.f32.xlu0 %v2923
        %v2925 = vpop.xlane.xlu0 %2924
        %v2926 = vsel %vm2670, %v2908, 0.0
        %2927 = vadd.xlane.f32.xlu0 %v2926
        %v2928 = vpop.xlane.xlu0 %2927
        %v2929 = vsel %vm2670, %v2910, 0.0
        %2930 = vadd.xlane.f32.xlu0 %v2929
        %v2931 = vpop.xlane.xlu0 %2930
        %v2932 = vsel %vm2670, %v2912, 0.0
        %2933 = vadd.xlane.f32.xlu0 %v2932
        %v2934 = vpop.xlane.xlu0 %2933
        %v2935 = vsel %vm2670, %v2914, 0.0
        %2936 = vadd.xlane.f32.xlu0 %v2935
        %v2937 = vpop.xlane.xlu0 %2936
        %v2938 = vsel %vm2670, %v2916, 0.0
        %2939 = vadd.xlane.f32.xlu0 %v2938
        %v2940 = vpop.xlane.xlu0 %2939
        %v2941 = vrcp.pop %v2919
        %v2942 = vrcp.pop %v2922
        %v2943 = vrcp.pop %v2925
        %v2944 = vrcp.pop %v2928
        %v2945 = vrcp.pop %v2931
        %v2946 = vrcp.pop %v2934
        %v2947 = vrcp.pop %v2937
        %v2948 = vrcp.pop %v2940
        %v2949 = vmul.f32 %v2902, %v2941
        %v2950 = vmul.f32 %v2904, %v2942
        %v2951 = vmul.f32 %v2906, %v2943
        %v2952 = vmul.f32 %v2908, %v2944
        %v2953 = vmul.f32 %v2910, %v2945
        %v2954 = vmul.f32 %v2912, %v2946
        %v2955 = vmul.f32 %v2914, %v2947
        %v2956 = vmul.f32 %v2916, %v2948
        %v2957 = vpack.c.bf16 %v2950, %v2949
        %v2958 = vpack.c.bf16 %v2952, %v2951
        %v2959 = vpack.c.bf16 %v2954, %v2953
        %v2960 = vpack.c.bf16 %v2956, %v2955
        %2961 = vrot.lane.b32.xlu0 %v2625, 48
        %v2962 = vpop.permute.xlu0 %2961
        %v2964 = vsel %vm2670, %v2957, 0
        %v2967 = vsel %vm2670, %v2958, 0
        %v2970 = vsel %vm2670, %v2959, 0
        %v2973 = vsel %vm2670, %v2960, 0
        %v2976 = vsel %vm2778, %v2962, 0
        %2978 = vmatpush.bf16.msra.mxu0 0
        %2979 = vmatpush.bf16.msra.mxu0 0
        %2980 = vmatpush.bf16.msra.mxu0 0
        %2981 = vmatpush.bf16.msra.mxu0 0
        %2982 = vmatpush.bf16.msra.mxu0 0
        %2983 = vmatpush.bf16.msra.mxu0 0
        %2984 = vmatpush.bf16.msra.mxu0 0
        %2985 = vmatpush.bf16.msra.mxu0 %v2976
        %2986 = vmatmul.bf16.gmra.mxu0 %v2964
        %v2987 = vpop.f32.mrf.mxu0
        %v2988 = vadd.f32 0.0, %v2987
        %v2989 = vpop.f32.mrf.mxu0
        %v2990 = vadd.f32 0.0, %v2989
        %2991 = vmatmul.bf16.gmra.mxu0 %v2967
        %v2992 = vpop.f32.mrf.mxu0
        %v2993 = vadd.f32 0.0, %v2992
        %v2994 = vpop.f32.mrf.mxu0
        %v2995 = vadd.f32 0.0, %v2994
        %2996 = vmatmul.bf16.gmra.mxu0 %v2970
        %v2997 = vpop.f32.mrf.mxu0
        %v2998 = vadd.f32 0.0, %v2997
        %v2999 = vpop.f32.mrf.mxu0
        %v3000 = vadd.f32 0.0, %v2999
        %3001 = vmatmul.bf16.gmra.mxu0 %v2973
        %v3002 = vpop.f32.mrf.mxu0
        %v3003 = vadd.f32 0.0, %v3002
        %v3004 = vpop.f32.mrf.mxu0
        %v3005 = vadd.f32 0.0, %v3004
        %3006 = vdwg.mxu0
        %3007 = vrot.lane.b32.xlu0 %v2621, 96
        %v3008 = vpop.permute.xlu0 %3007
        %3009 = vrot.lane.b32.xlu0 %v2622, 96
        %v3010 = vpop.permute.xlu0 %3009
        %3011 = vrot.lane.b32.xlu0 %v2623, 96
        %v3012 = vpop.permute.xlu0 %3011
        %3013 = vrot.lane.b32.xlu0 %v2624, 96
        %v3014 = vpop.permute.xlu0 %3013
        %3015 = vrot.lane.b32.xlu0 %v2625, 96
        %v3016 = vpop.permute.xlu0 %3015
        %v3018 = vsel %vm1260, %v3008, 0
        %v3021 = vsel %vm1260, %v3010, 0
        %v3024 = vsel %vm1260, %v3012, 0
        %v3027 = vsel %vm1260, %v3014, 0
        %v3030 = vsel %vm1260, %v3016, 0
        %3032 = vmatpush.bf16.xpose.msra.mxu0 0
        %3033 = vmatpush.bf16.xpose.msra.mxu0 0
        %3034 = vmatpush.bf16.xpose.msra.mxu0 0
        %3035 = vmatpush.bf16.xpose.msra.mxu0 0
        %3036 = vmatpush.bf16.xpose.msra.mxu0 0
        %3037 = vmatpush.bf16.xpose.msra.mxu0 0
        %3038 = vmatpush.bf16.xpose.msra.mxu0 0
        %3039 = vmatpush.bf16.xpose.msra.mxu0 %v3030
        %3040 = vmatmul.bf16.gmra.mxu0 %v3018
        %v3041 = vpop.f32.mrf.mxu0
        %v3042 = vadd.f32 0.0, %v3041
        %v3043 = vpop.f32.mrf.mxu0
        %v3044 = vadd.f32 0.0, %v3043
        %3045 = vmatmul.bf16.gmra.mxu0 %v3021
        %v3046 = vpop.f32.mrf.mxu0
        %v3047 = vadd.f32 0.0, %v3046
        %v3048 = vpop.f32.mrf.mxu0
        %v3049 = vadd.f32 0.0, %v3048
        %3050 = vmatmul.bf16.gmra.mxu0 %v3024
        %v3051 = vpop.f32.mrf.mxu0
        %v3052 = vadd.f32 0.0, %v3051
        %v3053 = vpop.f32.mrf.mxu0
        %v3054 = vadd.f32 0.0, %v3053
        %3055 = vmatmul.bf16.gmra.mxu0 %v3027
        %v3056 = vpop.f32.mrf.mxu0
        %v3057 = vadd.f32 0.0, %v3056
        %v3058 = vpop.f32.mrf.mxu0
        %v3059 = vadd.f32 0.0, %v3058
        %3060 = vdwg.mxu0
        %v3061 = vsel %vm2670, %v3042, -inf
        %3062 = vmax.xlane.f32.xlu0 %v3061
        %v3063 = vpop.xlane.xlu0 %3062
        %v3064 = vsel %vm2670, %v3044, -inf
        %3065 = vmax.xlane.f32.xlu0 %v3064
        %v3066 = vpop.xlane.xlu0 %3065
        %v3067 = vsel %vm2670, %v3047, -inf
        %3068 = vmax.xlane.f32.xlu0 %v3067
        %v3069 = vpop.xlane.xlu0 %3068
        %v3070 = vsel %vm2670, %v3049, -inf
        %3071 = vmax.xlane.f32.xlu0 %v3070
        %v3072 = vpop.xlane.xlu0 %3071
        %v3073 = vsel %vm2670, %v3052, -inf
        %3074 = vmax.xlane.f32.xlu0 %v3073
        %v3075 = vpop.xlane.xlu0 %3074
        %v3076 = vsel %vm2670, %v3054, -inf
        %3077 = vmax.xlane.f32.xlu0 %v3076
        %v3078 = vpop.xlane.xlu0 %3077
        %v3079 = vsel %vm2670, %v3057, -inf
        %3080 = vmax.xlane.f32.xlu0 %v3079
        %v3081 = vpop.xlane.xlu0 %3080
        %v3082 = vsel %vm2670, %v3059, -inf
        %3083 = vmax.xlane.f32.xlu0 %v3082
        %v3084 = vpop.xlane.xlu0 %3083
        %v3085 = vsub.f32 %v3042, %v3063
        %v3086 = vsub.f32 %v3044, %v3066
        %v3087 = vsub.f32 %v3047, %v3069
        %v3088 = vsub.f32 %v3049, %v3072
        %v3089 = vsub.f32 %v3052, %v3075
        %v3090 = vsub.f32 %v3054, %v3078
        %v3091 = vsub.f32 %v3057, %v3081
        %v3092 = vsub.f32 %v3059, %v3084
        %v3093 = vmul.f32 %v3085, 1.442695
        %v3094 = vpow.pop %v3093
        %v3095 = vmul.f32 %v3086, 1.442695
        %v3096 = vpow.pop %v3095
        %v3097 = vmul.f32 %v3087, 1.442695
        %v3098 = vpow.pop %v3097
        %v3099 = vmul.f32 %v3088, 1.442695
        %v3100 = vpow.pop %v3099
        %v3101 = vmul.f32 %v3089, 1.442695
        %v3102 = vpow.pop %v3101
        %v3103 = vmul.f32 %v3090, 1.442695
        %v3104 = vpow.pop %v3103
        %v3105 = vmul.f32 %v3091, 1.442695
        %v3106 = vpow.pop %v3105
        %v3107 = vmul.f32 %v3092, 1.442695
        %v3108 = vpow.pop %v3107
        %v3109 = vsel %vm2670, %v3094, 0.0
        %3110 = vadd.xlane.f32.xlu0 %v3109
        %v3111 = vpop.xlane.xlu0 %3110
        %v3112 = vsel %vm2670, %v3096, 0.0
        %3113 = vadd.xlane.f32.xlu0 %v3112
        %v3114 = vpop.xlane.xlu0 %3113
        %v3115 = vsel %vm2670, %v3098, 0.0
        %3116 = vadd.xlane.f32.xlu0 %v3115
        %v3117 = vpop.xlane.xlu0 %3116
        %v3118 = vsel %vm2670, %v3100, 0.0
        %3119 = vadd.xlane.f32.xlu0 %v3118
        %v3120 = vpop.xlane.xlu0 %3119
        %v3121 = vsel %vm2670, %v3102, 0.0
        %3122 = vadd.xlane.f32.xlu0 %v3121
        %v3123 = vpop.xlane.xlu0 %3122
        %v3124 = vsel %vm2670, %v3104, 0.0
        %3125 = vadd.xlane.f32.xlu0 %v3124
        %v3126 = vpop.xlane.xlu0 %3125
        %v3127 = vsel %vm2670, %v3106, 0.0
        %3128 = vadd.xlane.f32.xlu0 %v3127
        %v3129 = vpop.xlane.xlu0 %3128
        %v3130 = vsel %vm2670, %v3108, 0.0
        %3131 = vadd.xlane.f32.xlu0 %v3130
        %v3132 = vpop.xlane.xlu0 %3131
        %v3133 = vrcp.pop %v3111
        %v3134 = vrcp.pop %v3114
        %v3135 = vrcp.pop %v3117
        %v3136 = vrcp.pop %v3120
        %v3137 = vrcp.pop %v3123
        %v3138 = vrcp.pop %v3126
        %v3139 = vrcp.pop %v3129
        %v3140 = vrcp.pop %v3132
        %v3141 = vmul.f32 %v3094, %v3133
        %v3142 = vmul.f32 %v3096, %v3134
        %v3143 = vmul.f32 %v3098, %v3135
        %v3144 = vmul.f32 %v3100, %v3136
        %v3145 = vmul.f32 %v3102, %v3137
        %v3146 = vmul.f32 %v3104, %v3138
        %v3147 = vmul.f32 %v3106, %v3139
        %v3148 = vmul.f32 %v3108, %v3140
        %v3149 = vpack.c.bf16 %v3142, %v3141
        %v3150 = vpack.c.bf16 %v3144, %v3143
        %v3151 = vpack.c.bf16 %v3146, %v3145
        %v3152 = vpack.c.bf16 %v3148, %v3147
        %3153 = vrot.lane.b32.xlu0 %v2625, 32
        %v3154 = vpop.permute.xlu0 %3153
        %v3156 = vsel %vm2670, %v3149, 0
        %v3159 = vsel %vm2670, %v3150, 0
        %v3162 = vsel %vm2670, %v3151, 0
        %v3165 = vsel %vm2670, %v3152, 0
        %v3168 = vsel %vm2778, %v3154, 0
        %3170 = vmatpush.bf16.msra.mxu0 0
        %3171 = vmatpush.bf16.msra.mxu0 0
        %3172 = vmatpush.bf16.msra.mxu0 0
        %3173 = vmatpush.bf16.msra.mxu0 0
        %3174 = vmatpush.bf16.msra.mxu0 0
        %3175 = vmatpush.bf16.msra.mxu0 0
        %3176 = vmatpush.bf16.msra.mxu0 0
        %3177 = vmatpush.bf16.msra.mxu0 %v3168
        %3178 = vmatmul.bf16.gmra.mxu0 %v3156
        %v3179 = vpop.f32.mrf.mxu0
        %v3180 = vadd.f32 0.0, %v3179
        %v3181 = vpop.f32.mrf.mxu0
        %v3182 = vadd.f32 0.0, %v3181
        %3183 = vmatmul.bf16.gmra.mxu0 %v3159
        %v3184 = vpop.f32.mrf.mxu0
        %v3185 = vadd.f32 0.0, %v3184
        %v3186 = vpop.f32.mrf.mxu0
        %v3187 = vadd.f32 0.0, %v3186
        %3188 = vmatmul.bf16.gmra.mxu0 %v3162
        %v3189 = vpop.f32.mrf.mxu0
        %v3190 = vadd.f32 0.0, %v3189
        %v3191 = vpop.f32.mrf.mxu0
        %v3192 = vadd.f32 0.0, %v3191
        %3193 = vmatmul.bf16.gmra.mxu0 %v3165
        %v3194 = vpop.f32.mrf.mxu0
        %v3195 = vadd.f32 0.0, %v3194
        %v3196 = vpop.f32.mrf.mxu0
        %v3197 = vadd.f32 0.0, %v3196
        %3198 = vdwg.mxu0
        %3199 = vrot.lane.b32.xlu0 %v2621, 80
        %v3200 = vpop.permute.xlu0 %3199
        %3201 = vrot.lane.b32.xlu0 %v2622, 80
        %v3202 = vpop.permute.xlu0 %3201
        %3203 = vrot.lane.b32.xlu0 %v2623, 80
        %v3204 = vpop.permute.xlu0 %3203
        %3205 = vrot.lane.b32.xlu0 %v2624, 80
        %v3206 = vpop.permute.xlu0 %3205
        %3207 = vrot.lane.b32.xlu0 %v2625, 80
        %v3208 = vpop.permute.xlu0 %3207
        %v3210 = vsel %vm1260, %v3200, 0
        %v3213 = vsel %vm1260, %v3202, 0
        %v3216 = vsel %vm1260, %v3204, 0
        %v3219 = vsel %vm1260, %v3206, 0
        %v3222 = vsel %vm1260, %v3208, 0
        %3224 = vmatpush.bf16.xpose.msra.mxu0 0
        %3225 = vmatpush.bf16.xpose.msra.mxu0 0
        %3226 = vmatpush.bf16.xpose.msra.mxu0 0
        %3227 = vmatpush.bf16.xpose.msra.mxu0 0
        %3228 = vmatpush.bf16.xpose.msra.mxu0 0
        %3229 = vmatpush.bf16.xpose.msra.mxu0 0
        %3230 = vmatpush.bf16.xpose.msra.mxu0 0
        %3231 = vmatpush.bf16.xpose.msra.mxu0 %v3222
        %3232 = vmatmul.bf16.gmra.mxu0 %v3210
        %v3233 = vpop.f32.mrf.mxu0
        %v3234 = vadd.f32 0.0, %v3233
        %v3235 = vpop.f32.mrf.mxu0
        %v3236 = vadd.f32 0.0, %v3235
        %3237 = vmatmul.bf16.gmra.mxu0 %v3213
        %v3238 = vpop.f32.mrf.mxu0
        %v3239 = vadd.f32 0.0, %v3238
        %v3240 = vpop.f32.mrf.mxu0
        %v3241 = vadd.f32 0.0, %v3240
        %3242 = vmatmul.bf16.gmra.mxu0 %v3216
        %v3243 = vpop.f32.mrf.mxu0
        %v3244 = vadd.f32 0.0, %v3243
        %v3245 = vpop.f32.mrf.mxu0
        %v3246 = vadd.f32 0.0, %v3245
        %3247 = vmatmul.bf16.gmra.mxu0 %v3219
        %v3248 = vpop.f32.mrf.mxu0
        %v3249 = vadd.f32 0.0, %v3248
        %v3250 = vpop.f32.mrf.mxu0
        %v3251 = vadd.f32 0.0, %v3250
        %3252 = vdwg.mxu0
        %v3253 = vsel %vm2670, %v3234, -inf
        %3254 = vmax.xlane.f32.xlu0 %v3253
        %v3255 = vpop.xlane.xlu0 %3254
        %v3256 = vsel %vm2670, %v3236, -inf
        %3257 = vmax.xlane.f32.xlu0 %v3256
        %v3258 = vpop.xlane.xlu0 %3257
        %v3259 = vsel %vm2670, %v3239, -inf
        %3260 = vmax.xlane.f32.xlu0 %v3259
        %v3261 = vpop.xlane.xlu0 %3260
        %v3262 = vsel %vm2670, %v3241, -inf
        %3263 = vmax.xlane.f32.xlu0 %v3262
        %v3264 = vpop.xlane.xlu0 %3263
        %v3265 = vsel %vm2670, %v3244, -inf
        %3266 = vmax.xlane.f32.xlu0 %v3265
        %v3267 = vpop.xlane.xlu0 %3266
        %v3268 = vsel %vm2670, %v3246, -inf
        %3269 = vmax.xlane.f32.xlu0 %v3268
        %v3270 = vpop.xlane.xlu0 %3269
        %v3271 = vsel %vm2670, %v3249, -inf
        %3272 = vmax.xlane.f32.xlu0 %v3271
        %v3273 = vpop.xlane.xlu0 %3272
        %v3274 = vsel %vm2670, %v3251, -inf
        %3275 = vmax.xlane.f32.xlu0 %v3274
        %v3276 = vpop.xlane.xlu0 %3275
        %v3277 = vsub.f32 %v3234, %v3255
        %v3278 = vsub.f32 %v3236, %v3258
        %v3279 = vsub.f32 %v3239, %v3261
        %v3280 = vsub.f32 %v3241, %v3264
        %v3281 = vsub.f32 %v3244, %v3267
        %v3282 = vsub.f32 %v3246, %v3270
        %v3283 = vsub.f32 %v3249, %v3273
        %v3284 = vsub.f32 %v3251, %v3276
        %v3285 = vmul.f32 %v3277, 1.442695
        %v3286 = vpow.pop %v3285
        %v3287 = vmul.f32 %v3278, 1.442695
        %v3288 = vpow.pop %v3287
        %v3289 = vmul.f32 %v3279, 1.442695
        %v3290 = vpow.pop %v3289
        %v3291 = vmul.f32 %v3280, 1.442695
        %v3292 = vpow.pop %v3291
        %v3293 = vmul.f32 %v3281, 1.442695
        %v3294 = vpow.pop %v3293
        %v3295 = vmul.f32 %v3282, 1.442695
        %v3296 = vpow.pop %v3295
        %v3297 = vmul.f32 %v3283, 1.442695
        %v3298 = vpow.pop %v3297
        %v3299 = vmul.f32 %v3284, 1.442695
        %v3300 = vpow.pop %v3299
        %v3301 = vsel %vm2670, %v3286, 0.0
        %3302 = vadd.xlane.f32.xlu0 %v3301
        %v3303 = vpop.xlane.xlu0 %3302
        %v3304 = vsel %vm2670, %v3288, 0.0
        %3305 = vadd.xlane.f32.xlu0 %v3304
        %v3306 = vpop.xlane.xlu0 %3305
        %v3307 = vsel %vm2670, %v3290, 0.0
        %3308 = vadd.xlane.f32.xlu0 %v3307
        %v3309 = vpop.xlane.xlu0 %3308
        %v3310 = vsel %vm2670, %v3292, 0.0
        %3311 = vadd.xlane.f32.xlu0 %v3310
        %v3312 = vpop.xlane.xlu0 %3311
        %v3313 = vsel %vm2670, %v3294, 0.0
        %3314 = vadd.xlane.f32.xlu0 %v3313
        %v3315 = vpop.xlane.xlu0 %3314
        %v3316 = vsel %vm2670, %v3296, 0.0
        %3317 = vadd.xlane.f32.xlu0 %v3316
        %v3318 = vpop.xlane.xlu0 %3317
        %v3319 = vsel %vm2670, %v3298, 0.0
        %3320 = vadd.xlane.f32.xlu0 %v3319
        %v3321 = vpop.xlane.xlu0 %3320
        %v3322 = vsel %vm2670, %v3300, 0.0
        %3323 = vadd.xlane.f32.xlu0 %v3322
        %v3324 = vpop.xlane.xlu0 %3323
        %v3325 = vrcp.pop %v3303
        %v3326 = vrcp.pop %v3306
        %v3327 = vrcp.pop %v3309
        %v3328 = vrcp.pop %v3312
        %v3329 = vrcp.pop %v3315
        %v3330 = vrcp.pop %v3318
        %v3331 = vrcp.pop %v3321
        %v3332 = vrcp.pop %v3324
        %v3333 = vmul.f32 %v3286, %v3325
        %v3334 = vmul.f32 %v3288, %v3326
        %v3335 = vmul.f32 %v3290, %v3327
        %v3336 = vmul.f32 %v3292, %v3328
        %v3337 = vmul.f32 %v3294, %v3329
        %v3338 = vmul.f32 %v3296, %v3330
        %v3339 = vmul.f32 %v3298, %v3331
        %v3340 = vmul.f32 %v3300, %v3332
        %v3341 = vpack.c.bf16 %v3334, %v3333
        %v3342 = vpack.c.bf16 %v3336, %v3335
        %v3343 = vpack.c.bf16 %v3338, %v3337
        %v3344 = vpack.c.bf16 %v3340, %v3339
        %3345 = vrot.lane.b32.xlu0 %v2625, 16
        %v3346 = vpop.permute.xlu0 %3345
        %v3348 = vsel %vm2670, %v3341, 0
        %v3351 = vsel %vm2670, %v3342, 0
        %v3354 = vsel %vm2670, %v3343, 0
        %v3357 = vsel %vm2670, %v3344, 0
        %v3360 = vsel %vm2778, %v3346, 0
        %3362 = vmatpush.bf16.msra.mxu0 0
        %3363 = vmatpush.bf16.msra.mxu0 0
        %3364 = vmatpush.bf16.msra.mxu0 0
        %3365 = vmatpush.bf16.msra.mxu0 0
        %3366 = vmatpush.bf16.msra.mxu0 0
        %3367 = vmatpush.bf16.msra.mxu0 0
        %3368 = vmatpush.bf16.msra.mxu0 0
        %3369 = vmatpush.bf16.msra.mxu0 %v3360
        %3370 = vmatmul.bf16.gmra.mxu0 %v3348
        %v3371 = vpop.f32.mrf.mxu0
        %v3372 = vadd.f32 0.0, %v3371
        %v3373 = vpop.f32.mrf.mxu0
        %v3374 = vadd.f32 0.0, %v3373
        %3375 = vmatmul.bf16.gmra.mxu0 %v3351
        %v3376 = vpop.f32.mrf.mxu0
        %v3377 = vadd.f32 0.0, %v3376
        %v3378 = vpop.f32.mrf.mxu0
        %v3379 = vadd.f32 0.0, %v3378
        %3380 = vmatmul.bf16.gmra.mxu0 %v3354
        %v3381 = vpop.f32.mrf.mxu0
        %v3382 = vadd.f32 0.0, %v3381
        %v3383 = vpop.f32.mrf.mxu0
        %v3384 = vadd.f32 0.0, %v3383
        %3385 = vmatmul.bf16.gmra.mxu0 %v3357
        %v3386 = vpop.f32.mrf.mxu0
        %v3387 = vadd.f32 0.0, %v3386
        %v3388 = vpop.f32.mrf.mxu0
        %v3389 = vadd.f32 0.0, %v3388
        %3390 = vdwg.mxu0
        %3399 = vrot.lane.b32.xlu0 %v2988, 16
        %v3400 = vpop.permute.xlu0 %3399
        %3401 = vrot.lane.b32.xlu0 %v2990, 16
        %v3402 = vpop.permute.xlu0 %3401
        %3403 = vrot.lane.b32.xlu0 %v2993, 16
        %v3404 = vpop.permute.xlu0 %3403
        %3405 = vrot.lane.b32.xlu0 %v2995, 16
        %v3406 = vpop.permute.xlu0 %3405
        %3407 = vrot.lane.b32.xlu0 %v2998, 16
        %v3408 = vpop.permute.xlu0 %3407
        %3409 = vrot.lane.b32.xlu0 %v3000, 16
        %v3410 = vpop.permute.xlu0 %3409
        %3411 = vrot.lane.b32.xlu0 %v3003, 16
        %v3412 = vpop.permute.xlu0 %3411
        %3413 = vrot.lane.b32.xlu0 %v3005, 16
        %v3414 = vpop.permute.xlu0 %3413
        %3431 = vrot.lane.b32.xlu0 %v3180, 32
        %v3432 = vpop.permute.xlu0 %3431
        %3433 = vrot.lane.b32.xlu0 %v3182, 32
        %v3434 = vpop.permute.xlu0 %3433
        %3435 = vrot.lane.b32.xlu0 %v3185, 32
        %v3436 = vpop.permute.xlu0 %3435
        %3437 = vrot.lane.b32.xlu0 %v3187, 32
        %v3438 = vpop.permute.xlu0 %3437
        %3439 = vrot.lane.b32.xlu0 %v3190, 32
        %v3440 = vpop.permute.xlu0 %3439
        %3441 = vrot.lane.b32.xlu0 %v3192, 32
        %v3442 = vpop.permute.xlu0 %3441
        %3443 = vrot.lane.b32.xlu0 %v3195, 32
        %v3444 = vpop.permute.xlu0 %3443
        %3445 = vrot.lane.b32.xlu0 %v3197, 32
        %v3446 = vpop.permute.xlu0 %3445
        %3463 = vrot.lane.b32.xlu0 %v3372, 48
        %v3464 = vpop.permute.xlu0 %3463
        %3465 = vrot.lane.b32.xlu0 %v3374, 48
        %v3466 = vpop.permute.xlu0 %3465
        %3467 = vrot.lane.b32.xlu0 %v3377, 48
        %v3468 = vpop.permute.xlu0 %3467
        %3469 = vrot.lane.b32.xlu0 %v3379, 48
        %v3470 = vpop.permute.xlu0 %3469
        %3471 = vrot.lane.b32.xlu0 %v3382, 48
        %v3472 = vpop.permute.xlu0 %3471
        %3473 = vrot.lane.b32.xlu0 %v3384, 48
        %v3474 = vpop.permute.xlu0 %3473
        %3475 = vrot.lane.b32.xlu0 %v3387, 48
        %v3476 = vpop.permute.xlu0 %3475
        %3477 = vrot.lane.b32.xlu0 %v3389, 48
        %v3478 = vpop.permute.xlu0 %3477
        %v3487 = vsel %vm1260, %v2792, %v3400
        %v3488 = vsel %vm1260, %v2794, %v3402
        %v3489 = vsel %vm1260, %v2797, %v3404
        %v3490 = vsel %vm1260, %v2799, %v3406
        %v3491 = vsel %vm1260, %v2802, %v3408
        %v3492 = vsel %vm1260, %v2804, %v3410
        %v3493 = vsel %vm1260, %v2807, %v3412
        %v3494 = vsel %vm1260, %v2809, %v3414
        %v3495 = vsel %vm2197, %v3487, %v3432
        %v3496 = vsel %vm2197, %v3488, %v3434
        %v3497 = vsel %vm2197, %v3489, %v3436
        %v3498 = vsel %vm2197, %v3490, %v3438
        %v3499 = vsel %vm2197, %v3491, %v3440
        %v3500 = vsel %vm2197, %v3492, %v3442
        %v3501 = vsel %vm2197, %v3493, %v3444
        %v3502 = vsel %vm2197, %v3494, %v3446
        %v3503 = vsel %vm2206, %v3495, %v3464
        %v3504 = vsel %vm2206, %v3496, %v3466
        %v3505 = vsel %vm2206, %v3497, %v3468
        %v3506 = vsel %vm2206, %v3498, %v3470
        %v3507 = vsel %vm2206, %v3499, %v3472
        %v3508 = vsel %vm2206, %v3500, %v3474
        %v3509 = vsel %vm2206, %v3501, %v3476
        %v3510 = vsel %vm2206, %v3502, %v3478
        %v3511 = vpack.c.bf16 %v3504, %v3503
        %v3512 = vpack.c.bf16 %v3506, %v3505
        %v3513 = vpack.c.bf16 %v3508, %v3507
        %v3514 = vpack.c.bf16 %v3510, %v3509
        %v3515 = vperm.slane %v665, 0
        %v3524 = vunpack.c.l.b16 %v2613
        %v3525 = vunpack.c.l.b16 %v2614
        %v3526 = vunpack.c.l.b16 %v2615
        %v3527 = vunpack.c.l.b16 %v2616
        %v3528 = vunpack.c.l.b16 %v2617
        %v3529 = vunpack.c.l.b16 %v2618
        %v3530 = vunpack.c.l.b16 %v2619
        %v3531 = vunpack.c.l.b16 %v2620
        %v3532 = vpack.c.b16 %v3525, %v3524
        %v3533 = vpack.c.b16 %v3527, %v3526
        %v3534 = vpack.c.b16 %v3529, %v3528
        %v3535 = vpack.c.b16 %v3531, %v3530
        %v3541 = vsel %vm674, %v3511, 0
        %v3544 = vsel %vm674, %v3512, 0
        %v3547 = vsel %vm674, %v3513, 0
        %v3550 = vsel %vm674, %v3514, 0
        %3552 = vmatpush.bf16.msra.mxu0 0
        %3553 = vmatpush.bf16.msra.mxu0 0
        %3554 = vmatpush.bf16.msra.mxu0 0
        %3555 = vmatpush.bf16.msra.mxu0 0
        %3556 = vmatpush.bf16.msra.mxu0 %v3535
        %3557 = vmatpush.bf16.msra.mxu0 %v3534
        %3558 = vmatpush.bf16.msra.mxu0 %v3533
        %3559 = vmatpush.bf16.msra.mxu0 %v3532
        %3560 = vmatmul.bf16.gmra.mxu0 %v3541
        %v3561 = vpop.f32.mrf.mxu0
        %v3562 = vadd.f32 %v3515, %v3561
        %v3563 = vpop.f32.mrf.mxu0
        %v3564 = vadd.f32 %v3515, %v3563
        %3565 = vmatmul.bf16.gmra.mxu0 %v3544
        %v3566 = vpop.f32.mrf.mxu0
        %v3567 = vadd.f32 %v3515, %v3566
        %v3568 = vpop.f32.mrf.mxu0
        %v3569 = vadd.f32 %v3515, %v3568
        %3570 = vmatmul.bf16.gmra.mxu0 %v3547
        %v3571 = vpop.f32.mrf.mxu0
        %v3572 = vadd.f32 %v3515, %v3571
        %v3573 = vpop.f32.mrf.mxu0
        %v3574 = vadd.f32 %v3515, %v3573
        %3575 = vmatmul.bf16.gmra.mxu0 %v3550
        %v3576 = vpop.f32.mrf.mxu0
        %v3577 = vadd.f32 %v3515, %v3576
        %v3578 = vpop.f32.mrf.mxu0
        %v3579 = vadd.f32 %v3515, %v3578
        %3580 = vdwg.mxu0
        %v3581 = vadd.f32 %v3562, %v2285
        %v3582 = vadd.f32 %v3564, %v2286
        %v3583 = vadd.f32 %v3567, %v2287
        %v3584 = vadd.f32 %v3569, %v2288
        %v3585 = vadd.f32 %v3572, %v2289
        %v3586 = vadd.f32 %v3574, %v2290
        %v3587 = vadd.f32 %v3577, %v2291
        %v3588 = vadd.f32 %v3579, %v2292
        %v3589 = vsel %vm674, %v3581, 0.0
        %3590 = vadd.xlane.f32.xlu0 %v3589
        %v3591 = vpop.xlane.xlu0 %3590
        %v3592 = vsel %vm674, %v3582, 0.0
        %3593 = vadd.xlane.f32.xlu0 %v3592
        %v3594 = vpop.xlane.xlu0 %3593
        %v3595 = vsel %vm674, %v3583, 0.0
        %3596 = vadd.xlane.f32.xlu0 %v3595
        %v3597 = vpop.xlane.xlu0 %3596
        %v3598 = vsel %vm674, %v3584, 0.0
        %3599 = vadd.xlane.f32.xlu0 %v3598
        %v3600 = vpop.xlane.xlu0 %3599
        %v3601 = vsel %vm674, %v3585, 0.0
        %3602 = vadd.xlane.f32.xlu0 %v3601
        %v3603 = vpop.xlane.xlu0 %3602
        %v3604 = vsel %vm674, %v3586, 0.0
        %3605 = vadd.xlane.f32.xlu0 %v3604
        %v3606 = vpop.xlane.xlu0 %3605
        %v3607 = vsel %vm674, %v3587, 0.0
        %3608 = vadd.xlane.f32.xlu0 %v3607
        %v3609 = vpop.xlane.xlu0 %3608
        %v3610 = vsel %vm674, %v3588, 0.0
        %3611 = vadd.xlane.f32.xlu0 %v3610
        %v3612 = vpop.xlane.xlu0 %3611
        %v3613 = vmul.f32 %v3591, %v702
        %v3614 = vmul.f32 %v3594, %v702
        %v3615 = vmul.f32 %v3597, %v702
        %v3616 = vmul.f32 %v3600, %v702
        %v3617 = vmul.f32 %v3603, %v702
        %v3618 = vmul.f32 %v3606, %v702
        %v3619 = vmul.f32 %v3609, %v702
        %v3620 = vmul.f32 %v3612, %v702
        %v3621 = vsub.f32 %v3581, %v3613
        %v3622 = vsub.f32 %v3582, %v3614
        %v3623 = vsub.f32 %v3583, %v3615
        %v3624 = vsub.f32 %v3584, %v3616
        %v3625 = vsub.f32 %v3585, %v3617
        %v3626 = vsub.f32 %v3586, %v3618
        %v3627 = vsub.f32 %v3587, %v3619
        %v3628 = vsub.f32 %v3588, %v3620
        %v3629 = vmul.f32 %v3621, %v3621
        %v3630 = vmul.f32 %v3622, %v3622
        %v3631 = vmul.f32 %v3623, %v3623
        %v3632 = vmul.f32 %v3624, %v3624
        %v3633 = vmul.f32 %v3625, %v3625
        %v3634 = vmul.f32 %v3626, %v3626
        %v3635 = vmul.f32 %v3627, %v3627
        %v3636 = vmul.f32 %v3628, %v3628
        %v3637 = vsel %vm674, %v3629, 0.0
        %3638 = vadd.xlane.f32.xlu0 %v3637
        %v3639 = vpop.xlane.xlu0 %3638
        %v3640 = vsel %vm674, %v3630, 0.0
        %3641 = vadd.xlane.f32.xlu0 %v3640
        %v3642 = vpop.xlane.xlu0 %3641
        %v3643 = vsel %vm674, %v3631, 0.0
        %3644 = vadd.xlane.f32.xlu0 %v3643
        %v3645 = vpop.xlane.xlu0 %3644
        %v3646 = vsel %vm674, %v3632, 0.0
        %3647 = vadd.xlane.f32.xlu0 %v3646
        %v3648 = vpop.xlane.xlu0 %3647
        %v3649 = vsel %vm674, %v3633, 0.0
        %3650 = vadd.xlane.f32.xlu0 %v3649
        %v3651 = vpop.xlane.xlu0 %3650
        %v3652 = vsel %vm674, %v3634, 0.0
        %3653 = vadd.xlane.f32.xlu0 %v3652
        %v3654 = vpop.xlane.xlu0 %3653
        %v3655 = vsel %vm674, %v3635, 0.0
        %3656 = vadd.xlane.f32.xlu0 %v3655
        %v3657 = vpop.xlane.xlu0 %3656
        %v3658 = vsel %vm674, %v3636, 0.0
        %3659 = vadd.xlane.f32.xlu0 %v3658
        %v3660 = vpop.xlane.xlu0 %3659
        %v3661 = vmul.f32 %v3639, %v702
        %v3662 = vmul.f32 %v3642, %v702
        %v3663 = vmul.f32 %v3645, %v702
        %v3664 = vmul.f32 %v3648, %v702
        %v3665 = vmul.f32 %v3651, %v702
        %v3666 = vmul.f32 %v3654, %v702
        %v3667 = vmul.f32 %v3657, %v702
        %v3668 = vmul.f32 %v3660, %v702
        %v3669 = vadd.f32 %v3661, 1e-05
        %v3670 = vadd.f32 %v3662, 1e-05
        %v3671 = vadd.f32 %v3663, 1e-05
        %v3672 = vadd.f32 %v3664, 1e-05
        %v3673 = vadd.f32 %v3665, 1e-05
        %v3674 = vadd.f32 %v3666, 1e-05
        %v3675 = vadd.f32 %v3667, 1e-05
        %v3676 = vadd.f32 %v3668, 1e-05
        %v3677 = vrsqrt.pop %v3669
        %v3678 = vmul.f32 %v3677, %v3669
        %v3679 = vmul.f32 %v3678, %v3677
        %v3680 = vmul.f32 0.5, %v3679
        %v3681 = vsub.f32 1.5, %v3680
        %v3682 = vmul.f32 %v3677, %v3681
        %vm3683 = vweird.f32 %v3669
        %vm3684 = vweird.f32 %v3677
        %vm3685 = vmor %vm3683, %vm3684
        %v3686 = vsel %vm3685, %v3677, %v3682
        %v3687 = vrsqrt.pop %v3670
        %v3688 = vmul.f32 %v3687, %v3670
        %v3689 = vmul.f32 %v3688, %v3687
        %v3690 = vmul.f32 0.5, %v3689
        %v3691 = vsub.f32 1.5, %v3690
        %v3692 = vmul.f32 %v3687, %v3691
        %vm3693 = vweird.f32 %v3670
        %vm3694 = vweird.f32 %v3687
        %vm3695 = vmor %vm3693, %vm3694
        %v3696 = vsel %vm3695, %v3687, %v3692
        %v3697 = vrsqrt.pop %v3671
        %v3698 = vmul.f32 %v3697, %v3671
        %v3699 = vmul.f32 %v3698, %v3697
        %v3700 = vmul.f32 0.5, %v3699
        %v3701 = vsub.f32 1.5, %v3700
        %v3702 = vmul.f32 %v3697, %v3701
        %vm3703 = vweird.f32 %v3671
        %vm3704 = vweird.f32 %v3697
        %vm3705 = vmor %vm3703, %vm3704
        %v3706 = vsel %vm3705, %v3697, %v3702
        %v3707 = vrsqrt.pop %v3672
        %v3708 = vmul.f32 %v3707, %v3672
        %v3709 = vmul.f32 %v3708, %v3707
        %v3710 = vmul.f32 0.5, %v3709
        %v3711 = vsub.f32 1.5, %v3710
        %v3712 = vmul.f32 %v3707, %v3711
        %vm3713 = vweird.f32 %v3672
        %vm3714 = vweird.f32 %v3707
        %vm3715 = vmor %vm3713, %vm3714
        %v3716 = vsel %vm3715, %v3707, %v3712
        %v3717 = vrsqrt.pop %v3673
        %v3718 = vmul.f32 %v3717, %v3673
        %v3719 = vmul.f32 %v3718, %v3717
        %v3720 = vmul.f32 0.5, %v3719
        %v3721 = vsub.f32 1.5, %v3720
        %v3722 = vmul.f32 %v3717, %v3721
        %vm3723 = vweird.f32 %v3673
        %vm3724 = vweird.f32 %v3717
        %vm3725 = vmor %vm3723, %vm3724
        %v3726 = vsel %vm3725, %v3717, %v3722
        %v3727 = vrsqrt.pop %v3674
        %v3728 = vmul.f32 %v3727, %v3674
        %v3729 = vmul.f32 %v3728, %v3727
        %v3730 = vmul.f32 0.5, %v3729
        %v3731 = vsub.f32 1.5, %v3730
        %v3732 = vmul.f32 %v3727, %v3731
        %vm3733 = vweird.f32 %v3674
        %vm3734 = vweird.f32 %v3727
        %vm3735 = vmor %vm3733, %vm3734
        %v3736 = vsel %vm3735, %v3727, %v3732
        %v3737 = vrsqrt.pop %v3675
        %v3738 = vmul.f32 %v3737, %v3675
        %v3739 = vmul.f32 %v3738, %v3737
        %v3740 = vmul.f32 0.5, %v3739
        %v3741 = vsub.f32 1.5, %v3740
        %v3742 = vmul.f32 %v3737, %v3741
        %vm3743 = vweird.f32 %v3675
        %vm3744 = vweird.f32 %v3737
        %vm3745 = vmor %vm3743, %vm3744
        %v3746 = vsel %vm3745, %v3737, %v3742
        %v3747 = vrsqrt.pop %v3676
        %v3748 = vmul.f32 %v3747, %v3676
        %v3749 = vmul.f32 %v3748, %v3747
        %v3750 = vmul.f32 0.5, %v3749
        %v3751 = vsub.f32 1.5, %v3750
        %v3752 = vmul.f32 %v3747, %v3751
        %vm3753 = vweird.f32 %v3676
        %vm3754 = vweird.f32 %v3747
        %vm3755 = vmor %vm3753, %vm3754
        %v3756 = vsel %vm3755, %v3747, %v3752
        %v3757 = vmul.f32 %v3621, %v3686
        %v3758 = vmul.f32 %v3622, %v3696
        %v3759 = vmul.f32 %v3623, %v3706
        %v3760 = vmul.f32 %v3624, %v3716
        %v3761 = vmul.f32 %v3625, %v3726
        %v3762 = vmul.f32 %v3626, %v3736
        %v3763 = vmul.f32 %v3627, %v3746
        %v3764 = vmul.f32 %v3628, %v3756
        %v3765 = vperm.slane %v665, 1
        %v3766 = vmul.f32 %v3757, %v3765
        %v3767 = vmul.f32 %v3758, %v3765
        %v3768 = vmul.f32 %v3759, %v3765
        %v3769 = vmul.f32 %v3760, %v3765
        %v3770 = vmul.f32 %v3761, %v3765
        %v3771 = vmul.f32 %v3762, %v3765
        %v3772 = vmul.f32 %v3763, %v3765
        %v3773 = vmul.f32 %v3764, %v3765
        %v3774 = vperm.slane %v665, 2
        %v3775 = vadd.f32 %v3766, %v3774
        %v3776 = vadd.f32 %v3767, %v3774
        %v3777 = vadd.f32 %v3768, %v3774
        %v3778 = vadd.f32 %v3769, %v3774
        %v3779 = vadd.f32 %v3770, %v3774
        %v3780 = vadd.f32 %v3771, %v3774
        %v3781 = vadd.f32 %v3772, %v3774
        %v3782 = vadd.f32 %v3773, %v3774
        %v3783 = vpack.c.bf16 %v3776, %v3775
        %v3784 = vpack.c.bf16 %v3778, %v3777
        %v3785 = vpack.c.bf16 %v3780, %v3779
        %v3786 = vpack.c.bf16 %v3782, %v3781
        %v3787 = vld [vmem:[#allocation16] sm:$0xff]
        %v3788 = vld [vmem:[#allocation16 + $0x8] sm:$0xff]
        %v3789 = vld [vmem:[#allocation16 + $0x10] sm:$0xff]
        %v3790 = vld [vmem:[#allocation16 + $0x18] sm:$0xff]
        %v3791 = vld [vmem:[#allocation16 + $0x20] sm:$0xff]
        %v3792 = vld [vmem:[#allocation16 + $0x28] sm:$0xff]
        %v3793 = vld [vmem:[#allocation16 + $0x30] sm:$0xff]
        %v3794 = vld [vmem:[#allocation16 + $0x38] sm:$0xff]
        %v3795 = vld [vmem:[#allocation16 + $0x40] sm:$0xff]
        %v3796 = vld [vmem:[#allocation16 + $0x48] sm:$0xff]
        %v3797 = vld [vmem:[#allocation16 + $0x50] sm:$0xff]
        %v3798 = vld [vmem:[#allocation16 + $0x58] sm:$0xff]
        %v3799 = vld [vmem:[#allocation16 + $0x60] sm:$0xff]
        %v3800 = vld [vmem:[#allocation16 + $0x68] sm:$0xff]
        %v3801 = vld [vmem:[#allocation16 + $0x70] sm:$0xff]
        %v3802 = vld [vmem:[#allocation16 + $0x78] sm:$0xff]
        %v3803 = vld [vmem:[%s11] sm:$0xf]
        %v3805 = vperm.slane %v3803, 0
        %v3806 = vperm.slane %v3803, 1
        %v3807 = vperm.slane %v3803, 2
        %v3808 = vperm.slane %v3803, 3
        %v3829 = vunpack.c.l.b16 %v3787
        %v3830 = vunpack.c.h.b16 %v3787
        %v3831 = vunpack.c.l.b16 %v3788
        %v3832 = vunpack.c.h.b16 %v3788
        %v3833 = vunpack.c.l.b16 %v3789
        %v3834 = vunpack.c.h.b16 %v3789
        %v3835 = vunpack.c.l.b16 %v3790
        %v3836 = vunpack.c.h.b16 %v3790
        %v3837 = vunpack.c.l.b16 %v3791
        %v3838 = vunpack.c.h.b16 %v3791
        %v3839 = vunpack.c.l.b16 %v3792
        %v3840 = vunpack.c.h.b16 %v3792
        %v3841 = vunpack.c.l.b16 %v3793
        %v3842 = vunpack.c.h.b16 %v3793
        %v3843 = vunpack.c.l.b16 %v3794
        %v3844 = vunpack.c.h.b16 %v3794
        %v3845 = vunpack.c.l.b16 %v3795
        %v3846 = vunpack.c.h.b16 %v3795
        %v3847 = vunpack.c.l.b16 %v3796
        %v3848 = vunpack.c.h.b16 %v3796
        %v3849 = vunpack.c.l.b16 %v3797
        %v3850 = vunpack.c.h.b16 %v3797
        %v3851 = vunpack.c.l.b16 %v3798
        %v3852 = vunpack.c.h.b16 %v3798
        %v3853 = vunpack.c.l.b16 %v3799
        %v3854 = vunpack.c.h.b16 %v3799
        %v3855 = vunpack.c.l.b16 %v3800
        %v3856 = vunpack.c.h.b16 %v3800
        %v3857 = vunpack.c.l.b16 %v3801
        %v3858 = vunpack.c.h.b16 %v3801
        %v3859 = vunpack.c.l.b16 %v3802
        %v3860 = vunpack.c.h.b16 %v3802
        %v3861 = vpack.c.b16 %v3833, %v3829
        %v3862 = vpack.c.b16 %v3834, %v3830
        %v3863 = vpack.c.b16 %v3835, %v3831
        %v3864 = vpack.c.b16 %v3836, %v3832
        %v3865 = vpack.c.b16 %v3841, %v3837
        %v3866 = vpack.c.b16 %v3842, %v3838
        %v3867 = vpack.c.b16 %v3843, %v3839
        %v3868 = vpack.c.b16 %v3844, %v3840
        %v3869 = vpack.c.b16 %v3849, %v3845
        %v3870 = vpack.c.b16 %v3850, %v3846
        %v3871 = vpack.c.b16 %v3851, %v3847
        %v3872 = vpack.c.b16 %v3852, %v3848
        %v3873 = vpack.c.b16 %v3857, %v3853
        %v3874 = vpack.c.b16 %v3858, %v3854
        %v3875 = vpack.c.b16 %v3859, %v3855
        %v3876 = vpack.c.b16 %v3860, %v3856
        %v3894 = vsel %vm674, %v3783, 0
        %v3897 = vsel %vm674, %v3784, 0
        %v3900 = vsel %vm674, %v3785, 0
        %v3903 = vsel %vm674, %v3786, 0
        %3905 = vmatpush.bf16.msra.mxu0 0
        %3906 = vmatpush.bf16.msra.mxu0 0
        %3907 = vmatpush.bf16.msra.mxu0 0
        %3908 = vmatpush.bf16.msra.mxu0 0
        %3909 = vmatpush.bf16.msra.mxu0 %v3873
        %3910 = vmatpush.bf16.msra.mxu0 %v3869
        %3911 = vmatpush.bf16.msra.mxu0 %v3865
        %3912 = vmatpush.bf16.msra.mxu0 %v3861
        %3913 = vmatmul.bf16.gmra.mxu0 %v3894
        %v3914 = vpop.f32.mrf.mxu0
        %v3915 = vadd.f32 %v3805, %v3914
        %v3916 = vpop.f32.mrf.mxu0
        %v3917 = vadd.f32 %v3805, %v3916
        %3918 = vmatmul.bf16.gmra.mxu0 %v3897
        %v3919 = vpop.f32.mrf.mxu0
        %v3920 = vadd.f32 %v3805, %v3919
        %v3921 = vpop.f32.mrf.mxu0
        %v3922 = vadd.f32 %v3805, %v3921
        %3923 = vmatmul.bf16.gmra.mxu0 %v3900
        %v3924 = vpop.f32.mrf.mxu0
        %v3925 = vadd.f32 %v3805, %v3924
        %v3926 = vpop.f32.mrf.mxu0
        %v3927 = vadd.f32 %v3805, %v3926
        %3928 = vmatmul.bf16.gmra.mxu0 %v3903
        %v3929 = vpop.f32.mrf.mxu0
        %v3930 = vadd.f32 %v3805, %v3929
        %v3931 = vpop.f32.mrf.mxu0
        %v3932 = vadd.f32 %v3805, %v3931
        %3933 = vdwg.mxu0
        %3934 = vmatpush.bf16.msra.mxu0 0
        %3935 = vmatpush.bf16.msra.mxu0 0
        %3936 = vmatpush.bf16.msra.mxu0 0
        %3937 = vmatpush.bf16.msra.mxu0 0
        %3938 = vmatpush.bf16.msra.mxu0 %v3874
        %3939 = vmatpush.bf16.msra.mxu0 %v3870
        %3940 = vmatpush.bf16.msra.mxu0 %v3866
        %3941 = vmatpush.bf16.msra.mxu0 %v3862
        %3942 = vmatmul.bf16.gmra.mxu0 %v3894
        %v3943 = vpop.f32.mrf.mxu0
        %v3944 = vadd.f32 %v3806, %v3943
        %v3945 = vpop.f32.mrf.mxu0
        %v3946 = vadd.f32 %v3806, %v3945
        %3947 = vmatmul.bf16.gmra.mxu0 %v3897
        %v3948 = vpop.f32.mrf.mxu0
        %v3949 = vadd.f32 %v3806, %v3948
        %v3950 = vpop.f32.mrf.mxu0
        %v3951 = vadd.f32 %v3806, %v3950
        %3952 = vmatmul.bf16.gmra.mxu0 %v3900
        %v3953 = vpop.f32.mrf.mxu0
        %v3954 = vadd.f32 %v3806, %v3953
        %v3955 = vpop.f32.mrf.mxu0
        %v3956 = vadd.f32 %v3806, %v3955
        %3957 = vmatmul.bf16.gmra.mxu0 %v3903
        %v3958 = vpop.f32.mrf.mxu0
        %v3959 = vadd.f32 %v3806, %v3958
        %v3960 = vpop.f32.mrf.mxu0
        %v3961 = vadd.f32 %v3806, %v3960
        %3962 = vdwg.mxu0
        %3963 = vmatpush.bf16.msra.mxu0 0
        %3964 = vmatpush.bf16.msra.mxu0 0
        %3965 = vmatpush.bf16.msra.mxu0 0
        %3966 = vmatpush.bf16.msra.mxu0 0
        %3967 = vmatpush.bf16.msra.mxu0 %v3875
        %3968 = vmatpush.bf16.msra.mxu0 %v3871
        %3969 = vmatpush.bf16.msra.mxu0 %v3867
        %3970 = vmatpush.bf16.msra.mxu0 %v3863
        %3971 = vmatmul.bf16.gmra.mxu0 %v3894
        %v3972 = vpop.f32.mrf.mxu0
        %v3973 = vadd.f32 %v3807, %v3972
        %v3974 = vpop.f32.mrf.mxu0
        %v3975 = vadd.f32 %v3807, %v3974
        %3976 = vmatmul.bf16.gmra.mxu0 %v3897
        %v3977 = vpop.f32.mrf.mxu0
        %v3978 = vadd.f32 %v3807, %v3977
        %v3979 = vpop.f32.mrf.mxu0
        %v3980 = vadd.f32 %v3807, %v3979
        %3981 = vmatmul.bf16.gmra.mxu0 %v3900
        %v3982 = vpop.f32.mrf.mxu0
        %v3983 = vadd.f32 %v3807, %v3982
        %v3984 = vpop.f32.mrf.mxu0
        %v3985 = vadd.f32 %v3807, %v3984
        %3986 = vmatmul.bf16.gmra.mxu0 %v3903
        %v3987 = vpop.f32.mrf.mxu0
        %v3988 = vadd.f32 %v3807, %v3987
        %v3989 = vpop.f32.mrf.mxu0
        %v3990 = vadd.f32 %v3807, %v3989
        %3991 = vdwg.mxu0
        %3992 = vmatpush.bf16.msra.mxu0 0
        %3993 = vmatpush.bf16.msra.mxu0 0
        %3994 = vmatpush.bf16.msra.mxu0 0
        %3995 = vmatpush.bf16.msra.mxu0 0
        %3996 = vmatpush.bf16.msra.mxu0 %v3876
        %3997 = vmatpush.bf16.msra.mxu0 %v3872
        %3998 = vmatpush.bf16.msra.mxu0 %v3868
        %3999 = vmatpush.bf16.msra.mxu0 %v3864
        %4000 = vmatmul.bf16.gmra.mxu0 %v3894
        %v4001 = vpop.f32.mrf.mxu0
        %v4002 = vadd.f32 %v3808, %v4001
        %v4003 = vpop.f32.mrf.mxu0
        %v4004 = vadd.f32 %v3808, %v4003
        %4005 = vmatmul.bf16.gmra.mxu0 %v3897
        %v4006 = vpop.f32.mrf.mxu0
        %v4007 = vadd.f32 %v3808, %v4006
        %v4008 = vpop.f32.mrf.mxu0
        %v4009 = vadd.f32 %v3808, %v4008
        %4010 = vmatmul.bf16.gmra.mxu0 %v3900
        %v4011 = vpop.f32.mrf.mxu0
        %v4012 = vadd.f32 %v3808, %v4011
        %v4013 = vpop.f32.mrf.mxu0
        %v4014 = vadd.f32 %v3808, %v4013
        %4015 = vmatmul.bf16.gmra.mxu0 %v3903
        %v4016 = vpop.f32.mrf.mxu0
        %v4017 = vadd.f32 %v3808, %v4016
        %v4018 = vpop.f32.mrf.mxu0
        %v4019 = vadd.f32 %v3808, %v4018
        %4020 = vdwg.mxu0
        %v4021 = vmul.f32 %v3973, 0.5
        %v4022 = vmul.f32 %v4002, 0.5
        %v4023 = vmul.f32 %v3975, 0.5
        %v4024 = vmul.f32 %v4004, 0.5
        %v4025 = vmul.f32 %v3978, 0.5
        %v4026 = vmul.f32 %v4007, 0.5
        %v4027 = vmul.f32 %v3980, 0.5
        %v4028 = vmul.f32 %v4009, 0.5
        %v4029 = vmul.f32 %v3983, 0.5
        %v4030 = vmul.f32 %v4012, 0.5
        %v4031 = vmul.f32 %v3985, 0.5
        %v4032 = vmul.f32 %v4014, 0.5
        %v4033 = vmul.f32 %v3988, 0.5
        %v4034 = vmul.f32 %v4017, 0.5
        %v4035 = vmul.f32 %v3990, 0.5
        %v4036 = vmul.f32 %v4019, 0.5
        %v4037 = vmul.f32 %v3973, 0.044715
        %v4038 = vmul.f32 %v4002, 0.044715
        %v4039 = vmul.f32 %v3975, 0.044715
        %v4040 = vmul.f32 %v4004, 0.044715
        %v4041 = vmul.f32 %v3978, 0.044715
        %v4042 = vmul.f32 %v4007, 0.044715
        %v4043 = vmul.f32 %v3980, 0.044715
        %v4044 = vmul.f32 %v4009, 0.044715
        %v4045 = vmul.f32 %v3983, 0.044715
        %v4046 = vmul.f32 %v4012, 0.044715
        %v4047 = vmul.f32 %v3985, 0.044715
        %v4048 = vmul.f32 %v4014, 0.044715
        %v4049 = vmul.f32 %v3988, 0.044715
        %v4050 = vmul.f32 %v4017, 0.044715
        %v4051 = vmul.f32 %v3990, 0.044715
        %v4052 = vmul.f32 %v4019, 0.044715
        %v4053 = vmul.f32 %v4037, %v3973
        %v4054 = vmul.f32 %v4038, %v4002
        %v4055 = vmul.f32 %v4039, %v3975
        %v4056 = vmul.f32 %v4040, %v4004
        %v4057 = vmul.f32 %v4041, %v3978
        %v4058 = vmul.f32 %v4042, %v4007
        %v4059 = vmul.f32 %v4043, %v3980
        %v4060 = vmul.f32 %v4044, %v4009
        %v4061 = vmul.f32 %v4045, %v3983
        %v4062 = vmul.f32 %v4046, %v4012
        %v4063 = vmul.f32 %v4047, %v3985
        %v4064 = vmul.f32 %v4048, %v4014
        %v4065 = vmul.f32 %v4049, %v3988
        %v4066 = vmul.f32 %v4050, %v4017
        %v4067 = vmul.f32 %v4051, %v3990
        %v4068 = vmul.f32 %v4052, %v4019
        %v4069 = vmul.f32 %v4053, %v3973
        %v4070 = vmul.f32 %v4054, %v4002
        %v4071 = vmul.f32 %v4055, %v3975
        %v4072 = vmul.f32 %v4056, %v4004
        %v4073 = vmul.f32 %v4057, %v3978
        %v4074 = vmul.f32 %v4058, %v4007
        %v4075 = vmul.f32 %v4059, %v3980
        %v4076 = vmul.f32 %v4060, %v4009
        %v4077 = vmul.f32 %v4061, %v3983
        %v4078 = vmul.f32 %v4062, %v4012
        %v4079 = vmul.f32 %v4063, %v3985
        %v4080 = vmul.f32 %v4064, %v4014
        %v4081 = vmul.f32 %v4065, %v3988
        %v4082 = vmul.f32 %v4066, %v4017
        %v4083 = vmul.f32 %v4067, %v3990
        %v4084 = vmul.f32 %v4068, %v4019
        %v4085 = vadd.f32 %v3973, %v4069
        %v4086 = vadd.f32 %v4002, %v4070
        %v4087 = vadd.f32 %v3975, %v4071
        %v4088 = vadd.f32 %v4004, %v4072
        %v4089 = vadd.f32 %v3978, %v4073
        %v4090 = vadd.f32 %v4007, %v4074
        %v4091 = vadd.f32 %v3980, %v4075
        %v4092 = vadd.f32 %v4009, %v4076
        %v4093 = vadd.f32 %v3983, %v4077
        %v4094 = vadd.f32 %v4012, %v4078
        %v4095 = vadd.f32 %v3985, %v4079
        %v4096 = vadd.f32 %v4014, %v4080
        %v4097 = vadd.f32 %v3988, %v4081
        %v4098 = vadd.f32 %v4017, %v4082
        %v4099 = vadd.f32 %v3990, %v4083
        %v4100 = vadd.f32 %v4019, %v4084
        %v4101 = vmul.f32 %v4085, 0.7978846
        %v4102 = vmul.f32 %v4086, 0.7978846
        %v4103 = vmul.f32 %v4087, 0.7978846
        %v4104 = vmul.f32 %v4088, 0.7978846
        %v4105 = vmul.f32 %v4089, 0.7978846
        %v4106 = vmul.f32 %v4090, 0.7978846
        %v4107 = vmul.f32 %v4091, 0.7978846
        %v4108 = vmul.f32 %v4092, 0.7978846
        %v4109 = vmul.f32 %v4093, 0.7978846
        %v4110 = vmul.f32 %v4094, 0.7978846
        %v4111 = vmul.f32 %v4095, 0.7978846
        %v4112 = vmul.f32 %v4096, 0.7978846
        %v4113 = vmul.f32 %v4097, 0.7978846
        %v4114 = vmul.f32 %v4098, 0.7978846
        %v4115 = vmul.f32 %v4099, 0.7978846
        %v4116 = vmul.f32 %v4100, 0.7978846
        %v4117 = vtanh.pop %v4101
        %v4118 = vtanh.pop %v4102
        %v4119 = vtanh.pop %v4103
        %v4120 = vtanh.pop %v4104
        %v4121 = vtanh.pop %v4105
        %v4122 = vtanh.pop %v4106
        %v4123 = vtanh.pop %v4107
        %v4124 = vtanh.pop %v4108
        %v4125 = vtanh.pop %v4109
        %v4126 = vtanh.pop %v4110
        %v4127 = vtanh.pop %v4111
        %v4128 = vtanh.pop %v4112
        %v4129 = vtanh.pop %v4113
        %v4130 = vtanh.pop %v4114
        %v4131 = vtanh.pop %v4115
        %v4132 = vtanh.pop %v4116
        %v4133 = vadd.f32 %v4117, 1.0
        %v4134 = vadd.f32 %v4118, 1.0
        %v4135 = vadd.f32 %v4119, 1.0
        %v4136 = vadd.f32 %v4120, 1.0
        %v4137 = vadd.f32 %v4121, 1.0
        %v4138 = vadd.f32 %v4122, 1.0
        %v4139 = vadd.f32 %v4123, 1.0
        %v4140 = vadd.f32 %v4124, 1.0
        %v4141 = vadd.f32 %v4125, 1.0
        %v4142 = vadd.f32 %v4126, 1.0
        %v4143 = vadd.f32 %v4127, 1.0
        %v4144 = vadd.f32 %v4128, 1.0
        %v4145 = vadd.f32 %v4129, 1.0
        %v4146 = vadd.f32 %v4130, 1.0
        %v4147 = vadd.f32 %v4131, 1.0
        %v4148 = vadd.f32 %v4132, 1.0
        %v4149 = vmul.f32 %v4021, %v4133
        %v4150 = vmul.f32 %v4022, %v4134
        %v4151 = vmul.f32 %v4023, %v4135
        %v4152 = vmul.f32 %v4024, %v4136
        %v4153 = vmul.f32 %v4025, %v4137
        %v4154 = vmul.f32 %v4026, %v4138
        %v4155 = vmul.f32 %v4027, %v4139
        %v4156 = vmul.f32 %v4028, %v4140
        %v4157 = vmul.f32 %v4029, %v4141
        %v4158 = vmul.f32 %v4030, %v4142
        %v4159 = vmul.f32 %v4031, %v4143
        %v4160 = vmul.f32 %v4032, %v4144
        %v4161 = vmul.f32 %v4033, %v4145
        %v4162 = vmul.f32 %v4034, %v4146
        %v4163 = vmul.f32 %v4035, %v4147
        %v4164 = vmul.f32 %v4036, %v4148
        %v4165 = vmul.f32 %v3915, %v4149
        %v4166 = vmul.f32 %v3944, %v4150
        %v4167 = vmul.f32 %v3917, %v4151
        %v4168 = vmul.f32 %v3946, %v4152
        %v4169 = vmul.f32 %v3920, %v4153
        %v4170 = vmul.f32 %v3949, %v4154
        %v4171 = vmul.f32 %v3922, %v4155
        %v4172 = vmul.f32 %v3951, %v4156
        %v4173 = vmul.f32 %v3925, %v4157
        %v4174 = vmul.f32 %v3954, %v4158
        %v4175 = vmul.f32 %v3927, %v4159
        %v4176 = vmul.f32 %v3956, %v4160
        %v4177 = vmul.f32 %v3930, %v4161
        %v4178 = vmul.f32 %v3959, %v4162
        %v4179 = vmul.f32 %v3932, %v4163
        %v4180 = vmul.f32 %v3961, %v4164
        %v4181 = vpack.c.bf16 %v4167, %v4165
        %v4182 = vpack.c.bf16 %v4168, %v4166
        %v4183 = vpack.c.bf16 %v4171, %v4169
        %v4184 = vpack.c.bf16 %v4172, %v4170
        %v4185 = vpack.c.bf16 %v4175, %v4173
        %v4186 = vpack.c.bf16 %v4176, %v4174
        %v4187 = vpack.c.bf16 %v4179, %v4177
        %v4188 = vpack.c.bf16 %v4180, %v4178
        %v4189 = vld [vmem:[%s12] sm:$0xf]
        %v4190 = vld [vmem:[%s12 + $0x4] sm:$0xf]
        %v4191 = vld [vmem:[%s12 + $0x8] sm:$0xf]
        %v4192 = vld [vmem:[%s12 + $0xc] sm:$0xf]
        %v4193 = vld [vmem:[%s12 + $0x10] sm:$0xf]
        %v4194 = vld [vmem:[%s12 + $0x14] sm:$0xf]
        %v4195 = vld [vmem:[%s12 + $0x18] sm:$0xf]
        %v4196 = vld [vmem:[%s12 + $0x1c] sm:$0xf]
        %v4197 = vld [vmem:[%s12 + $0x20] sm:$0xf]
        %v4198 = vld [vmem:[%s12 + $0x24] sm:$0xf]
        %v4199 = vld [vmem:[%s12 + $0x28] sm:$0xf]
        %v4200 = vld [vmem:[%s12 + $0x2c] sm:$0xf]
        %v4201 = vld [vmem:[%s12 + $0x30] sm:$0xf]
        %v4202 = vld [vmem:[%s12 + $0x34] sm:$0xf]
        %v4203 = vld [vmem:[%s12 + $0x38] sm:$0xf]
        %v4204 = vld [vmem:[%s12 + $0x3c] sm:$0xf]
        %v4205 = vld [vmem:[%s12 + $0x40] sm:$0xf]
        %v4206 = vld [vmem:[%s12 + $0x44] sm:$0xf]
        %v4207 = vld [vmem:[%s12 + $0x48] sm:$0xf]
        %v4208 = vld [vmem:[%s12 + $0x4c] sm:$0xf]
        %v4209 = vld [vmem:[%s12 + $0x50] sm:$0xf]
        %v4210 = vld [vmem:[%s12 + $0x54] sm:$0xf]
        %v4211 = vld [vmem:[%s12 + $0x58] sm:$0xf]
        %v4212 = vld [vmem:[%s12 + $0x5c] sm:$0xf]
        %v4213 = vld [vmem:[%s12 + $0x60] sm:$0xf]
        %v4214 = vld [vmem:[%s12 + $0x64] sm:$0xf]
        %v4215 = vld [vmem:[%s12 + $0x68] sm:$0xf]
        %v4216 = vld [vmem:[%s12 + $0x6c] sm:$0xf]
        %v4217 = vld [vmem:[%s12 + $0x70] sm:$0xf]
        %v4218 = vld [vmem:[%s12 + $0x74] sm:$0xf]
        %v4219 = vld [vmem:[%s12 + $0x78] sm:$0xf]
        %v4220 = vld [vmem:[%s12 + $0x7c] sm:$0xf]
        %v4221 = vperm.slane %v665, 3
        %v4254 = vunpack.c.l.b16 %v4189
        %v4255 = vunpack.c.l.b16 %v4190
        %v4256 = vunpack.c.l.b16 %v4191
        %v4257 = vunpack.c.l.b16 %v4192
        %v4258 = vunpack.c.l.b16 %v4193
        %v4259 = vunpack.c.l.b16 %v4194
        %v4260 = vunpack.c.l.b16 %v4195
        %v4261 = vunpack.c.l.b16 %v4196
        %v4262 = vunpack.c.l.b16 %v4197
        %v4263 = vunpack.c.l.b16 %v4198
        %v4264 = vunpack.c.l.b16 %v4199
        %v4265 = vunpack.c.l.b16 %v4200
        %v4266 = vunpack.c.l.b16 %v4201
        %v4267 = vunpack.c.l.b16 %v4202
        %v4268 = vunpack.c.l.b16 %v4203
        %v4269 = vunpack.c.l.b16 %v4204
        %v4270 = vunpack.c.l.b16 %v4205
        %v4271 = vunpack.c.l.b16 %v4206
        %v4272 = vunpack.c.l.b16 %v4207
        %v4273 = vunpack.c.l.b16 %v4208
        %v4274 = vunpack.c.l.b16 %v4209
        %v4275 = vunpack.c.l.b16 %v4210
        %v4276 = vunpack.c.l.b16 %v4211
        %v4277 = vunpack.c.l.b16 %v4212
        %v4278 = vunpack.c.l.b16 %v4213
        %v4279 = vunpack.c.l.b16 %v4214
        %v4280 = vunpack.c.l.b16 %v4215
        %v4281 = vunpack.c.l.b16 %v4216
        %v4282 = vunpack.c.l.b16 %v4217
        %v4283 = vunpack.c.l.b16 %v4218
        %v4284 = vunpack.c.l.b16 %v4219
        %v4285 = vunpack.c.l.b16 %v4220
        %v4286 = vpack.c.b16 %v4255, %v4254
        %v4287 = vpack.c.b16 %v4257, %v4256
        %v4288 = vpack.c.b16 %v4259, %v4258
        %v4289 = vpack.c.b16 %v4261, %v4260
        %v4290 = vpack.c.b16 %v4263, %v4262
        %v4291 = vpack.c.b16 %v4265, %v4264
        %v4292 = vpack.c.b16 %v4267, %v4266
        %v4293 = vpack.c.b16 %v4269, %v4268
        %v4294 = vpack.c.b16 %v4271, %v4270
        %v4295 = vpack.c.b16 %v4273, %v4272
        %v4296 = vpack.c.b16 %v4275, %v4274
        %v4297 = vpack.c.b16 %v4277, %v4276
        %v4298 = vpack.c.b16 %v4279, %v4278
        %v4299 = vpack.c.b16 %v4281, %v4280
        %v4300 = vpack.c.b16 %v4283, %v4282
        %v4301 = vpack.c.b16 %v4285, %v4284
        %4318 = vmatpush.bf16.msra.mxu0 %v4293
        %4319 = vmatpush.bf16.msra.mxu0 %v4292
        %4320 = vmatpush.bf16.msra.mxu0 %v4291
        %4321 = vmatpush.bf16.msra.mxu0 %v4290
        %4322 = vmatpush.bf16.msra.mxu0 %v4289
        %4323 = vmatpush.bf16.msra.mxu0 %v4288
        %4324 = vmatpush.bf16.msra.mxu0 %v4287
        %4325 = vmatpush.bf16.msra.mxu0 %v4286
        %4326 = vmatmul.bf16.gmra.mxu0 %v4181
        %v4327 = vpop.f32.mrf.mxu0
        %v4328 = vadd.f32 %v4221, %v4327
        %v4329 = vpop.f32.mrf.mxu0
        %v4330 = vadd.f32 %v4221, %v4329
        %4331 = vmatmul.bf16.gmra.mxu0 %v4183
        %v4332 = vpop.f32.mrf.mxu0
        %v4333 = vadd.f32 %v4221, %v4332
        %v4334 = vpop.f32.mrf.mxu0
        %v4335 = vadd.f32 %v4221, %v4334
        %4336 = vmatmul.bf16.gmra.mxu0 %v4185
        %v4337 = vpop.f32.mrf.mxu0
        %v4338 = vadd.f32 %v4221, %v4337
        %v4339 = vpop.f32.mrf.mxu0
        %v4340 = vadd.f32 %v4221, %v4339
        %4341 = vmatmul.bf16.gmra.mxu0 %v4187
        %v4342 = vpop.f32.mrf.mxu0
        %v4343 = vadd.f32 %v4221, %v4342
        %v4344 = vpop.f32.mrf.mxu0
        %v4345 = vadd.f32 %v4221, %v4344
        %4346 = vdwg.mxu0
        %4347 = vmatpush.bf16.msra.mxu0 %v4301
        %4348 = vmatpush.bf16.msra.mxu0 %v4300
        %4349 = vmatpush.bf16.msra.mxu0 %v4299
        %4350 = vmatpush.bf16.msra.mxu0 %v4298
        %4351 = vmatpush.bf16.msra.mxu0 %v4297
        %4352 = vmatpush.bf16.msra.mxu0 %v4296
        %4353 = vmatpush.bf16.msra.mxu0 %v4295
        %4354 = vmatpush.bf16.msra.mxu0 %v4294
        %4355 = vmatmul.bf16.gmra.mxu0 %v4182
        %v4356 = vpop.f32.mrf.mxu0
        %v4357 = vadd.f32 %v4328, %v4356
        %v4358 = vpop.f32.mrf.mxu0
        %v4359 = vadd.f32 %v4330, %v4358
        %4360 = vmatmul.bf16.gmra.mxu0 %v4184
        %v4361 = vpop.f32.mrf.mxu0
        %v4362 = vadd.f32 %v4333, %v4361
        %v4363 = vpop.f32.mrf.mxu0
        %v4364 = vadd.f32 %v4335, %v4363
        %4365 = vmatmul.bf16.gmra.mxu0 %v4186
        %v4366 = vpop.f32.mrf.mxu0
        %v4367 = vadd.f32 %v4338, %v4366
        %v4368 = vpop.f32.mrf.mxu0
        %v4369 = vadd.f32 %v4340, %v4368
        %4370 = vmatmul.bf16.gmra.mxu0 %v4188
        %v4371 = vpop.f32.mrf.mxu0
        %v4372 = vadd.f32 %v4343, %v4371
        %v4373 = vpop.f32.mrf.mxu0
        %v4374 = vadd.f32 %v4345, %v4373
        %4375 = vdwg.mxu0
        %v4376 = vadd.f32 %v4357, %v3581
        %v4377 = vadd.f32 %v4359, %v3582
        %v4378 = vadd.f32 %v4362, %v3583
        %v4379 = vadd.f32 %v4364, %v3584
        %v4380 = vadd.f32 %v4367, %v3585
        %v4381 = vadd.f32 %v4369, %v3586
        %v4382 = vadd.f32 %v4372, %v3587
        %v4383 = vadd.f32 %v4374, %v3588
        %v4384 = vpack.c.bf16 %v4377, %v4376
        %v4385 = vpack.c.bf16 %v4379, %v4378
        %v4386 = vpack.c.bf16 %v4381, %v4380
        %v4387 = vpack.c.bf16 %v4383, %v4382
        %v4388 = vld [vmem:[#allocation17] sm:$0xf]
        %v4389 = vld [vmem:[#allocation17 + $0x4] sm:$0xf]
        %v4390 = vld [vmem:[#allocation17 + $0x8] sm:$0xf]
        %v4391 = vld [vmem:[#allocation17 + $0xc] sm:$0xf]
        %v4392 = vld [vmem:[#allocation17 + $0x10] sm:$0xf]
        %v4393 = vld [vmem:[#allocation17 + $0x14] sm:$0xf]
        %v4394 = vld [vmem:[#allocation17 + $0x18] sm:$0xf]
        %v4395 = vld [vmem:[#allocation17 + $0x1c] sm:$0xf]
        %v4396 = vperm.slane %v665, 4
        %v4405 = vunpack.c.l.b16 %v4388
        %v4406 = vunpack.c.l.b16 %v4389
        %v4407 = vunpack.c.l.b16 %v4390
        %v4408 = vunpack.c.l.b16 %v4391
        %v4409 = vunpack.c.l.b16 %v4392
        %v4410 = vunpack.c.l.b16 %v4393
        %v4411 = vunpack.c.l.b16 %v4394
        %v4412 = vunpack.c.l.b16 %v4395
        %v4413 = vpack.c.b16 %v4406, %v4405
        %v4414 = vpack.c.b16 %v4408, %v4407
        %v4415 = vpack.c.b16 %v4410, %v4409
        %v4416 = vpack.c.b16 %v4412, %v4411
        %v4422 = vsel %vm674, %v4384, 0
        %v4425 = vsel %vm674, %v4385, 0
        %v4428 = vsel %vm674, %v4386, 0
        %v4431 = vsel %vm674, %v4387, 0
        %4433 = vmatpush.bf16.msra.mxu0 0
        %4434 = vmatpush.bf16.msra.mxu0 0
        %4435 = vmatpush.bf16.msra.mxu0 0
        %4436 = vmatpush.bf16.msra.mxu0 0
        %4437 = vmatpush.bf16.msra.mxu0 %v4416
        %4438 = vmatpush.bf16.msra.mxu0 %v4415
        %4439 = vmatpush.bf16.msra.mxu0 %v4414
        %4440 = vmatpush.bf16.msra.mxu0 %v4413
        %4441 = vmatmul.bf16.gmra.mxu0 %v4422
        %v4442 = vpop.f32.mrf.mxu0
        %v4443 = vadd.f32 %v4396, %v4442
        %v4444 = vpop.f32.mrf.mxu0
        %v4445 = vadd.f32 %v4396, %v4444
        %4446 = vmatmul.bf16.gmra.mxu0 %v4425
        %v4447 = vpop.f32.mrf.mxu0
        %v4448 = vadd.f32 %v4396, %v4447
        %v4449 = vpop.f32.mrf.mxu0
        %v4450 = vadd.f32 %v4396, %v4449
        %4451 = vmatmul.bf16.gmra.mxu0 %v4428
        %v4452 = vpop.f32.mrf.mxu0
        %v4453 = vadd.f32 %v4396, %v4452
        %v4454 = vpop.f32.mrf.mxu0
        %v4455 = vadd.f32 %v4396, %v4454
        %4456 = vmatmul.bf16.gmra.mxu0 %v4431
        %v4457 = vpop.f32.mrf.mxu0
        %v4458 = vadd.f32 %v4396, %v4457
        %v4459 = vpop.f32.mrf.mxu0
        %v4460 = vadd.f32 %v4396, %v4459
        %4461 = vdwg.mxu0
        %v4462 = vadd.f32 %v4443, %v655
        %v4463 = vadd.f32 %v4445, %v656
        %v4464 = vadd.f32 %v4448, %v657
        %v4465 = vadd.f32 %v4450, %v658
        %v4466 = vadd.f32 %v4453, %v659
        %v4467 = vadd.f32 %v4455, %v660
        %v4468 = vadd.f32 %v4458, %v661
        %v4469 = vadd.f32 %v4460, %v662
        %4470 = vst.msk [vmem:[%s648] sm:$0xff] %vm674, %v4462
        %4471 = vst.msk [vmem:[%s648 + $0x8] sm:$0xff] %vm674, %v4463
        %4472 = vst.msk [vmem:[%s648 + $0x10] sm:$0xff] %vm674, %v4464
        %4473 = vst.msk [vmem:[%s648 + $0x18] sm:$0xff] %vm674, %v4465
        %4474 = vst.msk [vmem:[%s648 + $0x20] sm:$0xff] %vm674, %v4466
        %4475 = vst.msk [vmem:[%s648 + $0x28] sm:$0xff] %vm674, %v4467
        %4476 = vst.msk [vmem:[%s648 + $0x30] sm:$0xff] %vm674, %v4468
        %4477 = vst.msk [vmem:[%s648 + $0x38] sm:$0xff] %vm674, %v4469
        %s4478 = sand.u32 %s348, 1
        %s4479 = scalar_lea.sflag [#allocation4], %s4478
        %s4480 = sand.u32 %s348, 1
        %s4481 = smul.addr %s4480, 64
        %s4482 = scalar_lea.vmem [#allocation19], %s4481
        // Predicated region
        $region117: #{tpu_custom_call.1} parent=75 // pred_check
          %p4483 = pneg %p358
        $region118: #{tpu_custom_call.1} parent=75 // pred_check_branch
          %4485 = sbr.rel (%p4483) target = $region120
        $region119: #{tpu_custom_call.1} parent=75 // pred_region
          %4487 = vsyncadd %s4479, 0
          %s4488 = smul.addr %s36, 8
          %s4489 = smul.addr %s4488, 8
          %s4490 = scalar_lea.hbm %s14, %s4489
          %s4491 = sshll.u32 %s4482, 4
          %s4492 = int_to_ptr.vmem [resolvable:$true] %s4491
          %s4493 = sshll.u32 %s4490, 4
          %s4494 = int_to_ptr.hbm [resolvable:$true] %s4493
          %4499 = dma.vmem_to_hbm [thread:$0]  %s4492, 1024, %s4494, %s4479, 128, 128, 8
        $region120: #{tpu_custom_call.1} parent=75 // pred_fallthru
          _
      $region76: #{tpu_custom_call.1} parent=5 // pred_fallthru
        _
      %p4500 = scmp.le.s32.totalorder 2, %s31
      // Predicated region
      $region121: #{tpu_custom_call.1} parent=5 // pred_check
        %p4501 = pneg %p4500
      $region122: #{tpu_custom_call.1} parent=5 // pred_check_branch
        %4503 = sbr.rel (%p4501) target = $region124
      $region123: #{tpu_custom_call.1} parent=5 // pred_region
        %s4504 = ssub.s32 %s31, 2
        // Predicated region
        $region125: #{tpu_custom_call.1} parent=123 // pred_check
          %p4505 = pneg %p364
        $region126: #{tpu_custom_call.1} parent=123 // pred_check_branch
          %4507 = sbr.rel (%p4505) target = $region128
        $region127: #{tpu_custom_call.1} parent=123 // pred_region
          %s4508 = sand.u32 %s349, 1
          %s4509 = scalar_lea.sflag [#allocation4], %s4508
          %s4510 = sand.u32 %s349, 1
          %s4511 = smul.addr %s4510, 64
          %s4512 = scalar_lea.vmem [#allocation19], %s4511
          %4514 = dma.done %s4509, 1024
        $region128: #{tpu_custom_call.1} parent=123 // pred_fallthru
          _
      $region124: #{tpu_custom_call.1} parent=5 // pred_fallthru
        _
    $region6: #{tpu_custom_call.1} parent=1 // loop_footer
      %s35 = sadd.s32 1, %s31
    $region7: #{tpu_custom_call.1} parent=1 // loop_footer_branch
      %30 = sbr.rel target = $region3
    $region8: #{tpu_custom_call.1} parent=1 // loop_exit
      _
    %4515 = vsyncpa [#allocation3], 1
    %s4516 = scalar_lea.sflag [#allocation3], 1
    %4517 = vsyncpa %s4516, 1
    %4518 = vsyncpa [#allocation6], 1
    %4519 = vsyncpa [#allocation9], 1
    %4520 = vsyncpa [#allocation12], 1
    %4521 = vsyncpa [#allocation15], 1
    %4522 = vsyncpa [#allocation18], 1
    %4523 = vsyncpa [#allocation4], 1
    %s4524 = scalar_lea.sflag [#allocation4], 1
    %4525 = vsyncpa %s4524, 1

// kernel: tpu_custom_call.1
$region0: #{tpu_custom_call.1}
  #allocation0 [shape = 'u32[]', space=smem, size = 0x4, offset = 0x4, fixed_abs, tag = 'smem constant byte address 0x4 - core index']
  #allocation1 [shape = 'u32[72,128]{1,0:T(1,128)}', space=vmem, size = 0x9000, scoped, tag = 'internal scratch']
  %s0 = inlined_call_operand.vmem [shape: f32[2,64,64], index: 0, kind: input, shape index: {}]
  %s1 = inlined_call_operand.hbm [shape: f32[2,8,64], index: 1, kind: input, shape index: {}]
  %s2 = inlined_call_operand.hbm [shape: f32[13,64], index: 2, kind: input, shape index: {}]
  %s3 = inlined_call_operand.hbm [shape: bf16[64,64], index: 3, kind: input, shape index: {}]
  %s4 = inlined_call_operand.hbm [shape: bf16[64,64], index: 4, kind: input, shape index: {}]
  %s5 = inlined_call_operand.vmem [shape: bf16[64,192], index: 5, kind: input, shape index: {}]
  %s6 = inlined_call_operand.hbm [shape: bf16[64,64], index: 6, kind: input, shape index: {}]
  %s7 = inlined_call_operand.hbm [shape: bf16[64,64], index: 7, kind: input, shape index: {}]
  %s8 = inlined_call_operand.hbm [shape: bf16[64,128], index: 8, kind: input, shape index: {}]
  %s9 = inlined_call_operand.hbm [shape: bf16[64,64], index: 9, kind: input, shape index: {}]
  %s10 = inlined_call_operand.hbm [shape: bf16[64,512], index: 10, kind: input, shape index: {}]
  %s11 = inlined_call_operand.vmem [shape: f32[1,512], index: 11, kind: input, shape index: {}]
  %s12 = inlined_call_operand.vmem [shape: bf16[256,64], index: 12, kind: input, shape index: {}]
  %s13 = inlined_call_operand.hbm [shape: bf16[64,64], index: 13, kind: input, shape index: {}]
  %s14 = inlined_call_operand.hbm [shape: f32[2,64,64], index: 14, kind: output, shape index: {}]
  %s15 = sld [smem:[#allocation0]]
  $region129: #{tpu_custom_call.1} parent=0
    _
  %s17 = ssub.s32 1, %s15
  %s18 = scalar_select 0, %s17, %s15
  $region1: #{tpu_custom_call.1} parent=0
    #allocation2 [shape = 'u8[8192]{0}', space=vmem, size = 0x2000, scoped, tag = 'input window, operand 1']
    #allocation3 [shape = 's32[2]{0}', space=sflag, size = 0x8, scoped, tag = 'scoped memory for tpu_custom_call.1']
    #allocation4 [shape = 's32[2]{0}', space=sflag, size = 0x8, scoped, tag = 'scoped memory for tpu_custom_call.1']
    #allocation5 [shape = 'u8[8192]{0}', space=vmem, size = 0x2000, scoped, tag = 'input window, operand 2, single buffered']
    #allocation6 [shape = 's32[1]{0}', space=sflag, size = 0x4, scoped, tag = 'scoped memory for tpu_custom_call.1']
    #allocation7 [shape = 'u8[16384]{0}', space=vmem, size = 0x4000, scoped, tag = 'input window, operand 3, single buffered']
    #allocation8 [shape = 'u8[16384]{0}', space=vmem, size = 0x4000, scoped, tag = 'input window, operand 4, single buffered']
    #allocation9 [shape = 's32[1]{0}', space=sflag, size = 0x4, scoped, tag = 'scoped memory for tpu_custom_call.1']
    #allocation10 [shape = 'u8[16384]{0}', space=vmem, size = 0x4000, scoped, tag = 'input window, operand 6, single buffered']
    #allocation11 [shape = 'u8[16384]{0}', space=vmem, size = 0x4000, scoped, tag = 'input window, operand 7, single buffered']
    #allocation12 [shape = 's32[1]{0}', space=sflag, size = 0x4, scoped, tag = 'scoped memory for tpu_custom_call.1']
    #allocation13 [shape = 'u8[16384]{0}', space=vmem, size = 0x4000, scoped, tag = 'input window, operand 8, single buffered']
    #allocation14 [shape = 'u8[16384]{0}', space=vmem, size = 0x4000, scoped, tag = 'input window, operand 9, single buffered']
    #allocation15 [shape = 's32[1]{0}', space=sflag, size = 0x4, scoped, tag = 'scoped memory for tpu_custom_call.1']
    #allocation16 [shape = 'u8[65536]{0}', space=vmem, size = 0x10000, scoped, tag = 'input window, operand 10, single buffered']
    #allocation17 [shape = 'u8[16384]{0}', space=vmem, size = 0x4000, scoped, tag = 'input window, operand 13, single buffered']
    #allocation18 [shape = 's32[1]{0}', space=sflag, size = 0x4, scoped, tag = 'scoped memory for tpu_custom_call.1']
    #allocation19 [shape = 'u8[65536]{0}', space=vmem, size = 0x10000, scoped, tag = 'output window, operand 0']
    %19 = vsyncpa [#allocation3], 0
    %s20 = scalar_lea.sflag [#allocation3], 1
    %21 = vsyncpa %s20, 0
    %22 = vsyncpa [#allocation6], 0
    %23 = vsyncpa [#allocation9], 0
    %24 = vsyncpa [#allocation12], 0
    %25 = vsyncpa [#allocation15], 0
    %26 = vsyncpa [#allocation18], 0
    %27 = vsyncpa [#allocation4], 0
    %s28 = scalar_lea.sflag [#allocation4], 1
    %29 = vsyncpa %s28, 0
    loop: start=0, step=1, limit=4
    $region2: #{tpu_custom_call.1} parent=1 // loop_pre_header
      _
    $region3: #{tpu_custom_call.1} parent=1 // loop_header
      %s31 = sphi 0, %s35
      %p32 = scmp.ge.s32.totalorder %s31, 4
      %s41 = sphi 0, %s43
      %s44 = sphi 0, %s41
      %s45 = sphi 0, %s44
      %s61 = sphi 0, %s45
      %s67 = sphi 0, %s69
      %s70 = sphi 0, %s67
      %s71 = sphi 0, %s70
      %s87 = sphi 0, %s71
      %s91 = sphi 0, %s91
      %s93 = sphi 0, %s91
      %s94 = sphi 0, %s93
      %s108 = sphi 0, %s94
      %s112 = sphi 0, %s112
      %s114 = sphi 0, %s112
      %s115 = sphi 0, %s114
      %s129 = sphi 0, %s115
      %s133 = sphi 0, %s133
      %s135 = sphi 0, %s133
      %s136 = sphi 0, %s135
      %s150 = sphi 0, %s136
      %s154 = sphi 0, %s154
      %s156 = sphi 0, %s154
      %s157 = sphi 0, %s156
      %s171 = sphi 0, %s157
      %s175 = sphi 0, %s175
      %s177 = sphi 0, %s175
      %s178 = sphi 0, %s177
      %s192 = sphi 0, %s178
      %s196 = sphi 0, %s196
      %s198 = sphi 0, %s196
      %s199 = sphi 0, %s198
      %s213 = sphi 0, %s199
      %s217 = sphi 0, %s217
      %s219 = sphi 0, %s217
      %s220 = sphi 0, %s219
      %s234 = sphi 0, %s220
      %s238 = sphi 0, %s238
      %s240 = sphi 0, %s238
      %s241 = sphi 0, %s240
      %s255 = sphi 0, %s241
      %s259 = sphi 0, %s259
      %s261 = sphi 0, %s259
      %s262 = sphi 0, %s261
      %s276 = sphi 0, %s262
      %s280 = sphi 0, %s280
      %s282 = sphi 0, %s280
      %s283 = sphi 0, %s282
      %s297 = sphi 0, %s283
      %s301 = sphi 0, %s301
      %s303 = sphi 0, %s301
      %s304 = sphi 0, %s303
      %s318 = sphi 0, %s304
      %s322 = sphi 0, %s322
      %s324 = sphi 0, %s322
      %s325 = sphi 0, %s324
      %s339 = sphi 0, %s325
      %s345 = sphi 0, %s347
      %s348 = sphi 0, %s345
      %s349 = sphi 0, %s348
      %s365 = sphi 0, %s349
    $region4: #{tpu_custom_call.1} parent=1 // loop_header_branch
      %34 = sbr.rel (%p32) target = $region8
    $region5: #{tpu_custom_call.1} parent=1 // loop_body
      %s36 = ssub.s32 %s31, 1
      %s37 = ssub.s32 %s31, 2
      %s38 = sadd.s32 %s31, 1
      %s39 = ssub.s32 %s31, %s38
      %p40 = scmp.eq.s32.totalorder %s39, 0
      %s42 = sadd.s32 %s41, 1
      %s43 = scalar_select %p40, %s41, %s42
      %p46 = pneg %p40
      %p47 = scmp.eq.s32.totalorder %s31, 1
      %p48 = por %p46, %p47
      %p49 = scmp.ne.s32.totalorder %s41, %s44
      %p50 = scmp.eq.s32.totalorder %s31, 0
      %p51 = por %p49, %p50
      %p52 = scmp.ne.s32.totalorder %s41, %s44
      %p53 = scmp.eq.s32.totalorder %s36, 1
      %p54 = por %p52, %p53
      %p55 = scmp.ne.s32.totalorder %s44, %s45
      %p56 = scmp.eq.s32.totalorder %s36, 0
      %p57 = por %p55, %p56
      %p58 = scmp.ne.s32.totalorder %s44, %s45
      %p59 = scmp.eq.s32.totalorder %s37, 1
      %p60 = por %p58, %p59
      %p62 = scmp.ne.s32.totalorder %s45, %s61
      %p63 = scmp.eq.s32.totalorder %s37, 0
      %p64 = por %p62, %p63
      %s65 = ssub.s32 %s31, %s38
      %p66 = scmp.eq.s32.totalorder %s65, 0
      %s68 = sadd.s32 %s67, 1
      %s69 = scalar_select %p66, %s67, %s68
      %p72 = pneg %p66
      %p73 = scmp.eq.s32.totalorder %s31, 1
      %p74 = por %p72, %p73
      %p75 = scmp.ne.s32.totalorder %s67, %s70
      %p76 = scmp.eq.s32.totalorder %s31, 0
      %p77 = por %p75, %p76
      %p78 = scmp.ne.s32.totalorder %s67, %s70
      %p79 = scmp.eq.s32.totalorder %s36, 1
      %p80 = por %p78, %p79
      %p81 = scmp.ne.s32.totalorder %s70, %s71
      %p82 = scmp.eq.s32.totalorder %s36, 0
      %p83 = por %p81, %p82
      %p84 = scmp.ne.s32.totalorder %s70, %s71
      %p85 = scmp.eq.s32.totalorder %s37, 1
      %p86 = por %p84, %p85
      %p88 = scmp.ne.s32.totalorder %s71, %s87
      %p89 = scmp.eq.s32.totalorder %s37, 0
      %p90 = por %p88, %p89
      %s92 = sadd.s32 %s91, 1
      %p95 = scmp.eq.s32.totalorder %s31, 1
      %p96 = scmp.ne.s32.totalorder %s91, %s93
      %p97 = scmp.eq.s32.totalorder %s31, 0
      %p98 = por %p96, %p97
      %p99 = scmp.ne.s32.totalorder %s91, %s93
      %p100 = scmp.eq.s32.totalorder %s36, 1
      %p101 = por %p99, %p100
      %p102 = scmp.ne.s32.totalorder %s93, %s94
      %p103 = scmp.eq.s32.totalorder %s36, 0
      %p104 = por %p102, %p103
      %p105 = scmp.ne.s32.totalorder %s93, %s94
      %p106 = scmp.eq.s32.totalorder %s37, 1
      %p107 = por %p105, %p106
      %p109 = scmp.ne.s32.totalorder %s94, %s108
      %p110 = scmp.eq.s32.totalorder %s37, 0
      %p111 = por %p109, %p110
      %s113 = sadd.s32 %s112, 1
      %p116 = scmp.eq.s32.totalorder %s31, 1
      %p117 = scmp.ne.s32.totalorder %s112, %s114
      %p118 = scmp.eq.s32.totalorder %s31, 0
      %p119 = por %p117, %p118
      %p120 = scmp.ne.s32.totalorder %s112, %s114
      %p121 = scmp.eq.s32.totalorder %s36, 1
      %p122 = por %p120, %p121
      %p123 = scmp.ne.s32.totalorder %s114, %s115
      %p124 = scmp.eq.s32.totalorder %s36, 0
      %p125 = por %p123, %p124
      %p126 = scmp.ne.s32.totalorder %s114, %s115
      %p127 = scmp.eq.s32.totalorder %s37, 1
      %p128 = por %p126, %p127
      %p130 = scmp.ne.s32.totalorder %s115, %s129
      %p131 = scmp.eq.s32.totalorder %s37, 0
      %p132 = por %p130, %p131
      %s134 = sadd.s32 %s133, 1
      %p137 = scmp.eq.s32.totalorder %s31, 1
      %p138 = scmp.ne.s32.totalorder %s133, %s135
      %p139 = scmp.eq.s32.totalorder %s31, 0
      %p140 = por %p138, %p139
      %p141 = scmp.ne.s32.totalorder %s133, %s135
      %p142 = scmp.eq.s32.totalorder %s36, 1
      %p143 = por %p141, %p142
      %p144 = scmp.ne.s32.totalorder %s135, %s136
      %p145 = scmp.eq.s32.totalorder %s36, 0
      %p146 = por %p144, %p145
      %p147 = scmp.ne.s32.totalorder %s135, %s136
      %p148 = scmp.eq.s32.totalorder %s37, 1
      %p149 = por %p147, %p148
      %p151 = scmp.ne.s32.totalorder %s136, %s150
      %p152 = scmp.eq.s32.totalorder %s37, 0
      %p153 = por %p151, %p152
      %s155 = sadd.s32 %s154, 1
      %p158 = scmp.eq.s32.totalorder %s31, 1
      %p159 = scmp.ne.s32.totalorder %s154, %s156
      %p160 = scmp.eq.s32.totalorder %s31, 0
      %p161 = por %p159, %p160
      %p162 = scmp.ne.s32.totalorder %s154, %s156
      %p163 = scmp.eq.s32.totalorder %s36, 1
      %p164 = por %p162, %p163
      %p165 = scmp.ne.s32.totalorder %s156, %s157
      %p166 = scmp.eq.s32.totalorder %s36, 0
      %p167 = por %p165, %p166
      %p168 = scmp.ne.s32.totalorder %s156, %s157
      %p169 = scmp.eq.s32.totalorder %s37, 1
      %p170 = por %p168, %p169
      %p172 = scmp.ne.s32.totalorder %s157, %s171
      %p173 = scmp.eq.s32.totalorder %s37, 0
      %p174 = por %p172, %p173
      %s176 = sadd.s32 %s175, 1
      %p179 = scmp.eq.s32.totalorder %s31, 1
      %p180 = scmp.ne.s32.totalorder %s175, %s177
      %p181 = scmp.eq.s32.totalorder %s31, 0
      %p182 = por %p180, %p181
      %p183 = scmp.ne.s32.totalorder %s175, %s177
      %p184 = scmp.eq.s32.totalorder %s36, 1
      %p185 = por %p183, %p184
      %p186 = scmp.ne.s32.totalorder %s177, %s178
      %p187 = scmp.eq.s32.totalorder %s36, 0
      %p188 = por %p186, %p187
      %p189 = scmp.ne.s32.totalorder %s177, %s178
      %p190 = scmp.eq.s32.totalorder %s37, 1
      %p191 = por %p189, %p190
      %p193 = scmp.ne.s32.totalorder %s178, %s192
      %p194 = scmp.eq.s32.totalorder %s37, 0
      %p195 = por %p193, %p194
      %s197 = sadd.s32 %s196, 1
      %p200 = scmp.eq.s32.totalorder %s31, 1
      %p201 = scmp.ne.s32.totalorder %s196, %s198
      %p202 = scmp.eq.s32.totalorder %s31, 0
      %p203 = por %p201, %p202
      %p204 = scmp.ne.s32.totalorder %s196, %s198
      %p205 = scmp.eq.s32.totalorder %s36, 1
      %p206 = por %p204, %p205
      %p207 = scmp.ne.s32.totalorder %s198, %s199
      %p208 = scmp.eq.s32.totalorder %s36, 0
      %p209 = por %p207, %p208
      %p210 = scmp.ne.s32.totalorder %s198, %s199
      %p211 = scmp.eq.s32.totalorder %s37, 1
      %p212 = por %p210, %p211
      %p214 = scmp.ne.s32.totalorder %s199, %s213
      %p215 = scmp.eq.s32.totalorder %s37, 0
      %p216 = por %p214, %p215
      %s218 = sadd.s32 %s217, 1
      %p221 = scmp.eq.s32.totalorder %s31, 1
      %p222 = scmp.ne.s32.totalorder %s217, %s219
      %p223 = scmp.eq.s32.totalorder %s31, 0
      %p224 = por %p222, %p223
      %p225 = scmp.ne.s32.totalorder %s217, %s219
      %p226 = scmp.eq.s32.totalorder %s36, 1
      %p227 = por %p225, %p226
      %p228 = scmp.ne.s32.totalorder %s219, %s220
      %p229 = scmp.eq.s32.totalorder %s36, 0
      %p230 = por %p228, %p229
      %p231 = scmp.ne.s32.totalorder %s219, %s220
      %p232 = scmp.eq.s32.totalorder %s37, 1
      %p233 = por %p231, %p232
      %p235 = scmp.ne.s32.totalorder %s220, %s234
      %p236 = scmp.eq.s32.totalorder %s37, 0
      %p237 = por %p235, %p236
      %s239 = sadd.s32 %s238, 1
      %p242 = scmp.eq.s32.totalorder %s31, 1
      %p243 = scmp.ne.s32.totalorder %s238, %s240
      %p244 = scmp.eq.s32.totalorder %s31, 0
      %p245 = por %p243, %p244
      %p246 = scmp.ne.s32.totalorder %s238, %s240
      %p247 = scmp.eq.s32.totalorder %s36, 1
      %p248 = por %p246, %p247
      %p249 = scmp.ne.s32.totalorder %s240, %s241
      %p250 = scmp.eq.s32.totalorder %s36, 0
      %p251 = por %p249, %p250
      %p252 = scmp.ne.s32.totalorder %s240, %s241
      %p253 = scmp.eq.s32.totalorder %s37, 1
      %p254 = por %p252, %p253
      %p256 = scmp.ne.s32.totalorder %s241, %s255
      %p257 = scmp.eq.s32.totalorder %s37, 0
      %p258 = por %p256, %p257
      %s260 = sadd.s32 %s259, 1
      %p263 = scmp.eq.s32.totalorder %s31, 1
      %p264 = scmp.ne.s32.totalorder %s259, %s261
      %p265 = scmp.eq.s32.totalorder %s31, 0
      %p266 = por %p264, %p265
      %p267 = scmp.ne.s32.totalorder %s259, %s261
      %p268 = scmp.eq.s32.totalorder %s36, 1
      %p269 = por %p267, %p268
      %p270 = scmp.ne.s32.totalorder %s261, %s262
      %p271 = scmp.eq.s32.totalorder %s36, 0
      %p272 = por %p270, %p271
      %p273 = scmp.ne.s32.totalorder %s261, %s262
      %p274 = scmp.eq.s32.totalorder %s37, 1
      %p275 = por %p273, %p274
      %p277 = scmp.ne.s32.totalorder %s262, %s276
      %p278 = scmp.eq.s32.totalorder %s37, 0
      %p279 = por %p277, %p278
      %s281 = sadd.s32 %s280, 1
      %p284 = scmp.eq.s32.totalorder %s31, 1
      %p285 = scmp.ne.s32.totalorder %s280, %s282
      %p286 = scmp.eq.s32.totalorder %s31, 0
      %p287 = por %p285, %p286
      %p288 = scmp.ne.s32.totalorder %s280, %s282
      %p289 = scmp.eq.s32.totalorder %s36, 1
      %p290 = por %p288, %p289
      %p291 = scmp.ne.s32.totalorder %s282, %s283
      %p292 = scmp.eq.s32.totalorder %s36, 0
      %p293 = por %p291, %p292
      %p294 = scmp.ne.s32.totalorder %s282, %s283
      %p295 = scmp.eq.s32.totalorder %s37, 1
      %p296 = por %p294, %p295
      %p298 = scmp.ne.s32.totalorder %s283, %s297
      %p299 = scmp.eq.s32.totalorder %s37, 0
      %p300 = por %p298, %p299
      %s302 = sadd.s32 %s301, 1
      %p305 = scmp.eq.s32.totalorder %s31, 1
      %p306 = scmp.ne.s32.totalorder %s301, %s303
      %p307 = scmp.eq.s32.totalorder %s31, 0
      %p308 = por %p306, %p307
      %p309 = scmp.ne.s32.totalorder %s301, %s303
      %p310 = scmp.eq.s32.totalorder %s36, 1
      %p311 = por %p309, %p310
      %p312 = scmp.ne.s32.totalorder %s303, %s304
      %p313 = scmp.eq.s32.totalorder %s36, 0
      %p314 = por %p312, %p313
      %p315 = scmp.ne.s32.totalorder %s303, %s304
      %p316 = scmp.eq.s32.totalorder %s37, 1
      %p317 = por %p315, %p316
      %p319 = scmp.ne.s32.totalorder %s304, %s318
      %p320 = scmp.eq.s32.totalorder %s37, 0
      %p321 = por %p319, %p320
      %s323 = sadd.s32 %s322, 1
      %p326 = scmp.eq.s32.totalorder %s31, 1
      %p327 = scmp.ne.s32.totalorder %s322, %s324
      %p328 = scmp.eq.s32.totalorder %s31, 0
      %p329 = por %p327, %p328
      %p330 = scmp.ne.s32.totalorder %s322, %s324
      %p331 = scmp.eq.s32.totalorder %s36, 1
      %p332 = por %p330, %p331
      %p333 = scmp.ne.s32.totalorder %s324, %s325
      %p334 = scmp.eq.s32.totalorder %s36, 0
      %p335 = por %p333, %p334
      %p336 = scmp.ne.s32.totalorder %s324, %s325
      %p337 = scmp.eq.s32.totalorder %s37, 1
      %p338 = por %p336, %p337
      %p340 = scmp.ne.s32.totalorder %s325, %s339
      %p341 = scmp.eq.s32.totalorder %s37, 0
      %p342 = por %p340, %p341
      %s343 = ssub.s32 %s31, %s38
      %p344 = scmp.eq.s32.totalorder %s343, 0
      %s346 = sadd.s32 %s345, 1
      %s347 = scalar_select %p344, %s345, %s346
      %p350 = pneg %p344
      %p351 = scmp.eq.s32.totalorder %s31, 1
      %p352 = por %p350, %p351
      %p353 = scmp.ne.s32.totalorder %s345, %s348
      %p354 = scmp.eq.s32.totalorder %s31, 0
      %p355 = por %p353, %p354
      %p356 = scmp.ne.s32.totalorder %s345, %s348
      %p357 = scmp.eq.s32.totalorder %s36, 1
      %p358 = por %p356, %p357
      %p359 = scmp.ne.s32.totalorder %s348, %s349
      %p360 = scmp.eq.s32.totalorder %s36, 0
      %p361 = por %p359, %p360
      %p362 = scmp.ne.s32.totalorder %s348, %s349
      %p363 = scmp.eq.s32.totalorder %s37, 1
      %p364 = por %p362, %p363
      %p366 = scmp.ne.s32.totalorder %s349, %s365
      %p367 = scmp.eq.s32.totalorder %s37, 0
      %p368 = por %p366, %p367
      %p369 = scmp.le.s32.totalorder 1, %s31
      %p370 = scmp.lt.s32.totalorder %s31, 3
      %p371 = pnand %p369, %p370
      %p372 = pneg %p371
      // Predicated region
      $region9: #{tpu_custom_call.1} parent=5 // pred_check
        _
      $region10: #{tpu_custom_call.1} parent=5 // pred_check_branch
        %374 = sbr.rel (%p371) target = $region12
      $region11: #{tpu_custom_call.1} parent=5 // pred_region
        %s375 = ssub.s32 %s31, 1
        // Predicated region
        $region13: #{tpu_custom_call.1} parent=11 // pred_check
          %p376 = pneg %p104
        $region14: #{tpu_custom_call.1} parent=11 // pred_check_branch
          %378 = sbr.rel (%p376) target = $region16
        $region15: #{tpu_custom_call.1} parent=11 // pred_region
          %380 = vsyncadd [#allocation6], 0
          %s381 = sshll.u32 %s2, 4
          %s382 = int_to_ptr.hbm [resolvable:$true] %s381
          %s383 = sshll.u32 [#allocation5], 4
          %s384 = int_to_ptr.vmem [resolvable:$true] %s383
          %389 = dma.hbm_to_vmem [thread:$0]  %s382, 256, %s384, [#allocation6], 128, 128, 8
        $region16: #{tpu_custom_call.1} parent=11 // pred_fallthru
          _
        // Predicated region
        $region17: #{tpu_custom_call.1} parent=11 // pred_check
          %p390 = pneg %p125
        $region18: #{tpu_custom_call.1} parent=11 // pred_check_branch
          %392 = sbr.rel (%p390) target = $region20
        $region19: #{tpu_custom_call.1} parent=11 // pred_region
          %394 = vsyncadd [#allocation6], 0
          %s395 = sshll.u32 %s3, 4
          %s396 = int_to_ptr.hbm [resolvable:$true] %s395
          %s397 = sshll.u32 [#allocation7], 4
          %s398 = int_to_ptr.vmem [resolvable:$true] %s397
          %403 = dma.hbm_to_vmem [thread:$0]  %s396, 512, %s398, [#allocation6], 64, 64, 4
        $region20: #{tpu_custom_call.1} parent=11 // pred_fallthru
          _
        // Predicated region
        $region21: #{tpu_custom_call.1} parent=11 // pred_check
          %p404 = pneg %p146
        $region22: #{tpu_custom_call.1} parent=11 // pred_check_branch
          %406 = sbr.rel (%p404) target = $region24
        $region23: #{tpu_custom_call.1} parent=11 // pred_region
          %408 = vsyncadd [#allocation9], 0
          %s409 = sshll.u32 %s4, 4
          %s410 = int_to_ptr.hbm [resolvable:$true] %s409
          %s411 = sshll.u32 [#allocation8], 4
          %s412 = int_to_ptr.vmem [resolvable:$true] %s411
          %417 = dma.hbm_to_vmem [thread:$0]  %s410, 512, %s412, [#allocation9], 64, 64, 4
        $region24: #{tpu_custom_call.1} parent=11 // pred_fallthru
          _
        // Predicated region
        $region25: #{tpu_custom_call.1} parent=11 // pred_check
          %p418 = pneg %p167
        $region26: #{tpu_custom_call.1} parent=11 // pred_check_branch
          %420 = sbr.rel (%p418) target = $region28
        $region27: #{tpu_custom_call.1} parent=11 // pred_region
          _
        $region28: #{tpu_custom_call.1} parent=11 // pred_fallthru
          _
        // Predicated region
        $region29: #{tpu_custom_call.1} parent=11 // pred_check
          %p421 = pneg %p188
        $region30: #{tpu_custom_call.1} parent=11 // pred_check_branch
          %423 = sbr.rel (%p421) target = $region32
        $region31: #{tpu_custom_call.1} parent=11 // pred_region
          %425 = vsyncadd [#allocation9], 0
          %s426 = sshll.u32 %s6, 4
          %s427 = int_to_ptr.hbm [resolvable:$true] %s426
          %s428 = sshll.u32 [#allocation10], 4
          %s429 = int_to_ptr.vmem [resolvable:$true] %s428
          %434 = dma.hbm_to_vmem [thread:$0]  %s427, 512, %s429, [#allocation9], 64, 64, 4
        $region32: #{tpu_custom_call.1} parent=11 // pred_fallthru
          _
        // Predicated region
        $region33: #{tpu_custom_call.1} parent=11 // pred_check
          %p435 = pneg %p209
        $region34: #{tpu_custom_call.1} parent=11 // pred_check_branch
          %437 = sbr.rel (%p435) target = $region36
        $region35: #{tpu_custom_call.1} parent=11 // pred_region
          %439 = vsyncadd [#allocation12], 0
          %s440 = sshll.u32 %s7, 4
          %s441 = int_to_ptr.hbm [resolvable:$true] %s440
          %s442 = sshll.u32 [#allocation11], 4
          %s443 = int_to_ptr.vmem [resolvable:$true] %s442
          %448 = dma.hbm_to_vmem [thread:$0]  %s441, 512, %s443, [#allocation12], 64, 64, 4
        $region36: #{tpu_custom_call.1} parent=11 // pred_fallthru
          _
        // Predicated region
        $region37: #{tpu_custom_call.1} parent=11 // pred_check
          %p449 = pneg %p230
        $region38: #{tpu_custom_call.1} parent=11 // pred_check_branch
          %451 = sbr.rel (%p449) target = $region40
        $region39: #{tpu_custom_call.1} parent=11 // pred_region
          %453 = vsyncadd [#allocation12], 0
          %s454 = sshll.u32 %s8, 4
          %s455 = int_to_ptr.hbm [resolvable:$true] %s454
          %s456 = sshll.u32 [#allocation13], 4
          %s457 = int_to_ptr.vmem [resolvable:$true] %s456
          %462 = dma.hbm_to_vmem [thread:$0]  %s455, 512, %s457, [#allocation12], 64, 64, 4
        $region40: #{tpu_custom_call.1} parent=11 // pred_fallthru
          _
        // Predicated region
        $region41: #{tpu_custom_call.1} parent=11 // pred_check
          %p463 = pneg %p251
        $region42: #{tpu_custom_call.1} parent=11 // pred_check_branch
          %465 = sbr.rel (%p463) target = $region44
        $region43: #{tpu_custom_call.1} parent=11 // pred_region
          %467 = vsyncadd [#allocation15], 0
          %s468 = sshll.u32 %s9, 4
          %s469 = int_to_ptr.hbm [resolvable:$true] %s468
          %s470 = sshll.u32 [#allocation14], 4
          %s471 = int_to_ptr.vmem [resolvable:$true] %s470
          %476 = dma.hbm_to_vmem [thread:$0]  %s469, 512, %s471, [#allocation15], 64, 64, 4
        $region44: #{tpu_custom_call.1} parent=11 // pred_fallthru
          _
        // Predicated region
        $region45: #{tpu_custom_call.1} parent=11 // pred_check
          %p477 = pneg %p272
        $region46: #{tpu_custom_call.1} parent=11 // pred_check_branch
          %479 = sbr.rel (%p477) target = $region48
        $region47: #{tpu_custom_call.1} parent=11 // pred_region
          %481 = vsyncadd [#allocation15], 0
          %s482 = sshll.u32 %s10, 4
          %s483 = int_to_ptr.hbm [resolvable:$true] %s482
          %s484 = sshll.u32 [#allocation16], 4
          %s485 = int_to_ptr.vmem [resolvable:$true] %s484
          %490 = dma.hbm_to_vmem [thread:$0]  %s483, 2048, %s485, [#allocation15], 256, 256, 16
        $region48: #{tpu_custom_call.1} parent=11 // pred_fallthru
          _
        // Predicated region
        $region49: #{tpu_custom_call.1} parent=11 // pred_check
          %p491 = pneg %p293
        $region50: #{tpu_custom_call.1} parent=11 // pred_check_branch
          %493 = sbr.rel (%p491) target = $region52
        $region51: #{tpu_custom_call.1} parent=11 // pred_region
          _
        $region52: #{tpu_custom_call.1} parent=11 // pred_fallthru
          _
        // Predicated region
        $region53: #{tpu_custom_call.1} parent=11 // pred_check
          %p494 = pneg %p314
        $region54: #{tpu_custom_call.1} parent=11 // pred_check_branch
          %496 = sbr.rel (%p494) target = $region56
        $region55: #{tpu_custom_call.1} parent=11 // pred_region
          _
        $region56: #{tpu_custom_call.1} parent=11 // pred_fallthru
          _
        // Predicated region
        $region57: #{tpu_custom_call.1} parent=11 // pred_check
          %p497 = pneg %p335
        $region58: #{tpu_custom_call.1} parent=11 // pred_check_branch
          %499 = sbr.rel (%p497) target = $region60
        $region59: #{tpu_custom_call.1} parent=11 // pred_region
          %501 = vsyncadd [#allocation18], 0
          %s502 = sshll.u32 %s13, 4
          %s503 = int_to_ptr.hbm [resolvable:$true] %s502
          %s504 = sshll.u32 [#allocation17], 4
          %s505 = int_to_ptr.vmem [resolvable:$true] %s504
          %510 = dma.hbm_to_vmem [thread:$0]  %s503, 512, %s505, [#allocation18], 64, 64, 4
        $region60: #{tpu_custom_call.1} parent=11 // pred_fallthru
          _
      $region12: #{tpu_custom_call.1} parent=5 // pred_fallthru
        _
      %p511 = scmp.lt.s32.totalorder %s31, 2
      // Predicated region
      $region61: #{tpu_custom_call.1} parent=5 // pred_check
        %p512 = pneg %p511
      $region62: #{tpu_custom_call.1} parent=5 // pred_check_branch
        %514 = sbr.rel (%p512) target = $region64
      $region63: #{tpu_custom_call.1} parent=5 // pred_region
        // Predicated region
        $region65: #{tpu_custom_call.1} parent=63 // pred_check
          %p515 = pneg %p51
        $region66: #{tpu_custom_call.1} parent=63 // pred_check_branch
          %517 = sbr.rel (%p515) target = $region68
        $region67: #{tpu_custom_call.1} parent=63 // pred_region
          %p518 = scmp.lt.s32.totalorder %s31, 1
          %s519 = scalar_select %p518, %s31, 1
          %s520 = smul.addr %s519, 8
          %s521 = smul.addr %s520, 8
          %s522 = scalar_lea.vmem %s0, %s521
        $region68: #{tpu_custom_call.1} parent=63 // pred_fallthru
          _
        // Predicated region
        $region69: #{tpu_custom_call.1} parent=63 // pred_check
          %p523 = pneg %p77
        $region70: #{tpu_custom_call.1} parent=63 // pred_check_branch
          %525 = sbr.rel (%p523) target = $region72
        $region71: #{tpu_custom_call.1} parent=63 // pred_region
          %s526 = sand.u32 %s67, 1
          %s527 = scalar_lea.sflag [#allocation3], %s526
          %s528 = sand.u32 %s67, 1
          %s529 = smul.addr %s528, 8
          %s530 = scalar_lea.vmem [#allocation2], %s529
          %532 = vsyncadd %s527, 0
          %s533 = smul.addr %s31, 8
          %s534 = scalar_lea.hbm %s1, %s533
          %s536 = sshll.u32 %s534, 4
          %s537 = int_to_ptr.hbm [resolvable:$true] %s536
          %s538 = sshll.u32 %s530, 4
          %s539 = int_to_ptr.vmem [resolvable:$true] %s538
          %541 = dma.hbm_to_vmem [thread:$0]  %s537, 128, %s539, %s527
        $region72: #{tpu_custom_call.1} parent=63 // pred_fallthru
          _
      $region64: #{tpu_custom_call.1} parent=5 // pred_fallthru
        _
      %p542 = scmp.le.s32.totalorder 1, %s31
      %p543 = scmp.lt.s32.totalorder %s31, 3
      %p544 = pnand %p542, %p543
      %p545 = pneg %p544
      // Predicated region
      $region73: #{tpu_custom_call.1} parent=5 // pred_check
        _
      $region74: #{tpu_custom_call.1} parent=5 // pred_check_branch
        %547 = sbr.rel (%p544) target = $region76
      $region75: #{tpu_custom_call.1} parent=5 // pred_region
        %s548 = ssub.s32 %s31, 1
        %s549 = sand.u32 %s70, 1
        %s550 = scalar_lea.sflag [#allocation3], %s549
        %s551 = sand.u32 %s70, 1
        %s552 = smul.addr %s551, 8
        %s553 = scalar_lea.vmem [#allocation2], %s552
        // Predicated region
        $region77: #{tpu_custom_call.1} parent=75 // pred_check
          %p554 = pneg %p83
        $region78: #{tpu_custom_call.1} parent=75 // pred_check_branch
          %556 = sbr.rel (%p554) target = $region80
        $region79: #{tpu_custom_call.1} parent=75 // pred_region
          %558 = dma.done %s550, 128
        $region80: #{tpu_custom_call.1} parent=75 // pred_fallthru
          _
        // Predicated region
        $region81: #{tpu_custom_call.1} parent=75 // pred_check
          %p559 = pneg %p104
        $region82: #{tpu_custom_call.1} parent=75 // pred_check_branch
          %561 = sbr.rel (%p559) target = $region84
        $region83: #{tpu_custom_call.1} parent=75 // pred_region
          %563 = dma.done [#allocation6], 256
        $region84: #{tpu_custom_call.1} parent=75 // pred_fallthru
          _
        // Predicated region
        $region85: #{tpu_custom_call.1} parent=75 // pred_check
          %p564 = pneg %p125
        $region86: #{tpu_custom_call.1} parent=75 // pred_check_branch
          %566 = sbr.rel (%p564) target = $region88
        $region87: #{tpu_custom_call.1} parent=75 // pred_region
          %568 = dma.done [#allocation6], 512
        $region88: #{tpu_custom_call.1} parent=75 // pred_fallthru
          _
        // Predicated region
        $region89: #{tpu_custom_call.1} parent=75 // pred_check
          %p569 = pneg %p146
        $region90: #{tpu_custom_call.1} parent=75 // pred_check_branch
          %571 = sbr.rel (%p569) target = $region92
        $region91: #{tpu_custom_call.1} parent=75 // pred_region
          %573 = dma.done [#allocation9], 512
        $region92: #{tpu_custom_call.1} parent=75 // pred_fallthru
          _
        // Predicated region
        $region93: #{tpu_custom_call.1} parent=75 // pred_check
          %p574 = pneg %p188
        $region94: #{tpu_custom_call.1} parent=75 // pred_check_branch
          %576 = sbr.rel (%p574) target = $region96
        $region95: #{tpu_custom_call.1} parent=75 // pred_region
          %578 = dma.done [#allocation9], 512
        $region96: #{tpu_custom_call.1} parent=75 // pred_fallthru
          _
        // Predicated region
        $region97: #{tpu_custom_call.1} parent=75 // pred_check
          %p579 = pneg %p209
        $region98: #{tpu_custom_call.1} parent=75 // pred_check_branch
          %581 = sbr.rel (%p579) target = $region100
        $region99: #{tpu_custom_call.1} parent=75 // pred_region
          %583 = dma.done [#allocation12], 512
        $region100: #{tpu_custom_call.1} parent=75 // pred_fallthru
          _
        // Predicated region
        $region101: #{tpu_custom_call.1} parent=75 // pred_check
          %p584 = pneg %p230
        $region102: #{tpu_custom_call.1} parent=75 // pred_check_branch
          %586 = sbr.rel (%p584) target = $region104
        $region103: #{tpu_custom_call.1} parent=75 // pred_region
          %588 = dma.done [#allocation12], 512
        $region104: #{tpu_custom_call.1} parent=75 // pred_fallthru
          _
        // Predicated region
        $region105: #{tpu_custom_call.1} parent=75 // pred_check
          %p589 = pneg %p251
        $region106: #{tpu_custom_call.1} parent=75 // pred_check_branch
          %591 = sbr.rel (%p589) target = $region108
        $region107: #{tpu_custom_call.1} parent=75 // pred_region
          %593 = dma.done [#allocation15], 512
        $region108: #{tpu_custom_call.1} parent=75 // pred_fallthru
          _
        // Predicated region
        $region109: #{tpu_custom_call.1} parent=75 // pred_check
          %p594 = pneg %p272
        $region110: #{tpu_custom_call.1} parent=75 // pred_check_branch
          %596 = sbr.rel (%p594) target = $region112
        $region111: #{tpu_custom_call.1} parent=75 // pred_region
          %598 = dma.done [#allocation15], 2048
        $region112: #{tpu_custom_call.1} parent=75 // pred_fallthru
          _
        // Predicated region
        $region113: #{tpu_custom_call.1} parent=75 // pred_check
          %p599 = pneg %p335
        $region114: #{tpu_custom_call.1} parent=75 // pred_check_branch
          %601 = sbr.rel (%p599) target = $region116
        $region115: #{tpu_custom_call.1} parent=75 // pred_region
          %603 = dma.done [#allocation18], 512
        $region116: #{tpu_custom_call.1} parent=75 // pred_fallthru
          _
        %p604 = scmp.lt.s32.totalorder %s36, 1
        %s605 = scalar_select %p604, %s36, 1
        %s606 = smul.addr %s605, 8
        %s607 = smul.addr %s606, 8
        %s608 = scalar_lea.vmem %s0, %s607
        %p609 = pneg %p57
        %p610 = pneg %p54
        %s611 = sand.u32 %s70, 1
        %s612 = scalar_lea.sflag [#allocation3], %s611
        %s613 = sand.u32 %s70, 1
        %s614 = smul.addr %s613, 8
        %s615 = scalar_lea.vmem [#allocation2], %s614
        %p616 = pneg %p83
        %p617 = pneg %p80
        %p618 = pneg %p104
        %p619 = pneg %p101
        %p620 = pneg %p125
        %p621 = pneg %p122
        %p622 = pneg %p146
        %p623 = pneg %p143
        %p624 = pneg %p167
        %p625 = pneg %p164
        %p626 = pneg %p188
        %p627 = pneg %p185
        %p628 = pneg %p209
        %p629 = pneg %p206
        %p630 = pneg %p230
        %p631 = pneg %p227
        %p632 = pneg %p251
        %p633 = pneg %p248
        %p634 = pneg %p272
        %p635 = pneg %p269
        %p636 = pneg %p293
        %p637 = pneg %p290
        %p638 = pneg %p314
        %p639 = pneg %p311
        %p640 = pneg %p335
        %p641 = pneg %p332
        %p642 = pneg %p361
        %p643 = pneg %p358
        %s644 = sand.u32 %s348, 1
        %s645 = scalar_lea.sflag [#allocation4], %s644
        %s646 = sand.u32 %s348, 1
        %s647 = smul.addr %s646, 64
        %s648 = scalar_lea.vmem [#allocation19], %s647
        %p649 = scmp.lt.s32.totalorder %s36, 1
        %s650 = scalar_select %p649, %s36, 1
        %s651 = smul.addr %s650, 8
        %s652 = smul.addr %s651, 8
        %s653 = scalar_lea.vmem %s0, %s652
        %v655 = vld [vmem:[%s653] sm:$0xff]
        %v656 = vld [vmem:[%s653 + $0x8] sm:$0xff]
        %v657 = vld [vmem:[%s653 + $0x10] sm:$0xff]
        %v658 = vld [vmem:[%s653 + $0x18] sm:$0xff]
        %v659 = vld [vmem:[%s653 + $0x20] sm:$0xff]
        %v660 = vld [vmem:[%s653 + $0x28] sm:$0xff]
        %v661 = vld [vmem:[%s653 + $0x30] sm:$0xff]
        %v662 = vld [vmem:[%s653 + $0x38] sm:$0xff]
        %v663 = vld [vmem:[%s553] sm:$0xff]
        %v664 = vld [vmem:[#allocation5] sm:$0xff]
        %v665 = vld [vmem:[#allocation5 + $0x8] sm:$0x1f]
        %v666 = vld [vmem:[#allocation7] sm:$0xf]
        %v667 = vld [vmem:[#allocation7 + $0x4] sm:$0xf]
        %v668 = vld [vmem:[#allocation7 + $0x8] sm:$0xf]
        %v669 = vld [vmem:[#allocation7 + $0xc] sm:$0xf]
        %v670 = vld [vmem:[#allocation7 + $0x10] sm:$0xf]
        %v671 = vld [vmem:[#allocation7 + $0x14] sm:$0xf]
        %v672 = vld [vmem:[#allocation7 + $0x18] sm:$0xf]
        %v673 = vld [vmem:[#allocation7 + $0x1c] sm:$0xf]
        %vm674 = vcmask 523264
        %v675 = vsel %vm674, %v655, 0.0
        %v676 = vsel %vm674, %v656, 0.0
        %v677 = vadd.f32 %v675, %v676
        %v678 = vsel %vm674, %v657, 0.0
        %v679 = vadd.f32 %v677, %v678
        %v680 = vsel %vm674, %v658, 0.0
        %v681 = vadd.f32 %v679, %v680
        %v682 = vsel %vm674, %v659, 0.0
        %v683 = vadd.f32 %v681, %v682
        %v684 = vsel %vm674, %v660, 0.0
        %v685 = vadd.f32 %v683, %v684
        %v686 = vsel %vm674, %v661, 0.0
        %v687 = vadd.f32 %v685, %v686
        %v688 = vsel %vm674, %v662, 0.0
        %v689 = vadd.f32 %v687, %v688
        %v690 = vrot.slane %v689, 4
        %v691 = vadd.f32 %v689, %v690
        %v692 = vrot.slane %v691, 2
        %v693 = vadd.f32 %v691, %v692
        %v694 = vrot.slane %v693, 1
        %v695 = vadd.f32 %v693, %v694
        %v696 = vrcp.pop 64.0
        %v697 = vmul.f32 64.0, %v696
        %v698 = vsub.f32 1.0, %v697
        %v699 = vmul.f32 %v696, %v698
        %v700 = vadd.f32 %v696, %v699
        %vm701 = vweird.f32 %v696
        %v702 = vsel %vm701, %v696, %v700
        %v703 = vmul.f32 %v695, %v702
        %v704 = vpack.c.bf16 %v703, %v703
        %v713 = vunpack.c.l.b16 %v666
        %v714 = vunpack.c.l.b16 %v667
        %v715 = vunpack.c.l.b16 %v668
        %v716 = vunpack.c.l.b16 %v669
        %v717 = vunpack.c.l.b16 %v670
        %v718 = vunpack.c.l.b16 %v671
        %v719 = vunpack.c.l.b16 %v672
        %v720 = vunpack.c.l.b16 %v673
        %v721 = vpack.c.b16 %v714, %v713
        %v722 = vpack.c.b16 %v716, %v715
        %v723 = vpack.c.b16 %v718, %v717
        %v724 = vpack.c.b16 %v720, %v719
        %v730 = vsel %vm674, %v704, 0
        %732 = vmatpush.bf16.msra.mxu0 0
        %733 = vmatpush.bf16.msra.mxu0 0
        %734 = vmatpush.bf16.msra.mxu0 0
        %735 = vmatpush.bf16.msra.mxu0 0
        %736 = vmatpush.bf16.msra.mxu0 %v724
        %737 = vmatpush.bf16.msra.mxu0 %v723
        %738 = vmatpush.bf16.msra.mxu0 %v722
        %739 = vmatpush.bf16.msra.mxu0 %v721
        %740 = vmatmul.bf16.gmra.mxu0 %v730
        %v741 = vpop.f32.mrf.mxu0
        %v742 = vadd.f32 0.0, %v741
        %v743 = vpop.f32.mrf.mxu0
        %744 = vdwg.mxu0
        %v745 = vperm.slane %v742, 0
        %v746 = vsub.f32 %v655, %v745
        %v747 = vsub.f32 %v656, %v745
        %v748 = vsub.f32 %v657, %v745
        %v749 = vsub.f32 %v658, %v745
        %v750 = vsub.f32 %v659, %v745
        %v751 = vsub.f32 %v660, %v745
        %v752 = vsub.f32 %v661, %v745
        %v753 = vsub.f32 %v662, %v745
        %v754 = vmul.f32 %v746, %v746
        %v755 = vmul.f32 %v747, %v747
        %v756 = vmul.f32 %v748, %v748
        %v757 = vmul.f32 %v749, %v749
        %v758 = vmul.f32 %v750, %v750
        %v759 = vmul.f32 %v751, %v751
        %v760 = vmul.f32 %v752, %v752
        %v761 = vmul.f32 %v753, %v753
        %v762 = vsel %vm674, %v754, 0.0
        %v763 = vsel %vm674, %v755, 0.0
        %v764 = vadd.f32 %v762, %v763
        %v765 = vsel %vm674, %v756, 0.0
        %v766 = vadd.f32 %v764, %v765
        %v767 = vsel %vm674, %v757, 0.0
        %v768 = vadd.f32 %v766, %v767
        %v769 = vsel %vm674, %v758, 0.0
        %v770 = vadd.f32 %v768, %v769
        %v771 = vsel %vm674, %v759, 0.0
        %v772 = vadd.f32 %v770, %v771
        %v773 = vsel %vm674, %v760, 0.0
        %v774 = vadd.f32 %v772, %v773
        %v775 = vsel %vm674, %v761, 0.0
        %v776 = vadd.f32 %v774, %v775
        %v777 = vrot.slane %v776, 4
        %v778 = vadd.f32 %v776, %v777
        %v779 = vrot.slane %v778, 2
        %v780 = vadd.f32 %v778, %v779
        %v781 = vrot.slane %v780, 1
        %v782 = vadd.f32 %v780, %v781
        %v783 = vmul.f32 %v782, %v702
        %v784 = vpack.c.bf16 %v783, %v783
        %v786 = vsel %vm674, %v784, 0
        %788 = vmatpush.bf16.msra.mxu0 0
        %789 = vmatpush.bf16.msra.mxu0 0
        %790 = vmatpush.bf16.msra.mxu0 0
        %791 = vmatpush.bf16.msra.mxu0 0
        %792 = vmatpush.bf16.msra.mxu0 %v724
        %793 = vmatpush.bf16.msra.mxu0 %v723
        %794 = vmatpush.bf16.msra.mxu0 %v722
        %795 = vmatpush.bf16.msra.mxu0 %v721
        %796 = vmatmul.bf16.gmra.mxu0 %v786
        %v797 = vpop.f32.mrf.mxu0
        %v798 = vadd.f32 1e-05, %v797
        %v799 = vpop.f32.mrf.mxu0
        %800 = vdwg.mxu0
        %v801 = vrsqrt.pop %v798
        %v802 = vmul.f32 %v801, %v798
        %v803 = vmul.f32 %v802, %v801
        %v804 = vmul.f32 0.5, %v803
        %v805 = vsub.f32 1.5, %v804
        %v806 = vmul.f32 %v801, %v805
        %vm807 = vweird.f32 %v798
        %vm808 = vweird.f32 %v801
        %vm809 = vmor %vm807, %vm808
        %v810 = vsel %vm809, %v801, %v806
        %v811 = vperm.slane %v810, 0
        %v812 = vmul.f32 %v746, %v811
        %v813 = vmul.f32 %v747, %v811
        %v814 = vmul.f32 %v748, %v811
        %v815 = vmul.f32 %v749, %v811
        %v816 = vmul.f32 %v750, %v811
        %v817 = vmul.f32 %v751, %v811
        %v818 = vmul.f32 %v752, %v811
        %v819 = vmul.f32 %v753, %v811
        %v820 = vperm.slane %v664, 0
        %v821 = vmul.f32 %v812, %v820
        %v822 = vmul.f32 %v813, %v820
        %v823 = vmul.f32 %v814, %v820
        %v824 = vmul.f32 %v815, %v820
        %v825 = vmul.f32 %v816, %v820
        %v826 = vmul.f32 %v817, %v820
        %v827 = vmul.f32 %v818, %v820
        %v828 = vmul.f32 %v819, %v820
        %v829 = vperm.slane %v664, 1
        %v830 = vadd.f32 %v821, %v829
        %v831 = vadd.f32 %v822, %v829
        %v832 = vadd.f32 %v823, %v829
        %v833 = vadd.f32 %v824, %v829
        %v834 = vadd.f32 %v825, %v829
        %v835 = vadd.f32 %v826, %v829
        %v836 = vadd.f32 %v827, %v829
        %v837 = vadd.f32 %v828, %v829
        %v838 = vpack.c.bf16 %v831, %v830
        %v839 = vpack.c.bf16 %v833, %v832
        %v840 = vpack.c.bf16 %v835, %v834
        %v841 = vpack.c.bf16 %v837, %v836
        %v842 = vld [vmem:[#allocation8] sm:$0xf]
        %v843 = vld [vmem:[#allocation8 + $0x4] sm:$0xf]
        %v844 = vld [vmem:[#allocation8 + $0x8] sm:$0xf]
        %v845 = vld [vmem:[#allocation8 + $0xc] sm:$0xf]
        %v846 = vld [vmem:[#allocation8 + $0x10] sm:$0xf]
        %v847 = vld [vmem:[#allocation8 + $0x14] sm:$0xf]
        %v848 = vld [vmem:[#allocation8 + $0x18] sm:$0xf]
        %v849 = vld [vmem:[#allocation8 + $0x1c] sm:$0xf]
        %v850 = vperm.slane %v664, 2
        %v859 = vunpack.c.l.b16 %v842
        %v860 = vunpack.c.l.b16 %v843
        %v861 = vunpack.c.l.b16 %v844
        %v862 = vunpack.c.l.b16 %v845
        %v863 = vunpack.c.l.b16 %v846
        %v864 = vunpack.c.l.b16 %v847
        %v865 = vunpack.c.l.b16 %v848
        %v866 = vunpack.c.l.b16 %v849
        %v867 = vpack.c.b16 %v860, %v859
        %v868 = vpack.c.b16 %v862, %v861
        %v869 = vpack.c.b16 %v864, %v863
        %v870 = vpack.c.b16 %v866, %v865
        %v876 = vsel %vm674, %v838, 0
        %v879 = vsel %vm674, %v839, 0
        %v882 = vsel %vm674, %v840, 0
        %v885 = vsel %vm674, %v841, 0
        %887 = vmatpush.bf16.msra.mxu0 0
        %888 = vmatpush.bf16.msra.mxu0 0
        %889 = vmatpush.bf16.msra.mxu0 0
        %890 = vmatpush.bf16.msra.mxu0 0
        %891 = vmatpush.bf16.msra.mxu0 %v870
        %892 = vmatpush.bf16.msra.mxu0 %v869
        %893 = vmatpush.bf16.msra.mxu0 %v868
        %894 = vmatpush.bf16.msra.mxu0 %v867
        %895 = vmatmul.bf16.gmra.mxu0 %v876
        %v896 = vpop.f32.mrf.mxu0
        %v897 = vadd.f32 %v850, %v896
        %v898 = vpop.f32.mrf.mxu0
        %v899 = vadd.f32 %v850, %v898
        %900 = vmatmul.bf16.gmra.mxu0 %v879
        %v901 = vpop.f32.mrf.mxu0
        %v902 = vadd.f32 %v850, %v901
        %v903 = vpop.f32.mrf.mxu0
        %v904 = vadd.f32 %v850, %v903
        %905 = vmatmul.bf16.gmra.mxu0 %v882
        %v906 = vpop.f32.mrf.mxu0
        %v907 = vadd.f32 %v850, %v906
        %v908 = vpop.f32.mrf.mxu0
        %v909 = vadd.f32 %v850, %v908
        %910 = vmatmul.bf16.gmra.mxu0 %v885
        %v911 = vpop.f32.mrf.mxu0
        %v912 = vadd.f32 %v850, %v911
        %v913 = vpop.f32.mrf.mxu0
        %v914 = vadd.f32 %v850, %v913
        %915 = vdwg.mxu0
        %v916 = vsel %vm674, %v897, 0.0
        %917 = vadd.xlane.f32.xlu0 %v916
        %v918 = vpop.xlane.xlu0 %917
        %v919 = vsel %vm674, %v899, 0.0
        %920 = vadd.xlane.f32.xlu0 %v919
        %v921 = vpop.xlane.xlu0 %920
        %v922 = vsel %vm674, %v902, 0.0
        %923 = vadd.xlane.f32.xlu0 %v922
        %v924 = vpop.xlane.xlu0 %923
        %v925 = vsel %vm674, %v904, 0.0
        %926 = vadd.xlane.f32.xlu0 %v925
        %v927 = vpop.xlane.xlu0 %926
        %v928 = vsel %vm674, %v907, 0.0
        %929 = vadd.xlane.f32.xlu0 %v928
        %v930 = vpop.xlane.xlu0 %929
        %v931 = vsel %vm674, %v909, 0.0
        %932 = vadd.xlane.f32.xlu0 %v931
        %v933 = vpop.xlane.xlu0 %932
        %v934 = vsel %vm674, %v912, 0.0
        %935 = vadd.xlane.f32.xlu0 %v934
        %v936 = vpop.xlane.xlu0 %935
        %v937 = vsel %vm674, %v914, 0.0
        %938 = vadd.xlane.f32.xlu0 %v937
        %v939 = vpop.xlane.xlu0 %938
        %v940 = vmul.f32 %v918, %v702
        %v941 = vmul.f32 %v921, %v702
        %v942 = vmul.f32 %v924, %v702
        %v943 = vmul.f32 %v927, %v702
        %v944 = vmul.f32 %v930, %v702
        %v945 = vmul.f32 %v933, %v702
        %v946 = vmul.f32 %v936, %v702
        %v947 = vmul.f32 %v939, %v702
        %v948 = vsub.f32 %v897, %v940
        %v949 = vsub.f32 %v899, %v941
        %v950 = vsub.f32 %v902, %v942
        %v951 = vsub.f32 %v904, %v943
        %v952 = vsub.f32 %v907, %v944
        %v953 = vsub.f32 %v909, %v945
        %v954 = vsub.f32 %v912, %v946
        %v955 = vsub.f32 %v914, %v947
        %v956 = vmul.f32 %v948, %v948
        %v957 = vmul.f32 %v949, %v949
        %v958 = vmul.f32 %v950, %v950
        %v959 = vmul.f32 %v951, %v951
        %v960 = vmul.f32 %v952, %v952
        %v961 = vmul.f32 %v953, %v953
        %v962 = vmul.f32 %v954, %v954
        %v963 = vmul.f32 %v955, %v955
        %v964 = vsel %vm674, %v956, 0.0
        %965 = vadd.xlane.f32.xlu0 %v964
        %v966 = vpop.xlane.xlu0 %965
        %v967 = vsel %vm674, %v957, 0.0
        %968 = vadd.xlane.f32.xlu0 %v967
        %v969 = vpop.xlane.xlu0 %968
        %v970 = vsel %vm674, %v958, 0.0
        %971 = vadd.xlane.f32.xlu0 %v970
        %v972 = vpop.xlane.xlu0 %971
        %v973 = vsel %vm674, %v959, 0.0
        %974 = vadd.xlane.f32.xlu0 %v973
        %v975 = vpop.xlane.xlu0 %974
        %v976 = vsel %vm674, %v960, 0.0
        %977 = vadd.xlane.f32.xlu0 %v976
        %v978 = vpop.xlane.xlu0 %977
        %v979 = vsel %vm674, %v961, 0.0
        %980 = vadd.xlane.f32.xlu0 %v979
        %v981 = vpop.xlane.xlu0 %980
        %v982 = vsel %vm674, %v962, 0.0
        %983 = vadd.xlane.f32.xlu0 %v982
        %v984 = vpop.xlane.xlu0 %983
        %v985 = vsel %vm674, %v963, 0.0
        %986 = vadd.xlane.f32.xlu0 %v985
        %v987 = vpop.xlane.xlu0 %986
        %v988 = vmul.f32 %v966, %v702
        %v989 = vmul.f32 %v969, %v702
        %v990 = vmul.f32 %v972, %v702
        %v991 = vmul.f32 %v975, %v702
        %v992 = vmul.f32 %v978, %v702
        %v993 = vmul.f32 %v981, %v702
        %v994 = vmul.f32 %v984, %v702
        %v995 = vmul.f32 %v987, %v702
        %v996 = vadd.f32 %v988, 1e-05
        %v997 = vadd.f32 %v989, 1e-05
        %v998 = vadd.f32 %v990, 1e-05
        %v999 = vadd.f32 %v991, 1e-05
        %v1000 = vadd.f32 %v992, 1e-05
        %v1001 = vadd.f32 %v993, 1e-05
        %v1002 = vadd.f32 %v994, 1e-05
        %v1003 = vadd.f32 %v995, 1e-05
        %v1004 = vrsqrt.pop %v996
        %v1005 = vmul.f32 %v1004, %v996
        %v1006 = vmul.f32 %v1005, %v1004
        %v1007 = vmul.f32 0.5, %v1006
        %v1008 = vsub.f32 1.5, %v1007
        %v1009 = vmul.f32 %v1004, %v1008
        %vm1010 = vweird.f32 %v996
        %vm1011 = vweird.f32 %v1004
        %vm1012 = vmor %vm1010, %vm1011
        %v1013 = vsel %vm1012, %v1004, %v1009
        %v1014 = vrsqrt.pop %v997
        %v1015 = vmul.f32 %v1014, %v997
        %v1016 = vmul.f32 %v1015, %v1014
        %v1017 = vmul.f32 0.5, %v1016
        %v1018 = vsub.f32 1.5, %v1017
        %v1019 = vmul.f32 %v1014, %v1018
        %vm1020 = vweird.f32 %v997
        %vm1021 = vweird.f32 %v1014
        %vm1022 = vmor %vm1020, %vm1021
        %v1023 = vsel %vm1022, %v1014, %v1019
        %v1024 = vrsqrt.pop %v998
        %v1025 = vmul.f32 %v1024, %v998
        %v1026 = vmul.f32 %v1025, %v1024
        %v1027 = vmul.f32 0.5, %v1026
        %v1028 = vsub.f32 1.5, %v1027
        %v1029 = vmul.f32 %v1024, %v1028
        %vm1030 = vweird.f32 %v998
        %vm1031 = vweird.f32 %v1024
        %vm1032 = vmor %vm1030, %vm1031
        %v1033 = vsel %vm1032, %v1024, %v1029
        %v1034 = vrsqrt.pop %v999
        %v1035 = vmul.f32 %v1034, %v999
        %v1036 = vmul.f32 %v1035, %v1034
        %v1037 = vmul.f32 0.5, %v1036
        %v1038 = vsub.f32 1.5, %v1037
        %v1039 = vmul.f32 %v1034, %v1038
        %vm1040 = vweird.f32 %v999
        %vm1041 = vweird.f32 %v1034
        %vm1042 = vmor %vm1040, %vm1041
        %v1043 = vsel %vm1042, %v1034, %v1039
        %v1044 = vrsqrt.pop %v1000
        %v1045 = vmul.f32 %v1044, %v1000
        %v1046 = vmul.f32 %v1045, %v1044
        %v1047 = vmul.f32 0.5, %v1046
        %v1048 = vsub.f32 1.5, %v1047
        %v1049 = vmul.f32 %v1044, %v1048
        %vm1050 = vweird.f32 %v1000
        %vm1051 = vweird.f32 %v1044
        %vm1052 = vmor %vm1050, %vm1051
        %v1053 = vsel %vm1052, %v1044, %v1049
        %v1054 = vrsqrt.pop %v1001
        %v1055 = vmul.f32 %v1054, %v1001
        %v1056 = vmul.f32 %v1055, %v1054
        %v1057 = vmul.f32 0.5, %v1056
        %v1058 = vsub.f32 1.5, %v1057
        %v1059 = vmul.f32 %v1054, %v1058
        %vm1060 = vweird.f32 %v1001
        %vm1061 = vweird.f32 %v1054
        %vm1062 = vmor %vm1060, %vm1061
        %v1063 = vsel %vm1062, %v1054, %v1059
        %v1064 = vrsqrt.pop %v1002
        %v1065 = vmul.f32 %v1064, %v1002
        %v1066 = vmul.f32 %v1065, %v1064
        %v1067 = vmul.f32 0.5, %v1066
        %v1068 = vsub.f32 1.5, %v1067
        %v1069 = vmul.f32 %v1064, %v1068
        %vm1070 = vweird.f32 %v1002
        %vm1071 = vweird.f32 %v1064
        %vm1072 = vmor %vm1070, %vm1071
        %v1073 = vsel %vm1072, %v1064, %v1069
        %v1074 = vrsqrt.pop %v1003
        %v1075 = vmul.f32 %v1074, %v1003
        %v1076 = vmul.f32 %v1075, %v1074
        %v1077 = vmul.f32 0.5, %v1076
        %v1078 = vsub.f32 1.5, %v1077
        %v1079 = vmul.f32 %v1074, %v1078
        %vm1080 = vweird.f32 %v1003
        %vm1081 = vweird.f32 %v1074
        %vm1082 = vmor %vm1080, %vm1081
        %v1083 = vsel %vm1082, %v1074, %v1079
        %v1084 = vmul.f32 %v948, %v1013
        %v1085 = vmul.f32 %v949, %v1023
        %v1086 = vmul.f32 %v950, %v1033
        %v1087 = vmul.f32 %v951, %v1043
        %v1088 = vmul.f32 %v952, %v1053
        %v1089 = vmul.f32 %v953, %v1063
        %v1090 = vmul.f32 %v954, %v1073
        %v1091 = vmul.f32 %v955, %v1083
        %v1092 = vperm.slane %v664, 3
        %v1093 = vmul.f32 %v1084, %v1092
        %v1094 = vmul.f32 %v1085, %v1092
        %v1095 = vmul.f32 %v1086, %v1092
        %v1096 = vmul.f32 %v1087, %v1092
        %v1097 = vmul.f32 %v1088, %v1092
        %v1098 = vmul.f32 %v1089, %v1092
        %v1099 = vmul.f32 %v1090, %v1092
        %v1100 = vmul.f32 %v1091, %v1092
        %v1101 = vperm.slane %v664, 4
        %v1102 = vadd.f32 %v1093, %v1101
        %v1103 = vadd.f32 %v1094, %v1101
        %v1104 = vadd.f32 %v1095, %v1101
        %v1105 = vadd.f32 %v1096, %v1101
        %v1106 = vadd.f32 %v1097, %v1101
        %v1107 = vadd.f32 %v1098, %v1101
        %v1108 = vadd.f32 %v1099, %v1101
        %v1109 = vadd.f32 %v1100, %v1101
        %v1110 = vpack.c.bf16 %v1103, %v1102
        %v1111 = vpack.c.bf16 %v1105, %v1104
        %v1112 = vpack.c.bf16 %v1107, %v1106
        %v1113 = vpack.c.bf16 %v1109, %v1108
        %v1114 = vld [vmem:[%s5] sm:$0xff]
        %v1115 = vld [vmem:[%s5 + $0x8] sm:$0xff]
        %v1116 = vld [vmem:[%s5 + $0x10] sm:$0xff]
        %v1117 = vld [vmem:[%s5 + $0x18] sm:$0xff]
        %v1118 = vld [vmem:[%s5 + $0x20] sm:$0xff]
        %v1119 = vld [vmem:[%s5 + $0x28] sm:$0xff]
        %v1120 = vld [vmem:[%s5 + $0x30] sm:$0xff]
        %v1121 = vld [vmem:[%s5 + $0x38] sm:$0xff]
        %v1130 = vunpack.c.l.b16 %v1114
        %v1131 = vunpack.c.h.b16 %v1114
        %v1132 = vunpack.c.l.b16 %v1115
        %v1133 = vunpack.c.h.b16 %v1115
        %v1134 = vunpack.c.l.b16 %v1116
        %v1135 = vunpack.c.h.b16 %v1116
        %v1136 = vunpack.c.l.b16 %v1117
        %v1137 = vunpack.c.h.b16 %v1117
        %v1138 = vunpack.c.l.b16 %v1118
        %v1139 = vunpack.c.h.b16 %v1118
        %v1140 = vunpack.c.l.b16 %v1119
        %v1141 = vunpack.c.h.b16 %v1119
        %v1142 = vunpack.c.l.b16 %v1120
        %v1143 = vunpack.c.h.b16 %v1120
        %v1144 = vunpack.c.l.b16 %v1121
        %v1145 = vunpack.c.h.b16 %v1121
        %v1146 = vpack.c.b16 %v1132, %v1130
        %v1147 = vpack.c.b16 %v1133, %v1131
        %v1148 = vpack.c.b16 %v1136, %v1134
        %v1149 = vpack.c.b16 %v1137, %v1135
        %v1150 = vpack.c.b16 %v1140, %v1138
        %v1151 = vpack.c.b16 %v1141, %v1139
        %v1152 = vpack.c.b16 %v1144, %v1142
        %v1153 = vpack.c.b16 %v1145, %v1143
        %v1163 = vsel %vm674, %v1110, 0
        %v1166 = vsel %vm674, %v1111, 0
        %v1169 = vsel %vm674, %v1112, 0
        %v1172 = vsel %vm674, %v1113, 0
        %1174 = vmatpush.bf16.msra.mxu0 0
        %1175 = vmatpush.bf16.msra.mxu0 0
        %1176 = vmatpush.bf16.msra.mxu0 0
        %1177 = vmatpush.bf16.msra.mxu0 0
        %1178 = vmatpush.bf16.msra.mxu0 %v1152
        %1179 = vmatpush.bf16.msra.mxu0 %v1150
        %1180 = vmatpush.bf16.msra.mxu0 %v1148
        %1181 = vmatpush.bf16.msra.mxu0 %v1146
        %1182 = vmatmul.bf16.gmra.mxu0 %v1163
        %v1183 = vpop.f32.mrf.mxu0
        %v1184 = vadd.f32 0.0, %v1183
        %v1185 = vpop.f32.mrf.mxu0
        %v1186 = vadd.f32 0.0, %v1185
        %1187 = vmatmul.bf16.gmra.mxu0 %v1166
        %v1188 = vpop.f32.mrf.mxu0
        %v1189 = vadd.f32 0.0, %v1188
        %v1190 = vpop.f32.mrf.mxu0
        %v1191 = vadd.f32 0.0, %v1190
        %1192 = vmatmul.bf16.gmra.mxu0 %v1169
        %v1193 = vpop.f32.mrf.mxu0
        %v1194 = vadd.f32 0.0, %v1193
        %v1195 = vpop.f32.mrf.mxu0
        %v1196 = vadd.f32 0.0, %v1195
        %1197 = vmatmul.bf16.gmra.mxu0 %v1172
        %v1198 = vpop.f32.mrf.mxu0
        %v1199 = vadd.f32 0.0, %v1198
        %v1200 = vpop.f32.mrf.mxu0
        %v1201 = vadd.f32 0.0, %v1200
        %1202 = vdwg.mxu0
        %1203 = vmatpush.bf16.msra.mxu0 0
        %1204 = vmatpush.bf16.msra.mxu0 0
        %1205 = vmatpush.bf16.msra.mxu0 0
        %1206 = vmatpush.bf16.msra.mxu0 0
        %1207 = vmatpush.bf16.msra.mxu0 %v1153
        %1208 = vmatpush.bf16.msra.mxu0 %v1151
        %1209 = vmatpush.bf16.msra.mxu0 %v1149
        %1210 = vmatpush.bf16.msra.mxu0 %v1147
        %1211 = vmatmul.bf16.gmra.mxu0 %v1163
        %v1212 = vpop.f32.mrf.mxu0
        %v1213 = vadd.f32 0.0, %v1212
        %v1214 = vpop.f32.mrf.mxu0
        %v1215 = vadd.f32 0.0, %v1214
        %1216 = vmatmul.bf16.gmra.mxu0 %v1166
        %v1217 = vpop.f32.mrf.mxu0
        %v1218 = vadd.f32 0.0, %v1217
        %v1219 = vpop.f32.mrf.mxu0
        %v1220 = vadd.f32 0.0, %v1219
        %1221 = vmatmul.bf16.gmra.mxu0 %v1169
        %v1222 = vpop.f32.mrf.mxu0
        %v1223 = vadd.f32 0.0, %v1222
        %v1224 = vpop.f32.mrf.mxu0
        %v1225 = vadd.f32 0.0, %v1224
        %1226 = vmatmul.bf16.gmra.mxu0 %v1172
        %v1227 = vpop.f32.mrf.mxu0
        %v1228 = vadd.f32 0.0, %v1227
        %v1229 = vpop.f32.mrf.mxu0
        %v1230 = vadd.f32 0.0, %v1229
        %1231 = vdwg.mxu0
        %v1232 = vld [vmem:[#allocation10] sm:$0xf]
        %v1233 = vld [vmem:[#allocation10 + $0x4] sm:$0xf]
        %v1234 = vld [vmem:[#allocation10 + $0x8] sm:$0xf]
        %v1235 = vld [vmem:[#allocation10 + $0xc] sm:$0xf]
        %v1236 = vld [vmem:[#allocation10 + $0x10] sm:$0xf]
        %v1237 = vld [vmem:[#allocation10 + $0x14] sm:$0xf]
        %v1238 = vld [vmem:[#allocation10 + $0x18] sm:$0xf]
        %v1239 = vld [vmem:[#allocation10 + $0x1c] sm:$0xf]
        %v1240 = vpack.c.bf16 %v1186, %v1184
        %v1241 = vpack.c.bf16 %v1191, %v1189
        %v1242 = vpack.c.bf16 %v1196, %v1194
        %v1243 = vpack.c.bf16 %v1201, %v1199
        %v1244 = vpack.c.bf16 %v1215, %v1213
        %v1245 = vpack.c.bf16 %v1220, %v1218
        %v1246 = vpack.c.bf16 %v1225, %v1223
        %v1247 = vpack.c.bf16 %v1230, %v1228
        %1252 = vrot.lane.b32.xlu0 %v1240, 64
        %v1253 = vpop.permute.xlu0 %1252
        %1254 = vrot.lane.b32.xlu0 %v1241, 64
        %v1255 = vpop.permute.xlu0 %1254
        %1256 = vrot.lane.b32.xlu0 %v1242, 64
        %v1257 = vpop.permute.xlu0 %1256
        %1258 = vrot.lane.b32.xlu0 %v1243, 64
        %v1259 = vpop.permute.xlu0 %1258
        %vm1260 = vcmask 130048
        %v1262 = vsel %vm1260, %v1240, 0
        %v1265 = vsel %vm1260, %v1241, 0
        %v1268 = vsel %vm1260, %v1242, 0
        %v1271 = vsel %vm1260, %v1243, 0
        %v1274 = vsel %vm1260, %v1253, 0
        %v1277 = vsel %vm1260, %v1255, 0
        %v1280 = vsel %vm1260, %v1257, 0
        %v1283 = vsel %vm1260, %v1259, 0
        %1285 = vmatpush.bf16.xpose.msra.mxu0 0
        %1286 = vmatpush.bf16.xpose.msra.mxu0 0
        %1287 = vmatpush.bf16.xpose.msra.mxu0 0
        %1288 = vmatpush.bf16.xpose.msra.mxu0 0
        %1289 = vmatpush.bf16.xpose.msra.mxu0 %v1283
        %1290 = vmatpush.bf16.xpose.msra.mxu0 %v1280
        %1291 = vmatpush.bf16.xpose.msra.mxu0 %v1277
        %1292 = vmatpush.bf16.xpose.msra.mxu0 %v1274
        %1293 = vmatmul.bf16.gmra.mxu0 %v1262
        %v1294 = vpop.f32.mrf.mxu0
        %v1295 = vadd.f32 0.0, %v1294
        %v1296 = vpop.f32.mrf.mxu0
        %v1297 = vadd.f32 0.0, %v1296
        %1298 = vmatmul.bf16.gmra.mxu0 %v1265
        %v1299 = vpop.f32.mrf.mxu0
        %v1300 = vadd.f32 0.0, %v1299
        %v1301 = vpop.f32.mrf.mxu0
        %v1302 = vadd.f32 0.0, %v1301
        %1303 = vmatmul.bf16.gmra.mxu0 %v1268
        %v1304 = vpop.f32.mrf.mxu0
        %v1305 = vadd.f32 0.0, %v1304
        %v1306 = vpop.f32.mrf.mxu0
        %v1307 = vadd.f32 0.0, %v1306
        %1308 = vmatmul.bf16.gmra.mxu0 %v1271
        %v1309 = vpop.f32.mrf.mxu0
        %v1310 = vadd.f32 0.0, %v1309
        %v1311 = vpop.f32.mrf.mxu0
        %v1312 = vadd.f32 0.0, %v1311
        %1313 = vdwg.mxu0
        %v1314 = vsel %vm674, %v1295, -inf
        %1315 = vmax.xlane.f32.xlu0 %v1314
        %v1316 = vpop.xlane.xlu0 %1315
        %v1317 = vsel %vm674, %v1297, -inf
        %1318 = vmax.xlane.f32.xlu0 %v1317
        %v1319 = vpop.xlane.xlu0 %1318
        %v1320 = vsel %vm674, %v1300, -inf
        %1321 = vmax.xlane.f32.xlu0 %v1320
        %v1322 = vpop.xlane.xlu0 %1321
        %v1323 = vsel %vm674, %v1302, -inf
        %1324 = vmax.xlane.f32.xlu0 %v1323
        %v1325 = vpop.xlane.xlu0 %1324
        %v1326 = vsel %vm674, %v1305, -inf
        %1327 = vmax.xlane.f32.xlu0 %v1326
        %v1328 = vpop.xlane.xlu0 %1327
        %v1329 = vsel %vm674, %v1307, -inf
        %1330 = vmax.xlane.f32.xlu0 %v1329
        %v1331 = vpop.xlane.xlu0 %1330
        %v1332 = vsel %vm674, %v1310, -inf
        %1333 = vmax.xlane.f32.xlu0 %v1332
        %v1334 = vpop.xlane.xlu0 %1333
        %v1335 = vsel %vm674, %v1312, -inf
        %1336 = vmax.xlane.f32.xlu0 %v1335
        %v1337 = vpop.xlane.xlu0 %1336
        %v1338 = vsub.f32 %v1295, %v1316
        %v1339 = vsub.f32 %v1297, %v1319
        %v1340 = vsub.f32 %v1300, %v1322
        %v1341 = vsub.f32 %v1302, %v1325
        %v1342 = vsub.f32 %v1305, %v1328
        %v1343 = vsub.f32 %v1307, %v1331
        %v1344 = vsub.f32 %v1310, %v1334
        %v1345 = vsub.f32 %v1312, %v1337
        %v1346 = vmul.f32 %v1338, 1.442695
        %v1347 = vpow.pop %v1346
        %v1348 = vmul.f32 %v1339, 1.442695
        %v1349 = vpow.pop %v1348
        %v1350 = vmul.f32 %v1340, 1.442695
        %v1351 = vpow.pop %v1350
        %v1352 = vmul.f32 %v1341, 1.442695
        %v1353 = vpow.pop %v1352
        %v1354 = vmul.f32 %v1342, 1.442695
        %v1355 = vpow.pop %v1354
        %v1356 = vmul.f32 %v1343, 1.442695
        %v1357 = vpow.pop %v1356
        %v1358 = vmul.f32 %v1344, 1.442695
        %v1359 = vpow.pop %v1358
        %v1360 = vmul.f32 %v1345, 1.442695
        %v1361 = vpow.pop %v1360
        %v1362 = vsel %vm674, %v1347, 0.0
        %1363 = vadd.xlane.f32.xlu0 %v1362
        %v1364 = vpop.xlane.xlu0 %1363
        %v1365 = vsel %vm674, %v1349, 0.0
        %1366 = vadd.xlane.f32.xlu0 %v1365
        %v1367 = vpop.xlane.xlu0 %1366
        %v1368 = vsel %vm674, %v1351, 0.0
        %1369 = vadd.xlane.f32.xlu0 %v1368
        %v1370 = vpop.xlane.xlu0 %1369
        %v1371 = vsel %vm674, %v1353, 0.0
        %1372 = vadd.xlane.f32.xlu0 %v1371
        %v1373 = vpop.xlane.xlu0 %1372
        %v1374 = vsel %vm674, %v1355, 0.0
        %1375 = vadd.xlane.f32.xlu0 %v1374
        %v1376 = vpop.xlane.xlu0 %1375
        %v1377 = vsel %vm674, %v1357, 0.0
        %1378 = vadd.xlane.f32.xlu0 %v1377
        %v1379 = vpop.xlane.xlu0 %1378
        %v1380 = vsel %vm674, %v1359, 0.0
        %1381 = vadd.xlane.f32.xlu0 %v1380
        %v1382 = vpop.xlane.xlu0 %1381
        %v1383 = vsel %vm674, %v1361, 0.0
        %1384 = vadd.xlane.f32.xlu0 %v1383
        %v1385 = vpop.xlane.xlu0 %1384
        %v1386 = vrcp.pop %v1364
        %v1387 = vrcp.pop %v1367
        %v1388 = vrcp.pop %v1370
        %v1389 = vrcp.pop %v1373
        %v1390 = vrcp.pop %v1376
        %v1391 = vrcp.pop %v1379
        %v1392 = vrcp.pop %v1382
        %v1393 = vrcp.pop %v1385
        %v1394 = vmul.f32 %v1347, %v1386
        %v1395 = vmul.f32 %v1349, %v1387
        %v1396 = vmul.f32 %v1351, %v1388
        %v1397 = vmul.f32 %v1353, %v1389
        %v1398 = vmul.f32 %v1355, %v1390
        %v1399 = vmul.f32 %v1357, %v1391
        %v1400 = vmul.f32 %v1359, %v1392
        %v1401 = vmul.f32 %v1361, %v1393
        %v1402 = vpack.c.bf16 %v1395, %v1394
        %v1403 = vpack.c.bf16 %v1397, %v1396
        %v1404 = vpack.c.bf16 %v1399, %v1398
        %v1405 = vpack.c.bf16 %v1401, %v1400
        %v1407 = vsel %vm674, %v1402, 0
        %v1410 = vsel %vm674, %v1403, 0
        %v1413 = vsel %vm674, %v1404, 0
        %v1416 = vsel %vm674, %v1405, 0
        %1418 = vmatpush.bf16.msra.mxu0 0
        %1419 = vmatpush.bf16.msra.mxu0 0
        %1420 = vmatpush.bf16.msra.mxu0 0
        %1421 = vmatpush.bf16.msra.mxu0 0
        %1422 = vmatpush.bf16.msra.mxu0 %v1247
        %1423 = vmatpush.bf16.msra.mxu0 %v1246
        %1424 = vmatpush.bf16.msra.mxu0 %v1245
        %1425 = vmatpush.bf16.msra.mxu0 %v1244
        %1426 = vmatmul.bf16.gmra.mxu0 %v1407
        %v1427 = vpop.f32.mrf.mxu0
        %v1428 = vadd.f32 0.0, %v1427
        %v1429 = vpop.f32.mrf.mxu0
        %v1430 = vadd.f32 0.0, %v1429
        %1431 = vmatmul.bf16.gmra.mxu0 %v1410
        %v1432 = vpop.f32.mrf.mxu0
        %v1433 = vadd.f32 0.0, %v1432
        %v1434 = vpop.f32.mrf.mxu0
        %v1435 = vadd.f32 0.0, %v1434
        %1436 = vmatmul.bf16.gmra.mxu0 %v1413
        %v1437 = vpop.f32.mrf.mxu0
        %v1438 = vadd.f32 0.0, %v1437
        %v1439 = vpop.f32.mrf.mxu0
        %v1440 = vadd.f32 0.0, %v1439
        %1441 = vmatmul.bf16.gmra.mxu0 %v1416
        %v1442 = vpop.f32.mrf.mxu0
        %v1443 = vadd.f32 0.0, %v1442
        %v1444 = vpop.f32.mrf.mxu0
        %v1445 = vadd.f32 0.0, %v1444
        %1446 = vdwg.mxu0
        %1447 = vrot.lane.b32.xlu0 %v1240, 112
        %v1448 = vpop.permute.xlu0 %1447
        %1449 = vrot.lane.b32.xlu0 %v1241, 112
        %v1450 = vpop.permute.xlu0 %1449
        %1451 = vrot.lane.b32.xlu0 %v1242, 112
        %v1452 = vpop.permute.xlu0 %1451
        %1453 = vrot.lane.b32.xlu0 %v1243, 112
        %v1454 = vpop.permute.xlu0 %1453
        %1455 = vrot.lane.b32.xlu0 %v1240, 48
        %v1456 = vpop.permute.xlu0 %1455
        %1457 = vrot.lane.b32.xlu0 %v1241, 48
        %v1458 = vpop.permute.xlu0 %1457
        %1459 = vrot.lane.b32.xlu0 %v1242, 48
        %v1460 = vpop.permute.xlu0 %1459
        %1461 = vrot.lane.b32.xlu0 %v1243, 48
        %v1462 = vpop.permute.xlu0 %1461
        %v1464 = vsel %vm1260, %v1448, 0
        %v1467 = vsel %vm1260, %v1450, 0
        %v1470 = vsel %vm1260, %v1452, 0
        %v1473 = vsel %vm1260, %v1454, 0
        %v1476 = vsel %vm1260, %v1456, 0
        %v1479 = vsel %vm1260, %v1458, 0
        %v1482 = vsel %vm1260, %v1460, 0
        %v1485 = vsel %vm1260, %v1462, 0
        %1487 = vmatpush.bf16.xpose.msra.mxu0 0
        %1488 = vmatpush.bf16.xpose.msra.mxu0 0
        %1489 = vmatpush.bf16.xpose.msra.mxu0 0
        %1490 = vmatpush.bf16.xpose.msra.mxu0 0
        %1491 = vmatpush.bf16.xpose.msra.mxu0 %v1485
        %1492 = vmatpush.bf16.xpose.msra.mxu0 %v1482
        %1493 = vmatpush.bf16.xpose.msra.mxu0 %v1479
        %1494 = vmatpush.bf16.xpose.msra.mxu0 %v1476
        %1495 = vmatmul.bf16.gmra.mxu0 %v1464
        %v1496 = vpop.f32.mrf.mxu0
        %v1497 = vadd.f32 0.0, %v1496
        %v1498 = vpop.f32.mrf.mxu0
        %v1499 = vadd.f32 0.0, %v1498
        %1500 = vmatmul.bf16.gmra.mxu0 %v1467
        %v1501 = vpop.f32.mrf.mxu0
        %v1502 = vadd.f32 0.0, %v1501
        %v1503 = vpop.f32.mrf.mxu0
        %v1504 = vadd.f32 0.0, %v1503
        %1505 = vmatmul.bf16.gmra.mxu0 %v1470
        %v1506 = vpop.f32.mrf.mxu0
        %v1507 = vadd.f32 0.0, %v1506
        %v1508 = vpop.f32.mrf.mxu0
        %v1509 = vadd.f32 0.0, %v1508
        %1510 = vmatmul.bf16.gmra.mxu0 %v1473
        %v1511 = vpop.f32.mrf.mxu0
        %v1512 = vadd.f32 0.0, %v1511
        %v1513 = vpop.f32.mrf.mxu0
        %v1514 = vadd.f32 0.0, %v1513
        %1515 = vdwg.mxu0
        %v1516 = vsel %vm674, %v1497, -inf
        %1517 = vmax.xlane.f32.xlu0 %v1516
        %v1518 = vpop.xlane.xlu0 %1517
        %v1519 = vsel %vm674, %v1499, -inf
        %1520 = vmax.xlane.f32.xlu0 %v1519
        %v1521 = vpop.xlane.xlu0 %1520
        %v1522 = vsel %vm674, %v1502, -inf
        %1523 = vmax.xlane.f32.xlu0 %v1522
        %v1524 = vpop.xlane.xlu0 %1523
        %v1525 = vsel %vm674, %v1504, -inf
        %1526 = vmax.xlane.f32.xlu0 %v1525
        %v1527 = vpop.xlane.xlu0 %1526
        %v1528 = vsel %vm674, %v1507, -inf
        %1529 = vmax.xlane.f32.xlu0 %v1528
        %v1530 = vpop.xlane.xlu0 %1529
        %v1531 = vsel %vm674, %v1509, -inf
        %1532 = vmax.xlane.f32.xlu0 %v1531
        %v1533 = vpop.xlane.xlu0 %1532
        %v1534 = vsel %vm674, %v1512, -inf
        %1535 = vmax.xlane.f32.xlu0 %v1534
        %v1536 = vpop.xlane.xlu0 %1535
        %v1537 = vsel %vm674, %v1514, -inf
        %1538 = vmax.xlane.f32.xlu0 %v1537
        %v1539 = vpop.xlane.xlu0 %1538
        %v1540 = vsub.f32 %v1497, %v1518
        %v1541 = vsub.f32 %v1499, %v1521
        %v1542 = vsub.f32 %v1502, %v1524
        %v1543 = vsub.f32 %v1504, %v1527
        %v1544 = vsub.f32 %v1507, %v1530
        %v1545 = vsub.f32 %v1509, %v1533
        %v1546 = vsub.f32 %v1512, %v1536
        %v1547 = vsub.f32 %v1514, %v1539
        %v1548 = vmul.f32 %v1540, 1.442695
        %v1549 = vpow.pop %v1548
        %v1550 = vmul.f32 %v1541, 1.442695
        %v1551 = vpow.pop %v1550
        %v1552 = vmul.f32 %v1542, 1.442695
        %v1553 = vpow.pop %v1552
        %v1554 = vmul.f32 %v1543, 1.442695
        %v1555 = vpow.pop %v1554
        %v1556 = vmul.f32 %v1544, 1.442695
        %v1557 = vpow.pop %v1556
        %v1558 = vmul.f32 %v1545, 1.442695
        %v1559 = vpow.pop %v1558
        %v1560 = vmul.f32 %v1546, 1.442695
        %v1561 = vpow.pop %v1560
        %v1562 = vmul.f32 %v1547, 1.442695
        %v1563 = vpow.pop %v1562
        %v1564 = vsel %vm674, %v1549, 0.0
        %1565 = vadd.xlane.f32.xlu0 %v1564
        %v1566 = vpop.xlane.xlu0 %1565
        %v1567 = vsel %vm674, %v1551, 0.0
        %1568 = vadd.xlane.f32.xlu0 %v1567
        %v1569 = vpop.xlane.xlu0 %1568
        %v1570 = vsel %vm674, %v1553, 0.0
        %1571 = vadd.xlane.f32.xlu0 %v1570
        %v1572 = vpop.xlane.xlu0 %1571
        %v1573 = vsel %vm674, %v1555, 0.0
        %1574 = vadd.xlane.f32.xlu0 %v1573
        %v1575 = vpop.xlane.xlu0 %1574
        %v1576 = vsel %vm674, %v1557, 0.0
        %1577 = vadd.xlane.f32.xlu0 %v1576
        %v1578 = vpop.xlane.xlu0 %1577
        %v1579 = vsel %vm674, %v1559, 0.0
        %1580 = vadd.xlane.f32.xlu0 %v1579
        %v1581 = vpop.xlane.xlu0 %1580
        %v1582 = vsel %vm674, %v1561, 0.0
        %1583 = vadd.xlane.f32.xlu0 %v1582
        %v1584 = vpop.xlane.xlu0 %1583
        %v1585 = vsel %vm674, %v1563, 0.0
        %1586 = vadd.xlane.f32.xlu0 %v1585
        %v1587 = vpop.xlane.xlu0 %1586
        %v1588 = vrcp.pop %v1566
        %v1589 = vrcp.pop %v1569
        %v1590 = vrcp.pop %v1572
        %v1591 = vrcp.pop %v1575
        %v1592 = vrcp.pop %v1578
        %v1593 = vrcp.pop %v1581
        %v1594 = vrcp.pop %v1584
        %v1595 = vrcp.pop %v1587
        %v1596 = vmul.f32 %v1549, %v1588
        %v1597 = vmul.f32 %v1551, %v1589
        %v1598 = vmul.f32 %v1553, %v1590
        %v1599 = vmul.f32 %v1555, %v1591
        %v1600 = vmul.f32 %v1557, %v1592
        %v1601 = vmul.f32 %v1559, %v1593
        %v1602 = vmul.f32 %v1561, %v1594
        %v1603 = vmul.f32 %v1563, %v1595
        %v1604 = vpack.c.bf16 %v1597, %v1596
        %v1605 = vpack.c.bf16 %v1599, %v1598
        %v1606 = vpack.c.bf16 %v1601, %v1600
        %v1607 = vpack.c.bf16 %v1603, %v1602
        %1612 = vrot.lane.b32.xlu0 %v1244, 112
        %v1613 = vpop.permute.xlu0 %1612
        %1614 = vrot.lane.b32.xlu0 %v1245, 112
        %v1615 = vpop.permute.xlu0 %1614
        %1616 = vrot.lane.b32.xlu0 %v1246, 112
        %v1617 = vpop.permute.xlu0 %1616
        %1618 = vrot.lane.b32.xlu0 %v1247, 112
        %v1619 = vpop.permute.xlu0 %1618
        %v1625 = vsel %vm674, %v1604, 0
        %v1628 = vsel %vm674, %v1605, 0
        %v1631 = vsel %vm674, %v1606, 0
        %v1634 = vsel %vm674, %v1607, 0
        %1636 = vmatpush.bf16.msra.mxu0 0
        %1637 = vmatpush.bf16.msra.mxu0 0
        %1638 = vmatpush.bf16.msra.mxu0 0
        %1639 = vmatpush.bf16.msra.mxu0 0
        %1640 = vmatpush.bf16.msra.mxu0 %v1619
        %1641 = vmatpush.bf16.msra.mxu0 %v1617
        %1642 = vmatpush.bf16.msra.mxu0 %v1615
        %1643 = vmatpush.bf16.msra.mxu0 %v1613
        %1644 = vmatmul.bf16.gmra.mxu0 %v1625
        %v1645 = vpop.f32.mrf.mxu0
        %v1646 = vadd.f32 0.0, %v1645
        %v1647 = vpop.f32.mrf.mxu0
        %v1648 = vadd.f32 0.0, %v1647
        %1649 = vmatmul.bf16.gmra.mxu0 %v1628
        %v1650 = vpop.f32.mrf.mxu0
        %v1651 = vadd.f32 0.0, %v1650
        %v1652 = vpop.f32.mrf.mxu0
        %v1653 = vadd.f32 0.0, %v1652
        %1654 = vmatmul.bf16.gmra.mxu0 %v1631
        %v1655 = vpop.f32.mrf.mxu0
        %v1656 = vadd.f32 0.0, %v1655
        %v1657 = vpop.f32.mrf.mxu0
        %v1658 = vadd.f32 0.0, %v1657
        %1659 = vmatmul.bf16.gmra.mxu0 %v1634
        %v1660 = vpop.f32.mrf.mxu0
        %v1661 = vadd.f32 0.0, %v1660
        %v1662 = vpop.f32.mrf.mxu0
        %v1663 = vadd.f32 0.0, %v1662
        %1664 = vdwg.mxu0
        %1665 = vrot.lane.b32.xlu0 %v1240, 96
        %v1666 = vpop.permute.xlu0 %1665
        %1667 = vrot.lane.b32.xlu0 %v1241, 96
        %v1668 = vpop.permute.xlu0 %1667
        %1669 = vrot.lane.b32.xlu0 %v1242, 96
        %v1670 = vpop.permute.xlu0 %1669
        %1671 = vrot.lane.b32.xlu0 %v1243, 96
        %v1672 = vpop.permute.xlu0 %1671
        %1673 = vrot.lane.b32.xlu0 %v1240, 32
        %v1674 = vpop.permute.xlu0 %1673
        %1675 = vrot.lane.b32.xlu0 %v1241, 32
        %v1676 = vpop.permute.xlu0 %1675
        %1677 = vrot.lane.b32.xlu0 %v1242, 32
        %v1678 = vpop.permute.xlu0 %1677
        %1679 = vrot.lane.b32.xlu0 %v1243, 32
        %v1680 = vpop.permute.xlu0 %1679
        %v1682 = vsel %vm1260, %v1666, 0
        %v1685 = vsel %vm1260, %v1668, 0
        %v1688 = vsel %vm1260, %v1670, 0
        %v1691 = vsel %vm1260, %v1672, 0
        %v1694 = vsel %vm1260, %v1674, 0
        %v1697 = vsel %vm1260, %v1676, 0
        %v1700 = vsel %vm1260, %v1678, 0
        %v1703 = vsel %vm1260, %v1680, 0
        %1705 = vmatpush.bf16.xpose.msra.mxu0 0
        %1706 = vmatpush.bf16.xpose.msra.mxu0 0
        %1707 = vmatpush.bf16.xpose.msra.mxu0 0
        %1708 = vmatpush.bf16.xpose.msra.mxu0 0
        %1709 = vmatpush.bf16.xpose.msra.mxu0 %v1703
        %1710 = vmatpush.bf16.xpose.msra.mxu0 %v1700
        %1711 = vmatpush.bf16.xpose.msra.mxu0 %v1697
        %1712 = vmatpush.bf16.xpose.msra.mxu0 %v1694
        %1713 = vmatmul.bf16.gmra.mxu0 %v1682
        %v1714 = vpop.f32.mrf.mxu0
        %v1715 = vadd.f32 0.0, %v1714
        %v1716 = vpop.f32.mrf.mxu0
        %v1717 = vadd.f32 0.0, %v1716
        %1718 = vmatmul.bf16.gmra.mxu0 %v1685
        %v1719 = vpop.f32.mrf.mxu0
        %v1720 = vadd.f32 0.0, %v1719
        %v1721 = vpop.f32.mrf.mxu0
        %v1722 = vadd.f32 0.0, %v1721
        %1723 = vmatmul.bf16.gmra.mxu0 %v1688
        %v1724 = vpop.f32.mrf.mxu0
        %v1725 = vadd.f32 0.0, %v1724
        %v1726 = vpop.f32.mrf.mxu0
        %v1727 = vadd.f32 0.0, %v1726
        %1728 = vmatmul.bf16.gmra.mxu0 %v1691
        %v1729 = vpop.f32.mrf.mxu0
        %v1730 = vadd.f32 0.0, %v1729
        %v1731 = vpop.f32.mrf.mxu0
        %v1732 = vadd.f32 0.0, %v1731
        %1733 = vdwg.mxu0
        %v1734 = vsel %vm674, %v1715, -inf
        %1735 = vmax.xlane.f32.xlu0 %v1734
        %v1736 = vpop.xlane.xlu0 %1735
        %v1737 = vsel %vm674, %v1717, -inf
        %1738 = vmax.xlane.f32.xlu0 %v1737
        %v1739 = vpop.xlane.xlu0 %1738
        %v1740 = vsel %vm674, %v1720, -inf
        %1741 = vmax.xlane.f32.xlu0 %v1740
        %v1742 = vpop.xlane.xlu0 %1741
        %v1743 = vsel %vm674, %v1722, -inf
        %1744 = vmax.xlane.f32.xlu0 %v1743
        %v1745 = vpop.xlane.xlu0 %1744
        %v1746 = vsel %vm674, %v1725, -inf
        %1747 = vmax.xlane.f32.xlu0 %v1746
        %v1748 = vpop.xlane.xlu0 %1747
        %v1749 = vsel %vm674, %v1727, -inf
        %1750 = vmax.xlane.f32.xlu0 %v1749
        %v1751 = vpop.xlane.xlu0 %1750
        %v1752 = vsel %vm674, %v1730, -inf
        %1753 = vmax.xlane.f32.xlu0 %v1752
        %v1754 = vpop.xlane.xlu0 %1753
        %v1755 = vsel %vm674, %v1732, -inf
        %1756 = vmax.xlane.f32.xlu0 %v1755
        %v1757 = vpop.xlane.xlu0 %1756
        %v1758 = vsub.f32 %v1715, %v1736
        %v1759 = vsub.f32 %v1717, %v1739
        %v1760 = vsub.f32 %v1720, %v1742
        %v1761 = vsub.f32 %v1722, %v1745
        %v1762 = vsub.f32 %v1725, %v1748
        %v1763 = vsub.f32 %v1727, %v1751
        %v1764 = vsub.f32 %v1730, %v1754
        %v1765 = vsub.f32 %v1732, %v1757
        %v1766 = vmul.f32 %v1758, 1.442695
        %v1767 = vpow.pop %v1766
        %v1768 = vmul.f32 %v1759, 1.442695
        %v1769 = vpow.pop %v1768
        %v1770 = vmul.f32 %v1760, 1.442695
        %v1771 = vpow.pop %v1770
        %v1772 = vmul.f32 %v1761, 1.442695
        %v1773 = vpow.pop %v1772
        %v1774 = vmul.f32 %v1762, 1.442695
        %v1775 = vpow.pop %v1774
        %v1776 = vmul.f32 %v1763, 1.442695
        %v1777 = vpow.pop %v1776
        %v1778 = vmul.f32 %v1764, 1.442695
        %v1779 = vpow.pop %v1778
        %v1780 = vmul.f32 %v1765, 1.442695
        %v1781 = vpow.pop %v1780
        %v1782 = vsel %vm674, %v1767, 0.0
        %1783 = vadd.xlane.f32.xlu0 %v1782
        %v1784 = vpop.xlane.xlu0 %1783
        %v1785 = vsel %vm674, %v1769, 0.0
        %1786 = vadd.xlane.f32.xlu0 %v1785
        %v1787 = vpop.xlane.xlu0 %1786
        %v1788 = vsel %vm674, %v1771, 0.0
        %1789 = vadd.xlane.f32.xlu0 %v1788
        %v1790 = vpop.xlane.xlu0 %1789
        %v1791 = vsel %vm674, %v1773, 0.0
        %1792 = vadd.xlane.f32.xlu0 %v1791
        %v1793 = vpop.xlane.xlu0 %1792
        %v1794 = vsel %vm674, %v1775, 0.0
        %1795 = vadd.xlane.f32.xlu0 %v1794
        %v1796 = vpop.xlane.xlu0 %1795
        %v1797 = vsel %vm674, %v1777, 0.0
        %1798 = vadd.xlane.f32.xlu0 %v1797
        %v1799 = vpop.xlane.xlu0 %1798
        %v1800 = vsel %vm674, %v1779, 0.0
        %1801 = vadd.xlane.f32.xlu0 %v1800
        %v1802 = vpop.xlane.xlu0 %1801
        %v1803 = vsel %vm674, %v1781, 0.0
        %1804 = vadd.xlane.f32.xlu0 %v1803
        %v1805 = vpop.xlane.xlu0 %1804
        %v1806 = vrcp.pop %v1784
        %v1807 = vrcp.pop %v1787
        %v1808 = vrcp.pop %v1790
        %v1809 = vrcp.pop %v1793
        %v1810 = vrcp.pop %v1796
        %v1811 = vrcp.pop %v1799
        %v1812 = vrcp.pop %v1802
        %v1813 = vrcp.pop %v1805
        %v1814 = vmul.f32 %v1767, %v1806
        %v1815 = vmul.f32 %v1769, %v1807
        %v1816 = vmul.f32 %v1771, %v1808
        %v1817 = vmul.f32 %v1773, %v1809
        %v1818 = vmul.f32 %v1775, %v1810
        %v1819 = vmul.f32 %v1777, %v1811
        %v1820 = vmul.f32 %v1779, %v1812
        %v1821 = vmul.f32 %v1781, %v1813
        %v1822 = vpack.c.bf16 %v1815, %v1814
        %v1823 = vpack.c.bf16 %v1817, %v1816
        %v1824 = vpack.c.bf16 %v1819, %v1818
        %v1825 = vpack.c.bf16 %v1821, %v1820
        %1826 = vrot.lane.b32.xlu0 %v1244, 96
        %v1827 = vpop.permute.xlu0 %1826
        %1828 = vrot.lane.b32.xlu0 %v1245, 96
        %v1829 = vpop.permute.xlu0 %1828
        %1830 = vrot.lane.b32.xlu0 %v1246, 96
        %v1831 = vpop.permute.xlu0 %1830
        %1832 = vrot.lane.b32.xlu0 %v1247, 96
        %v1833 = vpop.permute.xlu0 %1832
        %v1839 = vsel %vm674, %v1822, 0
        %v1842 = vsel %vm674, %v1823, 0
        %v1845 = vsel %vm674, %v1824, 0
        %v1848 = vsel %vm674, %v1825, 0
        %1850 = vmatpush.bf16.msra.mxu0 0
        %1851 = vmatpush.bf16.msra.mxu0 0
        %1852 = vmatpush.bf16.msra.mxu0 0
        %1853 = vmatpush.bf16.msra.mxu0 0
        %1854 = vmatpush.bf16.msra.mxu0 %v1833
        %1855 = vmatpush.bf16.msra.mxu0 %v1831
        %1856 = vmatpush.bf16.msra.mxu0 %v1829
        %1857 = vmatpush.bf16.msra.mxu0 %v1827
        %1858 = vmatmul.bf16.gmra.mxu0 %v1839
        %v1859 = vpop.f32.mrf.mxu0
        %v1860 = vadd.f32 0.0, %v1859
        %v1861 = vpop.f32.mrf.mxu0
        %v1862 = vadd.f32 0.0, %v1861
        %1863 = vmatmul.bf16.gmra.mxu0 %v1842
        %v1864 = vpop.f32.mrf.mxu0
        %v1865 = vadd.f32 0.0, %v1864
        %v1866 = vpop.f32.mrf.mxu0
        %v1867 = vadd.f32 0.0, %v1866
        %1868 = vmatmul.bf16.gmra.mxu0 %v1845
        %v1869 = vpop.f32.mrf.mxu0
        %v1870 = vadd.f32 0.0, %v1869
        %v1871 = vpop.f32.mrf.mxu0
        %v1872 = vadd.f32 0.0, %v1871
        %1873 = vmatmul.bf16.gmra.mxu0 %v1848
        %v1874 = vpop.f32.mrf.mxu0
        %v1875 = vadd.f32 0.0, %v1874
        %v1876 = vpop.f32.mrf.mxu0
        %v1877 = vadd.f32 0.0, %v1876
        %1878 = vdwg.mxu0
        %1879 = vrot.lane.b32.xlu0 %v1240, 80
        %v1880 = vpop.permute.xlu0 %1879
        %1881 = vrot.lane.b32.xlu0 %v1241, 80
        %v1882 = vpop.permute.xlu0 %1881
        %1883 = vrot.lane.b32.xlu0 %v1242, 80
        %v1884 = vpop.permute.xlu0 %1883
        %1885 = vrot.lane.b32.xlu0 %v1243, 80
        %v1886 = vpop.permute.xlu0 %1885
        %1887 = vrot.lane.b32.xlu0 %v1240, 16
        %v1888 = vpop.permute.xlu0 %1887
        %1889 = vrot.lane.b32.xlu0 %v1241, 16
        %v1890 = vpop.permute.xlu0 %1889
        %1891 = vrot.lane.b32.xlu0 %v1242, 16
        %v1892 = vpop.permute.xlu0 %1891
        %1893 = vrot.lane.b32.xlu0 %v1243, 16
        %v1894 = vpop.permute.xlu0 %1893
        %v1896 = vsel %vm1260, %v1880, 0
        %v1899 = vsel %vm1260, %v1882, 0
        %v1902 = vsel %vm1260, %v1884, 0
        %v1905 = vsel %vm1260, %v1886, 0
        %v1908 = vsel %vm1260, %v1888, 0
        %v1911 = vsel %vm1260, %v1890, 0
        %v1914 = vsel %vm1260, %v1892, 0
        %v1917 = vsel %vm1260, %v1894, 0
        %1919 = vmatpush.bf16.xpose.msra.mxu0 0
        %1920 = vmatpush.bf16.xpose.msra.mxu0 0
        %1921 = vmatpush.bf16.xpose.msra.mxu0 0
        %1922 = vmatpush.bf16.xpose.msra.mxu0 0
        %1923 = vmatpush.bf16.xpose.msra.mxu0 %v1917
        %1924 = vmatpush.bf16.xpose.msra.mxu0 %v1914
        %1925 = vmatpush.bf16.xpose.msra.mxu0 %v1911
        %1926 = vmatpush.bf16.xpose.msra.mxu0 %v1908
        %1927 = vmatmul.bf16.gmra.mxu0 %v1896
        %v1928 = vpop.f32.mrf.mxu0
        %v1929 = vadd.f32 0.0, %v1928
        %v1930 = vpop.f32.mrf.mxu0
        %v1931 = vadd.f32 0.0, %v1930
        %1932 = vmatmul.bf16.gmra.mxu0 %v1899
        %v1933 = vpop.f32.mrf.mxu0
        %v1934 = vadd.f32 0.0, %v1933
        %v1935 = vpop.f32.mrf.mxu0
        %v1936 = vadd.f32 0.0, %v1935
        %1937 = vmatmul.bf16.gmra.mxu0 %v1902
        %v1938 = vpop.f32.mrf.mxu0
        %v1939 = vadd.f32 0.0, %v1938
        %v1940 = vpop.f32.mrf.mxu0
        %v1941 = vadd.f32 0.0, %v1940
        %1942 = vmatmul.bf16.gmra.mxu0 %v1905
        %v1943 = vpop.f32.mrf.mxu0
        %v1944 = vadd.f32 0.0, %v1943
        %v1945 = vpop.f32.mrf.mxu0
        %v1946 = vadd.f32 0.0, %v1945
        %1947 = vdwg.mxu0
        %v1948 = vsel %vm674, %v1929, -inf
        %1949 = vmax.xlane.f32.xlu0 %v1948
        %v1950 = vpop.xlane.xlu0 %1949
        %v1951 = vsel %vm674, %v1931, -inf
        %1952 = vmax.xlane.f32.xlu0 %v1951
        %v1953 = vpop.xlane.xlu0 %1952
        %v1954 = vsel %vm674, %v1934, -inf
        %1955 = vmax.xlane.f32.xlu0 %v1954
        %v1956 = vpop.xlane.xlu0 %1955
        %v1957 = vsel %vm674, %v1936, -inf
        %1958 = vmax.xlane.f32.xlu0 %v1957
        %v1959 = vpop.xlane.xlu0 %1958
        %v1960 = vsel %vm674, %v1939, -inf
        %1961 = vmax.xlane.f32.xlu0 %v1960
        %v1962 = vpop.xlane.xlu0 %1961
        %v1963 = vsel %vm674, %v1941, -inf
        %1964 = vmax.xlane.f32.xlu0 %v1963
        %v1965 = vpop.xlane.xlu0 %1964
        %v1966 = vsel %vm674, %v1944, -inf
        %1967 = vmax.xlane.f32.xlu0 %v1966
        %v1968 = vpop.xlane.xlu0 %1967
        %v1969 = vsel %vm674, %v1946, -inf
        %1970 = vmax.xlane.f32.xlu0 %v1969
        %v1971 = vpop.xlane.xlu0 %1970
        %v1972 = vsub.f32 %v1929, %v1950
        %v1973 = vsub.f32 %v1931, %v1953
        %v1974 = vsub.f32 %v1934, %v1956
        %v1975 = vsub.f32 %v1936, %v1959
        %v1976 = vsub.f32 %v1939, %v1962
        %v1977 = vsub.f32 %v1941, %v1965
        %v1978 = vsub.f32 %v1944, %v1968
        %v1979 = vsub.f32 %v1946, %v1971
        %v1980 = vmul.f32 %v1972, 1.442695
        %v1981 = vpow.pop %v1980
        %v1982 = vmul.f32 %v1973, 1.442695
        %v1983 = vpow.pop %v1982
        %v1984 = vmul.f32 %v1974, 1.442695
        %v1985 = vpow.pop %v1984
        %v1986 = vmul.f32 %v1975, 1.442695
        %v1987 = vpow.pop %v1986
        %v1988 = vmul.f32 %v1976, 1.442695
        %v1989 = vpow.pop %v1988
        %v1990 = vmul.f32 %v1977, 1.442695
        %v1991 = vpow.pop %v1990
        %v1992 = vmul.f32 %v1978, 1.442695
        %v1993 = vpow.pop %v1992
        %v1994 = vmul.f32 %v1979, 1.442695
        %v1995 = vpow.pop %v1994
        %v1996 = vsel %vm674, %v1981, 0.0
        %1997 = vadd.xlane.f32.xlu0 %v1996
        %v1998 = vpop.xlane.xlu0 %1997
        %v1999 = vsel %vm674, %v1983, 0.0
        %2000 = vadd.xlane.f32.xlu0 %v1999
        %v2001 = vpop.xlane.xlu0 %2000
        %v2002 = vsel %vm674, %v1985, 0.0
        %2003 = vadd.xlane.f32.xlu0 %v2002
        %v2004 = vpop.xlane.xlu0 %2003
        %v2005 = vsel %vm674, %v1987, 0.0
        %2006 = vadd.xlane.f32.xlu0 %v2005
        %v2007 = vpop.xlane.xlu0 %2006
        %v2008 = vsel %vm674, %v1989, 0.0
        %2009 = vadd.xlane.f32.xlu0 %v2008
        %v2010 = vpop.xlane.xlu0 %2009
        %v2011 = vsel %vm674, %v1991, 0.0
        %2012 = vadd.xlane.f32.xlu0 %v2011
        %v2013 = vpop.xlane.xlu0 %2012
        %v2014 = vsel %vm674, %v1993, 0.0
        %2015 = vadd.xlane.f32.xlu0 %v2014
        %v2016 = vpop.xlane.xlu0 %2015
        %v2017 = vsel %vm674, %v1995, 0.0
        %2018 = vadd.xlane.f32.xlu0 %v2017
        %v2019 = vpop.xlane.xlu0 %2018
        %v2020 = vrcp.pop %v1998
        %v2021 = vrcp.pop %v2001
        %v2022 = vrcp.pop %v2004
        %v2023 = vrcp.pop %v2007
        %v2024 = vrcp.pop %v2010
        %v2025 = vrcp.pop %v2013
        %v2026 = vrcp.pop %v2016
        %v2027 = vrcp.pop %v2019
        %v2028 = vmul.f32 %v1981, %v2020
        %v2029 = vmul.f32 %v1983, %v2021
        %v2030 = vmul.f32 %v1985, %v2022
        %v2031 = vmul.f32 %v1987, %v2023
        %v2032 = vmul.f32 %v1989, %v2024
        %v2033 = vmul.f32 %v1991, %v2025
        %v2034 = vmul.f32 %v1993, %v2026
        %v2035 = vmul.f32 %v1995, %v2027
        %v2036 = vpack.c.bf16 %v2029, %v2028
        %v2037 = vpack.c.bf16 %v2031, %v2030
        %v2038 = vpack.c.bf16 %v2033, %v2032
        %v2039 = vpack.c.bf16 %v2035, %v2034
        %2040 = vrot.lane.b32.xlu0 %v1244, 80
        %v2041 = vpop.permute.xlu0 %2040
        %2042 = vrot.lane.b32.xlu0 %v1245, 80
        %v2043 = vpop.permute.xlu0 %2042
        %2044 = vrot.lane.b32.xlu0 %v1246, 80
        %v2045 = vpop.permute.xlu0 %2044
        %2046 = vrot.lane.b32.xlu0 %v1247, 80
        %v2047 = vpop.permute.xlu0 %2046
        %v2053 = vsel %vm674, %v2036, 0
        %v2056 = vsel %vm674, %v2037, 0
        %v2059 = vsel %vm674, %v2038, 0
        %v2062 = vsel %vm674, %v2039, 0
        %2064 = vmatpush.bf16.msra.mxu0 0
        %2065 = vmatpush.bf16.msra.mxu0 0
        %2066 = vmatpush.bf16.msra.mxu0 0
        %2067 = vmatpush.bf16.msra.mxu0 0
        %2068 = vmatpush.bf16.msra.mxu0 %v2047
        %2069 = vmatpush.bf16.msra.mxu0 %v2045
        %2070 = vmatpush.bf16.msra.mxu0 %v2043
        %2071 = vmatpush.bf16.msra.mxu0 %v2041
        %2072 = vmatmul.bf16.gmra.mxu0 %v2053
        %v2073 = vpop.f32.mrf.mxu0
        %v2074 = vadd.f32 0.0, %v2073
        %v2075 = vpop.f32.mrf.mxu0
        %v2076 = vadd.f32 0.0, %v2075
        %2077 = vmatmul.bf16.gmra.mxu0 %v2056
        %v2078 = vpop.f32.mrf.mxu0
        %v2079 = vadd.f32 0.0, %v2078
        %v2080 = vpop.f32.mrf.mxu0
        %v2081 = vadd.f32 0.0, %v2080
        %2082 = vmatmul.bf16.gmra.mxu0 %v2059
        %v2083 = vpop.f32.mrf.mxu0
        %v2084 = vadd.f32 0.0, %v2083
        %v2085 = vpop.f32.mrf.mxu0
        %v2086 = vadd.f32 0.0, %v2085
        %2087 = vmatmul.bf16.gmra.mxu0 %v2062
        %v2088 = vpop.f32.mrf.mxu0
        %v2089 = vadd.f32 0.0, %v2088
        %v2090 = vpop.f32.mrf.mxu0
        %v2091 = vadd.f32 0.0, %v2090
        %2092 = vdwg.mxu0
        %2101 = vrot.lane.b32.xlu0 %v1646, 16
        %v2102 = vpop.permute.xlu0 %2101
        %2103 = vrot.lane.b32.xlu0 %v1648, 16
        %v2104 = vpop.permute.xlu0 %2103
        %2105 = vrot.lane.b32.xlu0 %v1651, 16
        %v2106 = vpop.permute.xlu0 %2105
        %2107 = vrot.lane.b32.xlu0 %v1653, 16
        %v2108 = vpop.permute.xlu0 %2107
        %2109 = vrot.lane.b32.xlu0 %v1656, 16
        %v2110 = vpop.permute.xlu0 %2109
        %2111 = vrot.lane.b32.xlu0 %v1658, 16
        %v2112 = vpop.permute.xlu0 %2111
        %2113 = vrot.lane.b32.xlu0 %v1661, 16
        %v2114 = vpop.permute.xlu0 %2113
        %2115 = vrot.lane.b32.xlu0 %v1663, 16
        %v2116 = vpop.permute.xlu0 %2115
        %2133 = vrot.lane.b32.xlu0 %v1860, 32
        %v2134 = vpop.permute.xlu0 %2133
        %2135 = vrot.lane.b32.xlu0 %v1862, 32
        %v2136 = vpop.permute.xlu0 %2135
        %2137 = vrot.lane.b32.xlu0 %v1865, 32
        %v2138 = vpop.permute.xlu0 %2137
        %2139 = vrot.lane.b32.xlu0 %v1867, 32
        %v2140 = vpop.permute.xlu0 %2139
        %2141 = vrot.lane.b32.xlu0 %v1870, 32
        %v2142 = vpop.permute.xlu0 %2141
        %2143 = vrot.lane.b32.xlu0 %v1872, 32
        %v2144 = vpop.permute.xlu0 %2143
        %2145 = vrot.lane.b32.xlu0 %v1875, 32
        %v2146 = vpop.permute.xlu0 %2145
        %2147 = vrot.lane.b32.xlu0 %v1877, 32
        %v2148 = vpop.permute.xlu0 %2147
        %2165 = vrot.lane.b32.xlu0 %v2074, 48
        %v2166 = vpop.permute.xlu0 %2165
        %2167 = vrot.lane.b32.xlu0 %v2076, 48
        %v2168 = vpop.permute.xlu0 %2167
        %2169 = vrot.lane.b32.xlu0 %v2079, 48
        %v2170 = vpop.permute.xlu0 %2169
        %2171 = vrot.lane.b32.xlu0 %v2081, 48
        %v2172 = vpop.permute.xlu0 %2171
        %2173 = vrot.lane.b32.xlu0 %v2084, 48
        %v2174 = vpop.permute.xlu0 %2173
        %2175 = vrot.lane.b32.xlu0 %v2086, 48
        %v2176 = vpop.permute.xlu0 %2175
        %2177 = vrot.lane.b32.xlu0 %v2089, 48
        %v2178 = vpop.permute.xlu0 %2177
        %2179 = vrot.lane.b32.xlu0 %v2091, 48
        %v2180 = vpop.permute.xlu0 %2179
        %v2189 = vsel %vm1260, %v1428, %v2102
        %v2190 = vsel %vm1260, %v1430, %v2104
        %v2191 = vsel %vm1260, %v1433, %v2106
        %v2192 = vsel %vm1260, %v1435, %v2108
        %v2193 = vsel %vm1260, %v1438, %v2110
        %v2194 = vsel %vm1260, %v1440, %v2112
        %v2195 = vsel %vm1260, %v1443, %v2114
        %v2196 = vsel %vm1260, %v1445, %v2116
        %vm2197 = vcmask 261120
        %v2198 = vsel %vm2197, %v2189, %v2134
        %v2199 = vsel %vm2197, %v2190, %v2136
        %v2200 = vsel %vm2197, %v2191, %v2138
        %v2201 = vsel %vm2197, %v2192, %v2140
        %v2202 = vsel %vm2197, %v2193, %v2142
        %v2203 = vsel %vm2197, %v2194, %v2144
        %v2204 = vsel %vm2197, %v2195, %v2146
        %v2205 = vsel %vm2197, %v2196, %v2148
        %vm2206 = vcmask 392192
        %v2207 = vsel %vm2206, %v2198, %v2166
        %v2208 = vsel %vm2206, %v2199, %v2168
        %v2209 = vsel %vm2206, %v2200, %v2170
        %v2210 = vsel %vm2206, %v2201, %v2172
        %v2211 = vsel %vm2206, %v2202, %v2174
        %v2212 = vsel %vm2206, %v2203, %v2176
        %v2213 = vsel %vm2206, %v2204, %v2178
        %v2214 = vsel %vm2206, %v2205, %v2180
        %v2215 = vpack.c.bf16 %v2208, %v2207
        %v2216 = vpack.c.bf16 %v2210, %v2209
        %v2217 = vpack.c.bf16 %v2212, %v2211
        %v2218 = vpack.c.bf16 %v2214, %v2213
        %v2219 = vperm.slane %v664, 5
        %v2228 = vunpack.c.l.b16 %v1232
        %v2229 = vunpack.c.l.b16 %v1233
        %v2230 = vunpack.c.l.b16 %v1234
        %v2231 = vunpack.c.l.b16 %v1235
        %v2232 = vunpack.c.l.b16 %v1236
        %v2233 = vunpack.c.l.b16 %v1237
        %v2234 = vunpack.c.l.b16 %v1238
        %v2235 = vunpack.c.l.b16 %v1239
        %v2236 = vpack.c.b16 %v2229, %v2228
        %v2237 = vpack.c.b16 %v2231, %v2230
        %v2238 = vpack.c.b16 %v2233, %v2232
        %v2239 = vpack.c.b16 %v2235, %v2234
        %v2245 = vsel %vm674, %v2215, 0
        %v2248 = vsel %vm674, %v2216, 0
        %v2251 = vsel %vm674, %v2217, 0
        %v2254 = vsel %vm674, %v2218, 0
        %2256 = vmatpush.bf16.msra.mxu0 0
        %2257 = vmatpush.bf16.msra.mxu0 0
        %2258 = vmatpush.bf16.msra.mxu0 0
        %2259 = vmatpush.bf16.msra.mxu0 0
        %2260 = vmatpush.bf16.msra.mxu0 %v2239
        %2261 = vmatpush.bf16.msra.mxu0 %v2238
        %2262 = vmatpush.bf16.msra.mxu0 %v2237
        %2263 = vmatpush.bf16.msra.mxu0 %v2236
        %2264 = vmatmul.bf16.gmra.mxu0 %v2245
        %v2265 = vpop.f32.mrf.mxu0
        %v2266 = vadd.f32 %v2219, %v2265
        %v2267 = vpop.f32.mrf.mxu0
        %v2268 = vadd.f32 %v2219, %v2267
        %2269 = vmatmul.bf16.gmra.mxu0 %v2248
        %v2270 = vpop.f32.mrf.mxu0
        %v2271 = vadd.f32 %v2219, %v2270
        %v2272 = vpop.f32.mrf.mxu0
        %v2273 = vadd.f32 %v2219, %v2272
        %2274 = vmatmul.bf16.gmra.mxu0 %v2251
        %v2275 = vpop.f32.mrf.mxu0
        %v2276 = vadd.f32 %v2219, %v2275
        %v2277 = vpop.f32.mrf.mxu0
        %v2278 = vadd.f32 %v2219, %v2277
        %2279 = vmatmul.bf16.gmra.mxu0 %v2254
        %v2280 = vpop.f32.mrf.mxu0
        %v2281 = vadd.f32 %v2219, %v2280
        %v2282 = vpop.f32.mrf.mxu0
        %v2283 = vadd.f32 %v2219, %v2282
        %2284 = vdwg.mxu0
        %v2285 = vadd.f32 %v2266, %v897
        %v2286 = vadd.f32 %v2268, %v899
        %v2287 = vadd.f32 %v2271, %v902
        %v2288 = vadd.f32 %v2273, %v904
        %v2289 = vadd.f32 %v2276, %v907
        %v2290 = vadd.f32 %v2278, %v909
        %v2291 = vadd.f32 %v2281, %v912
        %v2292 = vadd.f32 %v2283, %v914
        %v2293 = vsel %vm674, %v2285, 0.0
        %2294 = vadd.xlane.f32.xlu0 %v2293
        %v2295 = vpop.xlane.xlu0 %2294
        %v2296 = vsel %vm674, %v2286, 0.0
        %2297 = vadd.xlane.f32.xlu0 %v2296
        %v2298 = vpop.xlane.xlu0 %2297
        %v2299 = vsel %vm674, %v2287, 0.0
        %2300 = vadd.xlane.f32.xlu0 %v2299
        %v2301 = vpop.xlane.xlu0 %2300
        %v2302 = vsel %vm674, %v2288, 0.0
        %2303 = vadd.xlane.f32.xlu0 %v2302
        %v2304 = vpop.xlane.xlu0 %2303
        %v2305 = vsel %vm674, %v2289, 0.0
        %2306 = vadd.xlane.f32.xlu0 %v2305
        %v2307 = vpop.xlane.xlu0 %2306
        %v2308 = vsel %vm674, %v2290, 0.0
        %2309 = vadd.xlane.f32.xlu0 %v2308
        %v2310 = vpop.xlane.xlu0 %2309
        %v2311 = vsel %vm674, %v2291, 0.0
        %2312 = vadd.xlane.f32.xlu0 %v2311
        %v2313 = vpop.xlane.xlu0 %2312
        %v2314 = vsel %vm674, %v2292, 0.0
        %2315 = vadd.xlane.f32.xlu0 %v2314
        %v2316 = vpop.xlane.xlu0 %2315
        %v2317 = vmul.f32 %v2295, %v702
        %v2318 = vmul.f32 %v2298, %v702
        %v2319 = vmul.f32 %v2301, %v702
        %v2320 = vmul.f32 %v2304, %v702
        %v2321 = vmul.f32 %v2307, %v702
        %v2322 = vmul.f32 %v2310, %v702
        %v2323 = vmul.f32 %v2313, %v702
        %v2324 = vmul.f32 %v2316, %v702
        %v2325 = vsub.f32 %v2285, %v2317
        %v2326 = vsub.f32 %v2286, %v2318
        %v2327 = vsub.f32 %v2287, %v2319
        %v2328 = vsub.f32 %v2288, %v2320
        %v2329 = vsub.f32 %v2289, %v2321
        %v2330 = vsub.f32 %v2290, %v2322
        %v2331 = vsub.f32 %v2291, %v2323
        %v2332 = vsub.f32 %v2292, %v2324
        %v2333 = vmul.f32 %v2325, %v2325
        %v2334 = vmul.f32 %v2326, %v2326
        %v2335 = vmul.f32 %v2327, %v2327
        %v2336 = vmul.f32 %v2328, %v2328
        %v2337 = vmul.f32 %v2329, %v2329
        %v2338 = vmul.f32 %v2330, %v2330
        %v2339 = vmul.f32 %v2331, %v2331
        %v2340 = vmul.f32 %v2332, %v2332
        %v2341 = vsel %vm674, %v2333, 0.0
        %2342 = vadd.xlane.f32.xlu0 %v2341
        %v2343 = vpop.xlane.xlu0 %2342
        %v2344 = vsel %vm674, %v2334, 0.0
        %2345 = vadd.xlane.f32.xlu0 %v2344
        %v2346 = vpop.xlane.xlu0 %2345
        %v2347 = vsel %vm674, %v2335, 0.0
        %2348 = vadd.xlane.f32.xlu0 %v2347
        %v2349 = vpop.xlane.xlu0 %2348
        %v2350 = vsel %vm674, %v2336, 0.0
        %2351 = vadd.xlane.f32.xlu0 %v2350
        %v2352 = vpop.xlane.xlu0 %2351
        %v2353 = vsel %vm674, %v2337, 0.0
        %2354 = vadd.xlane.f32.xlu0 %v2353
        %v2355 = vpop.xlane.xlu0 %2354
        %v2356 = vsel %vm674, %v2338, 0.0
        %2357 = vadd.xlane.f32.xlu0 %v2356
        %v2358 = vpop.xlane.xlu0 %2357
        %v2359 = vsel %vm674, %v2339, 0.0
        %2360 = vadd.xlane.f32.xlu0 %v2359
        %v2361 = vpop.xlane.xlu0 %2360
        %v2362 = vsel %vm674, %v2340, 0.0
        %2363 = vadd.xlane.f32.xlu0 %v2362
        %v2364 = vpop.xlane.xlu0 %2363
        %v2365 = vmul.f32 %v2343, %v702
        %v2366 = vmul.f32 %v2346, %v702
        %v2367 = vmul.f32 %v2349, %v702
        %v2368 = vmul.f32 %v2352, %v702
        %v2369 = vmul.f32 %v2355, %v702
        %v2370 = vmul.f32 %v2358, %v702
        %v2371 = vmul.f32 %v2361, %v702
        %v2372 = vmul.f32 %v2364, %v702
        %v2373 = vadd.f32 %v2365, 1e-05
        %v2374 = vadd.f32 %v2366, 1e-05
        %v2375 = vadd.f32 %v2367, 1e-05
        %v2376 = vadd.f32 %v2368, 1e-05
        %v2377 = vadd.f32 %v2369, 1e-05
        %v2378 = vadd.f32 %v2370, 1e-05
        %v2379 = vadd.f32 %v2371, 1e-05
        %v2380 = vadd.f32 %v2372, 1e-05
        %v2381 = vrsqrt.pop %v2373
        %v2382 = vmul.f32 %v2381, %v2373
        %v2383 = vmul.f32 %v2382, %v2381
        %v2384 = vmul.f32 0.5, %v2383
        %v2385 = vsub.f32 1.5, %v2384
        %v2386 = vmul.f32 %v2381, %v2385
        %vm2387 = vweird.f32 %v2373
        %vm2388 = vweird.f32 %v2381
        %vm2389 = vmor %vm2387, %vm2388
        %v2390 = vsel %vm2389, %v2381, %v2386
        %v2391 = vrsqrt.pop %v2374
        %v2392 = vmul.f32 %v2391, %v2374
        %v2393 = vmul.f32 %v2392, %v2391
        %v2394 = vmul.f32 0.5, %v2393
        %v2395 = vsub.f32 1.5, %v2394
        %v2396 = vmul.f32 %v2391, %v2395
        %vm2397 = vweird.f32 %v2374
        %vm2398 = vweird.f32 %v2391
        %vm2399 = vmor %vm2397, %vm2398
        %v2400 = vsel %vm2399, %v2391, %v2396
        %v2401 = vrsqrt.pop %v2375
        %v2402 = vmul.f32 %v2401, %v2375
        %v2403 = vmul.f32 %v2402, %v2401
        %v2404 = vmul.f32 0.5, %v2403
        %v2405 = vsub.f32 1.5, %v2404
        %v2406 = vmul.f32 %v2401, %v2405
        %vm2407 = vweird.f32 %v2375
        %vm2408 = vweird.f32 %v2401
        %vm2409 = vmor %vm2407, %vm2408
        %v2410 = vsel %vm2409, %v2401, %v2406
        %v2411 = vrsqrt.pop %v2376
        %v2412 = vmul.f32 %v2411, %v2376
        %v2413 = vmul.f32 %v2412, %v2411
        %v2414 = vmul.f32 0.5, %v2413
        %v2415 = vsub.f32 1.5, %v2414
        %v2416 = vmul.f32 %v2411, %v2415
        %vm2417 = vweird.f32 %v2376
        %vm2418 = vweird.f32 %v2411
        %vm2419 = vmor %vm2417, %vm2418
        %v2420 = vsel %vm2419, %v2411, %v2416
        %v2421 = vrsqrt.pop %v2377
        %v2422 = vmul.f32 %v2421, %v2377
        %v2423 = vmul.f32 %v2422, %v2421
        %v2424 = vmul.f32 0.5, %v2423
        %v2425 = vsub.f32 1.5, %v2424
        %v2426 = vmul.f32 %v2421, %v2425
        %vm2427 = vweird.f32 %v2377
        %vm2428 = vweird.f32 %v2421
        %vm2429 = vmor %vm2427, %vm2428
        %v2430 = vsel %vm2429, %v2421, %v2426
        %v2431 = vrsqrt.pop %v2378
        %v2432 = vmul.f32 %v2431, %v2378
        %v2433 = vmul.f32 %v2432, %v2431
        %v2434 = vmul.f32 0.5, %v2433
        %v2435 = vsub.f32 1.5, %v2434
        %v2436 = vmul.f32 %v2431, %v2435
        %vm2437 = vweird.f32 %v2378
        %vm2438 = vweird.f32 %v2431
        %vm2439 = vmor %vm2437, %vm2438
        %v2440 = vsel %vm2439, %v2431, %v2436
        %v2441 = vrsqrt.pop %v2379
        %v2442 = vmul.f32 %v2441, %v2379
        %v2443 = vmul.f32 %v2442, %v2441
        %v2444 = vmul.f32 0.5, %v2443
        %v2445 = vsub.f32 1.5, %v2444
        %v2446 = vmul.f32 %v2441, %v2445
        %vm2447 = vweird.f32 %v2379
        %vm2448 = vweird.f32 %v2441
        %vm2449 = vmor %vm2447, %vm2448
        %v2450 = vsel %vm2449, %v2441, %v2446
        %v2451 = vrsqrt.pop %v2380
        %v2452 = vmul.f32 %v2451, %v2380
        %v2453 = vmul.f32 %v2452, %v2451
        %v2454 = vmul.f32 0.5, %v2453
        %v2455 = vsub.f32 1.5, %v2454
        %v2456 = vmul.f32 %v2451, %v2455
        %vm2457 = vweird.f32 %v2380
        %vm2458 = vweird.f32 %v2451
        %vm2459 = vmor %vm2457, %vm2458
        %v2460 = vsel %vm2459, %v2451, %v2456
        %v2461 = vmul.f32 %v2325, %v2390
        %v2462 = vmul.f32 %v2326, %v2400
        %v2463 = vmul.f32 %v2327, %v2410
        %v2464 = vmul.f32 %v2328, %v2420
        %v2465 = vmul.f32 %v2329, %v2430
        %v2466 = vmul.f32 %v2330, %v2440
        %v2467 = vmul.f32 %v2331, %v2450
        %v2468 = vmul.f32 %v2332, %v2460
        %v2469 = vperm.slane %v664, 6
        %v2470 = vmul.f32 %v2461, %v2469
        %v2471 = vmul.f32 %v2462, %v2469
        %v2472 = vmul.f32 %v2463, %v2469
        %v2473 = vmul.f32 %v2464, %v2469
        %v2474 = vmul.f32 %v2465, %v2469
        %v2475 = vmul.f32 %v2466, %v2469
        %v2476 = vmul.f32 %v2467, %v2469
        %v2477 = vmul.f32 %v2468, %v2469
        %v2478 = vperm.slane %v664, 7
        %v2479 = vadd.f32 %v2470, %v2478
        %v2480 = vadd.f32 %v2471, %v2478
        %v2481 = vadd.f32 %v2472, %v2478
        %v2482 = vadd.f32 %v2473, %v2478
        %v2483 = vadd.f32 %v2474, %v2478
        %v2484 = vadd.f32 %v2475, %v2478
        %v2485 = vadd.f32 %v2476, %v2478
        %v2486 = vadd.f32 %v2477, %v2478
        %v2487 = vpack.c.bf16 %v2480, %v2479
        %v2488 = vpack.c.bf16 %v2482, %v2481
        %v2489 = vpack.c.bf16 %v2484, %v2483
        %v2490 = vpack.c.bf16 %v2486, %v2485
        %v2491 = vld [vmem:[#allocation11] sm:$0xf]
        %v2492 = vld [vmem:[#allocation11 + $0x4] sm:$0xf]
        %v2493 = vld [vmem:[#allocation11 + $0x8] sm:$0xf]
        %v2494 = vld [vmem:[#allocation11 + $0xc] sm:$0xf]
        %v2495 = vld [vmem:[#allocation11 + $0x10] sm:$0xf]
        %v2496 = vld [vmem:[#allocation11 + $0x14] sm:$0xf]
        %v2497 = vld [vmem:[#allocation11 + $0x18] sm:$0xf]
        %v2498 = vld [vmem:[#allocation11 + $0x1c] sm:$0xf]
        %v2507 = vunpack.c.l.b16 %v2491
        %v2508 = vunpack.c.l.b16 %v2492
        %v2509 = vunpack.c.l.b16 %v2493
        %v2510 = vunpack.c.l.b16 %v2494
        %v2511 = vunpack.c.l.b16 %v2495
        %v2512 = vunpack.c.l.b16 %v2496
        %v2513 = vunpack.c.l.b16 %v2497
        %v2514 = vunpack.c.l.b16 %v2498
        %v2515 = vpack.c.b16 %v2508, %v2507
        %v2516 = vpack.c.b16 %v2510, %v2509
        %v2517 = vpack.c.b16 %v2512, %v2511
        %v2518 = vpack.c.b16 %v2514, %v2513
        %v2524 = vsel %vm674, %v2487, 0
        %v2527 = vsel %vm674, %v2488, 0
        %v2530 = vsel %vm674, %v2489, 0
        %v2533 = vsel %vm674, %v2490, 0
        %2535 = vmatpush.bf16.msra.mxu0 0
        %2536 = vmatpush.bf16.msra.mxu0 0
        %2537 = vmatpush.bf16.msra.mxu0 0
        %2538 = vmatpush.bf16.msra.mxu0 0
        %2539 = vmatpush.bf16.msra.mxu0 %v2518
        %2540 = vmatpush.bf16.msra.mxu0 %v2517
        %2541 = vmatpush.bf16.msra.mxu0 %v2516
        %2542 = vmatpush.bf16.msra.mxu0 %v2515
        %2543 = vmatmul.bf16.gmra.mxu0 %v2524
        %v2544 = vpop.f32.mrf.mxu0
        %v2545 = vadd.f32 0.0, %v2544
        %v2546 = vpop.f32.mrf.mxu0
        %v2547 = vadd.f32 0.0, %v2546
        %2548 = vmatmul.bf16.gmra.mxu0 %v2527
        %v2549 = vpop.f32.mrf.mxu0
        %v2550 = vadd.f32 0.0, %v2549
        %v2551 = vpop.f32.mrf.mxu0
        %v2552 = vadd.f32 0.0, %v2551
        %2553 = vmatmul.bf16.gmra.mxu0 %v2530
        %v2554 = vpop.f32.mrf.mxu0
        %v2555 = vadd.f32 0.0, %v2554
        %v2556 = vpop.f32.mrf.mxu0
        %v2557 = vadd.f32 0.0, %v2556
        %2558 = vmatmul.bf16.gmra.mxu0 %v2533
        %v2559 = vpop.f32.mrf.mxu0
        %v2560 = vadd.f32 0.0, %v2559
        %v2561 = vpop.f32.mrf.mxu0
        %v2562 = vadd.f32 0.0, %v2561
        %2563 = vdwg.mxu0
        %v2564 = vpack.c.bf16 %v663, %v663
        %v2565 = vld [vmem:[#allocation13] sm:$0xf]
        %v2566 = vld [vmem:[#allocation13 + $0x4] sm:$0xf]
        %v2567 = vld [vmem:[#allocation13 + $0x8] sm:$0xf]
        %v2568 = vld [vmem:[#allocation13 + $0xc] sm:$0xf]
        %v2569 = vld [vmem:[#allocation13 + $0x10] sm:$0xf]
        %v2570 = vld [vmem:[#allocation13 + $0x14] sm:$0xf]
        %v2571 = vld [vmem:[#allocation13 + $0x18] sm:$0xf]
        %v2572 = vld [vmem:[#allocation13 + $0x1c] sm:$0xf]
        %v2581 = vunpack.c.l.b16 %v2565
        %v2582 = vunpack.c.l.b16 %v2566
        %v2583 = vunpack.c.l.b16 %v2567
        %v2584 = vunpack.c.l.b16 %v2568
        %v2585 = vunpack.c.l.b16 %v2569
        %v2586 = vunpack.c.l.b16 %v2570
        %v2587 = vunpack.c.l.b16 %v2571
        %v2588 = vunpack.c.l.b16 %v2572
        %v2589 = vpack.c.b16 %v2582, %v2581
        %v2590 = vpack.c.b16 %v2584, %v2583
        %v2591 = vpack.c.b16 %v2586, %v2585
        %v2592 = vpack.c.b16 %v2588, %v2587
        %v2598 = vsel %vm674, %v2564, 0
        %2600 = vmatpush.bf16.msra.mxu0 0
        %2601 = vmatpush.bf16.msra.mxu0 0
        %2602 = vmatpush.bf16.msra.mxu0 0
        %2603 = vmatpush.bf16.msra.mxu0 0
        %2604 = vmatpush.bf16.msra.mxu0 %v2592
        %2605 = vmatpush.bf16.msra.mxu0 %v2591
        %2606 = vmatpush.bf16.msra.mxu0 %v2590
        %2607 = vmatpush.bf16.msra.mxu0 %v2589
        %2608 = vmatmul.bf16.gmra.mxu0 %v2598
        %v2609 = vpop.f32.mrf.mxu0
        %v2610 = vadd.f32 0.0, %v2609
        %v2611 = vpop.f32.mrf.mxu0
        %2612 = vdwg.mxu0
        %v2613 = vld [vmem:[#allocation14] sm:$0xf]
        %v2614 = vld [vmem:[#allocation14 + $0x4] sm:$0xf]
        %v2615 = vld [vmem:[#allocation14 + $0x8] sm:$0xf]
        %v2616 = vld [vmem:[#allocation14 + $0xc] sm:$0xf]
        %v2617 = vld [vmem:[#allocation14 + $0x10] sm:$0xf]
        %v2618 = vld [vmem:[#allocation14 + $0x14] sm:$0xf]
        %v2619 = vld [vmem:[#allocation14 + $0x18] sm:$0xf]
        %v2620 = vld [vmem:[#allocation14 + $0x1c] sm:$0xf]
        %v2621 = vpack.c.bf16 %v2547, %v2545
        %v2622 = vpack.c.bf16 %v2552, %v2550
        %v2623 = vpack.c.bf16 %v2557, %v2555
        %v2624 = vpack.c.bf16 %v2562, %v2560
        %v2625 = vpack.c.bf16 %v2610, %v2610
        %v2627 = vsel %vm1260, %v2621, 0
        %v2630 = vsel %vm1260, %v2622, 0
        %v2633 = vsel %vm1260, %v2623, 0
        %v2636 = vsel %vm1260, %v2624, 0
        %v2639 = vsel %vm1260, %v2625, 0
        %2641 = vmatpush.bf16.xpose.msra.mxu0 0
        %2642 = vmatpush.bf16.xpose.msra.mxu0 0
        %2643 = vmatpush.bf16.xpose.msra.mxu0 0
        %2644 = vmatpush.bf16.xpose.msra.mxu0 0
        %2645 = vmatpush.bf16.xpose.msra.mxu0 0
        %2646 = vmatpush.bf16.xpose.msra.mxu0 0
        %2647 = vmatpush.bf16.xpose.msra.mxu0 0
        %2648 = vmatpush.bf16.xpose.msra.mxu0 %v2639
        %2649 = vmatmul.bf16.gmra.mxu0 %v2627
        %v2650 = vpop.f32.mrf.mxu0
        %v2651 = vadd.f32 0.0, %v2650
        %v2652 = vpop.f32.mrf.mxu0
        %v2653 = vadd.f32 0.0, %v2652
        %2654 = vmatmul.bf16.gmra.mxu0 %v2630
        %v2655 = vpop.f32.mrf.mxu0
        %v2656 = vadd.f32 0.0, %v2655
        %v2657 = vpop.f32.mrf.mxu0
        %v2658 = vadd.f32 0.0, %v2657
        %2659 = vmatmul.bf16.gmra.mxu0 %v2633
        %v2660 = vpop.f32.mrf.mxu0
        %v2661 = vadd.f32 0.0, %v2660
        %v2662 = vpop.f32.mrf.mxu0
        %v2663 = vadd.f32 0.0, %v2662
        %2664 = vmatmul.bf16.gmra.mxu0 %v2636
        %v2665 = vpop.f32.mrf.mxu0
        %v2666 = vadd.f32 0.0, %v2665
        %v2667 = vpop.f32.mrf.mxu0
        %v2668 = vadd.f32 0.0, %v2667
        %2669 = vdwg.mxu0
        %vm2670 = vcmask 64512
        %v2671 = vsel %vm2670, %v2651, -inf
        %2672 = vmax.xlane.f32.xlu0 %v2671
        %v2673 = vpop.xlane.xlu0 %2672
        %v2674 = vsel %vm2670, %v2653, -inf
        %2675 = vmax.xlane.f32.xlu0 %v2674
        %v2676 = vpop.xlane.xlu0 %2675
        %v2677 = vsel %vm2670, %v2656, -inf
        %2678 = vmax.xlane.f32.xlu0 %v2677
        %v2679 = vpop.xlane.xlu0 %2678
        %v2680 = vsel %vm2670, %v2658, -inf
        %2681 = vmax.xlane.f32.xlu0 %v2680
        %v2682 = vpop.xlane.xlu0 %2681
        %v2683 = vsel %vm2670, %v2661, -inf
        %2684 = vmax.xlane.f32.xlu0 %v2683
        %v2685 = vpop.xlane.xlu0 %2684
        %v2686 = vsel %vm2670, %v2663, -inf
        %2687 = vmax.xlane.f32.xlu0 %v2686
        %v2688 = vpop.xlane.xlu0 %2687
        %v2689 = vsel %vm2670, %v2666, -inf
        %2690 = vmax.xlane.f32.xlu0 %v2689
        %v2691 = vpop.xlane.xlu0 %2690
        %v2692 = vsel %vm2670, %v2668, -inf
        %2693 = vmax.xlane.f32.xlu0 %v2692
        %v2694 = vpop.xlane.xlu0 %2693
        %v2695 = vsub.f32 %v2651, %v2673
        %v2696 = vsub.f32 %v2653, %v2676
        %v2697 = vsub.f32 %v2656, %v2679
        %v2698 = vsub.f32 %v2658, %v2682
        %v2699 = vsub.f32 %v2661, %v2685
        %v2700 = vsub.f32 %v2663, %v2688
        %v2701 = vsub.f32 %v2666, %v2691
        %v2702 = vsub.f32 %v2668, %v2694
        %v2703 = vmul.f32 %v2695, 1.442695
        %v2704 = vpow.pop %v2703
        %v2705 = vmul.f32 %v2696, 1.442695
        %v2706 = vpow.pop %v2705
        %v2707 = vmul.f32 %v2697, 1.442695
        %v2708 = vpow.pop %v2707
        %v2709 = vmul.f32 %v2698, 1.442695
        %v2710 = vpow.pop %v2709
        %v2711 = vmul.f32 %v2699, 1.442695
        %v2712 = vpow.pop %v2711
        %v2713 = vmul.f32 %v2700, 1.442695
        %v2714 = vpow.pop %v2713
        %v2715 = vmul.f32 %v2701, 1.442695
        %v2716 = vpow.pop %v2715
        %v2717 = vmul.f32 %v2702, 1.442695
        %v2718 = vpow.pop %v2717
        %v2719 = vsel %vm2670, %v2704, 0.0
        %2720 = vadd.xlane.f32.xlu0 %v2719
        %v2721 = vpop.xlane.xlu0 %2720
        %v2722 = vsel %vm2670, %v2706, 0.0
        %2723 = vadd.xlane.f32.xlu0 %v2722
        %v2724 = vpop.xlane.xlu0 %2723
        %v2725 = vsel %vm2670, %v2708, 0.0
        %2726 = vadd.xlane.f32.xlu0 %v2725
        %v2727 = vpop.xlane.xlu0 %2726
        %v2728 = vsel %vm2670, %v2710, 0.0
        %2729 = vadd.xlane.f32.xlu0 %v2728
        %v2730 = vpop.xlane.xlu0 %2729
        %v2731 = vsel %vm2670, %v2712, 0.0
        %2732 = vadd.xlane.f32.xlu0 %v2731
        %v2733 = vpop.xlane.xlu0 %2732
        %v2734 = vsel %vm2670, %v2714, 0.0
        %2735 = vadd.xlane.f32.xlu0 %v2734
        %v2736 = vpop.xlane.xlu0 %2735
        %v2737 = vsel %vm2670, %v2716, 0.0
        %2738 = vadd.xlane.f32.xlu0 %v2737
        %v2739 = vpop.xlane.xlu0 %2738
        %v2740 = vsel %vm2670, %v2718, 0.0
        %2741 = vadd.xlane.f32.xlu0 %v2740
        %v2742 = vpop.xlane.xlu0 %2741
        %v2743 = vrcp.pop %v2721
        %v2744 = vrcp.pop %v2724
        %v2745 = vrcp.pop %v2727
        %v2746 = vrcp.pop %v2730
        %v2747 = vrcp.pop %v2733
        %v2748 = vrcp.pop %v2736
        %v2749 = vrcp.pop %v2739
        %v2750 = vrcp.pop %v2742
        %v2751 = vmul.f32 %v2704, %v2743
        %v2752 = vmul.f32 %v2706, %v2744
        %v2753 = vmul.f32 %v2708, %v2745
        %v2754 = vmul.f32 %v2710, %v2746
        %v2755 = vmul.f32 %v2712, %v2747
        %v2756 = vmul.f32 %v2714, %v2748
        %v2757 = vmul.f32 %v2716, %v2749
        %v2758 = vmul.f32 %v2718, %v2750
        %v2759 = vpack.c.bf16 %v2752, %v2751
        %v2760 = vpack.c.bf16 %v2754, %v2753
        %v2761 = vpack.c.bf16 %v2756, %v2755
        %v2762 = vpack.c.bf16 %v2758, %v2757
        %2764 = vrot.lane.b32.xlu0 %v2625, 64
        %v2765 = vpop.permute.xlu0 %2764
        %v2767 = vsel %vm2670, %v2759, 0
        %v2770 = vsel %vm2670, %v2760, 0
        %v2773 = vsel %vm2670, %v2761, 0
        %v2776 = vsel %vm2670, %v2762, 0
        %vm2778 = vcmask 1043456
        %v2780 = vsel %vm2778, %v2765, 0
        %2782 = vmatpush.bf16.msra.mxu0 0
        %2783 = vmatpush.bf16.msra.mxu0 0
        %2784 = vmatpush.bf16.msra.mxu0 0
        %2785 = vmatpush.bf16.msra.mxu0 0
        %2786 = vmatpush.bf16.msra.mxu0 0
        %2787 = vmatpush.bf16.msra.mxu0 0
        %2788 = vmatpush.bf16.msra.mxu0 0
        %2789 = vmatpush.bf16.msra.mxu0 %v2780
        %2790 = vmatmul.bf16.gmra.mxu0 %v2767
        %v2791 = vpop.f32.mrf.mxu0
        %v2792 = vadd.f32 0.0, %v2791
        %v2793 = vpop.f32.mrf.mxu0
        %v2794 = vadd.f32 0.0, %v2793
        %2795 = vmatmul.bf16.gmra.mxu0 %v2770
        %v2796 = vpop.f32.mrf.mxu0
        %v2797 = vadd.f32 0.0, %v2796
        %v2798 = vpop.f32.mrf.mxu0
        %v2799 = vadd.f32 0.0, %v2798
        %2800 = vmatmul.bf16.gmra.mxu0 %v2773
        %v2801 = vpop.f32.mrf.mxu0
        %v2802 = vadd.f32 0.0, %v2801
        %v2803 = vpop.f32.mrf.mxu0
        %v2804 = vadd.f32 0.0, %v2803
        %2805 = vmatmul.bf16.gmra.mxu0 %v2776
        %v2806 = vpop.f32.mrf.mxu0
        %v2807 = vadd.f32 0.0, %v2806
        %v2808 = vpop.f32.mrf.mxu0
        %v2809 = vadd.f32 0.0, %v2808
        %2810 = vdwg.mxu0
        %2815 = vrot.lane.b32.xlu0 %v2621, 112
        %v2816 = vpop.permute.xlu0 %2815
        %2817 = vrot.lane.b32.xlu0 %v2622, 112
        %v2818 = vpop.permute.xlu0 %2817
        %2819 = vrot.lane.b32.xlu0 %v2623, 112
        %v2820 = vpop.permute.xlu0 %2819
        %2821 = vrot.lane.b32.xlu0 %v2624, 112
        %v2822 = vpop.permute.xlu0 %2821
        %2823 = vrot.lane.b32.xlu0 %v2625, 112
        %v2824 = vpop.permute.xlu0 %2823
        %v2826 = vsel %vm1260, %v2816, 0
        %v2829 = vsel %vm1260, %v2818, 0
        %v2832 = vsel %vm1260, %v2820, 0
        %v2835 = vsel %vm1260, %v2822, 0
        %v2838 = vsel %vm1260, %v2824, 0
        %2840 = vmatpush.bf16.xpose.msra.mxu0 0
        %2841 = vmatpush.bf16.xpose.msra.mxu0 0
        %2842 = vmatpush.bf16.xpose.msra.mxu0 0
        %2843 = vmatpush.bf16.xpose.msra.mxu0 0
        %2844 = vmatpush.bf16.xpose.msra.mxu0 0
        %2845 = vmatpush.bf16.xpose.msra.mxu0 0
        %2846 = vmatpush.bf16.xpose.msra.mxu0 0
        %2847 = vmatpush.bf16.xpose.msra.mxu0 %v2838
        %2848 = vmatmul.bf16.gmra.mxu0 %v2826
        %v2849 = vpop.f32.mrf.mxu0
        %v2850 = vadd.f32 0.0, %v2849
        %v2851 = vpop.f32.mrf.mxu0
        %v2852 = vadd.f32 0.0, %v2851
        %2853 = vmatmul.bf16.gmra.mxu0 %v2829
        %v2854 = vpop.f32.mrf.mxu0
        %v2855 = vadd.f32 0.0, %v2854
        %v2856 = vpop.f32.mrf.mxu0
        %v2857 = vadd.f32 0.0, %v2856
        %2858 = vmatmul.bf16.gmra.mxu0 %v2832
        %v2859 = vpop.f32.mrf.mxu0
        %v2860 = vadd.f32 0.0, %v2859
        %v2861 = vpop.f32.mrf.mxu0
        %v2862 = vadd.f32 0.0, %v2861
        %2863 = vmatmul.bf16.gmra.mxu0 %v2835
        %v2864 = vpop.f32.mrf.mxu0
        %v2865 = vadd.f32 0.0, %v2864
        %v2866 = vpop.f32.mrf.mxu0
        %v2867 = vadd.f32 0.0, %v2866
        %2868 = vdwg.mxu0
        %v2869 = vsel %vm2670, %v2850, -inf
        %2870 = vmax.xlane.f32.xlu0 %v2869
        %v2871 = vpop.xlane.xlu0 %2870
        %v2872 = vsel %vm2670, %v2852, -inf
        %2873 = vmax.xlane.f32.xlu0 %v2872
        %v2874 = vpop.xlane.xlu0 %2873
        %v2875 = vsel %vm2670, %v2855, -inf
        %2876 = vmax.xlane.f32.xlu0 %v2875
        %v2877 = vpop.xlane.xlu0 %2876
        %v2878 = vsel %vm2670, %v2857, -inf
        %2879 = vmax.xlane.f32.xlu0 %v2878
        %v2880 = vpop.xlane.xlu0 %2879
        %v2881 = vsel %vm2670, %v2860, -inf
        %2882 = vmax.xlane.f32.xlu0 %v2881
        %v2883 = vpop.xlane.xlu0 %2882
        %v2884 = vsel %vm2670, %v2862, -inf
        %2885 = vmax.xlane.f32.xlu0 %v2884
        %v2886 = vpop.xlane.xlu0 %2885
        %v2887 = vsel %vm2670, %v2865, -inf
        %2888 = vmax.xlane.f32.xlu0 %v2887
        %v2889 = vpop.xlane.xlu0 %2888
        %v2890 = vsel %vm2670, %v2867, -inf
        %2891 = vmax.xlane.f32.xlu0 %v2890
        %v2892 = vpop.xlane.xlu0 %2891
        %v2893 = vsub.f32 %v2850, %v2871
        %v2894 = vsub.f32 %v2852, %v2874
        %v2895 = vsub.f32 %v2855, %v2877
        %v2896 = vsub.f32 %v2857, %v2880
        %v2897 = vsub.f32 %v2860, %v2883
        %v2898 = vsub.f32 %v2862, %v2886
        %v2899 = vsub.f32 %v2865, %v2889
        %v2900 = vsub.f32 %v2867, %v2892
        %v2901 = vmul.f32 %v2893, 1.442695
        %v2902 = vpow.pop %v2901
        %v2903 = vmul.f32 %v2894, 1.442695
        %v2904 = vpow.pop %v2903
        %v2905 = vmul.f32 %v2895, 1.442695
        %v2906 = vpow.pop %v2905
        %v2907 = vmul.f32 %v2896, 1.442695
        %v2908 = vpow.pop %v2907
        %v2909 = vmul.f32 %v2897, 1.442695
        %v2910 = vpow.pop %v2909
        %v2911 = vmul.f32 %v2898, 1.442695
        %v2912 = vpow.pop %v2911
        %v2913 = vmul.f32 %v2899, 1.442695
        %v2914 = vpow.pop %v2913
        %v2915 = vmul.f32 %v2900, 1.442695
        %v2916 = vpow.pop %v2915
        %v2917 = vsel %vm2670, %v2902, 0.0
        %2918 = vadd.xlane.f32.xlu0 %v2917
        %v2919 = vpop.xlane.xlu0 %2918
        %v2920 = vsel %vm2670, %v2904, 0.0
        %2921 = vadd.xlane.f32.xlu0 %v2920
        %v2922 = vpop.xlane.xlu0 %2921
        %v2923 = vsel %vm2670, %v2906, 0.0
        %2924 = vadd.xlane.f32.xlu0 %v2923
        %v2925 = vpop.xlane.xlu0 %2924
        %v2926 = vsel %vm2670, %v2908, 0.0
        %2927 = vadd.xlane.f32.xlu0 %v2926
        %v2928 = vpop.xlane.xlu0 %2927
        %v2929 = vsel %vm2670, %v2910, 0.0
        %2930 = vadd.xlane.f32.xlu0 %v2929
        %v2931 = vpop.xlane.xlu0 %2930
        %v2932 = vsel %vm2670, %v2912, 0.0
        %2933 = vadd.xlane.f32.xlu0 %v2932
        %v2934 = vpop.xlane.xlu0 %2933
        %v2935 = vsel %vm2670, %v2914, 0.0
        %2936 = vadd.xlane.f32.xlu0 %v2935
        %v2937 = vpop.xlane.xlu0 %2936
        %v2938 = vsel %vm2670, %v2916, 0.0
        %2939 = vadd.xlane.f32.xlu0 %v2938
        %v2940 = vpop.xlane.xlu0 %2939
        %v2941 = vrcp.pop %v2919
        %v2942 = vrcp.pop %v2922
        %v2943 = vrcp.pop %v2925
        %v2944 = vrcp.pop %v2928
        %v2945 = vrcp.pop %v2931
        %v2946 = vrcp.pop %v2934
        %v2947 = vrcp.pop %v2937
        %v2948 = vrcp.pop %v2940
        %v2949 = vmul.f32 %v2902, %v2941
        %v2950 = vmul.f32 %v2904, %v2942
        %v2951 = vmul.f32 %v2906, %v2943
        %v2952 = vmul.f32 %v2908, %v2944
        %v2953 = vmul.f32 %v2910, %v2945
        %v2954 = vmul.f32 %v2912, %v2946
        %v2955 = vmul.f32 %v2914, %v2947
        %v2956 = vmul.f32 %v2916, %v2948
        %v2957 = vpack.c.bf16 %v2950, %v2949
        %v2958 = vpack.c.bf16 %v2952, %v2951
        %v2959 = vpack.c.bf16 %v2954, %v2953
        %v2960 = vpack.c.bf16 %v2956, %v2955
        %2961 = vrot.lane.b32.xlu0 %v2625, 48
        %v2962 = vpop.permute.xlu0 %2961
        %v2964 = vsel %vm2670, %v2957, 0
        %v2967 = vsel %vm2670, %v2958, 0
        %v2970 = vsel %vm2670, %v2959, 0
        %v2973 = vsel %vm2670, %v2960, 0
        %v2976 = vsel %vm2778, %v2962, 0
        %2978 = vmatpush.bf16.msra.mxu0 0
        %2979 = vmatpush.bf16.msra.mxu0 0
        %2980 = vmatpush.bf16.msra.mxu0 0
        %2981 = vmatpush.bf16.msra.mxu0 0
        %2982 = vmatpush.bf16.msra.mxu0 0
        %2983 = vmatpush.bf16.msra.mxu0 0
        %2984 = vmatpush.bf16.msra.mxu0 0
        %2985 = vmatpush.bf16.msra.mxu0 %v2976
        %2986 = vmatmul.bf16.gmra.mxu0 %v2964
        %v2987 = vpop.f32.mrf.mxu0
        %v2988 = vadd.f32 0.0, %v2987
        %v2989 = vpop.f32.mrf.mxu0
        %v2990 = vadd.f32 0.0, %v2989
        %2991 = vmatmul.bf16.gmra.mxu0 %v2967
        %v2992 = vpop.f32.mrf.mxu0
        %v2993 = vadd.f32 0.0, %v2992
        %v2994 = vpop.f32.mrf.mxu0
        %v2995 = vadd.f32 0.0, %v2994
        %2996 = vmatmul.bf16.gmra.mxu0 %v2970
        %v2997 = vpop.f32.mrf.mxu0
        %v2998 = vadd.f32 0.0, %v2997
        %v2999 = vpop.f32.mrf.mxu0
        %v3000 = vadd.f32 0.0, %v2999
        %3001 = vmatmul.bf16.gmra.mxu0 %v2973
        %v3002 = vpop.f32.mrf.mxu0
        %v3003 = vadd.f32 0.0, %v3002
        %v3004 = vpop.f32.mrf.mxu0
        %v3005 = vadd.f32 0.0, %v3004
        %3006 = vdwg.mxu0
        %3007 = vrot.lane.b32.xlu0 %v2621, 96
        %v3008 = vpop.permute.xlu0 %3007
        %3009 = vrot.lane.b32.xlu0 %v2622, 96
        %v3010 = vpop.permute.xlu0 %3009
        %3011 = vrot.lane.b32.xlu0 %v2623, 96
        %v3012 = vpop.permute.xlu0 %3011
        %3013 = vrot.lane.b32.xlu0 %v2624, 96
        %v3014 = vpop.permute.xlu0 %3013
        %3015 = vrot.lane.b32.xlu0 %v2625, 96
        %v3016 = vpop.permute.xlu0 %3015
        %v3018 = vsel %vm1260, %v3008, 0
        %v3021 = vsel %vm1260, %v3010, 0
        %v3024 = vsel %vm1260, %v3012, 0
        %v3027 = vsel %vm1260, %v3014, 0
        %v3030 = vsel %vm1260, %v3016, 0
        %3032 = vmatpush.bf16.xpose.msra.mxu0 0
        %3033 = vmatpush.bf16.xpose.msra.mxu0 0
        %3034 = vmatpush.bf16.xpose.msra.mxu0 0
        %3035 = vmatpush.bf16.xpose.msra.mxu0 0
        %3036 = vmatpush.bf16.xpose.msra.mxu0 0
        %3037 = vmatpush.bf16.xpose.msra.mxu0 0
        %3038 = vmatpush.bf16.xpose.msra.mxu0 0
        %3039 = vmatpush.bf16.xpose.msra.mxu0 %v3030
        %3040 = vmatmul.bf16.gmra.mxu0 %v3018
        %v3041 = vpop.f32.mrf.mxu0
        %v3042 = vadd.f32 0.0, %v3041
        %v3043 = vpop.f32.mrf.mxu0
        %v3044 = vadd.f32 0.0, %v3043
        %3045 = vmatmul.bf16.gmra.mxu0 %v3021
        %v3046 = vpop.f32.mrf.mxu0
        %v3047 = vadd.f32 0.0, %v3046
        %v3048 = vpop.f32.mrf.mxu0
        %v3049 = vadd.f32 0.0, %v3048
        %3050 = vmatmul.bf16.gmra.mxu0 %v3024
        %v3051 = vpop.f32.mrf.mxu0
        %v3052 = vadd.f32 0.0, %v3051
        %v3053 = vpop.f32.mrf.mxu0
        %v3054 = vadd.f32 0.0, %v3053
        %3055 = vmatmul.bf16.gmra.mxu0 %v3027
        %v3056 = vpop.f32.mrf.mxu0
        %v3057 = vadd.f32 0.0, %v3056
        %v3058 = vpop.f32.mrf.mxu0
        %v3059 = vadd.f32 0.0, %v3058
        %3060 = vdwg.mxu0
        %v3061 = vsel %vm2670, %v3042, -inf
        %3062 = vmax.xlane.f32.xlu0 %v3061
        %v3063 = vpop.xlane.xlu0 %3062
        %v3064 = vsel %vm2670, %v3044, -inf
        %3065 = vmax.xlane.f32.xlu0 %v3064
        %v3066 = vpop.xlane.xlu0 %3065
        %v3067 = vsel %vm2670, %v3047, -inf
        %3068 = vmax.xlane.f32.xlu0 %v3067
        %v3069 = vpop.xlane.xlu0 %3068
        %v3070 = vsel %vm2670, %v3049, -inf
        %3071 = vmax.xlane.f32.xlu0 %v3070
        %v3072 = vpop.xlane.xlu0 %3071
        %v3073 = vsel %vm2670, %v3052, -inf
        %3074 = vmax.xlane.f32.xlu0 %v3073
        %v3075 = vpop.xlane.xlu0 %3074
        %v3076 = vsel %vm2670, %v3054, -inf
        %3077 = vmax.xlane.f32.xlu0 %v3076
        %v3078 = vpop.xlane.xlu0 %3077
        %v3079 = vsel %vm2670, %v3057, -inf
        %3080 = vmax.xlane.f32.xlu0 %v3079
        %v3081 = vpop.xlane.xlu0 %3080
        %v3082 = vsel %vm2670, %v3059, -inf
        %3083 = vmax.xlane.f32.xlu0 %v3082
        %v3084 = vpop.xlane.xlu0 %3083
        %v3085 = vsub.f32 %v3042, %v3063
        %v3086 = vsub.f32 %v3044, %v3066
        %v3087 = vsub.f32 %v3047, %v3069
        %v3088 = vsub.f32 %v3049, %v3072
        %v3089 = vsub.f32 %v3052, %v3075
        %v3090 = vsub.f32 %v3054, %v3078
        %v3091 = vsub.f32 %v3057, %v3081
        %v3092 = vsub.f32 %v3059, %v3084
        %v3093 = vmul.f32 %v3085, 1.442695
        %v3094 = vpow.pop %v3093
        %v3095 = vmul.f32 %v3086, 1.442695
        %v3096 = vpow.pop %v3095
        %v3097 = vmul.f32 %v3087, 1.442695
        %v3098 = vpow.pop %v3097
        %v3099 = vmul.f32 %v3088, 1.442695
        %v3100 = vpow.pop %v3099
        %v3101 = vmul.f32 %v3089, 1.442695
        %v3102 = vpow.pop %v3101
        %v3103 = vmul.f32 %v3090, 1.442695
        %v3104 = vpow.pop %v3103
        %v3105 = vmul.f32 %v3091, 1.442695
        %v3106 = vpow.pop %v3105
        %v3107 = vmul.f32 %v3092, 1.442695
        %v3108 = vpow.pop %v3107
        %v3109 = vsel %vm2670, %v3094, 0.0
        %3110 = vadd.xlane.f32.xlu0 %v3109
        %v3111 = vpop.xlane.xlu0 %3110
        %v3112 = vsel %vm2670, %v3096, 0.0
        %3113 = vadd.xlane.f32.xlu0 %v3112
        %v3114 = vpop.xlane.xlu0 %3113
        %v3115 = vsel %vm2670, %v3098, 0.0
        %3116 = vadd.xlane.f32.xlu0 %v3115
        %v3117 = vpop.xlane.xlu0 %3116
        %v3118 = vsel %vm2670, %v3100, 0.0
        %3119 = vadd.xlane.f32.xlu0 %v3118
        %v3120 = vpop.xlane.xlu0 %3119
        %v3121 = vsel %vm2670, %v3102, 0.0
        %3122 = vadd.xlane.f32.xlu0 %v3121
        %v3123 = vpop.xlane.xlu0 %3122
        %v3124 = vsel %vm2670, %v3104, 0.0
        %3125 = vadd.xlane.f32.xlu0 %v3124
        %v3126 = vpop.xlane.xlu0 %3125
        %v3127 = vsel %vm2670, %v3106, 0.0
        %3128 = vadd.xlane.f32.xlu0 %v3127
        %v3129 = vpop.xlane.xlu0 %3128
        %v3130 = vsel %vm2670, %v3108, 0.0
        %3131 = vadd.xlane.f32.xlu0 %v3130
        %v3132 = vpop.xlane.xlu0 %3131
        %v3133 = vrcp.pop %v3111
        %v3134 = vrcp.pop %v3114
        %v3135 = vrcp.pop %v3117
        %v3136 = vrcp.pop %v3120
        %v3137 = vrcp.pop %v3123
        %v3138 = vrcp.pop %v3126
        %v3139 = vrcp.pop %v3129
        %v3140 = vrcp.pop %v3132
        %v3141 = vmul.f32 %v3094, %v3133
        %v3142 = vmul.f32 %v3096, %v3134
        %v3143 = vmul.f32 %v3098, %v3135
        %v3144 = vmul.f32 %v3100, %v3136
        %v3145 = vmul.f32 %v3102, %v3137
        %v3146 = vmul.f32 %v3104, %v3138
        %v3147 = vmul.f32 %v3106, %v3139
        %v3148 = vmul.f32 %v3108, %v3140
        %v3149 = vpack.c.bf16 %v3142, %v3141
        %v3150 = vpack.c.bf16 %v3144, %v3143
        %v3151 = vpack.c.bf16 %v3146, %v3145
        %v3152 = vpack.c.bf16 %v3148, %v3147
        %3153 = vrot.lane.b32.xlu0 %v2625, 32
        %v3154 = vpop.permute.xlu0 %3153
        %v3156 = vsel %vm2670, %v3149, 0
        %v3159 = vsel %vm2670, %v3150, 0
        %v3162 = vsel %vm2670, %v3151, 0
        %v3165 = vsel %vm2670, %v3152, 0
        %v3168 = vsel %vm2778, %v3154, 0
        %3170 = vmatpush.bf16.msra.mxu0 0
        %3171 = vmatpush.bf16.msra.mxu0 0
        %3172 = vmatpush.bf16.msra.mxu0 0
        %3173 = vmatpush.bf16.msra.mxu0 0
        %3174 = vmatpush.bf16.msra.mxu0 0
        %3175 = vmatpush.bf16.msra.mxu0 0
        %3176 = vmatpush.bf16.msra.mxu0 0
        %3177 = vmatpush.bf16.msra.mxu0 %v3168
        %3178 = vmatmul.bf16.gmra.mxu0 %v3156
        %v3179 = vpop.f32.mrf.mxu0
        %v3180 = vadd.f32 0.0, %v3179
        %v3181 = vpop.f32.mrf.mxu0
        %v3182 = vadd.f32 0.0, %v3181
        %3183 = vmatmul.bf16.gmra.mxu0 %v3159
        %v3184 = vpop.f32.mrf.mxu0
        %v3185 = vadd.f32 0.0, %v3184
        %v3186 = vpop.f32.mrf.mxu0
        %v3187 = vadd.f32 0.0, %v3186
        %3188 = vmatmul.bf16.gmra.mxu0 %v3162
        %v3189 = vpop.f32.mrf.mxu0
        %v3190 = vadd.f32 0.0, %v3189
        %v3191 = vpop.f32.mrf.mxu0
        %v3192 = vadd.f32 0.0, %v3191
        %3193 = vmatmul.bf16.gmra.mxu0 %v3165
        %v3194 = vpop.f32.mrf.mxu0
        %v3195 = vadd.f32 0.0, %v3194
        %v3196 = vpop.f32.mrf.mxu0
        %v3197 = vadd.f32 0.0, %v3196
        %3198 = vdwg.mxu0
        %3199 = vrot.lane.b32.xlu0 %v2621, 80
        %v3200 = vpop.permute.xlu0 %3199
        %3201 = vrot.lane.b32.xlu0 %v2622, 80
        %v3202 = vpop.permute.xlu0 %3201
        %3203 = vrot.lane.b32.xlu0 %v2623, 80
        %v3204 = vpop.permute.xlu0 %3203
        %3205 = vrot.lane.b32.xlu0 %v2624, 80
        %v3206 = vpop.permute.xlu0 %3205
        %3207 = vrot.lane.b32.xlu0 %v2625, 80
        %v3208 = vpop.permute.xlu0 %3207
        %v3210 = vsel %vm1260, %v3200, 0
        %v3213 = vsel %vm1260, %v3202, 0
        %v3216 = vsel %vm1260, %v3204, 0
        %v3219 = vsel %vm1260, %v3206, 0
        %v3222 = vsel %vm1260, %v3208, 0
        %3224 = vmatpush.bf16.xpose.msra.mxu0 0
        %3225 = vmatpush.bf16.xpose.msra.mxu0 0
        %3226 = vmatpush.bf16.xpose.msra.mxu0 0
        %3227 = vmatpush.bf16.xpose.msra.mxu0 0
        %3228 = vmatpush.bf16.xpose.msra.mxu0 0
        %3229 = vmatpush.bf16.xpose.msra.mxu0 0
        %3230 = vmatpush.bf16.xpose.msra.mxu0 0
        %3231 = vmatpush.bf16.xpose.msra.mxu0 %v3222
        %3232 = vmatmul.bf16.gmra.mxu0 %v3210
        %v3233 = vpop.f32.mrf.mxu0
        %v3234 = vadd.f32 0.0, %v3233
        %v3235 = vpop.f32.mrf.mxu0
        %v3236 = vadd.f32 0.0, %v3235
        %3237 = vmatmul.bf16.gmra.mxu0 %v3213
        %v3238 = vpop.f32.mrf.mxu0
        %v3239 = vadd.f32 0.0, %v3238
        %v3240 = vpop.f32.mrf.mxu0
        %v3241 = vadd.f32 0.0, %v3240
        %3242 = vmatmul.bf16.gmra.mxu0 %v3216
        %v3243 = vpop.f32.mrf.mxu0
        %v3244 = vadd.f32 0.0, %v3243
        %v3245 = vpop.f32.mrf.mxu0
        %v3246 = vadd.f32 0.0, %v3245
        %3247 = vmatmul.bf16.gmra.mxu0 %v3219
        %v3248 = vpop.f32.mrf.mxu0
        %v3249 = vadd.f32 0.0, %v3248
        %v3250 = vpop.f32.mrf.mxu0
        %v3251 = vadd.f32 0.0, %v3250
        %3252 = vdwg.mxu0
        %v3253 = vsel %vm2670, %v3234, -inf
        %3254 = vmax.xlane.f32.xlu0 %v3253
        %v3255 = vpop.xlane.xlu0 %3254
        %v3256 = vsel %vm2670, %v3236, -inf
        %3257 = vmax.xlane.f32.xlu0 %v3256
        %v3258 = vpop.xlane.xlu0 %3257
        %v3259 = vsel %vm2670, %v3239, -inf
        %3260 = vmax.xlane.f32.xlu0 %v3259
        %v3261 = vpop.xlane.xlu0 %3260
        %v3262 = vsel %vm2670, %v3241, -inf
        %3263 = vmax.xlane.f32.xlu0 %v3262
        %v3264 = vpop.xlane.xlu0 %3263
        %v3265 = vsel %vm2670, %v3244, -inf
        %3266 = vmax.xlane.f32.xlu0 %v3265
        %v3267 = vpop.xlane.xlu0 %3266
        %v3268 = vsel %vm2670, %v3246, -inf
        %3269 = vmax.xlane.f32.xlu0 %v3268
        %v3270 = vpop.xlane.xlu0 %3269
        %v3271 = vsel %vm2670, %v3249, -inf
        %3272 = vmax.xlane.f32.xlu0 %v3271
        %v3273 = vpop.xlane.xlu0 %3272
        %v3274 = vsel %vm2670, %v3251, -inf
        %3275 = vmax.xlane.f32.xlu0 %v3274
        %v3276 = vpop.xlane.xlu0 %3275
        %v3277 = vsub.f32 %v3234, %v3255
        %v3278 = vsub.f32 %v3236, %v3258
        %v3279 = vsub.f32 %v3239, %v3261
        %v3280 = vsub.f32 %v3241, %v3264
        %v3281 = vsub.f32 %v3244, %v3267
        %v3282 = vsub.f32 %v3246, %v3270
        %v3283 = vsub.f32 %v3249, %v3273
        %v3284 = vsub.f32 %v3251, %v3276
        %v3285 = vmul.f32 %v3277, 1.442695
        %v3286 = vpow.pop %v3285
        %v3287 = vmul.f32 %v3278, 1.442695
        %v3288 = vpow.pop %v3287
        %v3289 = vmul.f32 %v3279, 1.442695
        %v3290 = vpow.pop %v3289
        %v3291 = vmul.f32 %v3280, 1.442695
        %v3292 = vpow.pop %v3291
        %v3293 = vmul.f32 %v3281, 1.442695
        %v3294 = vpow.pop %v3293
        %v3295 = vmul.f32 %v3282, 1.442695
        %v3296 = vpow.pop %v3295
        %v3297 = vmul.f32 %v3283, 1.442695
        %v3298 = vpow.pop %v3297
        %v3299 = vmul.f32 %v3284, 1.442695
        %v3300 = vpow.pop %v3299
        %v3301 = vsel %vm2670, %v3286, 0.0
        %3302 = vadd.xlane.f32.xlu0 %v3301
        %v3303 = vpop.xlane.xlu0 %3302
        %v3304 = vsel %vm2670, %v3288, 0.0
        %3305 = vadd.xlane.f32.xlu0 %v3304
        %v3306 = vpop.xlane.xlu0 %3305
        %v3307 = vsel %vm2670, %v3290, 0.0
        %3308 = vadd.xlane.f32.xlu0 %v3307
        %v3309 = vpop.xlane.xlu0 %3308
        %v3310 = vsel %vm2670, %v3292, 0.0
        %3311 = vadd.xlane.f32.xlu0 %v3310
        %v3312 = vpop.xlane.xlu0 %3311
        %v3313 = vsel %vm2670, %v3294, 0.0
        %3314 = vadd.xlane.f32.xlu0 %v3313
        %v3315 = vpop.xlane.xlu0 %3314
        %v3316 = vsel %vm2670, %v3296, 0.0
        %3317 = vadd.xlane.f32.xlu0 %v3316
        %v3318 = vpop.xlane.xlu0 %3317
        %v3319 = vsel %vm2670, %v3298, 0.0
        %3320 = vadd.xlane.f32.xlu0 %v3319
        %v3321 = vpop.xlane.xlu0 %3320
        %v3322 = vsel %vm2670, %v3300, 0.0
        %3323 = vadd.xlane.f32.xlu0 %v3322
        %v3324 = vpop.xlane.xlu0 %3323
        %v3325 = vrcp.pop %v3303
        %v3326 = vrcp.pop %v3306
        %v3327 = vrcp.pop %v3309
        %v3328 = vrcp.pop %v3312
        %v3329 = vrcp.pop %v3315
        %v3330 = vrcp.pop %v3318
        %v3331 = vrcp.pop %v3321
        %v3332 = vrcp.pop %v3324
        %v3333 = vmul.f32 %v3286, %v3325
        %v3334 = vmul.f32 %v3288, %v3326
        %v3335 = vmul.f32 %v3290, %v3327
        %v3336 = vmul.f32 %v3292, %v3328
        %v3337 = vmul.f32 %v3294, %v3329
        %v3338 = vmul.f32 %v3296, %v3330
        %v3339 = vmul.f32 %v3298, %v3331
        %v3340 = vmul.f32 %v3300, %v3332
        %v3341 = vpack.c.bf16 %v3334, %v3333
        %v3342 = vpack.c.bf16 %v3336, %v3335
        %v3343 = vpack.c.bf16 %v3338, %v3337
        %v3344 = vpack.c.bf16 %v3340, %v3339
        %3345 = vrot.lane.b32.xlu0 %v2625, 16
        %v3346 = vpop.permute.xlu0 %3345
        %v3348 = vsel %vm2670, %v3341, 0
        %v3351 = vsel %vm2670, %v3342, 0
        %v3354 = vsel %vm2670, %v3343, 0
        %v3357 = vsel %vm2670, %v3344, 0
        %v3360 = vsel %vm2778, %v3346, 0
        %3362 = vmatpush.bf16.msra.mxu0 0
        %3363 = vmatpush.bf16.msra.mxu0 0
        %3364 = vmatpush.bf16.msra.mxu0 0
        %3365 = vmatpush.bf16.msra.mxu0 0
        %3366 = vmatpush.bf16.msra.mxu0 0
        %3367 = vmatpush.bf16.msra.mxu0 0
        %3368 = vmatpush.bf16.msra.mxu0 0
        %3369 = vmatpush.bf16.msra.mxu0 %v3360
        %3370 = vmatmul.bf16.gmra.mxu0 %v3348
        %v3371 = vpop.f32.mrf.mxu0
        %v3372 = vadd.f32 0.0, %v3371
        %v3373 = vpop.f32.mrf.mxu0
        %v3374 = vadd.f32 0.0, %v3373
        %3375 = vmatmul.bf16.gmra.mxu0 %v3351
        %v3376 = vpop.f32.mrf.mxu0
        %v3377 = vadd.f32 0.0, %v3376
        %v3378 = vpop.f32.mrf.mxu0
        %v3379 = vadd.f32 0.0, %v3378
        %3380 = vmatmul.bf16.gmra.mxu0 %v3354
        %v3381 = vpop.f32.mrf.mxu0
        %v3382 = vadd.f32 0.0, %v3381
        %v3383 = vpop.f32.mrf.mxu0
        %v3384 = vadd.f32 0.0, %v3383
        %3385 = vmatmul.bf16.gmra.mxu0 %v3357
        %v3386 = vpop.f32.mrf.mxu0
        %v3387 = vadd.f32 0.0, %v3386
        %v3388 = vpop.f32.mrf.mxu0
        %v3389 = vadd.f32 0.0, %v3388
        %3390 = vdwg.mxu0
        %3399 = vrot.lane.b32.xlu0 %v2988, 16
        %v3400 = vpop.permute.xlu0 %3399
        %3401 = vrot.lane.b32.xlu0 %v2990, 16
        %v3402 = vpop.permute.xlu0 %3401
        %3403 = vrot.lane.b32.xlu0 %v2993, 16
        %v3404 = vpop.permute.xlu0 %3403
        %3405 = vrot.lane.b32.xlu0 %v2995, 16
        %v3406 = vpop.permute.xlu0 %3405
        %3407 = vrot.lane.b32.xlu0 %v2998, 16
        %v3408 = vpop.permute.xlu0 %3407
        %3409 = vrot.lane.b32.xlu0 %v3000, 16
        %v3410 = vpop.permute.xlu0 %3409
        %3411 = vrot.lane.b32.xlu0 %v3003, 16
        %v3412 = vpop.permute.xlu0 %3411
        %3413 = vrot.lane.b32.xlu0 %v3005, 16
        %v3414 = vpop.permute.xlu0 %3413
        %3431 = vrot.lane.b32.xlu0 %v3180, 32
        %v3432 = vpop.permute.xlu0 %3431
        %3433 = vrot.lane.b32.xlu0 %v3182, 32
        %v3434 = vpop.permute.xlu0 %3433
        %3435 = vrot.lane.b32.xlu0 %v3185, 32
        %v3436 = vpop.permute.xlu0 %3435
        %3437 = vrot.lane.b32.xlu0 %v3187, 32
        %v3438 = vpop.permute.xlu0 %3437
        %3439 = vrot.lane.b32.xlu0 %v3190, 32
        %v3440 = vpop.permute.xlu0 %3439
        %3441 = vrot.lane.b32.xlu0 %v3192, 32
        %v3442 = vpop.permute.xlu0 %3441
        %3443 = vrot.lane.b32.xlu0 %v3195, 32
        %v3444 = vpop.permute.xlu0 %3443
        %3445 = vrot.lane.b32.xlu0 %v3197, 32
        %v3446 = vpop.permute.xlu0 %3445
        %3463 = vrot.lane.b32.xlu0 %v3372, 48
        %v3464 = vpop.permute.xlu0 %3463
        %3465 = vrot.lane.b32.xlu0 %v3374, 48
        %v3466 = vpop.permute.xlu0 %3465
        %3467 = vrot.lane.b32.xlu0 %v3377, 48
        %v3468 = vpop.permute.xlu0 %3467
        %3469 = vrot.lane.b32.xlu0 %v3379, 48
        %v3470 = vpop.permute.xlu0 %3469
        %3471 = vrot.lane.b32.xlu0 %v3382, 48
        %v3472 = vpop.permute.xlu0 %3471
        %3473 = vrot.lane.b32.xlu0 %v3384, 48
        %v3474 = vpop.permute.xlu0 %3473
        %3475 = vrot.lane.b32.xlu0 %v3387, 48
        %v3476 = vpop.permute.xlu0 %3475
        %3477 = vrot.lane.b32.xlu0 %v3389, 48
        %v3478 = vpop.permute.xlu0 %3477
        %v3487 = vsel %vm1260, %v2792, %v3400
        %v3488 = vsel %vm1260, %v2794, %v3402
        %v3489 = vsel %vm1260, %v2797, %v3404
        %v3490 = vsel %vm1260, %v2799, %v3406
        %v3491 = vsel %vm1260, %v2802, %v3408
        %v3492 = vsel %vm1260, %v2804, %v3410
        %v3493 = vsel %vm1260, %v2807, %v3412
        %v3494 = vsel %vm1260, %v2809, %v3414
        %v3495 = vsel %vm2197, %v3487, %v3432
        %v3496 = vsel %vm2197, %v3488, %v3434
        %v3497 = vsel %vm2197, %v3489, %v3436
        %v3498 = vsel %vm2197, %v3490, %v3438
        %v3499 = vsel %vm2197, %v3491, %v3440
        %v3500 = vsel %vm2197, %v3492, %v3442
        %v3501 = vsel %vm2197, %v3493, %v3444
        %v3502 = vsel %vm2197, %v3494, %v3446
        %v3503 = vsel %vm2206, %v3495, %v3464
        %v3504 = vsel %vm2206, %v3496, %v3466
        %v3505 = vsel %vm2206, %v3497, %v3468
        %v3506 = vsel %vm2206, %v3498, %v3470
        %v3507 = vsel %vm2206, %v3499, %v3472
        %v3508 = vsel %vm2206, %v3500, %v3474
        %v3509 = vsel %vm2206, %v3501, %v3476
        %v3510 = vsel %vm2206, %v3502, %v3478
        %v3511 = vpack.c.bf16 %v3504, %v3503
        %v3512 = vpack.c.bf16 %v3506, %v3505
        %v3513 = vpack.c.bf16 %v3508, %v3507
        %v3514 = vpack.c.bf16 %v3510, %v3509
        %v3515 = vperm.slane %v665, 0
        %v3524 = vunpack.c.l.b16 %v2613
        %v3525 = vunpack.c.l.b16 %v2614
        %v3526 = vunpack.c.l.b16 %v2615
        %v3527 = vunpack.c.l.b16 %v2616
        %v3528 = vunpack.c.l.b16 %v2617
        %v3529 = vunpack.c.l.b16 %v2618
        %v3530 = vunpack.c.l.b16 %v2619
        %v3531 = vunpack.c.l.b16 %v2620
        %v3532 = vpack.c.b16 %v3525, %v3524
        %v3533 = vpack.c.b16 %v3527, %v3526
        %v3534 = vpack.c.b16 %v3529, %v3528
        %v3535 = vpack.c.b16 %v3531, %v3530
        %v3541 = vsel %vm674, %v3511, 0
        %v3544 = vsel %vm674, %v3512, 0
        %v3547 = vsel %vm674, %v3513, 0
        %v3550 = vsel %vm674, %v3514, 0
        %3552 = vmatpush.bf16.msra.mxu0 0
        %3553 = vmatpush.bf16.msra.mxu0 0
        %3554 = vmatpush.bf16.msra.mxu0 0
        %3555 = vmatpush.bf16.msra.mxu0 0
        %3556 = vmatpush.bf16.msra.mxu0 %v3535
        %3557 = vmatpush.bf16.msra.mxu0 %v3534
        %3558 = vmatpush.bf16.msra.mxu0 %v3533
        %3559 = vmatpush.bf16.msra.mxu0 %v3532
        %3560 = vmatmul.bf16.gmra.mxu0 %v3541
        %v3561 = vpop.f32.mrf.mxu0
        %v3562 = vadd.f32 %v3515, %v3561
        %v3563 = vpop.f32.mrf.mxu0
        %v3564 = vadd.f32 %v3515, %v3563
        %3565 = vmatmul.bf16.gmra.mxu0 %v3544
        %v3566 = vpop.f32.mrf.mxu0
        %v3567 = vadd.f32 %v3515, %v3566
        %v3568 = vpop.f32.mrf.mxu0
        %v3569 = vadd.f32 %v3515, %v3568
        %3570 = vmatmul.bf16.gmra.mxu0 %v3547
        %v3571 = vpop.f32.mrf.mxu0
        %v3572 = vadd.f32 %v3515, %v3571
        %v3573 = vpop.f32.mrf.mxu0
        %v3574 = vadd.f32 %v3515, %v3573
        %3575 = vmatmul.bf16.gmra.mxu0 %v3550
        %v3576 = vpop.f32.mrf.mxu0
        %v3577 = vadd.f32 %v3515, %v3576
        %v3578 = vpop.f32.mrf.mxu0
        %v3579 = vadd.f32 %v3515, %v3578
        %3580 = vdwg.mxu0
        %v3581 = vadd.f32 %v3562, %v2285
        %v3582 = vadd.f32 %v3564, %v2286
        %v3583 = vadd.f32 %v3567, %v2287
        %v3584 = vadd.f32 %v3569, %v2288
        %v3585 = vadd.f32 %v3572, %v2289
        %v3586 = vadd.f32 %v3574, %v2290
        %v3587 = vadd.f32 %v3577, %v2291
        %v3588 = vadd.f32 %v3579, %v2292
        %v3589 = vsel %vm674, %v3581, 0.0
        %3590 = vadd.xlane.f32.xlu0 %v3589
        %v3591 = vpop.xlane.xlu0 %3590
        %v3592 = vsel %vm674, %v3582, 0.0
        %3593 = vadd.xlane.f32.xlu0 %v3592
        %v3594 = vpop.xlane.xlu0 %3593
        %v3595 = vsel %vm674, %v3583, 0.0
        %3596 = vadd.xlane.f32.xlu0 %v3595
        %v3597 = vpop.xlane.xlu0 %3596
        %v3598 = vsel %vm674, %v3584, 0.0
        %3599 = vadd.xlane.f32.xlu0 %v3598
        %v3600 = vpop.xlane.xlu0 %3599
        %v3601 = vsel %vm674, %v3585, 0.0
        %3602 = vadd.xlane.f32.xlu0 %v3601
        %v3603 = vpop.xlane.xlu0 %3602
        %v3604 = vsel %vm674, %v3586, 0.0
        %3605 = vadd.xlane.f32.xlu0 %v3604
        %v3606 = vpop.xlane.xlu0 %3605
        %v3607 = vsel %vm674, %v3587, 0.0
        %3608 = vadd.xlane.f32.xlu0 %v3607
        %v3609 = vpop.xlane.xlu0 %3608
        %v3610 = vsel %vm674, %v3588, 0.0
        %3611 = vadd.xlane.f32.xlu0 %v3610
        %v3612 = vpop.xlane.xlu0 %3611
        %v3613 = vmul.f32 %v3591, %v702
        %v3614 = vmul.f32 %v3594, %v702
        %v3615 = vmul.f32 %v3597, %v702
        %v3616 = vmul.f32 %v3600, %v702
        %v3617 = vmul.f32 %v3603, %v702
        %v3618 = vmul.f32 %v3606, %v702
        %v3619 = vmul.f32 %v3609, %v702
        %v3620 = vmul.f32 %v3612, %v702
        %v3621 = vsub.f32 %v3581, %v3613
        %v3622 = vsub.f32 %v3582, %v3614
        %v3623 = vsub.f32 %v3583, %v3615
        %v3624 = vsub.f32 %v3584, %v3616
        %v3625 = vsub.f32 %v3585, %v3617
        %v3626 = vsub.f32 %v3586, %v3618
        %v3627 = vsub.f32 %v3587, %v3619
        %v3628 = vsub.f32 %v3588, %v3620
        %v3629 = vmul.f32 %v3621, %v3621
        %v3630 = vmul.f32 %v3622, %v3622
        %v3631 = vmul.f32 %v3623, %v3623
        %v3632 = vmul.f32 %v3624, %v3624
        %v3633 = vmul.f32 %v3625, %v3625
        %v3634 = vmul.f32 %v3626, %v3626
        %v3635 = vmul.f32 %v3627, %v3627
        %v3636 = vmul.f32 %v3628, %v3628
        %v3637 = vsel %vm674, %v3629, 0.0
        %3638 = vadd.xlane.f32.xlu0 %v3637
        %v3639 = vpop.xlane.xlu0 %3638
        %v3640 = vsel %vm674, %v3630, 0.0
        %3641 = vadd.xlane.f32.xlu0 %v3640
        %v3642 = vpop.xlane.xlu0 %3641
        %v3643 = vsel %vm674, %v3631, 0.0
        %3644 = vadd.xlane.f32.xlu0 %v3643
        %v3645 = vpop.xlane.xlu0 %3644
        %v3646 = vsel %vm674, %v3632, 0.0
        %3647 = vadd.xlane.f32.xlu0 %v3646
        %v3648 = vpop.xlane.xlu0 %3647
        %v3649 = vsel %vm674, %v3633, 0.0
        %3650 = vadd.xlane.f32.xlu0 %v3649
        %v3651 = vpop.xlane.xlu0 %3650
        %v3652 = vsel %vm674, %v3634, 0.0
        %3653 = vadd.xlane.f32.xlu0 %v3652
        %v3654 = vpop.xlane.xlu0 %3653
        %v3655 = vsel %vm674, %v3635, 0.0
        %3656 = vadd.xlane.f32.xlu0 %v3655
        %v3657 = vpop.xlane.xlu0 %3656
        %v3658 = vsel %vm674, %v3636, 0.0
        %3659 = vadd.xlane.f32.xlu0 %v3658
        %v3660 = vpop.xlane.xlu0 %3659
        %v3661 = vmul.f32 %v3639, %v702
        %v3662 = vmul.f32 %v3642, %v702
        %v3663 = vmul.f32 %v3645, %v702
        %v3664 = vmul.f32 %v3648, %v702
        %v3665 = vmul.f32 %v3651, %v702
        %v3666 = vmul.f32 %v3654, %v702
        %v3667 = vmul.f32 %v3657, %v702
        %v3668 = vmul.f32 %v3660, %v702
        %v3669 = vadd.f32 %v3661, 1e-05
        %v3670 = vadd.f32 %v3662, 1e-05
        %v3671 = vadd.f32 %v3663, 1e-05
        %v3672 = vadd.f32 %v3664, 1e-05
        %v3673 = vadd.f32 %v3665, 1e-05
        %v3674 = vadd.f32 %v3666, 1e-05
        %v3675 = vadd.f32 %v3667, 1e-05
        %v3676 = vadd.f32 %v3668, 1e-05
        %v3677 = vrsqrt.pop %v3669
        %v3678 = vmul.f32 %v3677, %v3669
        %v3679 = vmul.f32 %v3678, %v3677
        %v3680 = vmul.f32 0.5, %v3679
        %v3681 = vsub.f32 1.5, %v3680
        %v3682 = vmul.f32 %v3677, %v3681
        %vm3683 = vweird.f32 %v3669
        %vm3684 = vweird.f32 %v3677
        %vm3685 = vmor %vm3683, %vm3684
        %v3686 = vsel %vm3685, %v3677, %v3682
        %v3687 = vrsqrt.pop %v3670
        %v3688 = vmul.f32 %v3687, %v3670
        %v3689 = vmul.f32 %v3688, %v3687
        %v3690 = vmul.f32 0.5, %v3689
        %v3691 = vsub.f32 1.5, %v3690
        %v3692 = vmul.f32 %v3687, %v3691
        %vm3693 = vweird.f32 %v3670
        %vm3694 = vweird.f32 %v3687
        %vm3695 = vmor %vm3693, %vm3694
        %v3696 = vsel %vm3695, %v3687, %v3692
        %v3697 = vrsqrt.pop %v3671
        %v3698 = vmul.f32 %v3697, %v3671
        %v3699 = vmul.f32 %v3698, %v3697
        %v3700 = vmul.f32 0.5, %v3699
        %v3701 = vsub.f32 1.5, %v3700
        %v3702 = vmul.f32 %v3697, %v3701
        %vm3703 = vweird.f32 %v3671
        %vm3704 = vweird.f32 %v3697
        %vm3705 = vmor %vm3703, %vm3704
        %v3706 = vsel %vm3705, %v3697, %v3702
        %v3707 = vrsqrt.pop %v3672
        %v3708 = vmul.f32 %v3707, %v3672
        %v3709 = vmul.f32 %v3708, %v3707
        %v3710 = vmul.f32 0.5, %v3709
        %v3711 = vsub.f32 1.5, %v3710
        %v3712 = vmul.f32 %v3707, %v3711
        %vm3713 = vweird.f32 %v3672
        %vm3714 = vweird.f32 %v3707
        %vm3715 = vmor %vm3713, %vm3714
        %v3716 = vsel %vm3715, %v3707, %v3712
        %v3717 = vrsqrt.pop %v3673
        %v3718 = vmul.f32 %v3717, %v3673
        %v3719 = vmul.f32 %v3718, %v3717
        %v3720 = vmul.f32 0.5, %v3719
        %v3721 = vsub.f32 1.5, %v3720
        %v3722 = vmul.f32 %v3717, %v3721
        %vm3723 = vweird.f32 %v3673
        %vm3724 = vweird.f32 %v3717
        %vm3725 = vmor %vm3723, %vm3724
        %v3726 = vsel %vm3725, %v3717, %v3722
        %v3727 = vrsqrt.pop %v3674
        %v3728 = vmul.f32 %v3727, %v3674
        %v3729 = vmul.f32 %v3728, %v3727
        %v3730 = vmul.f32 0.5, %v3729
        %v3731 = vsub.f32 1.5, %v3730
        %v3732 = vmul.f32 %v3727, %v3731
        %vm3733 = vweird.f32 %v3674
        %vm3734 = vweird.f32 %v3727
        %vm3735 = vmor %vm3733, %vm3734
        %v3736 = vsel %vm3735, %v3727, %v3732
        %v3737 = vrsqrt.pop %v3675
        %v3738 = vmul.f32 %v3737, %v3675
        %v3739 = vmul.f32 %v3738, %v3737
        %v3740 = vmul.f32 0.5, %v3739
        %v3741 = vsub.f32 1.5, %v3740
        %v3742 = vmul.f32 %v3737, %v3741
        %vm3743 = vweird.f32 %v3675
        %vm3744 = vweird.f32 %v3737
        %vm3745 = vmor %vm3743, %vm3744
        %v3746 = vsel %vm3745, %v3737, %v3742
        %v3747 = vrsqrt.pop %v3676
        %v3748 = vmul.f32 %v3747, %v3676
        %v3749 = vmul.f32 %v3748, %v3747
        %v3750 = vmul.f32 0.5, %v3749
        %v3751 = vsub.f32 1.5, %v3750
        %v3752 = vmul.f32 %v3747, %v3751
        %vm3753 = vweird.f32 %v3676
        %vm3754 = vweird.f32 %v3747
        %vm3755 = vmor %vm3753, %vm3754
        %v3756 = vsel %vm3755, %v3747, %v3752
        %v3757 = vmul.f32 %v3621, %v3686
        %v3758 = vmul.f32 %v3622, %v3696
        %v3759 = vmul.f32 %v3623, %v3706
        %v3760 = vmul.f32 %v3624, %v3716
        %v3761 = vmul.f32 %v3625, %v3726
        %v3762 = vmul.f32 %v3626, %v3736
        %v3763 = vmul.f32 %v3627, %v3746
        %v3764 = vmul.f32 %v3628, %v3756
        %v3765 = vperm.slane %v665, 1
        %v3766 = vmul.f32 %v3757, %v3765
        %v3767 = vmul.f32 %v3758, %v3765
        %v3768 = vmul.f32 %v3759, %v3765
        %v3769 = vmul.f32 %v3760, %v3765
        %v3770 = vmul.f32 %v3761, %v3765
        %v3771 = vmul.f32 %v3762, %v3765
        %v3772 = vmul.f32 %v3763, %v3765
        %v3773 = vmul.f32 %v3764, %v3765
        %v3774 = vperm.slane %v665, 2
        %v3775 = vadd.f32 %v3766, %v3774
        %v3776 = vadd.f32 %v3767, %v3774
        %v3777 = vadd.f32 %v3768, %v3774
        %v3778 = vadd.f32 %v3769, %v3774
        %v3779 = vadd.f32 %v3770, %v3774
        %v3780 = vadd.f32 %v3771, %v3774
        %v3781 = vadd.f32 %v3772, %v3774
        %v3782 = vadd.f32 %v3773, %v3774
        %v3783 = vpack.c.bf16 %v3776, %v3775
        %v3784 = vpack.c.bf16 %v3778, %v3777
        %v3785 = vpack.c.bf16 %v3780, %v3779
        %v3786 = vpack.c.bf16 %v3782, %v3781
        %v3787 = vld [vmem:[#allocation16] sm:$0xff]
        %v3788 = vld [vmem:[#allocation16 + $0x8] sm:$0xff]
        %v3789 = vld [vmem:[#allocation16 + $0x10] sm:$0xff]
        %v3790 = vld [vmem:[#allocation16 + $0x18] sm:$0xff]
        %v3791 = vld [vmem:[#allocation16 + $0x20] sm:$0xff]
        %v3792 = vld [vmem:[#allocation16 + $0x28] sm:$0xff]
        %v3793 = vld [vmem:[#allocation16 + $0x30] sm:$0xff]
        %v3794 = vld [vmem:[#allocation16 + $0x38] sm:$0xff]
        %v3795 = vld [vmem:[#allocation16 + $0x40] sm:$0xff]
        %v3796 = vld [vmem:[#allocation16 + $0x48] sm:$0xff]
        %v3797 = vld [vmem:[#allocation16 + $0x50] sm:$0xff]
        %v3798 = vld [vmem:[#allocation16 + $0x58] sm:$0xff]
        %v3799 = vld [vmem:[#allocation16 + $0x60] sm:$0xff]
        %v3800 = vld [vmem:[#allocation16 + $0x68] sm:$0xff]
        %v3801 = vld [vmem:[#allocation16 + $0x70] sm:$0xff]
        %v3802 = vld [vmem:[#allocation16 + $0x78] sm:$0xff]
        %v3803 = vld [vmem:[%s11] sm:$0xf]
        %v3805 = vperm.slane %v3803, 0
        %v3806 = vperm.slane %v3803, 1
        %v3807 = vperm.slane %v3803, 2
        %v3808 = vperm.slane %v3803, 3
        %v3829 = vunpack.c.l.b16 %v3787
        %v3830 = vunpack.c.h.b16 %v3787
        %v3831 = vunpack.c.l.b16 %v3788
        %v3832 = vunpack.c.h.b16 %v3788
        %v3833 = vunpack.c.l.b16 %v3789
        %v3834 = vunpack.c.h.b16 %v3789
        %v3835 = vunpack.c.l.b16 %v3790
        %v3836 = vunpack.c.h.b16 %v3790
        %v3837 = vunpack.c.l.b16 %v3791
        %v3838 = vunpack.c.h.b16 %v3791
        %v3839 = vunpack.c.l.b16 %v3792
        %v3840 = vunpack.c.h.b16 %v3792
        %v3841 = vunpack.c.l.b16 %v3793
        %v3842 = vunpack.c.h.b16 %v3793
        %v3843 = vunpack.c.l.b16 %v3794
        %v3844 = vunpack.c.h.b16 %v3794
        %v3845 = vunpack.c.l.b16 %v3795
        %v3846 = vunpack.c.h.b16 %v3795
        %v3847 = vunpack.c.l.b16 %v3796
        %v3848 = vunpack.c.h.b16 %v3796
        %v3849 = vunpack.c.l.b16 %v3797
        %v3850 = vunpack.c.h.b16 %v3797
        %v3851 = vunpack.c.l.b16 %v3798
        %v3852 = vunpack.c.h.b16 %v3798
        %v3853 = vunpack.c.l.b16 %v3799
        %v3854 = vunpack.c.h.b16 %v3799
        %v3855 = vunpack.c.l.b16 %v3800
        %v3856 = vunpack.c.h.b16 %v3800
        %v3857 = vunpack.c.l.b16 %v3801
        %v3858 = vunpack.c.h.b16 %v3801
        %v3859 = vunpack.c.l.b16 %v3802
        %v3860 = vunpack.c.h.b16 %v3802
        %v3861 = vpack.c.b16 %v3833, %v3829
        %v3862 = vpack.c.b16 %v3834, %v3830
        %v3863 = vpack.c.b16 %v3835, %v3831
        %v3864 = vpack.c.b16 %v3836, %v3832
        %v3865 = vpack.c.b16 %v3841, %v3837
        %v3866 = vpack.c.b16 %v3842, %v3838
        %v3867 = vpack.c.b16 %v3843, %v3839
        %v3868 = vpack.c.b16 %v3844, %v3840
        %v3869 = vpack.c.b16 %v3849, %v3845
        %v3870 = vpack.c.b16 %v3850, %v3846
        %v3871 = vpack.c.b16 %v3851, %v3847
        %v3872 = vpack.c.b16 %v3852, %v3848
        %v3873 = vpack.c.b16 %v3857, %v3853
        %v3874 = vpack.c.b16 %v3858, %v3854
        %v3875 = vpack.c.b16 %v3859, %v3855
        %v3876 = vpack.c.b16 %v3860, %v3856
        %v3894 = vsel %vm674, %v3783, 0
        %v3897 = vsel %vm674, %v3784, 0
        %v3900 = vsel %vm674, %v3785, 0
        %v3903 = vsel %vm674, %v3786, 0
        %3905 = vmatpush.bf16.msra.mxu0 0
        %3906 = vmatpush.bf16.msra.mxu0 0
        %3907 = vmatpush.bf16.msra.mxu0 0
        %3908 = vmatpush.bf16.msra.mxu0 0
        %3909 = vmatpush.bf16.msra.mxu0 %v3873
        %3910 = vmatpush.bf16.msra.mxu0 %v3869
        %3911 = vmatpush.bf16.msra.mxu0 %v3865
        %3912 = vmatpush.bf16.msra.mxu0 %v3861
        %3913 = vmatmul.bf16.gmra.mxu0 %v3894
        %v3914 = vpop.f32.mrf.mxu0
        %v3915 = vadd.f32 %v3805, %v3914
        %v3916 = vpop.f32.mrf.mxu0
        %v3917 = vadd.f32 %v3805, %v3916
        %3918 = vmatmul.bf16.gmra.mxu0 %v3897
        %v3919 = vpop.f32.mrf.mxu0
        %v3920 = vadd.f32 %v3805, %v3919
        %v3921 = vpop.f32.mrf.mxu0
        %v3922 = vadd.f32 %v3805, %v3921
        %3923 = vmatmul.bf16.gmra.mxu0 %v3900
        %v3924 = vpop.f32.mrf.mxu0
        %v3925 = vadd.f32 %v3805, %v3924
        %v3926 = vpop.f32.mrf.mxu0
        %v3927 = vadd.f32 %v3805, %v3926
        %3928 = vmatmul.bf16.gmra.mxu0 %v3903
        %v3929 = vpop.f32.mrf.mxu0
        %v3930 = vadd.f32 %v3805, %v3929
        %v3931 = vpop.f32.mrf.mxu0
        %v3932 = vadd.f32 %v3805, %v3931
        %3933 = vdwg.mxu0
        %3934 = vmatpush.bf16.msra.mxu0 0
        %3935 = vmatpush.bf16.msra.mxu0 0
        %3936 = vmatpush.bf16.msra.mxu0 0
        %3937 = vmatpush.bf16.msra.mxu0 0
        %3938 = vmatpush.bf16.msra.mxu0 %v3874
        %3939 = vmatpush.bf16.msra.mxu0 %v3870
        %3940 = vmatpush.bf16.msra.mxu0 %v3866
        %3941 = vmatpush.bf16.msra.mxu0 %v3862
        %3942 = vmatmul.bf16.gmra.mxu0 %v3894
        %v3943 = vpop.f32.mrf.mxu0
        %v3944 = vadd.f32 %v3806, %v3943
        %v3945 = vpop.f32.mrf.mxu0
        %v3946 = vadd.f32 %v3806, %v3945
        %3947 = vmatmul.bf16.gmra.mxu0 %v3897
        %v3948 = vpop.f32.mrf.mxu0
        %v3949 = vadd.f32 %v3806, %v3948
        %v3950 = vpop.f32.mrf.mxu0
        %v3951 = vadd.f32 %v3806, %v3950
        %3952 = vmatmul.bf16.gmra.mxu0 %v3900
        %v3953 = vpop.f32.mrf.mxu0
        %v3954 = vadd.f32 %v3806, %v3953
        %v3955 = vpop.f32.mrf.mxu0
        %v3956 = vadd.f32 %v3806, %v3955
        %3957 = vmatmul.bf16.gmra.mxu0 %v3903
        %v3958 = vpop.f32.mrf.mxu0
        %v3959 = vadd.f32 %v3806, %v3958
        %v3960 = vpop.f32.mrf.mxu0
        %v3961 = vadd.f32 %v3806, %v3960
        %3962 = vdwg.mxu0
        %3963 = vmatpush.bf16.msra.mxu0 0
        %3964 = vmatpush.bf16.msra.mxu0 0
        %3965 = vmatpush.bf16.msra.mxu0 0
        %3966 = vmatpush.bf16.msra.mxu0 0
        %3967 = vmatpush.bf16.msra.mxu0 %v3875
        %3968 = vmatpush.bf16.msra.mxu0 %v3871
        %3969 = vmatpush.bf16.msra.mxu0 %v3867
        %3970 = vmatpush.bf16.msra.mxu0 %v3863
        %3971 = vmatmul.bf16.gmra.mxu0 %v3894
        %v3972 = vpop.f32.mrf.mxu0
        %v3973 = vadd.f32 %v3807, %v3972
        %v3974 = vpop.f32.mrf.mxu0
        %v3975 = vadd.f32 %v3807, %v3974
        %3976 = vmatmul.bf16.gmra.mxu0 %v3897
        %v3977 = vpop.f32.mrf.mxu0
        %v3978 = vadd.f32 %v3807, %v3977
        %v3979 = vpop.f32.mrf.mxu0
        %v3980 = vadd.f32 %v3807, %v3979
        %3981 = vmatmul.bf16.gmra.mxu0 %v3900
        %v3982 = vpop.f32.mrf.mxu0
        %v3983 = vadd.f32 %v3807, %v3982
        %v3984 = vpop.f32.mrf.mxu0
        %v3985 = vadd.f32 %v3807, %v3984
        %3986 = vmatmul.bf16.gmra.mxu0 %v3903
        %v3987 = vpop.f32.mrf.mxu0
        %v3988 = vadd.f32 %v3807, %v3987
        %v3989 = vpop.f32.mrf.mxu0
        %v3990 = vadd.f32 %v3807, %v3989
        %3991 = vdwg.mxu0
        %3992 = vmatpush.bf16.msra.mxu0 0
        %3993 = vmatpush.bf16.msra.mxu0 0
        %3994 = vmatpush.bf16.msra.mxu0 0
        %3995 = vmatpush.bf16.msra.mxu0 0
        %3996 = vmatpush.bf16.msra.mxu0 %v3876
        %3997 = vmatpush.bf16.msra.mxu0 %v3872
        %3998 = vmatpush.bf16.msra.mxu0 %v3868
        %3999 = vmatpush.bf16.msra.mxu0 %v3864
        %4000 = vmatmul.bf16.gmra.mxu0 %v3894
        %v4001 = vpop.f32.mrf.mxu0
        %v4002 = vadd.f32 %v3808, %v4001
        %v4003 = vpop.f32.mrf.mxu0
        %v4004 = vadd.f32 %v3808, %v4003
        %4005 = vmatmul.bf16.gmra.mxu0 %v3897
        %v4006 = vpop.f32.mrf.mxu0
        %v4007 = vadd.f32 %v3808, %v4006
        %v4008 = vpop.f32.mrf.mxu0
        %v4009 = vadd.f32 %v3808, %v4008
        %4010 = vmatmul.bf16.gmra.mxu0 %v3900
        %v4011 = vpop.f32.mrf.mxu0
        %v4012 = vadd.f32 %v3808, %v4011
        %v4013 = vpop.f32.mrf.mxu0
        %v4014 = vadd.f32 %v3808, %v4013
        %4015 = vmatmul.bf16.gmra.mxu0 %v3903
        %v4016 = vpop.f32.mrf.mxu0
        %v4017 = vadd.f32 %v3808, %v4016
        %v4018 = vpop.f32.mrf.mxu0
        %v4019 = vadd.f32 %v3808, %v4018
        %4020 = vdwg.mxu0
        %v4021 = vmul.f32 %v3973, 0.5
        %v4022 = vmul.f32 %v4002, 0.5
        %v4023 = vmul.f32 %v3975, 0.5
        %v4024 = vmul.f32 %v4004, 0.5
        %v4025 = vmul.f32 %v3978, 0.5
        %v4026 = vmul.f32 %v4007, 0.5
        %v4027 = vmul.f32 %v3980, 0.5
        %v4028 = vmul.f32 %v4009, 0.5
        %v4029 = vmul.f32 %v3983, 0.5
        %v4030 = vmul.f32 %v4012, 0.5
        %v4031 = vmul.f32 %v3985, 0.5
        %v4032 = vmul.f32 %v4014, 0.5
        %v4033 = vmul.f32 %v3988, 0.5
        %v4034 = vmul.f32 %v4017, 0.5
        %v4035 = vmul.f32 %v3990, 0.5
        %v4036 = vmul.f32 %v4019, 0.5
        %v4037 = vmul.f32 %v3973, 0.044715
        %v4038 = vmul.f32 %v4002, 0.044715
        %v4039 = vmul.f32 %v3975, 0.044715
        %v4040 = vmul.f32 %v4004, 0.044715
        %v4041 = vmul.f32 %v3978, 0.044715
        %v4042 = vmul.f32 %v4007, 0.044715
        %v4043 = vmul.f32 %v3980, 0.044715
        %v4044 = vmul.f32 %v4009, 0.044715
        %v4045 = vmul.f32 %v3983, 0.044715
        %v4046 = vmul.f32 %v4012, 0.044715
        %v4047 = vmul.f32 %v3985, 0.044715
        %v4048 = vmul.f32 %v4014, 0.044715
        %v4049 = vmul.f32 %v3988, 0.044715
        %v4050 = vmul.f32 %v4017, 0.044715
        %v4051 = vmul.f32 %v3990, 0.044715
        %v4052 = vmul.f32 %v4019, 0.044715
        %v4053 = vmul.f32 %v4037, %v3973
        %v4054 = vmul.f32 %v4038, %v4002
        %v4055 = vmul.f32 %v4039, %v3975
        %v4056 = vmul.f32 %v4040, %v4004
        %v4057 = vmul.f32 %v4041, %v3978
        %v4058 = vmul.f32 %v4042, %v4007
        %v4059 = vmul.f32 %v4043, %v3980
        %v4060 = vmul.f32 %v4044, %v4009
        %v4061 = vmul.f32 %v4045, %v3983
        %v4062 = vmul.f32 %v4046, %v4012
        %v4063 = vmul.f32 %v4047, %v3985
        %v4064 = vmul.f32 %v4048, %v4014
        %v4065 = vmul.f32 %v4049, %v3988
        %v4066 = vmul.f32 %v4050, %v4017
        %v4067 = vmul.f32 %v4051, %v3990
        %v4068 = vmul.f32 %v4052, %v4019
        %v4069 = vmul.f32 %v4053, %v3973
        %v4070 = vmul.f32 %v4054, %v4002
        %v4071 = vmul.f32 %v4055, %v3975
        %v4072 = vmul.f32 %v4056, %v4004
        %v4073 = vmul.f32 %v4057, %v3978
        %v4074 = vmul.f32 %v4058, %v4007
        %v4075 = vmul.f32 %v4059, %v3980
        %v4076 = vmul.f32 %v4060, %v4009
        %v4077 = vmul.f32 %v4061, %v3983
        %v4078 = vmul.f32 %v4062, %v4012
        %v4079 = vmul.f32 %v4063, %v3985
        %v4080 = vmul.f32 %v4064, %v4014
        %v4081 = vmul.f32 %v4065, %v3988
        %v4082 = vmul.f32 %v4066, %v4017
        %v4083 = vmul.f32 %v4067, %v3990
        %v4084 = vmul.f32 %v4068, %v4019
        %v4085 = vadd.f32 %v3973, %v4069
        %v4086 = vadd.f32 %v4002, %v4070
        %v4087 = vadd.f32 %v3975, %v4071
        %v4088 = vadd.f32 %v4004, %v4072
        %v4089 = vadd.f32 %v3978, %v4073
        %v4090 = vadd.f32 %v4007, %v4074
        %v4091 = vadd.f32 %v3980, %v4075
        %v4092 = vadd.f32 %v4009, %v4076
        %v4093 = vadd.f32 %v3983, %v4077
        %v4094 = vadd.f32 %v4012, %v4078
        %v4095 = vadd.f32 %v3985, %v4079
        %v4096 = vadd.f32 %v4014, %v4080
        %v4097 = vadd.f32 %v3988, %v4081
        %v4098 = vadd.f32 %v4017, %v4082
        %v4099 = vadd.f32 %v3990, %v4083
        %v4100 = vadd.f32 %v4019, %v4084
        %v4101 = vmul.f32 %v4085, 0.7978846
        %v4102 = vmul.f32 %v4086, 0.7978846
        %v4103 = vmul.f32 %v4087, 0.7978846
        %v4104 = vmul.f32 %v4088, 0.7978846
        %v4105 = vmul.f32 %v4089, 0.7978846
        %v4106 = vmul.f32 %v4090, 0.7978846
        %v4107 = vmul.f32 %v4091, 0.7978846
        %v4108 = vmul.f32 %v4092, 0.7978846
        %v4109 = vmul.f32 %v4093, 0.7978846
        %v4110 = vmul.f32 %v4094, 0.7978846
        %v4111 = vmul.f32 %v4095, 0.7978846
        %v4112 = vmul.f32 %v4096, 0.7978846
        %v4113 = vmul.f32 %v4097, 0.7978846
        %v4114 = vmul.f32 %v4098, 0.7978846
        %v4115 = vmul.f32 %v4099, 0.7978846
        %v4116 = vmul.f32 %v4100, 0.7978846
        %v4117 = vtanh.pop %v4101
        %v4118 = vtanh.pop %v4102
        %v4119 = vtanh.pop %v4103
        %v4120 = vtanh.pop %v4104
        %v4121 = vtanh.pop %v4105
        %v4122 = vtanh.pop %v4106
        %v4123 = vtanh.pop %v4107
        %v4124 = vtanh.pop %v4108
        %v4125 = vtanh.pop %v4109
        %v4126 = vtanh.pop %v4110
        %v4127 = vtanh.pop %v4111
        %v4128 = vtanh.pop %v4112
        %v4129 = vtanh.pop %v4113
        %v4130 = vtanh.pop %v4114
        %v4131 = vtanh.pop %v4115
        %v4132 = vtanh.pop %v4116
        %v4133 = vadd.f32 %v4117, 1.0
        %v4134 = vadd.f32 %v4118, 1.0
        %v4135 = vadd.f32 %v4119, 1.0
        %v4136 = vadd.f32 %v4120, 1.0
        %v4137 = vadd.f32 %v4121, 1.0
        %v4138 = vadd.f32 %v4122, 1.0
        %v4139 = vadd.f32 %v4123, 1.0
        %v4140 = vadd.f32 %v4124, 1.0
        %v4141 = vadd.f32 %v4125, 1.0
        %v4142 = vadd.f32 %v4126, 1.0
        %v4143 = vadd.f32 %v4127, 1.0
        %v4144 = vadd.f32 %v4128, 1.0
        %v4145 = vadd.f32 %v4129, 1.0
        %v4146 = vadd.f32 %v4130, 1.0
        %v4147 = vadd.f32 %v4131, 1.0
        %v4148 = vadd.f32 %v4132, 1.0
        %v4149 = vmul.f32 %v4021, %v4133
        %v4150 = vmul.f32 %v4022, %v4134
        %v4151 = vmul.f32 %v4023, %v4135
        %v4152 = vmul.f32 %v4024, %v4136
        %v4153 = vmul.f32 %v4025, %v4137
        %v4154 = vmul.f32 %v4026, %v4138
        %v4155 = vmul.f32 %v4027, %v4139
        %v4156 = vmul.f32 %v4028, %v4140
        %v4157 = vmul.f32 %v4029, %v4141
        %v4158 = vmul.f32 %v4030, %v4142
        %v4159 = vmul.f32 %v4031, %v4143
        %v4160 = vmul.f32 %v4032, %v4144
        %v4161 = vmul.f32 %v4033, %v4145
        %v4162 = vmul.f32 %v4034, %v4146
        %v4163 = vmul.f32 %v4035, %v4147
        %v4164 = vmul.f32 %v4036, %v4148
        %v4165 = vmul.f32 %v3915, %v4149
        %v4166 = vmul.f32 %v3944, %v4150
        %v4167 = vmul.f32 %v3917, %v4151
        %v4168 = vmul.f32 %v3946, %v4152
        %v4169 = vmul.f32 %v3920, %v4153
        %v4170 = vmul.f32 %v3949, %v4154
        %v4171 = vmul.f32 %v3922, %v4155
        %v4172 = vmul.f32 %v3951, %v4156
        %v4173 = vmul.f32 %v3925, %v4157
        %v4174 = vmul.f32 %v3954, %v4158
        %v4175 = vmul.f32 %v3927, %v4159
        %v4176 = vmul.f32 %v3956, %v4160
        %v4177 = vmul.f32 %v3930, %v4161
        %v4178 = vmul.f32 %v3959, %v4162
        %v4179 = vmul.f32 %v3932, %v4163
        %v4180 = vmul.f32 %v3961, %v4164
        %v4181 = vpack.c.bf16 %v4167, %v4165
        %v4182 = vpack.c.bf16 %v4168, %v4166
        %v4183 = vpack.c.bf16 %v4171, %v4169
        %v4184 = vpack.c.bf16 %v4172, %v4170
        %v4185 = vpack.c.bf16 %v4175, %v4173
        %v4186 = vpack.c.bf16 %v4176, %v4174
        %v4187 = vpack.c.bf16 %v4179, %v4177
        %v4188 = vpack.c.bf16 %v4180, %v4178
        %v4189 = vld [vmem:[%s12] sm:$0xf]
        %v4190 = vld [vmem:[%s12 + $0x4] sm:$0xf]
        %v4191 = vld [vmem:[%s12 + $0x8] sm:$0xf]
        %v4192 = vld [vmem:[%s12 + $0xc] sm:$0xf]
        %v4193 = vld [vmem:[%s12 + $0x10] sm:$0xf]
        %v4194 = vld [vmem:[%s12 + $0x14] sm:$0xf]
        %v4195 = vld [vmem:[%s12 + $0x18] sm:$0xf]
        %v4196 = vld [vmem:[%s12 + $0x1c] sm:$0xf]
        %v4197 = vld [vmem:[%s12 + $0x20] sm:$0xf]
        %v4198 = vld [vmem:[%s12 + $0x24] sm:$0xf]
        %v4199 = vld [vmem:[%s12 + $0x28] sm:$0xf]
        %v4200 = vld [vmem:[%s12 + $0x2c] sm:$0xf]
        %v4201 = vld [vmem:[%s12 + $0x30] sm:$0xf]
        %v4202 = vld [vmem:[%s12 + $0x34] sm:$0xf]
        %v4203 = vld [vmem:[%s12 + $0x38] sm:$0xf]
        %v4204 = vld [vmem:[%s12 + $0x3c] sm:$0xf]
        %v4205 = vld [vmem:[%s12 + $0x40] sm:$0xf]
        %v4206 = vld [vmem:[%s12 + $0x44] sm:$0xf]
        %v4207 = vld [vmem:[%s12 + $0x48] sm:$0xf]
        %v4208 = vld [vmem:[%s12 + $0x4c] sm:$0xf]
        %v4209 = vld [vmem:[%s12 + $0x50] sm:$0xf]
        %v4210 = vld [vmem:[%s12 + $0x54] sm:$0xf]
        %v4211 = vld [vmem:[%s12 + $0x58] sm:$0xf]
        %v4212 = vld [vmem:[%s12 + $0x5c] sm:$0xf]
        %v4213 = vld [vmem:[%s12 + $0x60] sm:$0xf]
        %v4214 = vld [vmem:[%s12 + $0x64] sm:$0xf]
        %v4215 = vld [vmem:[%s12 + $0x68] sm:$0xf]
        %v4216 = vld [vmem:[%s12 + $0x6c] sm:$0xf]
        %v4217 = vld [vmem:[%s12 + $0x70] sm:$0xf]
        %v4218 = vld [vmem:[%s12 + $0x74] sm:$0xf]
        %v4219 = vld [vmem:[%s12 + $0x78] sm:$0xf]
        %v4220 = vld [vmem:[%s12 + $0x7c] sm:$0xf]
        %v4221 = vperm.slane %v665, 3
        %v4254 = vunpack.c.l.b16 %v4189
        %v4255 = vunpack.c.l.b16 %v4190
        %v4256 = vunpack.c.l.b16 %v4191
        %v4257 = vunpack.c.l.b16 %v4192
        %v4258 = vunpack.c.l.b16 %v4193
        %v4259 = vunpack.c.l.b16 %v4194
        %v4260 = vunpack.c.l.b16 %v4195
        %v4261 = vunpack.c.l.b16 %v4196
        %v4262 = vunpack.c.l.b16 %v4197
        %v4263 = vunpack.c.l.b16 %v4198
        %v4264 = vunpack.c.l.b16 %v4199
        %v4265 = vunpack.c.l.b16 %v4200
        %v4266 = vunpack.c.l.b16 %v4201
        %v4267 = vunpack.c.l.b16 %v4202
        %v4268 = vunpack.c.l.b16 %v4203
        %v4269 = vunpack.c.l.b16 %v4204
        %v4270 = vunpack.c.l.b16 %v4205
        %v4271 = vunpack.c.l.b16 %v4206
        %v4272 = vunpack.c.l.b16 %v4207
        %v4273 = vunpack.c.l.b16 %v4208
        %v4274 = vunpack.c.l.b16 %v4209
        %v4275 = vunpack.c.l.b16 %v4210
        %v4276 = vunpack.c.l.b16 %v4211
        %v4277 = vunpack.c.l.b16 %v4212
        %v4278 = vunpack.c.l.b16 %v4213
        %v4279 = vunpack.c.l.b16 %v4214
        %v4280 = vunpack.c.l.b16 %v4215
        %v4281 = vunpack.c.l.b16 %v4216
        %v4282 = vunpack.c.l.b16 %v4217
        %v4283 = vunpack.c.l.b16 %v4218
        %v4284 = vunpack.c.l.b16 %v4219
        %v4285 = vunpack.c.l.b16 %v4220
        %v4286 = vpack.c.b16 %v4255, %v4254
        %v4287 = vpack.c.b16 %v4257, %v4256
        %v4288 = vpack.c.b16 %v4259, %v4258
        %v4289 = vpack.c.b16 %v4261, %v4260
        %v4290 = vpack.c.b16 %v4263, %v4262
        %v4291 = vpack.c.b16 %v4265, %v4264
        %v4292 = vpack.c.b16 %v4267, %v4266
        %v4293 = vpack.c.b16 %v4269, %v4268
        %v4294 = vpack.c.b16 %v4271, %v4270
        %v4295 = vpack.c.b16 %v4273, %v4272
        %v4296 = vpack.c.b16 %v4275, %v4274
        %v4297 = vpack.c.b16 %v4277, %v4276
        %v4298 = vpack.c.b16 %v4279, %v4278
        %v4299 = vpack.c.b16 %v4281, %v4280
        %v4300 = vpack.c.b16 %v4283, %v4282
        %v4301 = vpack.c.b16 %v4285, %v4284
        %4318 = vmatpush.bf16.msra.mxu0 %v4293
        %4319 = vmatpush.bf16.msra.mxu0 %v4292
        %4320 = vmatpush.bf16.msra.mxu0 %v4291
        %4321 = vmatpush.bf16.msra.mxu0 %v4290
        %4322 = vmatpush.bf16.msra.mxu0 %v4289
        %4323 = vmatpush.bf16.msra.mxu0 %v4288
        %4324 = vmatpush.bf16.msra.mxu0 %v4287
        %4325 = vmatpush.bf16.msra.mxu0 %v4286
        %4326 = vmatmul.bf16.gmra.mxu0 %v4181
        %v4327 = vpop.f32.mrf.mxu0
        %v4328 = vadd.f32 %v4221, %v4327
        %v4329 = vpop.f32.mrf.mxu0
        %v4330 = vadd.f32 %v4221, %v4329
        %4331 = vmatmul.bf16.gmra.mxu0 %v4183
        %v4332 = vpop.f32.mrf.mxu0
        %v4333 = vadd.f32 %v4221, %v4332
        %v4334 = vpop.f32.mrf.mxu0
        %v4335 = vadd.f32 %v4221, %v4334
        %4336 = vmatmul.bf16.gmra.mxu0 %v4185
        %v4337 = vpop.f32.mrf.mxu0
        %v4338 = vadd.f32 %v4221, %v4337
        %v4339 = vpop.f32.mrf.mxu0
        %v4340 = vadd.f32 %v4221, %v4339
        %4341 = vmatmul.bf16.gmra.mxu0 %v4187
        %v4342 = vpop.f32.mrf.mxu0
        %v4343 = vadd.f32 %v4221, %v4342
        %v4344 = vpop.f32.mrf.mxu0
        %v4345 = vadd.f32 %v4221, %v4344
        %4346 = vdwg.mxu0
        %4347 = vmatpush.bf16.msra.mxu0 %v4301
        %4348 = vmatpush.bf16.msra.mxu0 %v4300
        %4349 = vmatpush.bf16.msra.mxu0 %v4299
        %4350 = vmatpush.bf16.msra.mxu0 %v4298
        %4351 = vmatpush.bf16.msra.mxu0 %v4297
        %4352 = vmatpush.bf16.msra.mxu0 %v4296
        %4353 = vmatpush.bf16.msra.mxu0 %v4295
        %4354 = vmatpush.bf16.msra.mxu0 %v4294
        %4355 = vmatmul.bf16.gmra.mxu0 %v4182
        %v4356 = vpop.f32.mrf.mxu0
        %v4357 = vadd.f32 %v4328, %v4356
        %v4358 = vpop.f32.mrf.mxu0
        %v4359 = vadd.f32 %v4330, %v4358
        %4360 = vmatmul.bf16.gmra.mxu0 %v4184
        %v4361 = vpop.f32.mrf.mxu0
        %v4362 = vadd.f32 %v4333, %v4361
        %v4363 = vpop.f32.mrf.mxu0
        %v4364 = vadd.f32 %v4335, %v4363
        %4365 = vmatmul.bf16.gmra.mxu0 %v4186
        %v4366 = vpop.f32.mrf.mxu0
        %v4367 = vadd.f32 %v4338, %v4366
        %v4368 = vpop.f32.mrf.mxu0
        %v4369 = vadd.f32 %v4340, %v4368
        %4370 = vmatmul.bf16.gmra.mxu0 %v4188
        %v4371 = vpop.f32.mrf.mxu0
        %v4372 = vadd.f32 %v4343, %v4371
        %v4373 = vpop.f32.mrf.mxu0
        %v4374 = vadd.f32 %v4345, %v4373
        %4375 = vdwg.mxu0
        %v4376 = vadd.f32 %v4357, %v3581
        %v4377 = vadd.f32 %v4359, %v3582
        %v4378 = vadd.f32 %v4362, %v3583
        %v4379 = vadd.f32 %v4364, %v3584
        %v4380 = vadd.f32 %v4367, %v3585
        %v4381 = vadd.f32 %v4369, %v3586
        %v4382 = vadd.f32 %v4372, %v3587
        %v4383 = vadd.f32 %v4374, %v3588
        %v4384 = vpack.c.bf16 %v4377, %v4376
        %v4385 = vpack.c.bf16 %v4379, %v4378
        %v4386 = vpack.c.bf16 %v4381, %v4380
        %v4387 = vpack.c.bf16 %v4383, %v4382
        %v4388 = vld [vmem:[#allocation17] sm:$0xf]
        %v4389 = vld [vmem:[#allocation17 + $0x4] sm:$0xf]
        %v4390 = vld [vmem:[#allocation17 + $0x8] sm:$0xf]
        %v4391 = vld [vmem:[#allocation17 + $0xc] sm:$0xf]
        %v4392 = vld [vmem:[#allocation17 + $0x10] sm:$0xf]
        %v4393 = vld [vmem:[#allocation17 + $0x14] sm:$0xf]
        %v4394 = vld [vmem:[#allocation17 + $0x18] sm:$0xf]
        %v4395 = vld [vmem:[#allocation17 + $0x1c] sm:$0xf]
        %v4396 = vperm.slane %v665, 4
        %v4405 = vunpack.c.l.b16 %v4388
        %v4406 = vunpack.c.l.b16 %v4389
        %v4407 = vunpack.c.l.b16 %v4390
        %v4408 = vunpack.c.l.b16 %v4391
        %v4409 = vunpack.c.l.b16 %v4392
        %v4410 = vunpack.c.l.b16 %v4393
        %v4411 = vunpack.c.l.b16 %v4394
        %v4412 = vunpack.c.l.b16 %v4395
        %v4413 = vpack.c.b16 %v4406, %v4405
        %v4414 = vpack.c.b16 %v4408, %v4407
        %v4415 = vpack.c.b16 %v4410, %v4409
        %v4416 = vpack.c.b16 %v4412, %v4411
        %v4422 = vsel %vm674, %v4384, 0
        %v4425 = vsel %vm674, %v4385, 0
        %v4428 = vsel %vm674, %v4386, 0
        %v4431 = vsel %vm674, %v4387, 0
        %4433 = vmatpush.bf16.msra.mxu0 0
        %4434 = vmatpush.bf16.msra.mxu0 0
        %4435 = vmatpush.bf16.msra.mxu0 0
        %4436 = vmatpush.bf16.msra.mxu0 0
        %4437 = vmatpush.bf16.msra.mxu0 %v4416
        %4438 = vmatpush.bf16.msra.mxu0 %v4415
        %4439 = vmatpush.bf16.msra.mxu0 %v4414
        %4440 = vmatpush.bf16.msra.mxu0 %v4413
        %4441 = vmatmul.bf16.gmra.mxu0 %v4422
        %v4442 = vpop.f32.mrf.mxu0
        %v4443 = vadd.f32 %v4396, %v4442
        %v4444 = vpop.f32.mrf.mxu0
        %v4445 = vadd.f32 %v4396, %v4444
        %4446 = vmatmul.bf16.gmra.mxu0 %v4425
        %v4447 = vpop.f32.mrf.mxu0
        %v4448 = vadd.f32 %v4396, %v4447
        %v4449 = vpop.f32.mrf.mxu0
        %v4450 = vadd.f32 %v4396, %v4449
        %4451 = vmatmul.bf16.gmra.mxu0 %v4428
        %v4452 = vpop.f32.mrf.mxu0
        %v4453 = vadd.f32 %v4396, %v4452
        %v4454 = vpop.f32.mrf.mxu0
        %v4455 = vadd.f32 %v4396, %v4454
        %4456 = vmatmul.bf16.gmra.mxu0 %v4431
        %v4457 = vpop.f32.mrf.mxu0
        %v4458 = vadd.f32 %v4396, %v4457
        %v4459 = vpop.f32.mrf.mxu0
        %v4460 = vadd.f32 %v4396, %v4459
        %4461 = vdwg.mxu0
        %v4462 = vadd.f32 %v4443, %v655
        %v4463 = vadd.f32 %v4445, %v656
        %v4464 = vadd.f32 %v4448, %v657
        %v4465 = vadd.f32 %v4450, %v658
        %v4466 = vadd.f32 %v4453, %v659
        %v4467 = vadd.f32 %v4455, %v660
        %v4468 = vadd.f32 %v4458, %v661
        %v4469 = vadd.f32 %v4460, %v662
        %4470 = vst.msk [vmem:[%s648] sm:$0xff] %vm674, %v4462
        %4471 = vst.msk [vmem:[%s648 + $0x8] sm:$0xff] %vm674, %v4463
        %4472 = vst.msk [vmem:[%s648 + $0x10] sm:$0xff] %vm674, %v4464
        %4473 = vst.msk [vmem:[%s648 + $0x18] sm:$0xff] %vm674, %v4465
        %4474 = vst.msk [vmem:[%s648 + $0x20] sm:$0xff] %vm674, %v4466
        %4475 = vst.msk [vmem:[%s648 + $0x28] sm:$0xff] %vm674, %v4467
        %4476 = vst.msk [vmem:[%s648 + $0x30] sm:$0xff] %vm674, %v4468
        %4477 = vst.msk [vmem:[%s648 + $0x38] sm:$0xff] %vm674, %v4469
        %s4478 = sand.u32 %s348, 1
        %s4479 = scalar_lea.sflag [#allocation4], %s4478
        %s4480 = sand.u32 %s348, 1
        %s4481 = smul.addr %s4480, 64
        %s4482 = scalar_lea.vmem [#allocation19], %s4481
        // Predicated region
        $region117: #{tpu_custom_call.1} parent=75 // pred_check
          %p4483 = pneg %p358
        $region118: #{tpu_custom_call.1} parent=75 // pred_check_branch
          %4485 = sbr.rel (%p4483) target = $region120
        $region119: #{tpu_custom_call.1} parent=75 // pred_region
          %4487 = vsyncadd %s4479, 0
          %s4488 = smul.addr %s36, 8
          %s4489 = smul.addr %s4488, 8
          %s4490 = scalar_lea.hbm %s14, %s4489
          %s4491 = sshll.u32 %s4482, 4
          %s4492 = int_to_ptr.vmem [resolvable:$true] %s4491
          %s4493 = sshll.u32 %s4490, 4
          %s4494 = int_to_ptr.hbm [resolvable:$true] %s4493
          %4499 = dma.vmem_to_hbm [thread:$0]  %s4492, 1024, %s4494, %s4479, 128, 128, 8
        $region120: #{tpu_custom_call.1} parent=75 // pred_fallthru
          _
      $region76: #{tpu_custom_call.1} parent=5 // pred_fallthru
        _
      %p4500 = scmp.le.s32.totalorder 2, %s31
      // Predicated region
      $region121: #{tpu_custom_call.1} parent=5 // pred_check
        %p4501 = pneg %p4500
      $region122: #{tpu_custom_call.1} parent=5 // pred_check_branch
        %4503 = sbr.rel (%p4501) target = $region124
      $region123: #{tpu_custom_call.1} parent=5 // pred_region
        %s4504 = ssub.s32 %s31, 2
        // Predicated region
        $region125: #{tpu_custom_call.1} parent=123 // pred_check
          %p4505 = pneg %p364
        $region126: #{tpu_custom_call.1} parent=123 // pred_check_branch
          %4507 = sbr.rel (%p4505) target = $region128
        $region127: #{tpu_custom_call.1} parent=123 // pred_region
          %s4508 = sand.u32 %s349, 1
          %s4509 = scalar_lea.sflag [#allocation4], %s4508
          %s4510 = sand.u32 %s349, 1
          %s4511 = smul.addr %s4510, 64
          %s4512 = scalar_lea.vmem [#allocation19], %s4511
          %4514 = dma.done %s4509, 1024
        $region128: #{tpu_custom_call.1} parent=123 // pred_fallthru
          _
      $region124: #{tpu_custom_call.1} parent=5 // pred_fallthru
        _
    $region6: #{tpu_custom_call.1} parent=1 // loop_footer
      %s35 = sadd.s32 1, %s31
    $region7: #{tpu_custom_call.1} parent=1 // loop_footer_branch
      %30 = sbr.rel target = $region3
    $region8: #{tpu_custom_call.1} parent=1 // loop_exit
      _
    %4515 = vsyncpa [#allocation3], 1
    %s4516 = scalar_lea.sflag [#allocation3], 1
    %4517 = vsyncpa %s4516, 1
    %4518 = vsyncpa [#allocation6], 1
    %4519 = vsyncpa [#allocation9], 1
    %4520 = vsyncpa [#allocation12], 1
    %4521 = vsyncpa [#allocation15], 1
    %4522 = vsyncpa [#allocation18], 1
    %4523 = vsyncpa [#allocation4], 1
    %s4524 = scalar_lea.sflag [#allocation4], 1
    %4525 = vsyncpa %s4524, 1

</llo_original>
